<compile_context>
chip_gen: v7x
topology: tpu7x:2x2x1
jax: 0.10.0
libtpu: 0.0.40
codegen_flags: <defaults>
</compile_context>

<pallas_src>
import functools

import jax
import jax.numpy as jnp
from jax.experimental import pallas as pl
from jax.experimental.pallas import tpu as pltpu

LANE = 128
INV_SQRT2 = 0.7071067811865476


def _round_up(n: int, m: int) -> int:
    return ((n + m - 1) // m) * m


# ---------------------------------------------------------------------------
# Exact-erf GELU helper (kernel-safe lowering: mul/add/where/exp/div only)
# ---------------------------------------------------------------------------
def _erf(x):
    """Abramowitz & Stegun 7.1.26 rational approximation of erf.

    Max abs error ~1.5e-7 -> indistinguishable from exact erf at the bf16/f32
    precision of this pipeline.  Uses only ops with guaranteed Mosaic lowering;
    the single exp runs on the EUP slot (otherwise idle here).
    """
    a1, a2, a3, a4, a5 = (0.254829592, -0.284496736, 1.421413741,
                          -1.453152027, 1.061405429)
    p = 0.3275911
    neg = x < 0.0
    z = jnp.where(neg, -x, x)
    t = 1.0 / (1.0 + p * z)
    poly = ((((a5 * t + a4) * t + a3) * t + a2) * t + a1) * t
    y = 1.0 - poly * jnp.exp(-(z * z))
    return jnp.where(neg, -y, y)


def _gelu_exact(x):
    return 0.5 * x * (1.0 + _erf(x * INV_SQRT2))


# ---------------------------------------------------------------------------
# Kernel: one fused Projection forward for a (TILE_B, IN) batch tile.
# ---------------------------------------------------------------------------
def projection_kernel(x_ref, w1cat_ref, b1_ref, w2_ref, b2_ref,
                      gamma_ref, beta_ref, w3_ref, bout_ref, o_ref, *, mid):
    # x_ref     : (TILE_B, IN)            bf16
    # w1cat_ref : (IN, MID + OUT_PAD)     bf16   [w1 | w1 @ pool (zero-padded to 128 lanes)]
    # b1_ref    : (1, MID)                f32
    # w2_ref    : (MID, FC2)              bf16
    # b2_ref    : (1, FC2)                f32
    # gamma/beta: (1, FC2)                f32
    # w3_ref    : (FC2, OUT_PAD)          bf16   (zero-padded to 128 lanes)
    # bout_ref  : (1, OUT_PAD)            f32    b3 + (b1 @ pool), padded
    # o_ref     : (TILE_B, OUT_PAD)       f32/bf16
    x = x_ref[...]

    # Fused fc1 + pool-folded baseline: ONE matmul, N = MID + OUT_PAD over K = IN.
    h = jnp.dot(x, w1cat_ref[...], preferred_element_type=jnp.float32)
    h1 = h[:, :mid] + b1_ref[...]          # lane-aligned cut (mid % 128 == 0)
    baseline = h[:, mid:]                  # (TILE_B, OUT_PAD), bias folded into bout

    # fc2 (bf16 operands, f32 MXU accumulation)
    h2 = jnp.dot(h1.astype(jnp.bfloat16), w2_ref[...],
                 preferred_element_type=jnp.float32) + b2_ref[...]

    # LayerNorm over last dim (eps=1e-5, biased variance, affine) -- all f32
    mean = jnp.mean(h2, axis=-1, keepdims=True)
    var = jnp.mean(jnp.square(h2 - mean), axis=-1, keepdims=True)
    hn = (h2 - mean) * jax.lax.rsqrt(var + 1e-5)
    hn = hn * gamma_ref[...] + beta_ref[...]

    # GELU (exact-erf semantics)
    hg = _gelu_exact(hn)

    # fc3 (+ folded biases) + baseline residual; 128-lane-dense store (unmasked vst)
    out = jnp.dot(hg.astype(jnp.bfloat16), w3_ref[...],
                  preferred_element_type=jnp.float32) + bout_ref[...]
    o_ref[...] = (out + baseline).astype(o_ref.dtype)


# ---------------------------------------------------------------------------
# Parameter construction / folding
# ---------------------------------------------------------------------------
def make_pool_matrix(middle_size: int, pooled: int = 64, dtype=jnp.float32):
    """(middle_size, pooled) matrix implementing AdaptiveAvgPool1d(pooled)."""
    assert middle_size % pooled == 0, "uniform-bin pooling requires divisibility"
    binsz = middle_size // pooled
    eye = jnp.eye(pooled, dtype=dtype)
    return jnp.repeat(eye, binsz, axis=0) / float(binsz)  # (middle_size, pooled)


def init_params(key, in_features, middle_size, out_features):
    """PyTorch-default Linear init (uniform +-1/sqrt(fan_in)) in f32."""
    fc2_out = int(out_features * 4)
    ks = jax.random.split(key, 3)

    def linear_init(k, fan_in, fan_out):
        kw, kb = jax.random.split(k)
        bound = 1.0 / jnp.sqrt(jnp.float32(fan_in))
        w = jax.random.uniform(kw, (fan_in, fan_out), jnp.float32, -bound, bound)
        b = jax.random.uniform(kb, (1, fan_out), jnp.float32, -bound, bound)
        return w, b

    w1, b1 = linear_init(ks[0], in_features, middle_size)
    w2, b2 = linear_init(ks[1], middle_size, fc2_out)
    w3, b3 = linear_init(ks[2], fc2_out, out_features)
    gamma = jnp.ones((1, fc2_out), jnp.float32)
    beta = jnp.zeros((1, fc2_out), jnp.float32)
    return dict(w1=w1, b1=b1, w2=w2, b2=b2, gamma=gamma, beta=beta, w3=w3, b3=b3)


def prepare_kernel_params(params, middle_size, out_features):
    """Fold pooling into fc1, concatenate the pooled columns onto w1 ([w1 | wb]),
    fold the pooled bias into the fc3 bias, pad the 64-wide output path to 128
    lanes, and quantize matmul operands to bf16."""
    assert middle_size % LANE == 0, \
        "middle_size must be a multiple of 128 so the in-kernel h1/baseline cuts are lane-aligned"
    pool = make_pool_matrix(middle_size, 64)                      # (MID, 64)
    out_pad = max(_round_up(out_features, LANE), LANE)

    def pad_cols(a, width):
        return jnp.pad(a, ((0, 0), (0, width - a.shape[-1])))

    wb = pad_cols(params["w1"] @ pool, out_pad)                   # (IN, OUT_PAD)
    bb = pad_cols(params["b1"] @ pool, out_pad)                   # (1, OUT_PAD)
    w1cat = jnp.concatenate([params["w1"], wb], axis=1)           # (IN, MID+OUT_PAD)
    w3p = pad_cols(params["w3"], out_pad)                         # (FC2, OUT_PAD)
    bout = pad_cols(params["b3"], out_pad) + bb                   # (1, OUT_PAD)

    return dict(
        w1cat=w1cat.astype(jnp.bfloat16),
        b1=params["b1"],
        w2=params["w2"].astype(jnp.bfloat16),
        b2=params["b2"],
        gamma=params["gamma"],
        beta=params["beta"],
        w3=w3p.astype(jnp.bfloat16),
        bout=bout,
        mid=int(middle_size),
        out_pad=int(out_pad),
    )


# ---------------------------------------------------------------------------
# Wrapper: batch-tiled pallas_call
# ---------------------------------------------------------------------------
def _choose_tile(batch: int, tile_b: int) -> int:
    """Clamp the tile to the (8-aligned) batch; prefer an even grid (v7x dual-TC)."""
    t = _round_up(min(int(tile_b), _round_up(batch, 8)), 8)
    g = pl.cdiv(batch, t)
    if g > 1 and g % 2 == 1:
        t2 = _round_up(pl.cdiv(batch, g + 1), 8)
        if t2 >= 128:
            t = t2
    return t


def _vmem_bytes_estimate(tile, in_f, mid, fc2, out_pad, weights):
    w_bytes = sum(int(w.size) * w.dtype.itemsize for w in weights)
    x_tile = tile * in_f * 2            # bf16, double-buffered
    o_tile = tile * out_pad * 4         # f32, double-buffered
    interm = tile * (mid + out_pad) * 4 + 4 * tile * fc2 * 4
    return 2 * w_bytes + 2 * x_tile + 2 * o_tile + interm


def projection_forward(x, kp, out_features, tile_b=512,
                       out_dtype=jnp.float32, return_padded=False):
    B, IN = x.shape
    MID = kp["mid"]
    OUT_PAD = kp["out_pad"]
    FC2 = kp["w2"].shape[1]

    # Cast to bf16 BEFORE any padding (halves any padded HBM copy; no f32 re-write of x).
    xb = x if x.dtype == jnp.bfloat16 else x.astype(jnp.bfloat16)

    tile = _choose_tile(B, tile_b)
    grid_b = pl.cdiv(B, tile)
    Bp = grid_b * tile
    if Bp != B:
        xb = jnp.pad(xb, ((0, Bp - B), (0, 0)))

    weights = (kp["w1cat"], kp["b1"], kp["w2"], kp["b2"],
               kp["gamma"], kp["beta"], kp["w3"], kp["bout"])
    # Grid-invariant weights: constant index map -> DMA'd once, VMEM-resident.
    weight_specs = [pl.BlockSpec(w.shape, lambda i: (0, 0)) for w in weights]

    # Advisory cost estimate (un-padded batch / true output width).
    flops = 2 * B * (IN * (MID + OUT_PAD) + MID * FC2 + FC2 * OUT_PAD)
    bytes_accessed = int(
        B * IN * 2
        + sum(int(w.size) * w.dtype.itemsize for w in weights)
        + B * out_features * jnp.dtype(out_dtype).itemsize)
    cost = pl.CostEstimate(flops=int(flops),
                           transcendentals=int(B * FC2),
                           bytes_accessed=bytes_accessed)

    cp_kwargs = dict(dimension_semantics=("parallel",))
    vmem_est = _vmem_bytes_estimate(tile, IN, MID, FC2, OUT_PAD, weights)
    if vmem_est > 16 * 1024 * 1024:   # only override past v5e's scoped-VMEM default
        cp_kwargs["vmem_limit_bytes"] = int(min(vmem_est * 5 // 4, 100 * 1024 * 1024))

    out = pl.pallas_call(
        functools.partial(projection_kernel, mid=MID),
        out_shape=jax.ShapeDtypeStruct((Bp, OUT_PAD), out_dtype),
        grid=(grid_b,),
        in_specs=[pl.BlockSpec((tile, IN), lambda i: (i, 0))] + weight_specs,
        out_specs=pl.BlockSpec((tile, OUT_PAD), lambda i: (i, 0)),
        compiler_params=pltpu.CompilerParams(**cp_kwargs),
        cost_estimate=cost,
    )(xb, *weights)

    if return_padded:
        return out                      # (Bp, OUT_PAD): no extra HBM->HBM copy for fused consumers
    return out[:B, :out_features]


# ---------------------------------------------------------------------------
# References
# ---------------------------------------------------------------------------
def projection_ref_f32(x, p, middle_size):
    """Pure f32 reference matching the original PyTorch module exactly."""
    pool = make_pool_matrix(middle_size, 64)
    h1 = x @ p["w1"] + p["b1"]
    baseline = h1 @ pool
    h2 = h1 @ p["w2"] + p["b2"]
    mean = jnp.mean(h2, axis=-1, keepdims=True)
    var = jnp.mean(jnp.square(h2 - mean), axis=-1, keepdims=True)
    hn = (h2 - mean) * jax.lax.rsqrt(var + 1e-5)
    hn = hn * p["gamma"] + p["beta"]
    hg = 0.5 * hn * (1.0 + jax.lax.erf(hn * INV_SQRT2))
    return hg @ p["w3"] + p["b3"] + baseline


def projection_ref_bf16(x, kp, out_features):
    """Mirrors the kernel's fused bf16-operand / f32-accumulate arithmetic."""
    xb = x.astype(jnp.bfloat16)
    mid = kp["mid"]
    h = jnp.dot(xb, kp["w1cat"], preferred_element_type=jnp.float32)
    h1 = h[:, :mid] + kp["b1"]
    baseline = h[:, mid:]
    h2 = jnp.dot(h1.astype(jnp.bfloat16), kp["w2"],
                 preferred_element_type=jnp.float32) + kp["b2"]
    mean = jnp.mean(h2, axis=-1, keepdims=True)
    var = jnp.mean(jnp.square(h2 - mean), axis=-1, keepdims=True)
    hn = (h2 - mean) * jax.lax.rsqrt(var + 1e-5)
    hn = hn * kp["gamma"] + kp["beta"]
    hg = _gelu_exact(hn)
    out = jnp.dot(hg.astype(jnp.bfloat16), kp["w3"],
                  preferred_element_type=jnp.float32) + kp["bout"]
    return (out + baseline)[:, :out_features]


if __name__ == "__main__":
    # Module-default feature dims (in=768, mid=512, out=64); small batch.
    # mid must be a multiple of 64 (uniform-bin pool) and 128 (lane-aligned fusion cut).
    B, IN, MID, OUT = 512, 768, 512, 64
    TILE_B = 256   # -> 2 grid steps: exercises the batch pipeline and even v7x TC split

    key = jax.random.PRNGKey(0)
    k_x, k_p = jax.random.split(key)
    x = jax.random.normal(k_x, (B, IN), jnp.float32)

    params = init_params(k_p, IN, MID, OUT)
    kp = prepare_kernel_params(params, MID, OUT)

    y = projection_forward(x, kp, OUT, tile_b=TILE_B)
    y = jax.block_until_ready(y)
    assert y.shape == (B, OUT)

    # Tight check vs a reference that mirrors the kernel's bf16/f32 arithmetic.
    y_bf16 = projection_ref_bf16(x, kp, OUT)
    assert jnp.allclose(y, y_bf16, atol=5e-3, rtol=5e-3), \
        "mismatch vs bf16-mirrored reference"

    # Looser check vs the exact f32 PyTorch-semantics reference
    # (difference is bf16 operand quantization on the MXU; accepted approximation).
    y_f32 = projection_ref_f32(x, params, MID)
    assert jnp.allclose(y, y_f32, atol=1e-1, rtol=1e-1), \
        "mismatch vs f32 reference"

    print("KERNEL_OK")
</pallas_src>

<mosaic_0001>
module attributes {stable_mosaic.version = 11 : i64} {
  func.func @projection_kernel(%arg0: i32, %arg1: memref<256x768xbf16, #tpu.memory_space<vmem>>, %arg2: memref<768x640xbf16, #tpu.memory_space<vmem>>, %arg3: memref<1x512xf32, #tpu.memory_space<vmem>>, %arg4: memref<512x256xbf16, #tpu.memory_space<vmem>>, %arg5: memref<1x256xf32, #tpu.memory_space<vmem>>, %arg6: memref<1x256xf32, #tpu.memory_space<vmem>>, %arg7: memref<1x256xf32, #tpu.memory_space<vmem>>, %arg8: memref<256x128xbf16, #tpu.memory_space<vmem>>, %arg9: memref<1x128xf32, #tpu.memory_space<vmem>>, %arg10: memref<256x128xf32, #tpu.memory_space<vmem>>) attributes {dimension_semantics = [#tpu.dimension_semantics<parallel>], iteration_bounds = array<i64: 2>, scalar_prefetch = 0 : i64, scratch_operands = 0 : i64, tpu.core_type = #tpu.core_type<tc>, window_params = [{transform_indices = @transform_0, window_bounds = array<i64: 256, 768>}, {pipeline_mode = #tpu.pipeline_mode<synchronous>, transform_indices = @transform_1, window_bounds = array<i64: 768, 640>}, {pipeline_mode = #tpu.pipeline_mode<synchronous>, transform_indices = @transform_2, window_bounds = array<i64: 1, 512>}, {pipeline_mode = #tpu.pipeline_mode<synchronous>, transform_indices = @transform_3, window_bounds = array<i64: 512, 256>}, {pipeline_mode = #tpu.pipeline_mode<synchronous>, transform_indices = @transform_4, window_bounds = array<i64: 1, 256>}, {pipeline_mode = #tpu.pipeline_mode<synchronous>, transform_indices = @transform_5, window_bounds = array<i64: 1, 256>}, {pipeline_mode = #tpu.pipeline_mode<synchronous>, transform_indices = @transform_6, window_bounds = array<i64: 1, 256>}, {pipeline_mode = #tpu.pipeline_mode<synchronous>, transform_indices = @transform_7, window_bounds = array<i64: 256, 128>}, {pipeline_mode = #tpu.pipeline_mode<synchronous>, transform_indices = @transform_8, window_bounds = array<i64: 1, 128>}, {transform_indices = @transform_9, window_bounds = array<i64: 256, 128>}]} {
    %c0 = arith.constant 0 : index
    %c0_0 = arith.constant 0 : index
    %0 = vector.load %arg1[%c0, %c0_0] : memref<256x768xbf16, #tpu.memory_space<vmem>>, vector<256x768xbf16>
    %c0_1 = arith.constant 0 : index
    %c0_2 = arith.constant 0 : index
    %1 = vector.load %arg2[%c0_1, %c0_2] : memref<768x640xbf16, #tpu.memory_space<vmem>>, vector<768x640xbf16>
    %cst = arith.constant dense<0.000000e+00> : vector<256x640xf32>
    %2 = tpu.matmul %0, %1, %cst {dimension_numbers = #tpu.dot_dimension_numbers<[1], [0], [0], [1], [0, 0, 1, 1], [], []>} : vector<256x768xbf16>, vector<768x640xbf16>, vector<256x640xf32> -> vector<256x640xf32>
    %3 = vector.extract_strided_slice %2 {offsets = [0, 0], sizes = [256, 512], strides = [1, 1]} : vector<256x640xf32> to vector<256x512xf32>
    %c0_3 = arith.constant 0 : index
    %c0_4 = arith.constant 0 : index
    %4 = vector.load %arg3[%c0_3, %c0_4] : memref<1x512xf32, #tpu.memory_space<vmem>>, vector<1x512xf32>
    %5 = vector.broadcast %4 : vector<1x512xf32> to vector<256x512xf32>
    %6 = arith.addf %3, %5 : vector<256x512xf32>
    %7 = vector.extract_strided_slice %2 {offsets = [0, 512], sizes = [256, 128], strides = [1, 1]} : vector<256x640xf32> to vector<256x128xf32>
    %8 = arith.truncf %6 : vector<256x512xf32> to vector<256x512xbf16>
    %c0_5 = arith.constant 0 : index
    %c0_6 = arith.constant 0 : index
    %9 = vector.load %arg4[%c0_5, %c0_6] : memref<512x256xbf16, #tpu.memory_space<vmem>>, vector<512x256xbf16>
    %cst_7 = arith.constant dense<0.000000e+00> : vector<256x256xf32>
    %10 = tpu.matmul %8, %9, %cst_7 {dimension_numbers = #tpu.dot_dimension_numbers<[1], [0], [0], [1], [0, 0, 1, 1], [], []>} : vector<256x512xbf16>, vector<512x256xbf16>, vector<256x256xf32> -> vector<256x256xf32>
    %c0_8 = arith.constant 0 : index
    %c0_9 = arith.constant 0 : index
    %11 = vector.load %arg5[%c0_8, %c0_9] : memref<1x256xf32, #tpu.memory_space<vmem>>, vector<1x256xf32>
    %12 = vector.broadcast %11 : vector<1x256xf32> to vector<256x256xf32>
    %13 = arith.addf %10, %12 : vector<256x256xf32>
    %cst_10 = arith.constant dense<0.000000e+00> : vector<256xf32>
    %14 = vector.multi_reduction <add>, %13, %cst_10 [1] : vector<256x256xf32> to vector<256xf32>
    %15 = vector.shape_cast %14 : vector<256xf32> to vector<256x1xf32>
    %cst_11 = arith.constant 2.560000e+02 : f32
    %16 = vector.broadcast %cst_11 : f32 to vector<256x1xf32>
    %17 = arith.divf %15, %16 : vector<256x1xf32>
    %18 = vector.broadcast %17 : vector<256x1xf32> to vector<256x256xf32>
    %19 = arith.subf %13, %18 : vector<256x256xf32>
    %20 = arith.mulf %19, %19 : vector<256x256xf32>
    %cst_12 = arith.constant dense<0.000000e+00> : vector<256xf32>
    %21 = vector.multi_reduction <add>, %20, %cst_12 [1] : vector<256x256xf32> to vector<256xf32>
    %22 = vector.shape_cast %21 : vector<256xf32> to vector<256x1xf32>
    %cst_13 = arith.constant 2.560000e+02 : f32
    %23 = vector.broadcast %cst_13 : f32 to vector<256x1xf32>
    %24 = arith.divf %22, %23 : vector<256x1xf32>
    %25 = vector.broadcast %17 : vector<256x1xf32> to vector<256x256xf32>
    %26 = arith.subf %13, %25 : vector<256x256xf32>
    %cst_14 = arith.constant 9.99999974E-6 : f32
    %27 = vector.broadcast %cst_14 : f32 to vector<256x1xf32>
    %28 = arith.addf %24, %27 : vector<256x1xf32>
    %29 = math.rsqrt %28 : vector<256x1xf32>
    %30 = vector.broadcast %29 : vector<256x1xf32> to vector<256x256xf32>
    %31 = arith.mulf %26, %30 : vector<256x256xf32>
    %c0_15 = arith.constant 0 : index
    %c0_16 = arith.constant 0 : index
    %32 = vector.load %arg6[%c0_15, %c0_16] : memref<1x256xf32, #tpu.memory_space<vmem>>, vector<1x256xf32>
    %33 = vector.broadcast %32 : vector<1x256xf32> to vector<256x256xf32>
    %34 = arith.mulf %31, %33 : vector<256x256xf32>
    %c0_17 = arith.constant 0 : index
    %c0_18 = arith.constant 0 : index
    %35 = vector.load %arg7[%c0_17, %c0_18] : memref<1x256xf32, #tpu.memory_space<vmem>>, vector<1x256xf32>
    %36 = vector.broadcast %35 : vector<1x256xf32> to vector<256x256xf32>
    %37 = arith.addf %34, %36 : vector<256x256xf32>
    %cst_19 = arith.constant 5.000000e-01 : f32
    %38 = vector.broadcast %cst_19 : f32 to vector<256x256xf32>
    %39 = arith.mulf %38, %37 : vector<256x256xf32>
    %cst_20 = arith.constant 0.707106769 : f32
    %40 = vector.broadcast %cst_20 : f32 to vector<256x256xf32>
    %41 = arith.mulf %37, %40 : vector<256x256xf32>
    %cst_21 = arith.constant 0.000000e+00 : f32
    %42 = vector.broadcast %cst_21 : f32 to vector<256x256xf32>
    %43 = arith.cmpf olt, %41, %42 : vector<256x256xf32>
    %cst_22 = arith.constant 0.000000e+00 : f32
    %44 = vector.broadcast %cst_22 : f32 to vector<256x256xf32>
    %45 = arith.subf %44, %41 : vector<256x256xf32>
    %46 = arith.select %43, %45, %41 : vector<256x256xi1>, vector<256x256xf32>
    %cst_23 = arith.constant 0.327591091 : f32
    %47 = vector.broadcast %cst_23 : f32 to vector<256x256xf32>
    %48 = arith.mulf %47, %46 : vector<256x256xf32>
    %cst_24 = arith.constant 1.000000e+00 : f32
    %49 = vector.broadcast %cst_24 : f32 to vector<256x256xf32>
    %50 = arith.addf %49, %48 : vector<256x256xf32>
    %cst_25 = arith.constant 1.000000e+00 : f32
    %51 = vector.broadcast %cst_25 : f32 to vector<256x256xf32>
    %52 = arith.divf %51, %50 : vector<256x256xf32>
    %cst_26 = arith.constant 1.06140542 : f32
    %53 = vector.broadcast %cst_26 : f32 to vector<256x256xf32>
    %54 = arith.mulf %53, %52 : vector<256x256xf32>
    %cst_27 = arith.constant -1.45315206 : f32
    %55 = vector.broadcast %cst_27 : f32 to vector<256x256xf32>
    %56 = arith.addf %54, %55 : vector<256x256xf32>
    %57 = arith.mulf %56, %52 : vector<256x256xf32>
    %cst_28 = arith.constant 1.42141378 : f32
    %58 = vector.broadcast %cst_28 : f32 to vector<256x256xf32>
    %59 = arith.addf %57, %58 : vector<256x256xf32>
    %60 = arith.mulf %59, %52 : vector<256x256xf32>
    %cst_29 = arith.constant -0.284496725 : f32
    %61 = vector.broadcast %cst_29 : f32 to vector<256x256xf32>
    %62 = arith.addf %60, %61 : vector<256x256xf32>
    %63 = arith.mulf %62, %52 : vector<256x256xf32>
    %cst_30 = arith.constant 0.254829586 : f32
    %64 = vector.broadcast %cst_30 : f32 to vector<256x256xf32>
    %65 = arith.addf %63, %64 : vector<256x256xf32>
    %66 = arith.mulf %65, %52 : vector<256x256xf32>
    %67 = arith.mulf %46, %46 : vector<256x256xf32>
    %cst_31 = arith.constant 0.000000e+00 : f32
    %68 = vector.broadcast %cst_31 : f32 to vector<256x256xf32>
    %69 = arith.subf %68, %67 : vector<256x256xf32>
    %70 = math.exp %69 : vector<256x256xf32>
    %71 = arith.mulf %66, %70 : vector<256x256xf32>
    %cst_32 = arith.constant 1.000000e+00 : f32
    %72 = vector.broadcast %cst_32 : f32 to vector<256x256xf32>
    %73 = arith.subf %72, %71 : vector<256x256xf32>
    %cst_33 = arith.constant 0.000000e+00 : f32
    %74 = vector.broadcast %cst_33 : f32 to vector<256x256xf32>
    %75 = arith.subf %74, %73 : vector<256x256xf32>
    %76 = arith.select %43, %75, %73 : vector<256x256xi1>, vector<256x256xf32>
    %cst_34 = arith.constant 1.000000e+00 : f32
    %77 = vector.broadcast %cst_34 : f32 to vector<256x256xf32>
    %78 = arith.addf %77, %76 : vector<256x256xf32>
    %79 = arith.mulf %39, %78 : vector<256x256xf32>
    %80 = arith.truncf %79 : vector<256x256xf32> to vector<256x256xbf16>
    %c0_35 = arith.constant 0 : index
    %c0_36 = arith.constant 0 : index
    %81 = vector.load %arg8[%c0_35, %c0_36] : memref<256x128xbf16, #tpu.memory_space<vmem>>, vector<256x128xbf16>
    %cst_37 = arith.constant dense<0.000000e+00> : vector<256x128xf32>
    %82 = tpu.matmul %80, %81, %cst_37 {dimension_numbers = #tpu.dot_dimension_numbers<[1], [0], [0], [1], [0, 0, 1, 1], [], []>} : vector<256x256xbf16>, vector<256x128xbf16>, vector<256x128xf32> -> vector<256x128xf32>
    %c0_38 = arith.constant 0 : index
    %c0_39 = arith.constant 0 : index
    %83 = vector.load %arg9[%c0_38, %c0_39] : memref<1x128xf32, #tpu.memory_space<vmem>>, vector<1x128xf32>
    %84 = vector.broadcast %83 : vector<1x128xf32> to vector<256x128xf32>
    %85 = arith.addf %82, %84 : vector<256x128xf32>
    %86 = arith.addf %85, %7 : vector<256x128xf32>
    %c0_40 = arith.constant 0 : index
    %c0_41 = arith.constant 0 : index
    %87 = vector.load %arg10[%c0_40, %c0_41] : memref<256x128xf32, #tpu.memory_space<vmem>>, vector<256x128xf32>
    tpu.vector_store %arg10[%c0_40, %c0_41], %86 {strides = array<i32>} : memref<256x128xf32, #tpu.memory_space<vmem>>, vector<256x128xf32>,
    return
  }
  func.func @transform_0(%arg0: i32) -> (i32, i32) {
    %c0_i32 = arith.constant 0 : i32
    %c0_i32_0 = arith.constant 0 : i32
    return %arg0, %c0_i32 : i32, i32
  }
  func.func @transform_1(%arg0: i32) -> (i32, i32) {
    %c0_i32 = arith.constant 0 : i32
    %c0_i32_0 = arith.constant 0 : i32
    %c0_i32_1 = arith.constant 0 : i32
    return %c0_i32, %c0_i32_0 : i32, i32
  }
  func.func @transform_2(%arg0: i32) -> (i32, i32) {
    %c0_i32 = arith.constant 0 : i32
    %c0_i32_0 = arith.constant 0 : i32
    %c0_i32_1 = arith.constant 0 : i32
    return %c0_i32, %c0_i32_0 : i32, i32
  }
  func.func @transform_3(%arg0: i32) -> (i32, i32) {
    %c0_i32 = arith.constant 0 : i32
    %c0_i32_0 = arith.constant 0 : i32
    %c0_i32_1 = arith.constant 0 : i32
    return %c0_i32, %c0_i32_0 : i32, i32
  }
  func.func @transform_4(%arg0: i32) -> (i32, i32) {
    %c0_i32 = arith.constant 0 : i32
    %c0_i32_0 = arith.constant 0 : i32
    %c0_i32_1 = arith.constant 0 : i32
    return %c0_i32, %c0_i32_0 : i32, i32
  }
  func.func @transform_5(%arg0: i32) -> (i32, i32) {
    %c0_i32 = arith.constant 0 : i32
    %c0_i32_0 = arith.constant 0 : i32
    %c0_i32_1 = arith.constant 0 : i32
    return %c0_i32, %c0_i32_0 : i32, i32
  }
  func.func @transform_6(%arg0: i32) -> (i32, i32) {
    %c0_i32 = arith.constant 0 : i32
    %c0_i32_0 = arith.constant 0 : i32
    %c0_i32_1 = arith.constant 0 : i32
    return %c0_i32, %c0_i32_0 : i32, i32
  }
  func.func @transform_7(%arg0: i32) -> (i32, i32) {
    %c0_i32 = arith.constant 0 : i32
    %c0_i32_0 = arith.constant 0 : i32
    %c0_i32_1 = arith.constant 0 : i32
    return %c0_i32, %c0_i32_0 : i32, i32
  }
  func.func @transform_8(%arg0: i32) -> (i32, i32) {
    %c0_i32 = arith.constant 0 : i32
    %c0_i32_0 = arith.constant 0 : i32
    %c0_i32_1 = arith.constant 0 : i32
    return %c0_i32, %c0_i32_0 : i32, i32
  }
  func.func @transform_9(%arg0: i32) -> (i32, i32) {
    %c0_i32 = arith.constant 0 : i32
    %c0_i32_0 = arith.constant 0 : i32
    return %arg0, %c0_i32 : i32, i32
  }
}

</mosaic_0001>

<llo_original>
// kernel: tpu_custom_call.1
$region0: #{tpu_custom_call.1}
  #allocation0 [shape = 'u32[]', space=smem, size = 0x4, offset = 0x4, fixed_abs, tag = 'smem constant byte address 0x4 - core index']
  #allocation1 [shape = 'u32[144,128]{1,0:T(1,128)}', space=vmem, size = 0x12000, scoped, tag = 'internal scratch']
  %s0 = inlined_call_operand.hbm [shape: bf16[512,768], index: 0, kind: input, shape index: {}]
  %s1 = inlined_call_operand.hbm [shape: bf16[768,640], index: 1, kind: input, shape index: {}]
  %s2 = inlined_call_operand.vmem [shape: f32[1,512], index: 2, kind: input, shape index: {}]
  %s3 = inlined_call_operand.hbm [shape: bf16[512,256], index: 3, kind: input, shape index: {}]
  %s4 = inlined_call_operand.vmem [shape: f32[1,256], index: 4, kind: input, shape index: {}]
  %s5 = inlined_call_operand.vmem [shape: f32[1,256], index: 5, kind: input, shape index: {}]
  %s6 = inlined_call_operand.vmem [shape: f32[1,256], index: 6, kind: input, shape index: {}]
  %s7 = inlined_call_operand.hbm [shape: bf16[256,128], index: 7, kind: input, shape index: {}]
  %s8 = inlined_call_operand.vmem [shape: f32[1,128], index: 8, kind: input, shape index: {}]
  %s9 = inlined_call_operand.hbm [shape: f32[512,128], index: 9, kind: output, shape index: {}]
  %s10 = sld [smem:[#allocation0]]
  $region85: #{tpu_custom_call.1} parent=0
    _
  %s12 = ssub.s32 1, %s10
  %s13 = scalar_select 0, %s12, %s10
  $region1: #{tpu_custom_call.1} parent=0
    #allocation2 [shape = 'u8[786432]{0}', space=vmem, size = 0xc0000, scoped, tag = 'input window, operand 0']
    #allocation3 [shape = 's32[2]{0}', space=sflag, size = 0x8, scoped, tag = 'scoped memory for tpu_custom_call.1']
    #allocation4 [shape = 's32[2]{0}', space=sflag, size = 0x8, scoped, tag = 'scoped memory for tpu_custom_call.1']
    #allocation5 [shape = 'u8[983040]{0}', space=vmem, size = 0xf0000, scoped, tag = 'input window, operand 1, single buffered']
    #allocation6 [shape = 's32[1]{0}', space=sflag, size = 0x4, scoped, tag = 'scoped memory for tpu_custom_call.1']
    #allocation7 [shape = 'u8[262144]{0}', space=vmem, size = 0x40000, scoped, tag = 'input window, operand 3, single buffered']
    #allocation8 [shape = 'u8[65536]{0}', space=vmem, size = 0x10000, scoped, tag = 'input window, operand 7, single buffered']
    #allocation9 [shape = 's32[1]{0}', space=sflag, size = 0x4, scoped, tag = 'scoped memory for tpu_custom_call.1']
    #allocation10 [shape = 'u8[262144]{0}', space=vmem, size = 0x40000, scoped, tag = 'output window, operand 0']
    %14 = vsyncpa [#allocation3], 0
    %s15 = scalar_lea.sflag [#allocation3], 1
    %16 = vsyncpa %s15, 0
    %17 = vsyncpa [#allocation6], 0
    %18 = vsyncpa [#allocation9], 0
    %19 = vsyncpa [#allocation4], 0
    %s20 = scalar_lea.sflag [#allocation4], 1
    %21 = vsyncpa %s20, 0
    loop: start=0, step=1, limit=4
    $region2: #{tpu_custom_call.1} parent=1 // loop_pre_header
      _
    $region3: #{tpu_custom_call.1} parent=1 // loop_header
      %s23 = sphi 0, %s27
      %p24 = scmp.ge.s32.totalorder %s23, 4
      %s33 = sphi 0, %s35
      %s36 = sphi 0, %s33
      %s37 = sphi 0, %s36
      %s53 = sphi 0, %s37
      %s57 = sphi 0, %s57
      %s59 = sphi 0, %s57
      %s60 = sphi 0, %s59
      %s74 = sphi 0, %s60
      %s78 = sphi 0, %s78
      %s80 = sphi 0, %s78
      %s81 = sphi 0, %s80
      %s95 = sphi 0, %s81
      %s99 = sphi 0, %s99
      %s101 = sphi 0, %s99
      %s102 = sphi 0, %s101
      %s116 = sphi 0, %s102
      %s120 = sphi 0, %s120
      %s122 = sphi 0, %s120
      %s123 = sphi 0, %s122
      %s137 = sphi 0, %s123
      %s141 = sphi 0, %s141
      %s143 = sphi 0, %s141
      %s144 = sphi 0, %s143
      %s158 = sphi 0, %s144
      %s162 = sphi 0, %s162
      %s164 = sphi 0, %s162
      %s165 = sphi 0, %s164
      %s179 = sphi 0, %s165
      %s183 = sphi 0, %s183
      %s185 = sphi 0, %s183
      %s186 = sphi 0, %s185
      %s200 = sphi 0, %s186
      %s204 = sphi 0, %s204
      %s206 = sphi 0, %s204
      %s207 = sphi 0, %s206
      %s221 = sphi 0, %s207
      %s227 = sphi 0, %s229
      %s230 = sphi 0, %s227
      %s231 = sphi 0, %s230
      %s247 = sphi 0, %s231
    $region4: #{tpu_custom_call.1} parent=1 // loop_header_branch
      %26 = sbr.rel (%p24) target = $region8
    $region5: #{tpu_custom_call.1} parent=1 // loop_body
      %s28 = ssub.s32 %s23, 1
      %s29 = ssub.s32 %s23, 2
      %s30 = sadd.s32 %s23, 1
      %s31 = ssub.s32 %s23, %s30
      %p32 = scmp.eq.s32.totalorder %s31, 0
      %s34 = sadd.s32 %s33, 1
      %s35 = scalar_select %p32, %s33, %s34
      %p38 = pneg %p32
      %p39 = scmp.eq.s32.totalorder %s23, 1
      %p40 = por %p38, %p39
      %p41 = scmp.ne.s32.totalorder %s33, %s36
      %p42 = scmp.eq.s32.totalorder %s23, 0
      %p43 = por %p41, %p42
      %p44 = scmp.ne.s32.totalorder %s33, %s36
      %p45 = scmp.eq.s32.totalorder %s28, 1
      %p46 = por %p44, %p45
      %p47 = scmp.ne.s32.totalorder %s36, %s37
      %p48 = scmp.eq.s32.totalorder %s28, 0
      %p49 = por %p47, %p48
      %p50 = scmp.ne.s32.totalorder %s36, %s37
      %p51 = scmp.eq.s32.totalorder %s29, 1
      %p52 = por %p50, %p51
      %p54 = scmp.ne.s32.totalorder %s37, %s53
      %p55 = scmp.eq.s32.totalorder %s29, 0
      %p56 = por %p54, %p55
      %s58 = sadd.s32 %s57, 1
      %p61 = scmp.eq.s32.totalorder %s23, 1
      %p62 = scmp.ne.s32.totalorder %s57, %s59
      %p63 = scmp.eq.s32.totalorder %s23, 0
      %p64 = por %p62, %p63
      %p65 = scmp.ne.s32.totalorder %s57, %s59
      %p66 = scmp.eq.s32.totalorder %s28, 1
      %p67 = por %p65, %p66
      %p68 = scmp.ne.s32.totalorder %s59, %s60
      %p69 = scmp.eq.s32.totalorder %s28, 0
      %p70 = por %p68, %p69
      %p71 = scmp.ne.s32.totalorder %s59, %s60
      %p72 = scmp.eq.s32.totalorder %s29, 1
      %p73 = por %p71, %p72
      %p75 = scmp.ne.s32.totalorder %s60, %s74
      %p76 = scmp.eq.s32.totalorder %s29, 0
      %p77 = por %p75, %p76
      %s79 = sadd.s32 %s78, 1
      %p82 = scmp.eq.s32.totalorder %s23, 1
      %p83 = scmp.ne.s32.totalorder %s78, %s80
      %p84 = scmp.eq.s32.totalorder %s23, 0
      %p85 = por %p83, %p84
      %p86 = scmp.ne.s32.totalorder %s78, %s80
      %p87 = scmp.eq.s32.totalorder %s28, 1
      %p88 = por %p86, %p87
      %p89 = scmp.ne.s32.totalorder %s80, %s81
      %p90 = scmp.eq.s32.totalorder %s28, 0
      %p91 = por %p89, %p90
      %p92 = scmp.ne.s32.totalorder %s80, %s81
      %p93 = scmp.eq.s32.totalorder %s29, 1
      %p94 = por %p92, %p93
      %p96 = scmp.ne.s32.totalorder %s81, %s95
      %p97 = scmp.eq.s32.totalorder %s29, 0
      %p98 = por %p96, %p97
      %s100 = sadd.s32 %s99, 1
      %p103 = scmp.eq.s32.totalorder %s23, 1
      %p104 = scmp.ne.s32.totalorder %s99, %s101
      %p105 = scmp.eq.s32.totalorder %s23, 0
      %p106 = por %p104, %p105
      %p107 = scmp.ne.s32.totalorder %s99, %s101
      %p108 = scmp.eq.s32.totalorder %s28, 1
      %p109 = por %p107, %p108
      %p110 = scmp.ne.s32.totalorder %s101, %s102
      %p111 = scmp.eq.s32.totalorder %s28, 0
      %p112 = por %p110, %p111
      %p113 = scmp.ne.s32.totalorder %s101, %s102
      %p114 = scmp.eq.s32.totalorder %s29, 1
      %p115 = por %p113, %p114
      %p117 = scmp.ne.s32.totalorder %s102, %s116
      %p118 = scmp.eq.s32.totalorder %s29, 0
      %p119 = por %p117, %p118
      %s121 = sadd.s32 %s120, 1
      %p124 = scmp.eq.s32.totalorder %s23, 1
      %p125 = scmp.ne.s32.totalorder %s120, %s122
      %p126 = scmp.eq.s32.totalorder %s23, 0
      %p127 = por %p125, %p126
      %p128 = scmp.ne.s32.totalorder %s120, %s122
      %p129 = scmp.eq.s32.totalorder %s28, 1
      %p130 = por %p128, %p129
      %p131 = scmp.ne.s32.totalorder %s122, %s123
      %p132 = scmp.eq.s32.totalorder %s28, 0
      %p133 = por %p131, %p132
      %p134 = scmp.ne.s32.totalorder %s122, %s123
      %p135 = scmp.eq.s32.totalorder %s29, 1
      %p136 = por %p134, %p135
      %p138 = scmp.ne.s32.totalorder %s123, %s137
      %p139 = scmp.eq.s32.totalorder %s29, 0
      %p140 = por %p138, %p139
      %s142 = sadd.s32 %s141, 1
      %p145 = scmp.eq.s32.totalorder %s23, 1
      %p146 = scmp.ne.s32.totalorder %s141, %s143
      %p147 = scmp.eq.s32.totalorder %s23, 0
      %p148 = por %p146, %p147
      %p149 = scmp.ne.s32.totalorder %s141, %s143
      %p150 = scmp.eq.s32.totalorder %s28, 1
      %p151 = por %p149, %p150
      %p152 = scmp.ne.s32.totalorder %s143, %s144
      %p153 = scmp.eq.s32.totalorder %s28, 0
      %p154 = por %p152, %p153
      %p155 = scmp.ne.s32.totalorder %s143, %s144
      %p156 = scmp.eq.s32.totalorder %s29, 1
      %p157 = por %p155, %p156
      %p159 = scmp.ne.s32.totalorder %s144, %s158
      %p160 = scmp.eq.s32.totalorder %s29, 0
      %p161 = por %p159, %p160
      %s163 = sadd.s32 %s162, 1
      %p166 = scmp.eq.s32.totalorder %s23, 1
      %p167 = scmp.ne.s32.totalorder %s162, %s164
      %p168 = scmp.eq.s32.totalorder %s23, 0
      %p169 = por %p167, %p168
      %p170 = scmp.ne.s32.totalorder %s162, %s164
      %p171 = scmp.eq.s32.totalorder %s28, 1
      %p172 = por %p170, %p171
      %p173 = scmp.ne.s32.totalorder %s164, %s165
      %p174 = scmp.eq.s32.totalorder %s28, 0
      %p175 = por %p173, %p174
      %p176 = scmp.ne.s32.totalorder %s164, %s165
      %p177 = scmp.eq.s32.totalorder %s29, 1
      %p178 = por %p176, %p177
      %p180 = scmp.ne.s32.totalorder %s165, %s179
      %p181 = scmp.eq.s32.totalorder %s29, 0
      %p182 = por %p180, %p181
      %s184 = sadd.s32 %s183, 1
      %p187 = scmp.eq.s32.totalorder %s23, 1
      %p188 = scmp.ne.s32.totalorder %s183, %s185
      %p189 = scmp.eq.s32.totalorder %s23, 0
      %p190 = por %p188, %p189
      %p191 = scmp.ne.s32.totalorder %s183, %s185
      %p192 = scmp.eq.s32.totalorder %s28, 1
      %p193 = por %p191, %p192
      %p194 = scmp.ne.s32.totalorder %s185, %s186
      %p195 = scmp.eq.s32.totalorder %s28, 0
      %p196 = por %p194, %p195
      %p197 = scmp.ne.s32.totalorder %s185, %s186
      %p198 = scmp.eq.s32.totalorder %s29, 1
      %p199 = por %p197, %p198
      %p201 = scmp.ne.s32.totalorder %s186, %s200
      %p202 = scmp.eq.s32.totalorder %s29, 0
      %p203 = por %p201, %p202
      %s205 = sadd.s32 %s204, 1
      %p208 = scmp.eq.s32.totalorder %s23, 1
      %p209 = scmp.ne.s32.totalorder %s204, %s206
      %p210 = scmp.eq.s32.totalorder %s23, 0
      %p211 = por %p209, %p210
      %p212 = scmp.ne.s32.totalorder %s204, %s206
      %p213 = scmp.eq.s32.totalorder %s28, 1
      %p214 = por %p212, %p213
      %p215 = scmp.ne.s32.totalorder %s206, %s207
      %p216 = scmp.eq.s32.totalorder %s28, 0
      %p217 = por %p215, %p216
      %p218 = scmp.ne.s32.totalorder %s206, %s207
      %p219 = scmp.eq.s32.totalorder %s29, 1
      %p220 = por %p218, %p219
      %p222 = scmp.ne.s32.totalorder %s207, %s221
      %p223 = scmp.eq.s32.totalorder %s29, 0
      %p224 = por %p222, %p223
      %s225 = ssub.s32 %s23, %s30
      %p226 = scmp.eq.s32.totalorder %s225, 0
      %s228 = sadd.s32 %s227, 1
      %s229 = scalar_select %p226, %s227, %s228
      %p232 = pneg %p226
      %p233 = scmp.eq.s32.totalorder %s23, 1
      %p234 = por %p232, %p233
      %p235 = scmp.ne.s32.totalorder %s227, %s230
      %p236 = scmp.eq.s32.totalorder %s23, 0
      %p237 = por %p235, %p236
      %p238 = scmp.ne.s32.totalorder %s227, %s230
      %p239 = scmp.eq.s32.totalorder %s28, 1
      %p240 = por %p238, %p239
      %p241 = scmp.ne.s32.totalorder %s230, %s231
      %p242 = scmp.eq.s32.totalorder %s28, 0
      %p243 = por %p241, %p242
      %p244 = scmp.ne.s32.totalorder %s230, %s231
      %p245 = scmp.eq.s32.totalorder %s29, 1
      %p246 = por %p244, %p245
      %p248 = scmp.ne.s32.totalorder %s231, %s247
      %p249 = scmp.eq.s32.totalorder %s29, 0
      %p250 = por %p248, %p249
      %p251 = scmp.le.s32.totalorder 1, %s23
      %p252 = scmp.lt.s32.totalorder %s23, 3
      %p253 = pnand %p251, %p252
      %p254 = pneg %p253
      // Predicated region
      $region9: #{tpu_custom_call.1} parent=5 // pred_check
        _
      $region10: #{tpu_custom_call.1} parent=5 // pred_check_branch
        %256 = sbr.rel (%p253) target = $region12
      $region11: #{tpu_custom_call.1} parent=5 // pred_region
        %s257 = ssub.s32 %s23, 1
        // Predicated region
        $region13: #{tpu_custom_call.1} parent=11 // pred_check
          %p258 = pneg %p70
        $region14: #{tpu_custom_call.1} parent=11 // pred_check_branch
          %260 = sbr.rel (%p258) target = $region16
        $region15: #{tpu_custom_call.1} parent=11 // pred_region
          %s262 = ssub.s32 30720, 30720
          %263 = vsyncadd [#allocation6], %s262
          %s264 = sshll.u32 [#allocation5], 4
          %s265 = int_to_ptr.vmem [resolvable:$true] %s264
          %270 = dma.hbm_to_vmem [thread:$0]  %s1, 30720, %s265, [#allocation6], 320, 320, 20
        $region16: #{tpu_custom_call.1} parent=11 // pred_fallthru
          _
        // Predicated region
        $region17: #{tpu_custom_call.1} parent=11 // pred_check
          %p271 = pneg %p91
        $region18: #{tpu_custom_call.1} parent=11 // pred_check_branch
          %273 = sbr.rel (%p271) target = $region20
        $region19: #{tpu_custom_call.1} parent=11 // pred_region
          _
        $region20: #{tpu_custom_call.1} parent=11 // pred_fallthru
          _
        // Predicated region
        $region21: #{tpu_custom_call.1} parent=11 // pred_check
          %p274 = pneg %p112
        $region22: #{tpu_custom_call.1} parent=11 // pred_check_branch
          %276 = sbr.rel (%p274) target = $region24
        $region23: #{tpu_custom_call.1} parent=11 // pred_region
          %s278 = ssub.s32 8192, 8192
          %279 = vsyncadd [#allocation6], %s278
          %s280 = sshll.u32 [#allocation7], 4
          %s281 = int_to_ptr.vmem [resolvable:$true] %s280
          %286 = dma.hbm_to_vmem [thread:$0]  %s3, 8192, %s281, [#allocation6], 128, 128, 8
        $region24: #{tpu_custom_call.1} parent=11 // pred_fallthru
          _
        // Predicated region
        $region25: #{tpu_custom_call.1} parent=11 // pred_check
          %p287 = pneg %p133
        $region26: #{tpu_custom_call.1} parent=11 // pred_check_branch
          %289 = sbr.rel (%p287) target = $region28
        $region27: #{tpu_custom_call.1} parent=11 // pred_region
          _
        $region28: #{tpu_custom_call.1} parent=11 // pred_fallthru
          _
        // Predicated region
        $region29: #{tpu_custom_call.1} parent=11 // pred_check
          %p290 = pneg %p154
        $region30: #{tpu_custom_call.1} parent=11 // pred_check_branch
          %292 = sbr.rel (%p290) target = $region32
        $region31: #{tpu_custom_call.1} parent=11 // pred_region
          _
        $region32: #{tpu_custom_call.1} parent=11 // pred_fallthru
          _
        // Predicated region
        $region33: #{tpu_custom_call.1} parent=11 // pred_check
          %p293 = pneg %p175
        $region34: #{tpu_custom_call.1} parent=11 // pred_check_branch
          %295 = sbr.rel (%p293) target = $region36
        $region35: #{tpu_custom_call.1} parent=11 // pred_region
          _
        $region36: #{tpu_custom_call.1} parent=11 // pred_fallthru
          _
        // Predicated region
        $region37: #{tpu_custom_call.1} parent=11 // pred_check
          %p296 = pneg %p196
        $region38: #{tpu_custom_call.1} parent=11 // pred_check_branch
          %298 = sbr.rel (%p296) target = $region40
        $region39: #{tpu_custom_call.1} parent=11 // pred_region
          %s300 = ssub.s32 2048, 2048
          %301 = vsyncadd [#allocation9], %s300
          %s302 = sshll.u32 [#allocation8], 4
          %s303 = int_to_ptr.vmem [resolvable:$true] %s302
          %308 = dma.hbm_to_vmem [thread:$0]  %s7, 2048, %s303, [#allocation9], 64, 64, 4
        $region40: #{tpu_custom_call.1} parent=11 // pred_fallthru
          _
        // Predicated region
        $region41: #{tpu_custom_call.1} parent=11 // pred_check
          %p309 = pneg %p217
        $region42: #{tpu_custom_call.1} parent=11 // pred_check_branch
          %311 = sbr.rel (%p309) target = $region44
        $region43: #{tpu_custom_call.1} parent=11 // pred_region
          _
        $region44: #{tpu_custom_call.1} parent=11 // pred_fallthru
          _
      $region12: #{tpu_custom_call.1} parent=5 // pred_fallthru
        _
      %p312 = scmp.lt.s32.totalorder %s23, 2
      // Predicated region
      $region45: #{tpu_custom_call.1} parent=5 // pred_check
        %p313 = pneg %p312
      $region46: #{tpu_custom_call.1} parent=5 // pred_check_branch
        %315 = sbr.rel (%p313) target = $region48
      $region47: #{tpu_custom_call.1} parent=5 // pred_region
        // Predicated region
        $region49: #{tpu_custom_call.1} parent=47 // pred_check
          %p316 = pneg %p43
        $region50: #{tpu_custom_call.1} parent=47 // pred_check_branch
          %318 = sbr.rel (%p316) target = $region52
        $region51: #{tpu_custom_call.1} parent=47 // pred_region
          %s319 = sand.u32 %s33, 1
          %s320 = scalar_lea.sflag [#allocation3], %s319
          %s321 = sand.u32 %s33, 1
          %s322 = smul.addr %s321, 768
          %s323 = scalar_lea.vmem [#allocation2], %s322
          %s324 = smul.u32 32, %s23
          %s326 = ssub.s32 12288, 12288
          %327 = vsyncadd %s320, %s326
          %s328 = smul.addr %s324, 6
          %s329 = smul.addr %s328, 64
          %s330 = scalar_lea.hbm %s0, %s329
          %s331 = sshll.u32 %s323, 4
          %s332 = int_to_ptr.vmem [resolvable:$true] %s331
          %337 = dma.hbm_to_vmem [thread:$0]  %s330, 12288, %s332, %s320, 384, 384, 24
        $region52: #{tpu_custom_call.1} parent=47 // pred_fallthru
          _
      $region48: #{tpu_custom_call.1} parent=5 // pred_fallthru
        _
      %p338 = scmp.le.s32.totalorder 1, %s23
      %p339 = scmp.lt.s32.totalorder %s23, 3
      %p340 = pnand %p338, %p339
      %p341 = pneg %p340
      // Predicated region
      $region53: #{tpu_custom_call.1} parent=5 // pred_check
        _
      $region54: #{tpu_custom_call.1} parent=5 // pred_check_branch
        %343 = sbr.rel (%p340) target = $region56
      $region55: #{tpu_custom_call.1} parent=5 // pred_region
        %s344 = ssub.s32 %s23, 1
        %s345 = sand.u32 %s36, 1
        %s346 = scalar_lea.sflag [#allocation3], %s345
        %s347 = sand.u32 %s36, 1
        %s348 = smul.addr %s347, 768
        %s349 = scalar_lea.vmem [#allocation2], %s348
        // Predicated region
        $region57: #{tpu_custom_call.1} parent=55 // pred_check
          %p350 = pneg %p49
        $region58: #{tpu_custom_call.1} parent=55 // pred_check_branch
          %352 = sbr.rel (%p350) target = $region60
        $region59: #{tpu_custom_call.1} parent=55 // pred_region
          %353 = dma.done %s346, 12288
        $region60: #{tpu_custom_call.1} parent=55 // pred_fallthru
          _
        // Predicated region
        $region61: #{tpu_custom_call.1} parent=55 // pred_check
          %p354 = pneg %p70
        $region62: #{tpu_custom_call.1} parent=55 // pred_check_branch
          %356 = sbr.rel (%p354) target = $region64
        $region63: #{tpu_custom_call.1} parent=55 // pred_region
          %357 = dma.done [#allocation6], 30720
        $region64: #{tpu_custom_call.1} parent=55 // pred_fallthru
          _
        // Predicated region
        $region65: #{tpu_custom_call.1} parent=55 // pred_check
          %p358 = pneg %p112
        $region66: #{tpu_custom_call.1} parent=55 // pred_check_branch
          %360 = sbr.rel (%p358) target = $region68
        $region67: #{tpu_custom_call.1} parent=55 // pred_region
          %361 = dma.done [#allocation6], 8192
        $region68: #{tpu_custom_call.1} parent=55 // pred_fallthru
          _
        // Predicated region
        $region69: #{tpu_custom_call.1} parent=55 // pred_check
          %p362 = pneg %p196
        $region70: #{tpu_custom_call.1} parent=55 // pred_check_branch
          %364 = sbr.rel (%p362) target = $region72
        $region71: #{tpu_custom_call.1} parent=55 // pred_region
          %365 = dma.done [#allocation9], 2048
        $region72: #{tpu_custom_call.1} parent=55 // pred_fallthru
          _
        %s366 = sand.u32 %s36, 1
        %s367 = scalar_lea.sflag [#allocation3], %s366
        %s368 = sand.u32 %s36, 1
        %s369 = smul.addr %s368, 768
        %s370 = scalar_lea.vmem [#allocation2], %s369
        %p371 = pneg %p49
        %p372 = pneg %p46
        %p373 = pneg %p70
        %p374 = pneg %p67
        %p375 = pneg %p91
        %p376 = pneg %p88
        %p377 = pneg %p112
        %p378 = pneg %p109
        %p379 = pneg %p133
        %p380 = pneg %p130
        %p381 = pneg %p154
        %p382 = pneg %p151
        %p383 = pneg %p175
        %p384 = pneg %p172
        %p385 = pneg %p196
        %p386 = pneg %p193
        %p387 = pneg %p217
        %p388 = pneg %p214
        %p389 = pneg %p243
        %p390 = pneg %p240
        %s391 = sand.u32 %s230, 1
        %s392 = scalar_lea.sflag [#allocation4], %s391
        %s393 = sand.u32 %s230, 1
        %s394 = smul.addr %s393, 256
        %s395 = scalar_lea.vmem [#allocation10], %s394
        %s396 = smul.u32 32, %s28
        %s397 = smul.u32 32, %s28
        %v399 = vld [vmem:[%s349] sm:$0xff]
        %v400 = vld [vmem:[%s349 + $0x8] sm:$0xff]
        %v401 = vld [vmem:[%s349 + $0x10] sm:$0xff]
        %v402 = vld [vmem:[%s349 + $0x18] sm:$0xff]
        %v403 = vld [vmem:[%s349 + $0x20] sm:$0xff]
        %v404 = vld [vmem:[%s349 + $0x28] sm:$0xff]
        %v405 = vld [vmem:[%s349 + $0x30] sm:$0xff]
        %v406 = vld [vmem:[%s349 + $0x38] sm:$0xff]
        %v407 = vld [vmem:[%s349 + $0x40] sm:$0xff]
        %v408 = vld [vmem:[%s349 + $0x48] sm:$0xff]
        %v409 = vld [vmem:[%s349 + $0x50] sm:$0xff]
        %v410 = vld [vmem:[%s349 + $0x58] sm:$0xff]
        %v411 = vld [vmem:[%s349 + $0x60] sm:$0xff]
        %v412 = vld [vmem:[%s349 + $0x68] sm:$0xff]
        %v413 = vld [vmem:[%s349 + $0x70] sm:$0xff]
        %v414 = vld [vmem:[%s349 + $0x78] sm:$0xff]
        %v415 = vld [vmem:[%s349 + $0x80] sm:$0xff]
        %v416 = vld [vmem:[%s349 + $0x88] sm:$0xff]
        %v417 = vld [vmem:[%s349 + $0x90] sm:$0xff]
        %v418 = vld [vmem:[%s349 + $0x98] sm:$0xff]
        %v419 = vld [vmem:[%s349 + $0xa0] sm:$0xff]
        %v420 = vld [vmem:[%s349 + $0xa8] sm:$0xff]
        %v421 = vld [vmem:[%s349 + $0xb0] sm:$0xff]
        %v422 = vld [vmem:[%s349 + $0xb8] sm:$0xff]
        %v423 = vld [vmem:[%s349 + $0xc0] sm:$0xff]
        %v424 = vld [vmem:[%s349 + $0xc8] sm:$0xff]
        %v425 = vld [vmem:[%s349 + $0xd0] sm:$0xff]
        %v426 = vld [vmem:[%s349 + $0xd8] sm:$0xff]
        %v427 = vld [vmem:[%s349 + $0xe0] sm:$0xff]
        %v428 = vld [vmem:[%s349 + $0xe8] sm:$0xff]
        %v429 = vld [vmem:[%s349 + $0xf0] sm:$0xff]
        %v430 = vld [vmem:[%s349 + $0xf8] sm:$0xff]
        %v431 = vld [vmem:[%s349 + $0x100] sm:$0xff]
        %v432 = vld [vmem:[%s349 + $0x108] sm:$0xff]
        %v433 = vld [vmem:[%s349 + $0x110] sm:$0xff]
        %v434 = vld [vmem:[%s349 + $0x118] sm:$0xff]
        %v435 = vld [vmem:[%s349 + $0x120] sm:$0xff]
        %v436 = vld [vmem:[%s349 + $0x128] sm:$0xff]
        %v437 = vld [vmem:[%s349 + $0x130] sm:$0xff]
        %v438 = vld [vmem:[%s349 + $0x138] sm:$0xff]
        %v439 = vld [vmem:[%s349 + $0x140] sm:$0xff]
        %v440 = vld [vmem:[%s349 + $0x148] sm:$0xff]
        %v441 = vld [vmem:[%s349 + $0x150] sm:$0xff]
        %v442 = vld [vmem:[%s349 + $0x158] sm:$0xff]
        %v443 = vld [vmem:[%s349 + $0x160] sm:$0xff]
        %v444 = vld [vmem:[%s349 + $0x168] sm:$0xff]
        %v445 = vld [vmem:[%s349 + $0x170] sm:$0xff]
        %v446 = vld [vmem:[%s349 + $0x178] sm:$0xff]
        %v447 = vld [vmem:[%s349 + $0x180] sm:$0xff]
        %v448 = vld [vmem:[%s349 + $0x188] sm:$0xff]
        %v449 = vld [vmem:[%s349 + $0x190] sm:$0xff]
        %v450 = vld [vmem:[%s349 + $0x198] sm:$0xff]
        %v451 = vld [vmem:[%s349 + $0x1a0] sm:$0xff]
        %v452 = vld [vmem:[%s349 + $0x1a8] sm:$0xff]
        %v453 = vld [vmem:[%s349 + $0x1b0] sm:$0xff]
        %v454 = vld [vmem:[%s349 + $0x1b8] sm:$0xff]
        %v455 = vld [vmem:[%s349 + $0x1c0] sm:$0xff]
        %v456 = vld [vmem:[%s349 + $0x1c8] sm:$0xff]
        %v457 = vld [vmem:[%s349 + $0x1d0] sm:$0xff]
        %v458 = vld [vmem:[%s349 + $0x1d8] sm:$0xff]
        %v459 = vld [vmem:[%s349 + $0x1e0] sm:$0xff]
        %v460 = vld [vmem:[%s349 + $0x1e8] sm:$0xff]
        %v461 = vld [vmem:[%s349 + $0x1f0] sm:$0xff]
        %v462 = vld [vmem:[%s349 + $0x1f8] sm:$0xff]
        %v463 = vld [vmem:[%s349 + $0x200] sm:$0xff]
        %v464 = vld [vmem:[%s349 + $0x208] sm:$0xff]
        %v465 = vld [vmem:[%s349 + $0x210] sm:$0xff]
        %v466 = vld [vmem:[%s349 + $0x218] sm:$0xff]
        %v467 = vld [vmem:[%s349 + $0x220] sm:$0xff]
        %v468 = vld [vmem:[%s349 + $0x228] sm:$0xff]
        %v469 = vld [vmem:[%s349 + $0x230] sm:$0xff]
        %v470 = vld [vmem:[%s349 + $0x238] sm:$0xff]
        %v471 = vld [vmem:[%s349 + $0x240] sm:$0xff]
        %v472 = vld [vmem:[%s349 + $0x248] sm:$0xff]
        %v473 = vld [vmem:[%s349 + $0x250] sm:$0xff]
        %v474 = vld [vmem:[%s349 + $0x258] sm:$0xff]
        %v475 = vld [vmem:[%s349 + $0x260] sm:$0xff]
        %v476 = vld [vmem:[%s349 + $0x268] sm:$0xff]
        %v477 = vld [vmem:[%s349 + $0x270] sm:$0xff]
        %v478 = vld [vmem:[%s349 + $0x278] sm:$0xff]
        %v479 = vld [vmem:[%s349 + $0x280] sm:$0xff]
        %v480 = vld [vmem:[%s349 + $0x288] sm:$0xff]
        %v481 = vld [vmem:[%s349 + $0x290] sm:$0xff]
        %v482 = vld [vmem:[%s349 + $0x298] sm:$0xff]
        %v483 = vld [vmem:[%s349 + $0x2a0] sm:$0xff]
        %v484 = vld [vmem:[%s349 + $0x2a8] sm:$0xff]
        %v485 = vld [vmem:[%s349 + $0x2b0] sm:$0xff]
        %v486 = vld [vmem:[%s349 + $0x2b8] sm:$0xff]
        %v487 = vld [vmem:[%s349 + $0x2c0] sm:$0xff]
        %v488 = vld [vmem:[%s349 + $0x2c8] sm:$0xff]
        %v489 = vld [vmem:[%s349 + $0x2d0] sm:$0xff]
        %v490 = vld [vmem:[%s349 + $0x2d8] sm:$0xff]
        %v491 = vld [vmem:[%s349 + $0x2e0] sm:$0xff]
        %v492 = vld [vmem:[%s349 + $0x2e8] sm:$0xff]
        %v493 = vld [vmem:[%s349 + $0x2f0] sm:$0xff]
        %v494 = vld [vmem:[%s349 + $0x2f8] sm:$0xff]
        %v495 = vld [vmem:[#allocation5] sm:$0xff]
        %v496 = vld [vmem:[#allocation5 + $0x8] sm:$0xff]
        %v497 = vld [vmem:[#allocation5 + $0x10] sm:$0xf]
        %v498 = vld [vmem:[#allocation5 + $0x14] sm:$0xff]
        %v499 = vld [vmem:[#allocation5 + $0x1c] sm:$0xff]
        %v500 = vld [vmem:[#allocation5 + $0x24] sm:$0xf]
        %v501 = vld [vmem:[#allocation5 + $0x28] sm:$0xff]
        %v502 = vld [vmem:[#allocation5 + $0x30] sm:$0xff]
        %v503 = vld [vmem:[#allocation5 + $0x38] sm:$0xf]
        %v504 = vld [vmem:[#allocation5 + $0x3c] sm:$0xff]
        %v505 = vld [vmem:[#allocation5 + $0x44] sm:$0xff]
        %v506 = vld [vmem:[#allocation5 + $0x4c] sm:$0xf]
        %v507 = vld [vmem:[#allocation5 + $0x50] sm:$0xff]
        %v508 = vld [vmem:[#allocation5 + $0x58] sm:$0xff]
        %v509 = vld [vmem:[#allocation5 + $0x60] sm:$0xf]
        %v510 = vld [vmem:[#allocation5 + $0x64] sm:$0xff]
        %v511 = vld [vmem:[#allocation5 + $0x6c] sm:$0xff]
        %v512 = vld [vmem:[#allocation5 + $0x74] sm:$0xf]
        %v513 = vld [vmem:[#allocation5 + $0x78] sm:$0xff]
        %v514 = vld [vmem:[#allocation5 + $0x80] sm:$0xff]
        %v515 = vld [vmem:[#allocation5 + $0x88] sm:$0xf]
        %v516 = vld [vmem:[#allocation5 + $0x8c] sm:$0xff]
        %v517 = vld [vmem:[#allocation5 + $0x94] sm:$0xff]
        %v518 = vld [vmem:[#allocation5 + $0x9c] sm:$0xf]
        %v519 = vld [vmem:[#allocation5 + $0xa0] sm:$0xff]
        %v520 = vld [vmem:[#allocation5 + $0xa8] sm:$0xff]
        %v521 = vld [vmem:[#allocation5 + $0xb0] sm:$0xf]
        %v522 = vld [vmem:[#allocation5 + $0xb4] sm:$0xff]
        %v523 = vld [vmem:[#allocation5 + $0xbc] sm:$0xff]
        %v524 = vld [vmem:[#allocation5 + $0xc4] sm:$0xf]
        %v525 = vld [vmem:[#allocation5 + $0xc8] sm:$0xff]
        %v526 = vld [vmem:[#allocation5 + $0xd0] sm:$0xff]
        %v527 = vld [vmem:[#allocation5 + $0xd8] sm:$0xf]
        %v528 = vld [vmem:[#allocation5 + $0xdc] sm:$0xff]
        %v529 = vld [vmem:[#allocation5 + $0xe4] sm:$0xff]
        %v530 = vld [vmem:[#allocation5 + $0xec] sm:$0xf]
        %v531 = vld [vmem:[#allocation5 + $0xf0] sm:$0xff]
        %v532 = vld [vmem:[#allocation5 + $0xf8] sm:$0xff]
        %v533 = vld [vmem:[#allocation5 + $0x100] sm:$0xf]
        %v534 = vld [vmem:[#allocation5 + $0x104] sm:$0xff]
        %v535 = vld [vmem:[#allocation5 + $0x10c] sm:$0xff]
        %v536 = vld [vmem:[#allocation5 + $0x114] sm:$0xf]
        %v537 = vld [vmem:[#allocation5 + $0x118] sm:$0xff]
        %v538 = vld [vmem:[#allocation5 + $0x120] sm:$0xff]
        %v539 = vld [vmem:[#allocation5 + $0x128] sm:$0xf]
        %v540 = vld [vmem:[#allocation5 + $0x12c] sm:$0xff]
        %v541 = vld [vmem:[#allocation5 + $0x134] sm:$0xff]
        %v542 = vld [vmem:[#allocation5 + $0x13c] sm:$0xf]
        %v543 = vld [vmem:[#allocation5 + $0x140] sm:$0xff]
        %v544 = vld [vmem:[#allocation5 + $0x148] sm:$0xff]
        %v545 = vld [vmem:[#allocation5 + $0x150] sm:$0xf]
        %v546 = vld [vmem:[#allocation5 + $0x154] sm:$0xff]
        %v547 = vld [vmem:[#allocation5 + $0x15c] sm:$0xff]
        %v548 = vld [vmem:[#allocation5 + $0x164] sm:$0xf]
        %v549 = vld [vmem:[#allocation5 + $0x168] sm:$0xff]
        %v550 = vld [vmem:[#allocation5 + $0x170] sm:$0xff]
        %v551 = vld [vmem:[#allocation5 + $0x178] sm:$0xf]
        %v552 = vld [vmem:[#allocation5 + $0x17c] sm:$0xff]
        %v553 = vld [vmem:[#allocation5 + $0x184] sm:$0xff]
        %v554 = vld [vmem:[#allocation5 + $0x18c] sm:$0xf]
        %v555 = vld [vmem:[#allocation5 + $0x190] sm:$0xff]
        %v556 = vld [vmem:[#allocation5 + $0x198] sm:$0xff]
        %v557 = vld [vmem:[#allocation5 + $0x1a0] sm:$0xf]
        %v558 = vld [vmem:[#allocation5 + $0x1a4] sm:$0xff]
        %v559 = vld [vmem:[#allocation5 + $0x1ac] sm:$0xff]
        %v560 = vld [vmem:[#allocation5 + $0x1b4] sm:$0xf]
        %v561 = vld [vmem:[#allocation5 + $0x1b8] sm:$0xff]
        %v562 = vld [vmem:[#allocation5 + $0x1c0] sm:$0xff]
        %v563 = vld [vmem:[#allocation5 + $0x1c8] sm:$0xf]
        %v564 = vld [vmem:[#allocation5 + $0x1cc] sm:$0xff]
        %v565 = vld [vmem:[#allocation5 + $0x1d4] sm:$0xff]
        %v566 = vld [vmem:[#allocation5 + $0x1dc] sm:$0xf]
        %v567 = vld [vmem:[#allocation5 + $0x1e0] sm:$0xff]
        %v568 = vld [vmem:[#allocation5 + $0x1e8] sm:$0xff]
        %v569 = vld [vmem:[#allocation5 + $0x1f0] sm:$0xf]
        %v570 = vld [vmem:[#allocation5 + $0x1f4] sm:$0xff]
        %v571 = vld [vmem:[#allocation5 + $0x1fc] sm:$0xff]
        %v572 = vld [vmem:[#allocation5 + $0x204] sm:$0xf]
        %v573 = vld [vmem:[#allocation5 + $0x208] sm:$0xff]
        %v574 = vld [vmem:[#allocation5 + $0x210] sm:$0xff]
        %v575 = vld [vmem:[#allocation5 + $0x218] sm:$0xf]
        %v576 = vld [vmem:[#allocation5 + $0x21c] sm:$0xff]
        %v577 = vld [vmem:[#allocation5 + $0x224] sm:$0xff]
        %v578 = vld [vmem:[#allocation5 + $0x22c] sm:$0xf]
        %v579 = vld [vmem:[#allocation5 + $0x230] sm:$0xff]
        %v580 = vld [vmem:[#allocation5 + $0x238] sm:$0xff]
        %v581 = vld [vmem:[#allocation5 + $0x240] sm:$0xf]
        %v582 = vld [vmem:[#allocation5 + $0x244] sm:$0xff]
        %v583 = vld [vmem:[#allocation5 + $0x24c] sm:$0xff]
        %v584 = vld [vmem:[#allocation5 + $0x254] sm:$0xf]
        %v585 = vld [vmem:[#allocation5 + $0x258] sm:$0xff]
        %v586 = vld [vmem:[#allocation5 + $0x260] sm:$0xff]
        %v587 = vld [vmem:[#allocation5 + $0x268] sm:$0xf]
        %v588 = vld [vmem:[#allocation5 + $0x26c] sm:$0xff]
        %v589 = vld [vmem:[#allocation5 + $0x274] sm:$0xff]
        %v590 = vld [vmem:[#allocation5 + $0x27c] sm:$0xf]
        %v591 = vld [vmem:[#allocation5 + $0x280] sm:$0xff]
        %v592 = vld [vmem:[#allocation5 + $0x288] sm:$0xff]
        %v593 = vld [vmem:[#allocation5 + $0x290] sm:$0xf]
        %v594 = vld [vmem:[#allocation5 + $0x294] sm:$0xff]
        %v595 = vld [vmem:[#allocation5 + $0x29c] sm:$0xff]
        %v596 = vld [vmem:[#allocation5 + $0x2a4] sm:$0xf]
        %v597 = vld [vmem:[#allocation5 + $0x2a8] sm:$0xff]
        %v598 = vld [vmem:[#allocation5 + $0x2b0] sm:$0xff]
        %v599 = vld [vmem:[#allocation5 + $0x2b8] sm:$0xf]
        %v600 = vld [vmem:[#allocation5 + $0x2bc] sm:$0xff]
        %v601 = vld [vmem:[#allocation5 + $0x2c4] sm:$0xff]
        %v602 = vld [vmem:[#allocation5 + $0x2cc] sm:$0xf]
        %v603 = vld [vmem:[#allocation5 + $0x2d0] sm:$0xff]
        %v604 = vld [vmem:[#allocation5 + $0x2d8] sm:$0xff]
        %v605 = vld [vmem:[#allocation5 + $0x2e0] sm:$0xf]
        %v606 = vld [vmem:[#allocation5 + $0x2e4] sm:$0xff]
        %v607 = vld [vmem:[#allocation5 + $0x2ec] sm:$0xff]
        %v608 = vld [vmem:[#allocation5 + $0x2f4] sm:$0xf]
        %v609 = vld [vmem:[#allocation5 + $0x2f8] sm:$0xff]
        %v610 = vld [vmem:[#allocation5 + $0x300] sm:$0xff]
        %v611 = vld [vmem:[#allocation5 + $0x308] sm:$0xf]
        %v612 = vld [vmem:[#allocation5 + $0x30c] sm:$0xff]
        %v613 = vld [vmem:[#allocation5 + $0x314] sm:$0xff]
        %v614 = vld [vmem:[#allocation5 + $0x31c] sm:$0xf]
        %v615 = vld [vmem:[#allocation5 + $0x320] sm:$0xff]
        %v616 = vld [vmem:[#allocation5 + $0x328] sm:$0xff]
        %v617 = vld [vmem:[#allocation5 + $0x330] sm:$0xf]
        %v618 = vld [vmem:[#allocation5 + $0x334] sm:$0xff]
        %v619 = vld [vmem:[#allocation5 + $0x33c] sm:$0xff]
        %v620 = vld [vmem:[#allocation5 + $0x344] sm:$0xf]
        %v621 = vld [vmem:[#allocation5 + $0x348] sm:$0xff]
        %v622 = vld [vmem:[#allocation5 + $0x350] sm:$0xff]
        %v623 = vld [vmem:[#allocation5 + $0x358] sm:$0xf]
        %v624 = vld [vmem:[#allocation5 + $0x35c] sm:$0xff]
        %v625 = vld [vmem:[#allocation5 + $0x364] sm:$0xff]
        %v626 = vld [vmem:[#allocation5 + $0x36c] sm:$0xf]
        %v627 = vld [vmem:[#allocation5 + $0x370] sm:$0xff]
        %v628 = vld [vmem:[#allocation5 + $0x378] sm:$0xff]
        %v629 = vld [vmem:[#allocation5 + $0x380] sm:$0xf]
        %v630 = vld [vmem:[#allocation5 + $0x384] sm:$0xff]
        %v631 = vld [vmem:[#allocation5 + $0x38c] sm:$0xff]
        %v632 = vld [vmem:[#allocation5 + $0x394] sm:$0xf]
        %v633 = vld [vmem:[#allocation5 + $0x398] sm:$0xff]
        %v634 = vld [vmem:[#allocation5 + $0x3a0] sm:$0xff]
        %v635 = vld [vmem:[#allocation5 + $0x3a8] sm:$0xf]
        %v636 = vld [vmem:[#allocation5 + $0x3ac] sm:$0xff]
        %v637 = vld [vmem:[#allocation5 + $0x3b4] sm:$0xff]
        %v638 = vld [vmem:[#allocation5 + $0x3bc] sm:$0xf]
        %v639 = vld [vmem:[#allocation5 + $0x3c0] sm:$0xff]
        %v640 = vld [vmem:[#allocation5 + $0x3c8] sm:$0xff]
        %v641 = vld [vmem:[#allocation5 + $0x3d0] sm:$0xf]
        %v642 = vld [vmem:[#allocation5 + $0x3d4] sm:$0xff]
        %v643 = vld [vmem:[#allocation5 + $0x3dc] sm:$0xff]
        %v644 = vld [vmem:[#allocation5 + $0x3e4] sm:$0xf]
        %v645 = vld [vmem:[#allocation5 + $0x3e8] sm:$0xff]
        %v646 = vld [vmem:[#allocation5 + $0x3f0] sm:$0xff]
        %v647 = vld [vmem:[#allocation5 + $0x3f8] sm:$0xf]
        %v648 = vld [vmem:[#allocation5 + $0x3fc] sm:$0xff]
        %v649 = vld [vmem:[#allocation5 + $0x404] sm:$0xff]
        %v650 = vld [vmem:[#allocation5 + $0x40c] sm:$0xf]
        %v651 = vld [vmem:[#allocation5 + $0x410] sm:$0xff]
        %v652 = vld [vmem:[#allocation5 + $0x418] sm:$0xff]
        %v653 = vld [vmem:[#allocation5 + $0x420] sm:$0xf]
        %v654 = vld [vmem:[#allocation5 + $0x424] sm:$0xff]
        %v655 = vld [vmem:[#allocation5 + $0x42c] sm:$0xff]
        %v656 = vld [vmem:[#allocation5 + $0x434] sm:$0xf]
        %v657 = vld [vmem:[#allocation5 + $0x438] sm:$0xff]
        %v658 = vld [vmem:[#allocation5 + $0x440] sm:$0xff]
        %v659 = vld [vmem:[#allocation5 + $0x448] sm:$0xf]
        %v660 = vld [vmem:[#allocation5 + $0x44c] sm:$0xff]
        %v661 = vld [vmem:[#allocation5 + $0x454] sm:$0xff]
        %v662 = vld [vmem:[#allocation5 + $0x45c] sm:$0xf]
        %v663 = vld [vmem:[#allocation5 + $0x460] sm:$0xff]
        %v664 = vld [vmem:[#allocation5 + $0x468] sm:$0xff]
        %v665 = vld [vmem:[#allocation5 + $0x470] sm:$0xf]
        %v666 = vld [vmem:[#allocation5 + $0x474] sm:$0xff]
        %v667 = vld [vmem:[#allocation5 + $0x47c] sm:$0xff]
        %v668 = vld [vmem:[#allocation5 + $0x484] sm:$0xf]
        %v669 = vld [vmem:[#allocation5 + $0x488] sm:$0xff]
        %v670 = vld [vmem:[#allocation5 + $0x490] sm:$0xff]
        %v671 = vld [vmem:[#allocation5 + $0x498] sm:$0xf]
        %v672 = vld [vmem:[#allocation5 + $0x49c] sm:$0xff]
        %v673 = vld [vmem:[#allocation5 + $0x4a4] sm:$0xff]
        %v674 = vld [vmem:[#allocation5 + $0x4ac] sm:$0xf]
        %v675 = vld [vmem:[#allocation5 + $0x4b0] sm:$0xff]
        %v676 = vld [vmem:[#allocation5 + $0x4b8] sm:$0xff]
        %v677 = vld [vmem:[#allocation5 + $0x4c0] sm:$0xf]
        %v678 = vld [vmem:[#allocation5 + $0x4c4] sm:$0xff]
        %v679 = vld [vmem:[#allocation5 + $0x4cc] sm:$0xff]
        %v680 = vld [vmem:[#allocation5 + $0x4d4] sm:$0xf]
        %v681 = vld [vmem:[#allocation5 + $0x4d8] sm:$0xff]
        %v682 = vld [vmem:[#allocation5 + $0x4e0] sm:$0xff]
        %v683 = vld [vmem:[#allocation5 + $0x4e8] sm:$0xf]
        %v684 = vld [vmem:[#allocation5 + $0x4ec] sm:$0xff]
        %v685 = vld [vmem:[#allocation5 + $0x4f4] sm:$0xff]
        %v686 = vld [vmem:[#allocation5 + $0x4fc] sm:$0xf]
        %v687 = vld [vmem:[#allocation5 + $0x500] sm:$0xff]
        %v688 = vld [vmem:[#allocation5 + $0x508] sm:$0xff]
        %v689 = vld [vmem:[#allocation5 + $0x510] sm:$0xf]
        %v690 = vld [vmem:[#allocation5 + $0x514] sm:$0xff]
        %v691 = vld [vmem:[#allocation5 + $0x51c] sm:$0xff]
        %v692 = vld [vmem:[#allocation5 + $0x524] sm:$0xf]
        %v693 = vld [vmem:[#allocation5 + $0x528] sm:$0xff]
        %v694 = vld [vmem:[#allocation5 + $0x530] sm:$0xff]
        %v695 = vld [vmem:[#allocation5 + $0x538] sm:$0xf]
        %v696 = vld [vmem:[#allocation5 + $0x53c] sm:$0xff]
        %v697 = vld [vmem:[#allocation5 + $0x544] sm:$0xff]
        %v698 = vld [vmem:[#allocation5 + $0x54c] sm:$0xf]
        %v699 = vld [vmem:[#allocation5 + $0x550] sm:$0xff]
        %v700 = vld [vmem:[#allocation5 + $0x558] sm:$0xff]
        %v701 = vld [vmem:[#allocation5 + $0x560] sm:$0xf]
        %v702 = vld [vmem:[#allocation5 + $0x564] sm:$0xff]
        %v703 = vld [vmem:[#allocation5 + $0x56c] sm:$0xff]
        %v704 = vld [vmem:[#allocation5 + $0x574] sm:$0xf]
        %v705 = vld [vmem:[#allocation5 + $0x578] sm:$0xff]
        %v706 = vld [vmem:[#allocation5 + $0x580] sm:$0xff]
        %v707 = vld [vmem:[#allocation5 + $0x588] sm:$0xf]
        %v708 = vld [vmem:[#allocation5 + $0x58c] sm:$0xff]
        %v709 = vld [vmem:[#allocation5 + $0x594] sm:$0xff]
        %v710 = vld [vmem:[#allocation5 + $0x59c] sm:$0xf]
        %v711 = vld [vmem:[#allocation5 + $0x5a0] sm:$0xff]
        %v712 = vld [vmem:[#allocation5 + $0x5a8] sm:$0xff]
        %v713 = vld [vmem:[#allocation5 + $0x5b0] sm:$0xf]
        %v714 = vld [vmem:[#allocation5 + $0x5b4] sm:$0xff]
        %v715 = vld [vmem:[#allocation5 + $0x5bc] sm:$0xff]
        %v716 = vld [vmem:[#allocation5 + $0x5c4] sm:$0xf]
        %v717 = vld [vmem:[#allocation5 + $0x5c8] sm:$0xff]
        %v718 = vld [vmem:[#allocation5 + $0x5d0] sm:$0xff]
        %v719 = vld [vmem:[#allocation5 + $0x5d8] sm:$0xf]
        %v720 = vld [vmem:[#allocation5 + $0x5dc] sm:$0xff]
        %v721 = vld [vmem:[#allocation5 + $0x5e4] sm:$0xff]
        %v722 = vld [vmem:[#allocation5 + $0x5ec] sm:$0xf]
        %v723 = vld [vmem:[#allocation5 + $0x5f0] sm:$0xff]
        %v724 = vld [vmem:[#allocation5 + $0x5f8] sm:$0xff]
        %v725 = vld [vmem:[#allocation5 + $0x600] sm:$0xf]
        %v726 = vld [vmem:[#allocation5 + $0x604] sm:$0xff]
        %v727 = vld [vmem:[#allocation5 + $0x60c] sm:$0xff]
        %v728 = vld [vmem:[#allocation5 + $0x614] sm:$0xf]
        %v729 = vld [vmem:[#allocation5 + $0x618] sm:$0xff]
        %v730 = vld [vmem:[#allocation5 + $0x620] sm:$0xff]
        %v731 = vld [vmem:[#allocation5 + $0x628] sm:$0xf]
        %v732 = vld [vmem:[#allocation5 + $0x62c] sm:$0xff]
        %v733 = vld [vmem:[#allocation5 + $0x634] sm:$0xff]
        %v734 = vld [vmem:[#allocation5 + $0x63c] sm:$0xf]
        %v735 = vld [vmem:[#allocation5 + $0x640] sm:$0xff]
        %v736 = vld [vmem:[#allocation5 + $0x648] sm:$0xff]
        %v737 = vld [vmem:[#allocation5 + $0x650] sm:$0xf]
        %v738 = vld [vmem:[#allocation5 + $0x654] sm:$0xff]
        %v739 = vld [vmem:[#allocation5 + $0x65c] sm:$0xff]
        %v740 = vld [vmem:[#allocation5 + $0x664] sm:$0xf]
        %v741 = vld [vmem:[#allocation5 + $0x668] sm:$0xff]
        %v742 = vld [vmem:[#allocation5 + $0x670] sm:$0xff]
        %v743 = vld [vmem:[#allocation5 + $0x678] sm:$0xf]
        %v744 = vld [vmem:[#allocation5 + $0x67c] sm:$0xff]
        %v745 = vld [vmem:[#allocation5 + $0x684] sm:$0xff]
        %v746 = vld [vmem:[#allocation5 + $0x68c] sm:$0xf]
        %v747 = vld [vmem:[#allocation5 + $0x690] sm:$0xff]
        %v748 = vld [vmem:[#allocation5 + $0x698] sm:$0xff]
        %v749 = vld [vmem:[#allocation5 + $0x6a0] sm:$0xf]
        %v750 = vld [vmem:[#allocation5 + $0x6a4] sm:$0xff]
        %v751 = vld [vmem:[#allocation5 + $0x6ac] sm:$0xff]
        %v752 = vld [vmem:[#allocation5 + $0x6b4] sm:$0xf]
        %v753 = vld [vmem:[#allocation5 + $0x6b8] sm:$0xff]
        %v754 = vld [vmem:[#allocation5 + $0x6c0] sm:$0xff]
        %v755 = vld [vmem:[#allocation5 + $0x6c8] sm:$0xf]
        %v756 = vld [vmem:[#allocation5 + $0x6cc] sm:$0xff]
        %v757 = vld [vmem:[#allocation5 + $0x6d4] sm:$0xff]
        %v758 = vld [vmem:[#allocation5 + $0x6dc] sm:$0xf]
        %v759 = vld [vmem:[#allocation5 + $0x6e0] sm:$0xff]
        %v760 = vld [vmem:[#allocation5 + $0x6e8] sm:$0xff]
        %v761 = vld [vmem:[#allocation5 + $0x6f0] sm:$0xf]
        %v762 = vld [vmem:[#allocation5 + $0x6f4] sm:$0xff]
        %v763 = vld [vmem:[#allocation5 + $0x6fc] sm:$0xff]
        %v764 = vld [vmem:[#allocation5 + $0x704] sm:$0xf]
        %v765 = vld [vmem:[#allocation5 + $0x708] sm:$0xff]
        %v766 = vld [vmem:[#allocation5 + $0x710] sm:$0xff]
        %v767 = vld [vmem:[#allocation5 + $0x718] sm:$0xf]
        %v768 = vld [vmem:[#allocation5 + $0x71c] sm:$0xff]
        %v769 = vld [vmem:[#allocation5 + $0x724] sm:$0xff]
        %v770 = vld [vmem:[#allocation5 + $0x72c] sm:$0xf]
        %v771 = vld [vmem:[#allocation5 + $0x730] sm:$0xff]
        %v772 = vld [vmem:[#allocation5 + $0x738] sm:$0xff]
        %v773 = vld [vmem:[#allocation5 + $0x740] sm:$0xf]
        %v774 = vld [vmem:[#allocation5 + $0x744] sm:$0xff]
        %v775 = vld [vmem:[#allocation5 + $0x74c] sm:$0xff]
        %v776 = vld [vmem:[#allocation5 + $0x754] sm:$0xf]
        %v777 = vld [vmem:[#allocation5 + $0x758] sm:$0xff]
        %v778 = vld [vmem:[#allocation5 + $0x760] sm:$0xff]
        %v779 = vld [vmem:[#allocation5 + $0x768] sm:$0xf]
        %v780 = vld [vmem:[#allocation5 + $0x76c] sm:$0xff]
        %v781 = vld [vmem:[#allocation5 + $0x774] sm:$0xff]
        %v782 = vld [vmem:[#allocation5 + $0x77c] sm:$0xf]
        %v879 = vunpack.c.l.b16 %v399
        %v880 = vunpack.c.h.b16 %v399
        %v881 = vunpack.c.l.b16 %v400
        %v882 = vunpack.c.h.b16 %v400
        %v883 = vunpack.c.l.b16 %v401
        %v884 = vunpack.c.h.b16 %v401
        %v885 = vunpack.c.l.b16 %v402
        %v886 = vunpack.c.h.b16 %v402
        %v887 = vunpack.c.l.b16 %v403
        %v888 = vunpack.c.h.b16 %v403
        %v889 = vunpack.c.l.b16 %v404
        %v890 = vunpack.c.h.b16 %v404
        %v891 = vunpack.c.l.b16 %v405
        %v892 = vunpack.c.h.b16 %v405
        %v893 = vunpack.c.l.b16 %v406
        %v894 = vunpack.c.h.b16 %v406
        %v895 = vunpack.c.l.b16 %v407
        %v896 = vunpack.c.h.b16 %v407
        %v897 = vunpack.c.l.b16 %v408
        %v898 = vunpack.c.h.b16 %v408
        %v899 = vunpack.c.l.b16 %v409
        %v900 = vunpack.c.h.b16 %v409
        %v901 = vunpack.c.l.b16 %v410
        %v902 = vunpack.c.h.b16 %v410
        %v903 = vunpack.c.l.b16 %v411
        %v904 = vunpack.c.h.b16 %v411
        %v905 = vunpack.c.l.b16 %v412
        %v906 = vunpack.c.h.b16 %v412
        %v907 = vunpack.c.l.b16 %v413
        %v908 = vunpack.c.h.b16 %v413
        %v909 = vunpack.c.l.b16 %v414
        %v910 = vunpack.c.h.b16 %v414
        %v911 = vunpack.c.l.b16 %v415
        %v912 = vunpack.c.h.b16 %v415
        %v913 = vunpack.c.l.b16 %v416
        %v914 = vunpack.c.h.b16 %v416
        %v915 = vunpack.c.l.b16 %v417
        %v916 = vunpack.c.h.b16 %v417
        %v917 = vunpack.c.l.b16 %v418
        %v918 = vunpack.c.h.b16 %v418
        %v919 = vunpack.c.l.b16 %v419
        %v920 = vunpack.c.h.b16 %v419
        %v921 = vunpack.c.l.b16 %v420
        %v922 = vunpack.c.h.b16 %v420
        %v923 = vunpack.c.l.b16 %v421
        %v924 = vunpack.c.h.b16 %v421
        %v925 = vunpack.c.l.b16 %v422
        %v926 = vunpack.c.h.b16 %v422
        %v927 = vunpack.c.l.b16 %v423
        %v928 = vunpack.c.h.b16 %v423
        %v929 = vunpack.c.l.b16 %v424
        %v930 = vunpack.c.h.b16 %v424
        %v931 = vunpack.c.l.b16 %v425
        %v932 = vunpack.c.h.b16 %v425
        %v933 = vunpack.c.l.b16 %v426
        %v934 = vunpack.c.h.b16 %v426
        %v935 = vunpack.c.l.b16 %v427
        %v936 = vunpack.c.h.b16 %v427
        %v937 = vunpack.c.l.b16 %v428
        %v938 = vunpack.c.h.b16 %v428
        %v939 = vunpack.c.l.b16 %v429
        %v940 = vunpack.c.h.b16 %v429
        %v941 = vunpack.c.l.b16 %v430
        %v942 = vunpack.c.h.b16 %v430
        %v943 = vunpack.c.l.b16 %v431
        %v944 = vunpack.c.h.b16 %v431
        %v945 = vunpack.c.l.b16 %v432
        %v946 = vunpack.c.h.b16 %v432
        %v947 = vunpack.c.l.b16 %v433
        %v948 = vunpack.c.h.b16 %v433
        %v949 = vunpack.c.l.b16 %v434
        %v950 = vunpack.c.h.b16 %v434
        %v951 = vunpack.c.l.b16 %v435
        %v952 = vunpack.c.h.b16 %v435
        %v953 = vunpack.c.l.b16 %v436
        %v954 = vunpack.c.h.b16 %v436
        %v955 = vunpack.c.l.b16 %v437
        %v956 = vunpack.c.h.b16 %v437
        %v957 = vunpack.c.l.b16 %v438
        %v958 = vunpack.c.h.b16 %v438
        %v959 = vunpack.c.l.b16 %v439
        %v960 = vunpack.c.h.b16 %v439
        %v961 = vunpack.c.l.b16 %v440
        %v962 = vunpack.c.h.b16 %v440
        %v963 = vunpack.c.l.b16 %v441
        %v964 = vunpack.c.h.b16 %v441
        %v965 = vunpack.c.l.b16 %v442
        %v966 = vunpack.c.h.b16 %v442
        %v967 = vunpack.c.l.b16 %v443
        %v968 = vunpack.c.h.b16 %v443
        %v969 = vunpack.c.l.b16 %v444
        %v970 = vunpack.c.h.b16 %v444
        %v971 = vunpack.c.l.b16 %v445
        %v972 = vunpack.c.h.b16 %v445
        %v973 = vunpack.c.l.b16 %v446
        %v974 = vunpack.c.h.b16 %v446
        %v975 = vunpack.c.l.b16 %v447
        %v976 = vunpack.c.h.b16 %v447
        %v977 = vunpack.c.l.b16 %v448
        %v978 = vunpack.c.h.b16 %v448
        %v979 = vunpack.c.l.b16 %v449
        %v980 = vunpack.c.h.b16 %v449
        %v981 = vunpack.c.l.b16 %v450
        %v982 = vunpack.c.h.b16 %v450
        %v983 = vunpack.c.l.b16 %v451
        %v984 = vunpack.c.h.b16 %v451
        %v985 = vunpack.c.l.b16 %v452
        %v986 = vunpack.c.h.b16 %v452
        %v987 = vunpack.c.l.b16 %v453
        %v988 = vunpack.c.h.b16 %v453
        %v989 = vunpack.c.l.b16 %v454
        %v990 = vunpack.c.h.b16 %v454
        %v991 = vunpack.c.l.b16 %v455
        %v992 = vunpack.c.h.b16 %v455
        %v993 = vunpack.c.l.b16 %v456
        %v994 = vunpack.c.h.b16 %v456
        %v995 = vunpack.c.l.b16 %v457
        %v996 = vunpack.c.h.b16 %v457
        %v997 = vunpack.c.l.b16 %v458
        %v998 = vunpack.c.h.b16 %v458
        %v999 = vunpack.c.l.b16 %v459
        %v1000 = vunpack.c.h.b16 %v459
        %v1001 = vunpack.c.l.b16 %v460
        %v1002 = vunpack.c.h.b16 %v460
        %v1003 = vunpack.c.l.b16 %v461
        %v1004 = vunpack.c.h.b16 %v461
        %v1005 = vunpack.c.l.b16 %v462
        %v1006 = vunpack.c.h.b16 %v462
        %v1007 = vunpack.c.l.b16 %v463
        %v1008 = vunpack.c.h.b16 %v463
        %v1009 = vunpack.c.l.b16 %v464
        %v1010 = vunpack.c.h.b16 %v464
        %v1011 = vunpack.c.l.b16 %v465
        %v1012 = vunpack.c.h.b16 %v465
        %v1013 = vunpack.c.l.b16 %v466
        %v1014 = vunpack.c.h.b16 %v466
        %v1015 = vunpack.c.l.b16 %v467
        %v1016 = vunpack.c.h.b16 %v467
        %v1017 = vunpack.c.l.b16 %v468
        %v1018 = vunpack.c.h.b16 %v468
        %v1019 = vunpack.c.l.b16 %v469
        %v1020 = vunpack.c.h.b16 %v469
        %v1021 = vunpack.c.l.b16 %v470
        %v1022 = vunpack.c.h.b16 %v470
        %v1023 = vunpack.c.l.b16 %v471
        %v1024 = vunpack.c.h.b16 %v471
        %v1025 = vunpack.c.l.b16 %v472
        %v1026 = vunpack.c.h.b16 %v472
        %v1027 = vunpack.c.l.b16 %v473
        %v1028 = vunpack.c.h.b16 %v473
        %v1029 = vunpack.c.l.b16 %v474
        %v1030 = vunpack.c.h.b16 %v474
        %v1031 = vunpack.c.l.b16 %v475
        %v1032 = vunpack.c.h.b16 %v475
        %v1033 = vunpack.c.l.b16 %v476
        %v1034 = vunpack.c.h.b16 %v476
        %v1035 = vunpack.c.l.b16 %v477
        %v1036 = vunpack.c.h.b16 %v477
        %v1037 = vunpack.c.l.b16 %v478
        %v1038 = vunpack.c.h.b16 %v478
        %v1039 = vunpack.c.l.b16 %v479
        %v1040 = vunpack.c.h.b16 %v479
        %v1041 = vunpack.c.l.b16 %v480
        %v1042 = vunpack.c.h.b16 %v480
        %v1043 = vunpack.c.l.b16 %v481
        %v1044 = vunpack.c.h.b16 %v481
        %v1045 = vunpack.c.l.b16 %v482
        %v1046 = vunpack.c.h.b16 %v482
        %v1047 = vunpack.c.l.b16 %v483
        %v1048 = vunpack.c.h.b16 %v483
        %v1049 = vunpack.c.l.b16 %v484
        %v1050 = vunpack.c.h.b16 %v484
        %v1051 = vunpack.c.l.b16 %v485
        %v1052 = vunpack.c.h.b16 %v485
        %v1053 = vunpack.c.l.b16 %v486
        %v1054 = vunpack.c.h.b16 %v486
        %v1055 = vunpack.c.l.b16 %v487
        %v1056 = vunpack.c.h.b16 %v487
        %v1057 = vunpack.c.l.b16 %v488
        %v1058 = vunpack.c.h.b16 %v488
        %v1059 = vunpack.c.l.b16 %v489
        %v1060 = vunpack.c.h.b16 %v489
        %v1061 = vunpack.c.l.b16 %v490
        %v1062 = vunpack.c.h.b16 %v490
        %v1063 = vunpack.c.l.b16 %v491
        %v1064 = vunpack.c.h.b16 %v491
        %v1065 = vunpack.c.l.b16 %v492
        %v1066 = vunpack.c.h.b16 %v492
        %v1067 = vunpack.c.l.b16 %v493
        %v1068 = vunpack.c.h.b16 %v493
        %v1069 = vunpack.c.l.b16 %v494
        %v1070 = vunpack.c.h.b16 %v494
        %v1071 = vpack.c.b16 %v885, %v879
        %v1072 = vpack.c.b16 %v886, %v880
        %v1073 = vpack.c.b16 %v887, %v881
        %v1074 = vpack.c.b16 %v888, %v882
        %v1075 = vpack.c.b16 %v889, %v883
        %v1076 = vpack.c.b16 %v890, %v884
        %v1077 = vpack.c.b16 %v897, %v891
        %v1078 = vpack.c.b16 %v898, %v892
        %v1079 = vpack.c.b16 %v899, %v893
        %v1080 = vpack.c.b16 %v900, %v894
        %v1081 = vpack.c.b16 %v901, %v895
        %v1082 = vpack.c.b16 %v902, %v896
        %v1083 = vpack.c.b16 %v909, %v903
        %v1084 = vpack.c.b16 %v910, %v904
        %v1085 = vpack.c.b16 %v911, %v905
        %v1086 = vpack.c.b16 %v912, %v906
        %v1087 = vpack.c.b16 %v913, %v907
        %v1088 = vpack.c.b16 %v914, %v908
        %v1089 = vpack.c.b16 %v921, %v915
        %v1090 = vpack.c.b16 %v922, %v916
        %v1091 = vpack.c.b16 %v923, %v917
        %v1092 = vpack.c.b16 %v924, %v918
        %v1093 = vpack.c.b16 %v925, %v919
        %v1094 = vpack.c.b16 %v926, %v920
        %v1095 = vpack.c.b16 %v933, %v927
        %v1096 = vpack.c.b16 %v934, %v928
        %v1097 = vpack.c.b16 %v935, %v929
        %v1098 = vpack.c.b16 %v936, %v930
        %v1099 = vpack.c.b16 %v937, %v931
        %v1100 = vpack.c.b16 %v938, %v932
        %v1101 = vpack.c.b16 %v945, %v939
        %v1102 = vpack.c.b16 %v946, %v940
        %v1103 = vpack.c.b16 %v947, %v941
        %v1104 = vpack.c.b16 %v948, %v942
        %v1105 = vpack.c.b16 %v949, %v943
        %v1106 = vpack.c.b16 %v950, %v944
        %v1107 = vpack.c.b16 %v957, %v951
        %v1108 = vpack.c.b16 %v958, %v952
        %v1109 = vpack.c.b16 %v959, %v953
        %v1110 = vpack.c.b16 %v960, %v954
        %v1111 = vpack.c.b16 %v961, %v955
        %v1112 = vpack.c.b16 %v962, %v956
        %v1113 = vpack.c.b16 %v969, %v963
        %v1114 = vpack.c.b16 %v970, %v964
        %v1115 = vpack.c.b16 %v971, %v965
        %v1116 = vpack.c.b16 %v972, %v966
        %v1117 = vpack.c.b16 %v973, %v967
        %v1118 = vpack.c.b16 %v974, %v968
        %v1119 = vpack.c.b16 %v981, %v975
        %v1120 = vpack.c.b16 %v982, %v976
        %v1121 = vpack.c.b16 %v983, %v977
        %v1122 = vpack.c.b16 %v984, %v978
        %v1123 = vpack.c.b16 %v985, %v979
        %v1124 = vpack.c.b16 %v986, %v980
        %v1125 = vpack.c.b16 %v993, %v987
        %v1126 = vpack.c.b16 %v994, %v988
        %v1127 = vpack.c.b16 %v995, %v989
        %v1128 = vpack.c.b16 %v996, %v990
        %v1129 = vpack.c.b16 %v997, %v991
        %v1130 = vpack.c.b16 %v998, %v992
        %v1131 = vpack.c.b16 %v1005, %v999
        %v1132 = vpack.c.b16 %v1006, %v1000
        %v1133 = vpack.c.b16 %v1007, %v1001
        %v1134 = vpack.c.b16 %v1008, %v1002
        %v1135 = vpack.c.b16 %v1009, %v1003
        %v1136 = vpack.c.b16 %v1010, %v1004
        %v1137 = vpack.c.b16 %v1017, %v1011
        %v1138 = vpack.c.b16 %v1018, %v1012
        %v1139 = vpack.c.b16 %v1019, %v1013
        %v1140 = vpack.c.b16 %v1020, %v1014
        %v1141 = vpack.c.b16 %v1021, %v1015
        %v1142 = vpack.c.b16 %v1022, %v1016
        %v1143 = vpack.c.b16 %v1029, %v1023
        %v1144 = vpack.c.b16 %v1030, %v1024
        %v1145 = vpack.c.b16 %v1031, %v1025
        %v1146 = vpack.c.b16 %v1032, %v1026
        %v1147 = vpack.c.b16 %v1033, %v1027
        %v1148 = vpack.c.b16 %v1034, %v1028
        %v1149 = vpack.c.b16 %v1041, %v1035
        %v1150 = vpack.c.b16 %v1042, %v1036
        %v1151 = vpack.c.b16 %v1043, %v1037
        %v1152 = vpack.c.b16 %v1044, %v1038
        %v1153 = vpack.c.b16 %v1045, %v1039
        %v1154 = vpack.c.b16 %v1046, %v1040
        %v1155 = vpack.c.b16 %v1053, %v1047
        %v1156 = vpack.c.b16 %v1054, %v1048
        %v1157 = vpack.c.b16 %v1055, %v1049
        %v1158 = vpack.c.b16 %v1056, %v1050
        %v1159 = vpack.c.b16 %v1057, %v1051
        %v1160 = vpack.c.b16 %v1058, %v1052
        %v1161 = vpack.c.b16 %v1065, %v1059
        %v1162 = vpack.c.b16 %v1066, %v1060
        %v1163 = vpack.c.b16 %v1067, %v1061
        %v1164 = vpack.c.b16 %v1068, %v1062
        %v1165 = vpack.c.b16 %v1069, %v1063
        %v1166 = vpack.c.b16 %v1070, %v1064
        %v1551 = vunpack.c.l.b16 %v495
        %v1552 = vunpack.c.h.b16 %v495
        %v1553 = vunpack.c.l.b16 %v496
        %v1554 = vunpack.c.h.b16 %v496
        %v1555 = vunpack.c.l.b16 %v497
        %v1556 = vunpack.c.l.b16 %v498
        %v1557 = vunpack.c.h.b16 %v498
        %v1558 = vunpack.c.l.b16 %v499
        %v1559 = vunpack.c.h.b16 %v499
        %v1560 = vunpack.c.l.b16 %v500
        %v1561 = vunpack.c.l.b16 %v501
        %v1562 = vunpack.c.h.b16 %v501
        %v1563 = vunpack.c.l.b16 %v502
        %v1564 = vunpack.c.h.b16 %v502
        %v1565 = vunpack.c.l.b16 %v503
        %v1566 = vunpack.c.l.b16 %v504
        %v1567 = vunpack.c.h.b16 %v504
        %v1568 = vunpack.c.l.b16 %v505
        %v1569 = vunpack.c.h.b16 %v505
        %v1570 = vunpack.c.l.b16 %v506
        %v1571 = vunpack.c.l.b16 %v507
        %v1572 = vunpack.c.h.b16 %v507
        %v1573 = vunpack.c.l.b16 %v508
        %v1574 = vunpack.c.h.b16 %v508
        %v1575 = vunpack.c.l.b16 %v509
        %v1576 = vunpack.c.l.b16 %v510
        %v1577 = vunpack.c.h.b16 %v510
        %v1578 = vunpack.c.l.b16 %v511
        %v1579 = vunpack.c.h.b16 %v511
        %v1580 = vunpack.c.l.b16 %v512
        %v1581 = vunpack.c.l.b16 %v513
        %v1582 = vunpack.c.h.b16 %v513
        %v1583 = vunpack.c.l.b16 %v514
        %v1584 = vunpack.c.h.b16 %v514
        %v1585 = vunpack.c.l.b16 %v515
        %v1586 = vunpack.c.l.b16 %v516
        %v1587 = vunpack.c.h.b16 %v516
        %v1588 = vunpack.c.l.b16 %v517
        %v1589 = vunpack.c.h.b16 %v517
        %v1590 = vunpack.c.l.b16 %v518
        %v1591 = vunpack.c.l.b16 %v519
        %v1592 = vunpack.c.h.b16 %v519
        %v1593 = vunpack.c.l.b16 %v520
        %v1594 = vunpack.c.h.b16 %v520
        %v1595 = vunpack.c.l.b16 %v521
        %v1596 = vunpack.c.l.b16 %v522
        %v1597 = vunpack.c.h.b16 %v522
        %v1598 = vunpack.c.l.b16 %v523
        %v1599 = vunpack.c.h.b16 %v523
        %v1600 = vunpack.c.l.b16 %v524
        %v1601 = vunpack.c.l.b16 %v525
        %v1602 = vunpack.c.h.b16 %v525
        %v1603 = vunpack.c.l.b16 %v526
        %v1604 = vunpack.c.h.b16 %v526
        %v1605 = vunpack.c.l.b16 %v527
        %v1606 = vunpack.c.l.b16 %v528
        %v1607 = vunpack.c.h.b16 %v528
        %v1608 = vunpack.c.l.b16 %v529
        %v1609 = vunpack.c.h.b16 %v529
        %v1610 = vunpack.c.l.b16 %v530
        %v1611 = vunpack.c.l.b16 %v531
        %v1612 = vunpack.c.h.b16 %v531
        %v1613 = vunpack.c.l.b16 %v532
        %v1614 = vunpack.c.h.b16 %v532
        %v1615 = vunpack.c.l.b16 %v533
        %v1616 = vunpack.c.l.b16 %v534
        %v1617 = vunpack.c.h.b16 %v534
        %v1618 = vunpack.c.l.b16 %v535
        %v1619 = vunpack.c.h.b16 %v535
        %v1620 = vunpack.c.l.b16 %v536
        %v1621 = vunpack.c.l.b16 %v537
        %v1622 = vunpack.c.h.b16 %v537
        %v1623 = vunpack.c.l.b16 %v538
        %v1624 = vunpack.c.h.b16 %v538
        %v1625 = vunpack.c.l.b16 %v539
        %v1626 = vunpack.c.l.b16 %v540
        %v1627 = vunpack.c.h.b16 %v540
        %v1628 = vunpack.c.l.b16 %v541
        %v1629 = vunpack.c.h.b16 %v541
        %v1630 = vunpack.c.l.b16 %v542
        %v1631 = vunpack.c.l.b16 %v543
        %v1632 = vunpack.c.h.b16 %v543
        %v1633 = vunpack.c.l.b16 %v544
        %v1634 = vunpack.c.h.b16 %v544
        %v1635 = vunpack.c.l.b16 %v545
        %v1636 = vunpack.c.l.b16 %v546
        %v1637 = vunpack.c.h.b16 %v546
        %v1638 = vunpack.c.l.b16 %v547
        %v1639 = vunpack.c.h.b16 %v547
        %v1640 = vunpack.c.l.b16 %v548
        %v1641 = vunpack.c.l.b16 %v549
        %v1642 = vunpack.c.h.b16 %v549
        %v1643 = vunpack.c.l.b16 %v550
        %v1644 = vunpack.c.h.b16 %v550
        %v1645 = vunpack.c.l.b16 %v551
        %v1646 = vunpack.c.l.b16 %v552
        %v1647 = vunpack.c.h.b16 %v552
        %v1648 = vunpack.c.l.b16 %v553
        %v1649 = vunpack.c.h.b16 %v553
        %v1650 = vunpack.c.l.b16 %v554
        %v1651 = vunpack.c.l.b16 %v555
        %v1652 = vunpack.c.h.b16 %v555
        %v1653 = vunpack.c.l.b16 %v556
        %v1654 = vunpack.c.h.b16 %v556
        %v1655 = vunpack.c.l.b16 %v557
        %v1656 = vunpack.c.l.b16 %v558
        %v1657 = vunpack.c.h.b16 %v558
        %v1658 = vunpack.c.l.b16 %v559
        %v1659 = vunpack.c.h.b16 %v559
        %v1660 = vunpack.c.l.b16 %v560
        %v1661 = vunpack.c.l.b16 %v561
        %v1662 = vunpack.c.h.b16 %v561
        %v1663 = vunpack.c.l.b16 %v562
        %v1664 = vunpack.c.h.b16 %v562
        %v1665 = vunpack.c.l.b16 %v563
        %v1666 = vunpack.c.l.b16 %v564
        %v1667 = vunpack.c.h.b16 %v564
        %v1668 = vunpack.c.l.b16 %v565
        %v1669 = vunpack.c.h.b16 %v565
        %v1670 = vunpack.c.l.b16 %v566
        %v1671 = vunpack.c.l.b16 %v567
        %v1672 = vunpack.c.h.b16 %v567
        %v1673 = vunpack.c.l.b16 %v568
        %v1674 = vunpack.c.h.b16 %v568
        %v1675 = vunpack.c.l.b16 %v569
        %v1676 = vunpack.c.l.b16 %v570
        %v1677 = vunpack.c.h.b16 %v570
        %v1678 = vunpack.c.l.b16 %v571
        %v1679 = vunpack.c.h.b16 %v571
        %v1680 = vunpack.c.l.b16 %v572
        %v1681 = vunpack.c.l.b16 %v573
        %v1682 = vunpack.c.h.b16 %v573
        %v1683 = vunpack.c.l.b16 %v574
        %v1684 = vunpack.c.h.b16 %v574
        %v1685 = vunpack.c.l.b16 %v575
        %v1686 = vunpack.c.l.b16 %v576
        %v1687 = vunpack.c.h.b16 %v576
        %v1688 = vunpack.c.l.b16 %v577
        %v1689 = vunpack.c.h.b16 %v577
        %v1690 = vunpack.c.l.b16 %v578
        %v1691 = vunpack.c.l.b16 %v579
        %v1692 = vunpack.c.h.b16 %v579
        %v1693 = vunpack.c.l.b16 %v580
        %v1694 = vunpack.c.h.b16 %v580
        %v1695 = vunpack.c.l.b16 %v581
        %v1696 = vunpack.c.l.b16 %v582
        %v1697 = vunpack.c.h.b16 %v582
        %v1698 = vunpack.c.l.b16 %v583
        %v1699 = vunpack.c.h.b16 %v583
        %v1700 = vunpack.c.l.b16 %v584
        %v1701 = vunpack.c.l.b16 %v585
        %v1702 = vunpack.c.h.b16 %v585
        %v1703 = vunpack.c.l.b16 %v586
        %v1704 = vunpack.c.h.b16 %v586
        %v1705 = vunpack.c.l.b16 %v587
        %v1706 = vunpack.c.l.b16 %v588
        %v1707 = vunpack.c.h.b16 %v588
        %v1708 = vunpack.c.l.b16 %v589
        %v1709 = vunpack.c.h.b16 %v589
        %v1710 = vunpack.c.l.b16 %v590
        %v1711 = vunpack.c.l.b16 %v591
        %v1712 = vunpack.c.h.b16 %v591
        %v1713 = vunpack.c.l.b16 %v592
        %v1714 = vunpack.c.h.b16 %v592
        %v1715 = vunpack.c.l.b16 %v593
        %v1716 = vunpack.c.l.b16 %v594
        %v1717 = vunpack.c.h.b16 %v594
        %v1718 = vunpack.c.l.b16 %v595
        %v1719 = vunpack.c.h.b16 %v595
        %v1720 = vunpack.c.l.b16 %v596
        %v1721 = vunpack.c.l.b16 %v597
        %v1722 = vunpack.c.h.b16 %v597
        %v1723 = vunpack.c.l.b16 %v598
        %v1724 = vunpack.c.h.b16 %v598
        %v1725 = vunpack.c.l.b16 %v599
        %v1726 = vunpack.c.l.b16 %v600
        %v1727 = vunpack.c.h.b16 %v600
        %v1728 = vunpack.c.l.b16 %v601
        %v1729 = vunpack.c.h.b16 %v601
        %v1730 = vunpack.c.l.b16 %v602
        %v1731 = vunpack.c.l.b16 %v603
        %v1732 = vunpack.c.h.b16 %v603
        %v1733 = vunpack.c.l.b16 %v604
        %v1734 = vunpack.c.h.b16 %v604
        %v1735 = vunpack.c.l.b16 %v605
        %v1736 = vunpack.c.l.b16 %v606
        %v1737 = vunpack.c.h.b16 %v606
        %v1738 = vunpack.c.l.b16 %v607
        %v1739 = vunpack.c.h.b16 %v607
        %v1740 = vunpack.c.l.b16 %v608
        %v1741 = vunpack.c.l.b16 %v609
        %v1742 = vunpack.c.h.b16 %v609
        %v1743 = vunpack.c.l.b16 %v610
        %v1744 = vunpack.c.h.b16 %v610
        %v1745 = vunpack.c.l.b16 %v611
        %v1746 = vunpack.c.l.b16 %v612
        %v1747 = vunpack.c.h.b16 %v612
        %v1748 = vunpack.c.l.b16 %v613
        %v1749 = vunpack.c.h.b16 %v613
        %v1750 = vunpack.c.l.b16 %v614
        %v1751 = vunpack.c.l.b16 %v615
        %v1752 = vunpack.c.h.b16 %v615
        %v1753 = vunpack.c.l.b16 %v616
        %v1754 = vunpack.c.h.b16 %v616
        %v1755 = vunpack.c.l.b16 %v617
        %v1756 = vunpack.c.l.b16 %v618
        %v1757 = vunpack.c.h.b16 %v618
        %v1758 = vunpack.c.l.b16 %v619
        %v1759 = vunpack.c.h.b16 %v619
        %v1760 = vunpack.c.l.b16 %v620
        %v1761 = vunpack.c.l.b16 %v621
        %v1762 = vunpack.c.h.b16 %v621
        %v1763 = vunpack.c.l.b16 %v622
        %v1764 = vunpack.c.h.b16 %v622
        %v1765 = vunpack.c.l.b16 %v623
        %v1766 = vunpack.c.l.b16 %v624
        %v1767 = vunpack.c.h.b16 %v624
        %v1768 = vunpack.c.l.b16 %v625
        %v1769 = vunpack.c.h.b16 %v625
        %v1770 = vunpack.c.l.b16 %v626
        %v1771 = vunpack.c.l.b16 %v627
        %v1772 = vunpack.c.h.b16 %v627
        %v1773 = vunpack.c.l.b16 %v628
        %v1774 = vunpack.c.h.b16 %v628
        %v1775 = vunpack.c.l.b16 %v629
        %v1776 = vunpack.c.l.b16 %v630
        %v1777 = vunpack.c.h.b16 %v630
        %v1778 = vunpack.c.l.b16 %v631
        %v1779 = vunpack.c.h.b16 %v631
        %v1780 = vunpack.c.l.b16 %v632
        %v1781 = vunpack.c.l.b16 %v633
        %v1782 = vunpack.c.h.b16 %v633
        %v1783 = vunpack.c.l.b16 %v634
        %v1784 = vunpack.c.h.b16 %v634
        %v1785 = vunpack.c.l.b16 %v635
        %v1786 = vunpack.c.l.b16 %v636
        %v1787 = vunpack.c.h.b16 %v636
        %v1788 = vunpack.c.l.b16 %v637
        %v1789 = vunpack.c.h.b16 %v637
        %v1790 = vunpack.c.l.b16 %v638
        %v1791 = vunpack.c.l.b16 %v639
        %v1792 = vunpack.c.h.b16 %v639
        %v1793 = vunpack.c.l.b16 %v640
        %v1794 = vunpack.c.h.b16 %v640
        %v1795 = vunpack.c.l.b16 %v641
        %v1796 = vunpack.c.l.b16 %v642
        %v1797 = vunpack.c.h.b16 %v642
        %v1798 = vunpack.c.l.b16 %v643
        %v1799 = vunpack.c.h.b16 %v643
        %v1800 = vunpack.c.l.b16 %v644
        %v1801 = vunpack.c.l.b16 %v645
        %v1802 = vunpack.c.h.b16 %v645
        %v1803 = vunpack.c.l.b16 %v646
        %v1804 = vunpack.c.h.b16 %v646
        %v1805 = vunpack.c.l.b16 %v647
        %v1806 = vunpack.c.l.b16 %v648
        %v1807 = vunpack.c.h.b16 %v648
        %v1808 = vunpack.c.l.b16 %v649
        %v1809 = vunpack.c.h.b16 %v649
        %v1810 = vunpack.c.l.b16 %v650
        %v1811 = vunpack.c.l.b16 %v651
        %v1812 = vunpack.c.h.b16 %v651
        %v1813 = vunpack.c.l.b16 %v652
        %v1814 = vunpack.c.h.b16 %v652
        %v1815 = vunpack.c.l.b16 %v653
        %v1816 = vunpack.c.l.b16 %v654
        %v1817 = vunpack.c.h.b16 %v654
        %v1818 = vunpack.c.l.b16 %v655
        %v1819 = vunpack.c.h.b16 %v655
        %v1820 = vunpack.c.l.b16 %v656
        %v1821 = vunpack.c.l.b16 %v657
        %v1822 = vunpack.c.h.b16 %v657
        %v1823 = vunpack.c.l.b16 %v658
        %v1824 = vunpack.c.h.b16 %v658
        %v1825 = vunpack.c.l.b16 %v659
        %v1826 = vunpack.c.l.b16 %v660
        %v1827 = vunpack.c.h.b16 %v660
        %v1828 = vunpack.c.l.b16 %v661
        %v1829 = vunpack.c.h.b16 %v661
        %v1830 = vunpack.c.l.b16 %v662
        %v1831 = vunpack.c.l.b16 %v663
        %v1832 = vunpack.c.h.b16 %v663
        %v1833 = vunpack.c.l.b16 %v664
        %v1834 = vunpack.c.h.b16 %v664
        %v1835 = vunpack.c.l.b16 %v665
        %v1836 = vunpack.c.l.b16 %v666
        %v1837 = vunpack.c.h.b16 %v666
        %v1838 = vunpack.c.l.b16 %v667
        %v1839 = vunpack.c.h.b16 %v667
        %v1840 = vunpack.c.l.b16 %v668
        %v1841 = vunpack.c.l.b16 %v669
        %v1842 = vunpack.c.h.b16 %v669
        %v1843 = vunpack.c.l.b16 %v670
        %v1844 = vunpack.c.h.b16 %v670
        %v1845 = vunpack.c.l.b16 %v671
        %v1846 = vunpack.c.l.b16 %v672
        %v1847 = vunpack.c.h.b16 %v672
        %v1848 = vunpack.c.l.b16 %v673
        %v1849 = vunpack.c.h.b16 %v673
        %v1850 = vunpack.c.l.b16 %v674
        %v1851 = vunpack.c.l.b16 %v675
        %v1852 = vunpack.c.h.b16 %v675
        %v1853 = vunpack.c.l.b16 %v676
        %v1854 = vunpack.c.h.b16 %v676
        %v1855 = vunpack.c.l.b16 %v677
        %v1856 = vunpack.c.l.b16 %v678
        %v1857 = vunpack.c.h.b16 %v678
        %v1858 = vunpack.c.l.b16 %v679
        %v1859 = vunpack.c.h.b16 %v679
        %v1860 = vunpack.c.l.b16 %v680
        %v1861 = vunpack.c.l.b16 %v681
        %v1862 = vunpack.c.h.b16 %v681
        %v1863 = vunpack.c.l.b16 %v682
        %v1864 = vunpack.c.h.b16 %v682
        %v1865 = vunpack.c.l.b16 %v683
        %v1866 = vunpack.c.l.b16 %v684
        %v1867 = vunpack.c.h.b16 %v684
        %v1868 = vunpack.c.l.b16 %v685
        %v1869 = vunpack.c.h.b16 %v685
        %v1870 = vunpack.c.l.b16 %v686
        %v1871 = vunpack.c.l.b16 %v687
        %v1872 = vunpack.c.h.b16 %v687
        %v1873 = vunpack.c.l.b16 %v688
        %v1874 = vunpack.c.h.b16 %v688
        %v1875 = vunpack.c.l.b16 %v689
        %v1876 = vunpack.c.l.b16 %v690
        %v1877 = vunpack.c.h.b16 %v690
        %v1878 = vunpack.c.l.b16 %v691
        %v1879 = vunpack.c.h.b16 %v691
        %v1880 = vunpack.c.l.b16 %v692
        %v1881 = vunpack.c.l.b16 %v693
        %v1882 = vunpack.c.h.b16 %v693
        %v1883 = vunpack.c.l.b16 %v694
        %v1884 = vunpack.c.h.b16 %v694
        %v1885 = vunpack.c.l.b16 %v695
        %v1886 = vunpack.c.l.b16 %v696
        %v1887 = vunpack.c.h.b16 %v696
        %v1888 = vunpack.c.l.b16 %v697
        %v1889 = vunpack.c.h.b16 %v697
        %v1890 = vunpack.c.l.b16 %v698
        %v1891 = vunpack.c.l.b16 %v699
        %v1892 = vunpack.c.h.b16 %v699
        %v1893 = vunpack.c.l.b16 %v700
        %v1894 = vunpack.c.h.b16 %v700
        %v1895 = vunpack.c.l.b16 %v701
        %v1896 = vunpack.c.l.b16 %v702
        %v1897 = vunpack.c.h.b16 %v702
        %v1898 = vunpack.c.l.b16 %v703
        %v1899 = vunpack.c.h.b16 %v703
        %v1900 = vunpack.c.l.b16 %v704
        %v1901 = vunpack.c.l.b16 %v705
        %v1902 = vunpack.c.h.b16 %v705
        %v1903 = vunpack.c.l.b16 %v706
        %v1904 = vunpack.c.h.b16 %v706
        %v1905 = vunpack.c.l.b16 %v707
        %v1906 = vunpack.c.l.b16 %v708
        %v1907 = vunpack.c.h.b16 %v708
        %v1908 = vunpack.c.l.b16 %v709
        %v1909 = vunpack.c.h.b16 %v709
        %v1910 = vunpack.c.l.b16 %v710
        %v1911 = vunpack.c.l.b16 %v711
        %v1912 = vunpack.c.h.b16 %v711
        %v1913 = vunpack.c.l.b16 %v712
        %v1914 = vunpack.c.h.b16 %v712
        %v1915 = vunpack.c.l.b16 %v713
        %v1916 = vunpack.c.l.b16 %v714
        %v1917 = vunpack.c.h.b16 %v714
        %v1918 = vunpack.c.l.b16 %v715
        %v1919 = vunpack.c.h.b16 %v715
        %v1920 = vunpack.c.l.b16 %v716
        %v1921 = vunpack.c.l.b16 %v717
        %v1922 = vunpack.c.h.b16 %v717
        %v1923 = vunpack.c.l.b16 %v718
        %v1924 = vunpack.c.h.b16 %v718
        %v1925 = vunpack.c.l.b16 %v719
        %v1926 = vunpack.c.l.b16 %v720
        %v1927 = vunpack.c.h.b16 %v720
        %v1928 = vunpack.c.l.b16 %v721
        %v1929 = vunpack.c.h.b16 %v721
        %v1930 = vunpack.c.l.b16 %v722
        %v1931 = vunpack.c.l.b16 %v723
        %v1932 = vunpack.c.h.b16 %v723
        %v1933 = vunpack.c.l.b16 %v724
        %v1934 = vunpack.c.h.b16 %v724
        %v1935 = vunpack.c.l.b16 %v725
        %v1936 = vunpack.c.l.b16 %v726
        %v1937 = vunpack.c.h.b16 %v726
        %v1938 = vunpack.c.l.b16 %v727
        %v1939 = vunpack.c.h.b16 %v727
        %v1940 = vunpack.c.l.b16 %v728
        %v1941 = vunpack.c.l.b16 %v729
        %v1942 = vunpack.c.h.b16 %v729
        %v1943 = vunpack.c.l.b16 %v730
        %v1944 = vunpack.c.h.b16 %v730
        %v1945 = vunpack.c.l.b16 %v731
        %v1946 = vunpack.c.l.b16 %v732
        %v1947 = vunpack.c.h.b16 %v732
        %v1948 = vunpack.c.l.b16 %v733
        %v1949 = vunpack.c.h.b16 %v733
        %v1950 = vunpack.c.l.b16 %v734
        %v1951 = vunpack.c.l.b16 %v735
        %v1952 = vunpack.c.h.b16 %v735
        %v1953 = vunpack.c.l.b16 %v736
        %v1954 = vunpack.c.h.b16 %v736
        %v1955 = vunpack.c.l.b16 %v737
        %v1956 = vunpack.c.l.b16 %v738
        %v1957 = vunpack.c.h.b16 %v738
        %v1958 = vunpack.c.l.b16 %v739
        %v1959 = vunpack.c.h.b16 %v739
        %v1960 = vunpack.c.l.b16 %v740
        %v1961 = vunpack.c.l.b16 %v741
        %v1962 = vunpack.c.h.b16 %v741
        %v1963 = vunpack.c.l.b16 %v742
        %v1964 = vunpack.c.h.b16 %v742
        %v1965 = vunpack.c.l.b16 %v743
        %v1966 = vunpack.c.l.b16 %v744
        %v1967 = vunpack.c.h.b16 %v744
        %v1968 = vunpack.c.l.b16 %v745
        %v1969 = vunpack.c.h.b16 %v745
        %v1970 = vunpack.c.l.b16 %v746
        %v1971 = vunpack.c.l.b16 %v747
        %v1972 = vunpack.c.h.b16 %v747
        %v1973 = vunpack.c.l.b16 %v748
        %v1974 = vunpack.c.h.b16 %v748
        %v1975 = vunpack.c.l.b16 %v749
        %v1976 = vunpack.c.l.b16 %v750
        %v1977 = vunpack.c.h.b16 %v750
        %v1978 = vunpack.c.l.b16 %v751
        %v1979 = vunpack.c.h.b16 %v751
        %v1980 = vunpack.c.l.b16 %v752
        %v1981 = vunpack.c.l.b16 %v753
        %v1982 = vunpack.c.h.b16 %v753
        %v1983 = vunpack.c.l.b16 %v754
        %v1984 = vunpack.c.h.b16 %v754
        %v1985 = vunpack.c.l.b16 %v755
        %v1986 = vunpack.c.l.b16 %v756
        %v1987 = vunpack.c.h.b16 %v756
        %v1988 = vunpack.c.l.b16 %v757
        %v1989 = vunpack.c.h.b16 %v757
        %v1990 = vunpack.c.l.b16 %v758
        %v1991 = vunpack.c.l.b16 %v759
        %v1992 = vunpack.c.h.b16 %v759
        %v1993 = vunpack.c.l.b16 %v760
        %v1994 = vunpack.c.h.b16 %v760
        %v1995 = vunpack.c.l.b16 %v761
        %v1996 = vunpack.c.l.b16 %v762
        %v1997 = vunpack.c.h.b16 %v762
        %v1998 = vunpack.c.l.b16 %v763
        %v1999 = vunpack.c.h.b16 %v763
        %v2000 = vunpack.c.l.b16 %v764
        %v2001 = vunpack.c.l.b16 %v765
        %v2002 = vunpack.c.h.b16 %v765
        %v2003 = vunpack.c.l.b16 %v766
        %v2004 = vunpack.c.h.b16 %v766
        %v2005 = vunpack.c.l.b16 %v767
        %v2006 = vunpack.c.l.b16 %v768
        %v2007 = vunpack.c.h.b16 %v768
        %v2008 = vunpack.c.l.b16 %v769
        %v2009 = vunpack.c.h.b16 %v769
        %v2010 = vunpack.c.l.b16 %v770
        %v2011 = vunpack.c.l.b16 %v771
        %v2012 = vunpack.c.h.b16 %v771
        %v2013 = vunpack.c.l.b16 %v772
        %v2014 = vunpack.c.h.b16 %v772
        %v2015 = vunpack.c.l.b16 %v773
        %v2016 = vunpack.c.l.b16 %v774
        %v2017 = vunpack.c.h.b16 %v774
        %v2018 = vunpack.c.l.b16 %v775
        %v2019 = vunpack.c.h.b16 %v775
        %v2020 = vunpack.c.l.b16 %v776
        %v2021 = vunpack.c.l.b16 %v777
        %v2022 = vunpack.c.h.b16 %v777
        %v2023 = vunpack.c.l.b16 %v778
        %v2024 = vunpack.c.h.b16 %v778
        %v2025 = vunpack.c.l.b16 %v779
        %v2026 = vunpack.c.l.b16 %v780
        %v2027 = vunpack.c.h.b16 %v780
        %v2028 = vunpack.c.l.b16 %v781
        %v2029 = vunpack.c.h.b16 %v781
        %v2030 = vunpack.c.l.b16 %v782
        %v2031 = vpack.c.b16 %v1556, %v1551
        %v2032 = vpack.c.b16 %v1557, %v1552
        %v2033 = vpack.c.b16 %v1558, %v1553
        %v2034 = vpack.c.b16 %v1559, %v1554
        %v2035 = vpack.c.b16 %v1560, %v1555
        %v2036 = vpack.c.b16 %v1566, %v1561
        %v2037 = vpack.c.b16 %v1567, %v1562
        %v2038 = vpack.c.b16 %v1568, %v1563
        %v2039 = vpack.c.b16 %v1569, %v1564
        %v2040 = vpack.c.b16 %v1570, %v1565
        %v2041 = vpack.c.b16 %v1576, %v1571
        %v2042 = vpack.c.b16 %v1577, %v1572
        %v2043 = vpack.c.b16 %v1578, %v1573
        %v2044 = vpack.c.b16 %v1579, %v1574
        %v2045 = vpack.c.b16 %v1580, %v1575
        %v2046 = vpack.c.b16 %v1586, %v1581
        %v2047 = vpack.c.b16 %v1587, %v1582
        %v2048 = vpack.c.b16 %v1588, %v1583
        %v2049 = vpack.c.b16 %v1589, %v1584
        %v2050 = vpack.c.b16 %v1590, %v1585
        %v2051 = vpack.c.b16 %v1596, %v1591
        %v2052 = vpack.c.b16 %v1597, %v1592
        %v2053 = vpack.c.b16 %v1598, %v1593
        %v2054 = vpack.c.b16 %v1599, %v1594
        %v2055 = vpack.c.b16 %v1600, %v1595
        %v2056 = vpack.c.b16 %v1606, %v1601
        %v2057 = vpack.c.b16 %v1607, %v1602
        %v2058 = vpack.c.b16 %v1608, %v1603
        %v2059 = vpack.c.b16 %v1609, %v1604
        %v2060 = vpack.c.b16 %v1610, %v1605
        %v2061 = vpack.c.b16 %v1616, %v1611
        %v2062 = vpack.c.b16 %v1617, %v1612
        %v2063 = vpack.c.b16 %v1618, %v1613
        %v2064 = vpack.c.b16 %v1619, %v1614
        %v2065 = vpack.c.b16 %v1620, %v1615
        %v2066 = vpack.c.b16 %v1626, %v1621
        %v2067 = vpack.c.b16 %v1627, %v1622
        %v2068 = vpack.c.b16 %v1628, %v1623
        %v2069 = vpack.c.b16 %v1629, %v1624
        %v2070 = vpack.c.b16 %v1630, %v1625
        %v2071 = vpack.c.b16 %v1636, %v1631
        %v2072 = vpack.c.b16 %v1637, %v1632
        %v2073 = vpack.c.b16 %v1638, %v1633
        %v2074 = vpack.c.b16 %v1639, %v1634
        %v2075 = vpack.c.b16 %v1640, %v1635
        %v2076 = vpack.c.b16 %v1646, %v1641
        %v2077 = vpack.c.b16 %v1647, %v1642
        %v2078 = vpack.c.b16 %v1648, %v1643
        %v2079 = vpack.c.b16 %v1649, %v1644
        %v2080 = vpack.c.b16 %v1650, %v1645
        %v2081 = vpack.c.b16 %v1656, %v1651
        %v2082 = vpack.c.b16 %v1657, %v1652
        %v2083 = vpack.c.b16 %v1658, %v1653
        %v2084 = vpack.c.b16 %v1659, %v1654
        %v2085 = vpack.c.b16 %v1660, %v1655
        %v2086 = vpack.c.b16 %v1666, %v1661
        %v2087 = vpack.c.b16 %v1667, %v1662
        %v2088 = vpack.c.b16 %v1668, %v1663
        %v2089 = vpack.c.b16 %v1669, %v1664
        %v2090 = vpack.c.b16 %v1670, %v1665
        %v2091 = vpack.c.b16 %v1676, %v1671
        %v2092 = vpack.c.b16 %v1677, %v1672
        %v2093 = vpack.c.b16 %v1678, %v1673
        %v2094 = vpack.c.b16 %v1679, %v1674
        %v2095 = vpack.c.b16 %v1680, %v1675
        %v2096 = vpack.c.b16 %v1686, %v1681
        %v2097 = vpack.c.b16 %v1687, %v1682
        %v2098 = vpack.c.b16 %v1688, %v1683
        %v2099 = vpack.c.b16 %v1689, %v1684
        %v2100 = vpack.c.b16 %v1690, %v1685
        %v2101 = vpack.c.b16 %v1696, %v1691
        %v2102 = vpack.c.b16 %v1697, %v1692
        %v2103 = vpack.c.b16 %v1698, %v1693
        %v2104 = vpack.c.b16 %v1699, %v1694
        %v2105 = vpack.c.b16 %v1700, %v1695
        %v2106 = vpack.c.b16 %v1706, %v1701
        %v2107 = vpack.c.b16 %v1707, %v1702
        %v2108 = vpack.c.b16 %v1708, %v1703
        %v2109 = vpack.c.b16 %v1709, %v1704
        %v2110 = vpack.c.b16 %v1710, %v1705
        %v2111 = vpack.c.b16 %v1716, %v1711
        %v2112 = vpack.c.b16 %v1717, %v1712
        %v2113 = vpack.c.b16 %v1718, %v1713
        %v2114 = vpack.c.b16 %v1719, %v1714
        %v2115 = vpack.c.b16 %v1720, %v1715
        %v2116 = vpack.c.b16 %v1726, %v1721
        %v2117 = vpack.c.b16 %v1727, %v1722
        %v2118 = vpack.c.b16 %v1728, %v1723
        %v2119 = vpack.c.b16 %v1729, %v1724
        %v2120 = vpack.c.b16 %v1730, %v1725
        %v2121 = vpack.c.b16 %v1736, %v1731
        %v2122 = vpack.c.b16 %v1737, %v1732
        %v2123 = vpack.c.b16 %v1738, %v1733
        %v2124 = vpack.c.b16 %v1739, %v1734
        %v2125 = vpack.c.b16 %v1740, %v1735
        %v2126 = vpack.c.b16 %v1746, %v1741
        %v2127 = vpack.c.b16 %v1747, %v1742
        %v2128 = vpack.c.b16 %v1748, %v1743
        %v2129 = vpack.c.b16 %v1749, %v1744
        %v2130 = vpack.c.b16 %v1750, %v1745
        %v2131 = vpack.c.b16 %v1756, %v1751
        %v2132 = vpack.c.b16 %v1757, %v1752
        %v2133 = vpack.c.b16 %v1758, %v1753
        %v2134 = vpack.c.b16 %v1759, %v1754
        %v2135 = vpack.c.b16 %v1760, %v1755
        %v2136 = vpack.c.b16 %v1766, %v1761
        %v2137 = vpack.c.b16 %v1767, %v1762
        %v2138 = vpack.c.b16 %v1768, %v1763
        %v2139 = vpack.c.b16 %v1769, %v1764
        %v2140 = vpack.c.b16 %v1770, %v1765
        %v2141 = vpack.c.b16 %v1776, %v1771
        %v2142 = vpack.c.b16 %v1777, %v1772
        %v2143 = vpack.c.b16 %v1778, %v1773
        %v2144 = vpack.c.b16 %v1779, %v1774
        %v2145 = vpack.c.b16 %v1780, %v1775
        %v2146 = vpack.c.b16 %v1786, %v1781
        %v2147 = vpack.c.b16 %v1787, %v1782
        %v2148 = vpack.c.b16 %v1788, %v1783
        %v2149 = vpack.c.b16 %v1789, %v1784
        %v2150 = vpack.c.b16 %v1790, %v1785
        %v2151 = vpack.c.b16 %v1796, %v1791
        %v2152 = vpack.c.b16 %v1797, %v1792
        %v2153 = vpack.c.b16 %v1798, %v1793
        %v2154 = vpack.c.b16 %v1799, %v1794
        %v2155 = vpack.c.b16 %v1800, %v1795
        %v2156 = vpack.c.b16 %v1806, %v1801
        %v2157 = vpack.c.b16 %v1807, %v1802
        %v2158 = vpack.c.b16 %v1808, %v1803
        %v2159 = vpack.c.b16 %v1809, %v1804
        %v2160 = vpack.c.b16 %v1810, %v1805
        %v2161 = vpack.c.b16 %v1816, %v1811
        %v2162 = vpack.c.b16 %v1817, %v1812
        %v2163 = vpack.c.b16 %v1818, %v1813
        %v2164 = vpack.c.b16 %v1819, %v1814
        %v2165 = vpack.c.b16 %v1820, %v1815
        %v2166 = vpack.c.b16 %v1826, %v1821
        %v2167 = vpack.c.b16 %v1827, %v1822
        %v2168 = vpack.c.b16 %v1828, %v1823
        %v2169 = vpack.c.b16 %v1829, %v1824
        %v2170 = vpack.c.b16 %v1830, %v1825
        %v2171 = vpack.c.b16 %v1836, %v1831
        %v2172 = vpack.c.b16 %v1837, %v1832
        %v2173 = vpack.c.b16 %v1838, %v1833
        %v2174 = vpack.c.b16 %v1839, %v1834
        %v2175 = vpack.c.b16 %v1840, %v1835
        %v2176 = vpack.c.b16 %v1846, %v1841
        %v2177 = vpack.c.b16 %v1847, %v1842
        %v2178 = vpack.c.b16 %v1848, %v1843
        %v2179 = vpack.c.b16 %v1849, %v1844
        %v2180 = vpack.c.b16 %v1850, %v1845
        %v2181 = vpack.c.b16 %v1856, %v1851
        %v2182 = vpack.c.b16 %v1857, %v1852
        %v2183 = vpack.c.b16 %v1858, %v1853
        %v2184 = vpack.c.b16 %v1859, %v1854
        %v2185 = vpack.c.b16 %v1860, %v1855
        %v2186 = vpack.c.b16 %v1866, %v1861
        %v2187 = vpack.c.b16 %v1867, %v1862
        %v2188 = vpack.c.b16 %v1868, %v1863
        %v2189 = vpack.c.b16 %v1869, %v1864
        %v2190 = vpack.c.b16 %v1870, %v1865
        %v2191 = vpack.c.b16 %v1876, %v1871
        %v2192 = vpack.c.b16 %v1877, %v1872
        %v2193 = vpack.c.b16 %v1878, %v1873
        %v2194 = vpack.c.b16 %v1879, %v1874
        %v2195 = vpack.c.b16 %v1880, %v1875
        %v2196 = vpack.c.b16 %v1886, %v1881
        %v2197 = vpack.c.b16 %v1887, %v1882
        %v2198 = vpack.c.b16 %v1888, %v1883
        %v2199 = vpack.c.b16 %v1889, %v1884
        %v2200 = vpack.c.b16 %v1890, %v1885
        %v2201 = vpack.c.b16 %v1896, %v1891
        %v2202 = vpack.c.b16 %v1897, %v1892
        %v2203 = vpack.c.b16 %v1898, %v1893
        %v2204 = vpack.c.b16 %v1899, %v1894
        %v2205 = vpack.c.b16 %v1900, %v1895
        %v2206 = vpack.c.b16 %v1906, %v1901
        %v2207 = vpack.c.b16 %v1907, %v1902
        %v2208 = vpack.c.b16 %v1908, %v1903
        %v2209 = vpack.c.b16 %v1909, %v1904
        %v2210 = vpack.c.b16 %v1910, %v1905
        %v2211 = vpack.c.b16 %v1916, %v1911
        %v2212 = vpack.c.b16 %v1917, %v1912
        %v2213 = vpack.c.b16 %v1918, %v1913
        %v2214 = vpack.c.b16 %v1919, %v1914
        %v2215 = vpack.c.b16 %v1920, %v1915
        %v2216 = vpack.c.b16 %v1926, %v1921
        %v2217 = vpack.c.b16 %v1927, %v1922
        %v2218 = vpack.c.b16 %v1928, %v1923
        %v2219 = vpack.c.b16 %v1929, %v1924
        %v2220 = vpack.c.b16 %v1930, %v1925
        %v2221 = vpack.c.b16 %v1936, %v1931
        %v2222 = vpack.c.b16 %v1937, %v1932
        %v2223 = vpack.c.b16 %v1938, %v1933
        %v2224 = vpack.c.b16 %v1939, %v1934
        %v2225 = vpack.c.b16 %v1940, %v1935
        %v2226 = vpack.c.b16 %v1946, %v1941
        %v2227 = vpack.c.b16 %v1947, %v1942
        %v2228 = vpack.c.b16 %v1948, %v1943
        %v2229 = vpack.c.b16 %v1949, %v1944
        %v2230 = vpack.c.b16 %v1950, %v1945
        %v2231 = vpack.c.b16 %v1956, %v1951
        %v2232 = vpack.c.b16 %v1957, %v1952
        %v2233 = vpack.c.b16 %v1958, %v1953
        %v2234 = vpack.c.b16 %v1959, %v1954
        %v2235 = vpack.c.b16 %v1960, %v1955
        %v2236 = vpack.c.b16 %v1966, %v1961
        %v2237 = vpack.c.b16 %v1967, %v1962
        %v2238 = vpack.c.b16 %v1968, %v1963
        %v2239 = vpack.c.b16 %v1969, %v1964
        %v2240 = vpack.c.b16 %v1970, %v1965
        %v2241 = vpack.c.b16 %v1976, %v1971
        %v2242 = vpack.c.b16 %v1977, %v1972
        %v2243 = vpack.c.b16 %v1978, %v1973
        %v2244 = vpack.c.b16 %v1979, %v1974
        %v2245 = vpack.c.b16 %v1980, %v1975
        %v2246 = vpack.c.b16 %v1986, %v1981
        %v2247 = vpack.c.b16 %v1987, %v1982
        %v2248 = vpack.c.b16 %v1988, %v1983
        %v2249 = vpack.c.b16 %v1989, %v1984
        %v2250 = vpack.c.b16 %v1990, %v1985
        %v2251 = vpack.c.b16 %v1996, %v1991
        %v2252 = vpack.c.b16 %v1997, %v1992
        %v2253 = vpack.c.b16 %v1998, %v1993
        %v2254 = vpack.c.b16 %v1999, %v1994
        %v2255 = vpack.c.b16 %v2000, %v1995
        %v2256 = vpack.c.b16 %v2006, %v2001
        %v2257 = vpack.c.b16 %v2007, %v2002
        %v2258 = vpack.c.b16 %v2008, %v2003
        %v2259 = vpack.c.b16 %v2009, %v2004
        %v2260 = vpack.c.b16 %v2010, %v2005
        %v2261 = vpack.c.b16 %v2016, %v2011
        %v2262 = vpack.c.b16 %v2017, %v2012
        %v2263 = vpack.c.b16 %v2018, %v2013
        %v2264 = vpack.c.b16 %v2019, %v2014
        %v2265 = vpack.c.b16 %v2020, %v2015
        %v2266 = vpack.c.b16 %v2026, %v2021
        %v2267 = vpack.c.b16 %v2027, %v2022
        %v2268 = vpack.c.b16 %v2028, %v2023
        %v2269 = vpack.c.b16 %v2029, %v2024
        %v2270 = vpack.c.b16 %v2030, %v2025
        %2511 = vmatprep.subr.bf16.mxu0 %v2032
        %2512 = vmatpush1.bf16.msra.mxu0 %v2031
        %2513 = vmatprep.subr.bf16.mxu0 %v2037
        %2514 = vmatpush1.bf16.msra.mxu0 %v2036
        %2515 = vmatprep.subr.bf16.mxu0 %v2042
        %2516 = vmatpush1.bf16.msra.mxu0 %v2041
        %2517 = vmatprep.subr.bf16.mxu0 %v2047
        %2518 = vmatpush1.bf16.msra.mxu0 %v2046
        %2519 = vmatprep.subr.bf16.mxu0 %v2052
        %2520 = vmatpush1.bf16.msra.mxu0 %v2051
        %2521 = vmatprep.subr.bf16.mxu0 %v2057
        %2522 = vmatpush1.bf16.msra.mxu0 %v2056
        %2523 = vmatprep.subr.bf16.mxu0 %v2062
        %2524 = vmatpush1.bf16.msra.mxu0 %v2061
        %2525 = vmatprep.subr.bf16.mxu0 %v2067
        %2526 = vmatpush1.bf16.msra.mxu0 %v2066
        %2527 = vmatprep.subr.bf16.mxu0 %v2072
        %2528 = vmatpush1.bf16.msra.mxu0 %v2071
        %2529 = vmatprep.subr.bf16.mxu0 %v2077
        %2530 = vmatpush1.bf16.msra.mxu0 %v2076
        %2531 = vmatprep.subr.bf16.mxu0 %v2082
        %2532 = vmatpush1.bf16.msra.mxu0 %v2081
        %2533 = vmatprep.subr.bf16.mxu0 %v2087
        %2534 = vmatpush1.bf16.msra.mxu0 %v2086
        %2535 = vmatprep.subr.bf16.mxu0 %v2092
        %2536 = vmatpush1.bf16.msra.mxu0 %v2091
        %2537 = vmatprep.subr.bf16.mxu0 %v2097
        %2538 = vmatpush1.bf16.msra.mxu0 %v2096
        %2539 = vmatprep.subr.bf16.mxu0 %v2102
        %2540 = vmatpush1.bf16.msra.mxu0 %v2101
        %2541 = vmatprep.subr.bf16.mxu0 %v2107
        %2542 = vmatpush1.bf16.msra.mxu0 %v2106
        %2543 = vmatprep.mubr.bf16.mxu0 %v1072
        %2544 = vmatmul.mubr.bf16.gmra.mrb[0].mxu0 %v1071
        %v2545 = vpop.f32.mrb[0].mxu0
        %v2546 = vadd.f32 0.0, %v2545
        %v2547 = vpop.f32.mrb[0].mxu0
        %v2548 = vadd.f32 0.0, %v2547
        %v2549 = vpop.f32.mrb[0].mxu0
        %v2550 = vadd.f32 0.0, %v2549
        %v2551 = vpop.f32.mrb[0].mxu0
        %v2552 = vadd.f32 0.0, %v2551
        %2553 = vmatprep.mubr.bf16.mxu0 %v1078
        %2554 = vmatmul.mubr.bf16.gmra.mrb[0].mxu0 %v1077
        %v2555 = vpop.f32.mrb[0].mxu0
        %v2556 = vadd.f32 0.0, %v2555
        %v2557 = vpop.f32.mrb[0].mxu0
        %v2558 = vadd.f32 0.0, %v2557
        %v2559 = vpop.f32.mrb[0].mxu0
        %v2560 = vadd.f32 0.0, %v2559
        %v2561 = vpop.f32.mrb[0].mxu0
        %v2562 = vadd.f32 0.0, %v2561
        %2563 = vmatprep.mubr.bf16.mxu0 %v1084
        %2564 = vmatmul.mubr.bf16.gmra.mrb[0].mxu0 %v1083
        %v2565 = vpop.f32.mrb[0].mxu0
        %v2566 = vadd.f32 0.0, %v2565
        %v2567 = vpop.f32.mrb[0].mxu0
        %v2568 = vadd.f32 0.0, %v2567
        %v2569 = vpop.f32.mrb[0].mxu0
        %v2570 = vadd.f32 0.0, %v2569
        %v2571 = vpop.f32.mrb[0].mxu0
        %v2572 = vadd.f32 0.0, %v2571
        %2573 = vmatprep.mubr.bf16.mxu0 %v1090
        %2574 = vmatmul.mubr.bf16.gmra.mrb[0].mxu0 %v1089
        %v2575 = vpop.f32.mrb[0].mxu0
        %v2576 = vadd.f32 0.0, %v2575
        %v2577 = vpop.f32.mrb[0].mxu0
        %v2578 = vadd.f32 0.0, %v2577
        %v2579 = vpop.f32.mrb[0].mxu0
        %v2580 = vadd.f32 0.0, %v2579
        %v2581 = vpop.f32.mrb[0].mxu0
        %v2582 = vadd.f32 0.0, %v2581
        %2583 = vmatprep.mubr.bf16.mxu0 %v1096
        %2584 = vmatmul.mubr.bf16.gmra.mrb[0].mxu0 %v1095
        %v2585 = vpop.f32.mrb[0].mxu0
        %v2586 = vadd.f32 0.0, %v2585
        %v2587 = vpop.f32.mrb[0].mxu0
        %v2588 = vadd.f32 0.0, %v2587
        %v2589 = vpop.f32.mrb[0].mxu0
        %v2590 = vadd.f32 0.0, %v2589
        %v2591 = vpop.f32.mrb[0].mxu0
        %v2592 = vadd.f32 0.0, %v2591
        %2593 = vmatprep.mubr.bf16.mxu0 %v1102
        %2594 = vmatmul.mubr.bf16.gmra.mrb[0].mxu0 %v1101
        %v2595 = vpop.f32.mrb[0].mxu0
        %v2596 = vadd.f32 0.0, %v2595
        %v2597 = vpop.f32.mrb[0].mxu0
        %v2598 = vadd.f32 0.0, %v2597
        %v2599 = vpop.f32.mrb[0].mxu0
        %v2600 = vadd.f32 0.0, %v2599
        %v2601 = vpop.f32.mrb[0].mxu0
        %v2602 = vadd.f32 0.0, %v2601
        %2603 = vmatprep.mubr.bf16.mxu0 %v1108
        %2604 = vmatmul.mubr.bf16.gmra.mrb[0].mxu0 %v1107
        %v2605 = vpop.f32.mrb[0].mxu0
        %v2606 = vadd.f32 0.0, %v2605
        %v2607 = vpop.f32.mrb[0].mxu0
        %v2608 = vadd.f32 0.0, %v2607
        %v2609 = vpop.f32.mrb[0].mxu0
        %v2610 = vadd.f32 0.0, %v2609
        %v2611 = vpop.f32.mrb[0].mxu0
        %v2612 = vadd.f32 0.0, %v2611
        %2613 = vmatprep.mubr.bf16.mxu0 %v1114
        %2614 = vmatmul.mubr.bf16.gmra.mrb[0].mxu0 %v1113
        %v2615 = vpop.f32.mrb[0].mxu0
        %v2616 = vadd.f32 0.0, %v2615
        %v2617 = vpop.f32.mrb[0].mxu0
        %v2618 = vadd.f32 0.0, %v2617
        %v2619 = vpop.f32.mrb[0].mxu0
        %v2620 = vadd.f32 0.0, %v2619
        %v2621 = vpop.f32.mrb[0].mxu0
        %v2622 = vadd.f32 0.0, %v2621
        %2623 = vmatprep.mubr.bf16.mxu0 %v1120
        %2624 = vmatmul.mubr.bf16.gmra.mrb[0].mxu0 %v1119
        %v2625 = vpop.f32.mrb[0].mxu0
        %v2626 = vadd.f32 0.0, %v2625
        %v2627 = vpop.f32.mrb[0].mxu0
        %v2628 = vadd.f32 0.0, %v2627
        %v2629 = vpop.f32.mrb[0].mxu0
        %v2630 = vadd.f32 0.0, %v2629
        %v2631 = vpop.f32.mrb[0].mxu0
        %v2632 = vadd.f32 0.0, %v2631
        %2633 = vmatprep.mubr.bf16.mxu0 %v1126
        %2634 = vmatmul.mubr.bf16.gmra.mrb[0].mxu0 %v1125
        %v2635 = vpop.f32.mrb[0].mxu0
        %v2636 = vadd.f32 0.0, %v2635
        %v2637 = vpop.f32.mrb[0].mxu0
        %v2638 = vadd.f32 0.0, %v2637
        %v2639 = vpop.f32.mrb[0].mxu0
        %v2640 = vadd.f32 0.0, %v2639
        %v2641 = vpop.f32.mrb[0].mxu0
        %v2642 = vadd.f32 0.0, %v2641
        %2643 = vmatprep.mubr.bf16.mxu0 %v1132
        %2644 = vmatmul.mubr.bf16.gmra.mrb[0].mxu0 %v1131
        %v2645 = vpop.f32.mrb[0].mxu0
        %v2646 = vadd.f32 0.0, %v2645
        %v2647 = vpop.f32.mrb[0].mxu0
        %v2648 = vadd.f32 0.0, %v2647
        %v2649 = vpop.f32.mrb[0].mxu0
        %v2650 = vadd.f32 0.0, %v2649
        %v2651 = vpop.f32.mrb[0].mxu0
        %v2652 = vadd.f32 0.0, %v2651
        %2653 = vmatprep.mubr.bf16.mxu0 %v1138
        %2654 = vmatmul.mubr.bf16.gmra.mrb[0].mxu0 %v1137
        %v2655 = vpop.f32.mrb[0].mxu0
        %v2656 = vadd.f32 0.0, %v2655
        %v2657 = vpop.f32.mrb[0].mxu0
        %v2658 = vadd.f32 0.0, %v2657
        %v2659 = vpop.f32.mrb[0].mxu0
        %v2660 = vadd.f32 0.0, %v2659
        %v2661 = vpop.f32.mrb[0].mxu0
        %v2662 = vadd.f32 0.0, %v2661
        %2663 = vmatprep.mubr.bf16.mxu0 %v1144
        %2664 = vmatmul.mubr.bf16.gmra.mrb[0].mxu0 %v1143
        %v2665 = vpop.f32.mrb[0].mxu0
        %v2666 = vadd.f32 0.0, %v2665
        %v2667 = vpop.f32.mrb[0].mxu0
        %v2668 = vadd.f32 0.0, %v2667
        %v2669 = vpop.f32.mrb[0].mxu0
        %v2670 = vadd.f32 0.0, %v2669
        %v2671 = vpop.f32.mrb[0].mxu0
        %v2672 = vadd.f32 0.0, %v2671
        %2673 = vmatprep.mubr.bf16.mxu0 %v1150
        %2674 = vmatmul.mubr.bf16.gmra.mrb[0].mxu0 %v1149
        %v2675 = vpop.f32.mrb[0].mxu0
        %v2676 = vadd.f32 0.0, %v2675
        %v2677 = vpop.f32.mrb[0].mxu0
        %v2678 = vadd.f32 0.0, %v2677
        %v2679 = vpop.f32.mrb[0].mxu0
        %v2680 = vadd.f32 0.0, %v2679
        %v2681 = vpop.f32.mrb[0].mxu0
        %v2682 = vadd.f32 0.0, %v2681
        %2683 = vmatprep.mubr.bf16.mxu0 %v1156
        %2684 = vmatmul.mubr.bf16.gmra.mrb[0].mxu0 %v1155
        %v2685 = vpop.f32.mrb[0].mxu0
        %v2686 = vadd.f32 0.0, %v2685
        %v2687 = vpop.f32.mrb[0].mxu0
        %v2688 = vadd.f32 0.0, %v2687
        %v2689 = vpop.f32.mrb[0].mxu0
        %v2690 = vadd.f32 0.0, %v2689
        %v2691 = vpop.f32.mrb[0].mxu0
        %v2692 = vadd.f32 0.0, %v2691
        %2693 = vmatprep.mubr.bf16.mxu0 %v1162
        %2694 = vmatmul.mubr.bf16.gmra.mrb[0].mxu0 %v1161
        %v2695 = vpop.f32.mrb[0].mxu0
        %v2696 = vadd.f32 0.0, %v2695
        %v2697 = vpop.f32.mrb[0].mxu0
        %v2698 = vadd.f32 0.0, %v2697
        %v2699 = vpop.f32.mrb[0].mxu0
        %v2700 = vadd.f32 0.0, %v2699
        %v2701 = vpop.f32.mrb[0].mxu0
        %v2702 = vadd.f32 0.0, %v2701
        %2703 = vdwg.mxu0
        %2704 = vmatprep.subr.bf16.mxu0 %v2112
        %2705 = vmatpush1.bf16.msra.mxu0 %v2111
        %2706 = vmatprep.subr.bf16.mxu0 %v2117
        %2707 = vmatpush1.bf16.msra.mxu0 %v2116
        %2708 = vmatprep.subr.bf16.mxu0 %v2122
        %2709 = vmatpush1.bf16.msra.mxu0 %v2121
        %2710 = vmatprep.subr.bf16.mxu0 %v2127
        %2711 = vmatpush1.bf16.msra.mxu0 %v2126
        %2712 = vmatprep.subr.bf16.mxu0 %v2132
        %2713 = vmatpush1.bf16.msra.mxu0 %v2131
        %2714 = vmatprep.subr.bf16.mxu0 %v2137
        %2715 = vmatpush1.bf16.msra.mxu0 %v2136
        %2716 = vmatprep.subr.bf16.mxu0 %v2142
        %2717 = vmatpush1.bf16.msra.mxu0 %v2141
        %2718 = vmatprep.subr.bf16.mxu0 %v2147
        %2719 = vmatpush1.bf16.msra.mxu0 %v2146
        %2720 = vmatprep.subr.bf16.mxu0 %v2152
        %2721 = vmatpush1.bf16.msra.mxu0 %v2151
        %2722 = vmatprep.subr.bf16.mxu0 %v2157
        %2723 = vmatpush1.bf16.msra.mxu0 %v2156
        %2724 = vmatprep.subr.bf16.mxu0 %v2162
        %2725 = vmatpush1.bf16.msra.mxu0 %v2161
        %2726 = vmatprep.subr.bf16.mxu0 %v2167
        %2727 = vmatpush1.bf16.msra.mxu0 %v2166
        %2728 = vmatprep.subr.bf16.mxu0 %v2172
        %2729 = vmatpush1.bf16.msra.mxu0 %v2171
        %2730 = vmatprep.subr.bf16.mxu0 %v2177
        %2731 = vmatpush1.bf16.msra.mxu0 %v2176
        %2732 = vmatprep.subr.bf16.mxu0 %v2182
        %2733 = vmatpush1.bf16.msra.mxu0 %v2181
        %2734 = vmatprep.subr.bf16.mxu0 %v2187
        %2735 = vmatpush1.bf16.msra.mxu0 %v2186
        %2736 = vmatprep.mubr.bf16.mxu0 %v1074
        %2737 = vmatmul.mubr.bf16.gmra.mrb[0].mxu0 %v1073
        %v2738 = vpop.f32.mrb[0].mxu0
        %v2739 = vadd.f32 %v2546, %v2738
        %v2740 = vpop.f32.mrb[0].mxu0
        %v2741 = vadd.f32 %v2548, %v2740
        %v2742 = vpop.f32.mrb[0].mxu0
        %v2743 = vadd.f32 %v2550, %v2742
        %v2744 = vpop.f32.mrb[0].mxu0
        %v2745 = vadd.f32 %v2552, %v2744
        %2746 = vmatprep.mubr.bf16.mxu0 %v1080
        %2747 = vmatmul.mubr.bf16.gmra.mrb[0].mxu0 %v1079
        %v2748 = vpop.f32.mrb[0].mxu0
        %v2749 = vadd.f32 %v2556, %v2748
        %v2750 = vpop.f32.mrb[0].mxu0
        %v2751 = vadd.f32 %v2558, %v2750
        %v2752 = vpop.f32.mrb[0].mxu0
        %v2753 = vadd.f32 %v2560, %v2752
        %v2754 = vpop.f32.mrb[0].mxu0
        %v2755 = vadd.f32 %v2562, %v2754
        %2756 = vmatprep.mubr.bf16.mxu0 %v1086
        %2757 = vmatmul.mubr.bf16.gmra.mrb[0].mxu0 %v1085
        %v2758 = vpop.f32.mrb[0].mxu0
        %v2759 = vadd.f32 %v2566, %v2758
        %v2760 = vpop.f32.mrb[0].mxu0
        %v2761 = vadd.f32 %v2568, %v2760
        %v2762 = vpop.f32.mrb[0].mxu0
        %v2763 = vadd.f32 %v2570, %v2762
        %v2764 = vpop.f32.mrb[0].mxu0
        %v2765 = vadd.f32 %v2572, %v2764
        %2766 = vmatprep.mubr.bf16.mxu0 %v1092
        %2767 = vmatmul.mubr.bf16.gmra.mrb[0].mxu0 %v1091
        %v2768 = vpop.f32.mrb[0].mxu0
        %v2769 = vadd.f32 %v2576, %v2768
        %v2770 = vpop.f32.mrb[0].mxu0
        %v2771 = vadd.f32 %v2578, %v2770
        %v2772 = vpop.f32.mrb[0].mxu0
        %v2773 = vadd.f32 %v2580, %v2772
        %v2774 = vpop.f32.mrb[0].mxu0
        %v2775 = vadd.f32 %v2582, %v2774
        %2776 = vmatprep.mubr.bf16.mxu0 %v1098
        %2777 = vmatmul.mubr.bf16.gmra.mrb[0].mxu0 %v1097
        %v2778 = vpop.f32.mrb[0].mxu0
        %v2779 = vadd.f32 %v2586, %v2778
        %v2780 = vpop.f32.mrb[0].mxu0
        %v2781 = vadd.f32 %v2588, %v2780
        %v2782 = vpop.f32.mrb[0].mxu0
        %v2783 = vadd.f32 %v2590, %v2782
        %v2784 = vpop.f32.mrb[0].mxu0
        %v2785 = vadd.f32 %v2592, %v2784
        %2786 = vmatprep.mubr.bf16.mxu0 %v1104
        %2787 = vmatmul.mubr.bf16.gmra.mrb[0].mxu0 %v1103
        %v2788 = vpop.f32.mrb[0].mxu0
        %v2789 = vadd.f32 %v2596, %v2788
        %v2790 = vpop.f32.mrb[0].mxu0
        %v2791 = vadd.f32 %v2598, %v2790
        %v2792 = vpop.f32.mrb[0].mxu0
        %v2793 = vadd.f32 %v2600, %v2792
        %v2794 = vpop.f32.mrb[0].mxu0
        %v2795 = vadd.f32 %v2602, %v2794
        %2796 = vmatprep.mubr.bf16.mxu0 %v1110
        %2797 = vmatmul.mubr.bf16.gmra.mrb[0].mxu0 %v1109
        %v2798 = vpop.f32.mrb[0].mxu0
        %v2799 = vadd.f32 %v2606, %v2798
        %v2800 = vpop.f32.mrb[0].mxu0
        %v2801 = vadd.f32 %v2608, %v2800
        %v2802 = vpop.f32.mrb[0].mxu0
        %v2803 = vadd.f32 %v2610, %v2802
        %v2804 = vpop.f32.mrb[0].mxu0
        %v2805 = vadd.f32 %v2612, %v2804
        %2806 = vmatprep.mubr.bf16.mxu0 %v1116
        %2807 = vmatmul.mubr.bf16.gmra.mrb[0].mxu0 %v1115
        %v2808 = vpop.f32.mrb[0].mxu0
        %v2809 = vadd.f32 %v2616, %v2808
        %v2810 = vpop.f32.mrb[0].mxu0
        %v2811 = vadd.f32 %v2618, %v2810
        %v2812 = vpop.f32.mrb[0].mxu0
        %v2813 = vadd.f32 %v2620, %v2812
        %v2814 = vpop.f32.mrb[0].mxu0
        %v2815 = vadd.f32 %v2622, %v2814
        %2816 = vmatprep.mubr.bf16.mxu0 %v1122
        %2817 = vmatmul.mubr.bf16.gmra.mrb[0].mxu0 %v1121
        %v2818 = vpop.f32.mrb[0].mxu0
        %v2819 = vadd.f32 %v2626, %v2818
        %v2820 = vpop.f32.mrb[0].mxu0
        %v2821 = vadd.f32 %v2628, %v2820
        %v2822 = vpop.f32.mrb[0].mxu0
        %v2823 = vadd.f32 %v2630, %v2822
        %v2824 = vpop.f32.mrb[0].mxu0
        %v2825 = vadd.f32 %v2632, %v2824
        %2826 = vmatprep.mubr.bf16.mxu0 %v1128
        %2827 = vmatmul.mubr.bf16.gmra.mrb[0].mxu0 %v1127
        %v2828 = vpop.f32.mrb[0].mxu0
        %v2829 = vadd.f32 %v2636, %v2828
        %v2830 = vpop.f32.mrb[0].mxu0
        %v2831 = vadd.f32 %v2638, %v2830
        %v2832 = vpop.f32.mrb[0].mxu0
        %v2833 = vadd.f32 %v2640, %v2832
        %v2834 = vpop.f32.mrb[0].mxu0
        %v2835 = vadd.f32 %v2642, %v2834
        %2836 = vmatprep.mubr.bf16.mxu0 %v1134
        %2837 = vmatmul.mubr.bf16.gmra.mrb[0].mxu0 %v1133
        %v2838 = vpop.f32.mrb[0].mxu0
        %v2839 = vadd.f32 %v2646, %v2838
        %v2840 = vpop.f32.mrb[0].mxu0
        %v2841 = vadd.f32 %v2648, %v2840
        %v2842 = vpop.f32.mrb[0].mxu0
        %v2843 = vadd.f32 %v2650, %v2842
        %v2844 = vpop.f32.mrb[0].mxu0
        %v2845 = vadd.f32 %v2652, %v2844
        %2846 = vmatprep.mubr.bf16.mxu0 %v1140
        %2847 = vmatmul.mubr.bf16.gmra.mrb[0].mxu0 %v1139
        %v2848 = vpop.f32.mrb[0].mxu0
        %v2849 = vadd.f32 %v2656, %v2848
        %v2850 = vpop.f32.mrb[0].mxu0
        %v2851 = vadd.f32 %v2658, %v2850
        %v2852 = vpop.f32.mrb[0].mxu0
        %v2853 = vadd.f32 %v2660, %v2852
        %v2854 = vpop.f32.mrb[0].mxu0
        %v2855 = vadd.f32 %v2662, %v2854
        %2856 = vmatprep.mubr.bf16.mxu0 %v1146
        %2857 = vmatmul.mubr.bf16.gmra.mrb[0].mxu0 %v1145
        %v2858 = vpop.f32.mrb[0].mxu0
        %v2859 = vadd.f32 %v2666, %v2858
        %v2860 = vpop.f32.mrb[0].mxu0
        %v2861 = vadd.f32 %v2668, %v2860
        %v2862 = vpop.f32.mrb[0].mxu0
        %v2863 = vadd.f32 %v2670, %v2862
        %v2864 = vpop.f32.mrb[0].mxu0
        %v2865 = vadd.f32 %v2672, %v2864
        %2866 = vmatprep.mubr.bf16.mxu0 %v1152
        %2867 = vmatmul.mubr.bf16.gmra.mrb[0].mxu0 %v1151
        %v2868 = vpop.f32.mrb[0].mxu0
        %v2869 = vadd.f32 %v2676, %v2868
        %v2870 = vpop.f32.mrb[0].mxu0
        %v2871 = vadd.f32 %v2678, %v2870
        %v2872 = vpop.f32.mrb[0].mxu0
        %v2873 = vadd.f32 %v2680, %v2872
        %v2874 = vpop.f32.mrb[0].mxu0
        %v2875 = vadd.f32 %v2682, %v2874
        %2876 = vmatprep.mubr.bf16.mxu0 %v1158
        %2877 = vmatmul.mubr.bf16.gmra.mrb[0].mxu0 %v1157
        %v2878 = vpop.f32.mrb[0].mxu0
        %v2879 = vadd.f32 %v2686, %v2878
        %v2880 = vpop.f32.mrb[0].mxu0
        %v2881 = vadd.f32 %v2688, %v2880
        %v2882 = vpop.f32.mrb[0].mxu0
        %v2883 = vadd.f32 %v2690, %v2882
        %v2884 = vpop.f32.mrb[0].mxu0
        %v2885 = vadd.f32 %v2692, %v2884
        %2886 = vmatprep.mubr.bf16.mxu0 %v1164
        %2887 = vmatmul.mubr.bf16.gmra.mrb[0].mxu0 %v1163
        %v2888 = vpop.f32.mrb[0].mxu0
        %v2889 = vadd.f32 %v2696, %v2888
        %v2890 = vpop.f32.mrb[0].mxu0
        %v2891 = vadd.f32 %v2698, %v2890
        %v2892 = vpop.f32.mrb[0].mxu0
        %v2893 = vadd.f32 %v2700, %v2892
        %v2894 = vpop.f32.mrb[0].mxu0
        %v2895 = vadd.f32 %v2702, %v2894
        %2896 = vdwg.mxu0
        %2897 = vmatprep.subr.bf16.mxu0 %v2192
        %2898 = vmatpush1.bf16.msra.mxu0 %v2191
        %2899 = vmatprep.subr.bf16.mxu0 %v2197
        %2900 = vmatpush1.bf16.msra.mxu0 %v2196
        %2901 = vmatprep.subr.bf16.mxu0 %v2202
        %2902 = vmatpush1.bf16.msra.mxu0 %v2201
        %2903 = vmatprep.subr.bf16.mxu0 %v2207
        %2904 = vmatpush1.bf16.msra.mxu0 %v2206
        %2905 = vmatprep.subr.bf16.mxu0 %v2212
        %2906 = vmatpush1.bf16.msra.mxu0 %v2211
        %2907 = vmatprep.subr.bf16.mxu0 %v2217
        %2908 = vmatpush1.bf16.msra.mxu0 %v2216
        %2909 = vmatprep.subr.bf16.mxu0 %v2222
        %2910 = vmatpush1.bf16.msra.mxu0 %v2221
        %2911 = vmatprep.subr.bf16.mxu0 %v2227
        %2912 = vmatpush1.bf16.msra.mxu0 %v2226
        %2913 = vmatprep.subr.bf16.mxu0 %v2232
        %2914 = vmatpush1.bf16.msra.mxu0 %v2231
        %2915 = vmatprep.subr.bf16.mxu0 %v2237
        %2916 = vmatpush1.bf16.msra.mxu0 %v2236
        %2917 = vmatprep.subr.bf16.mxu0 %v2242
        %2918 = vmatpush1.bf16.msra.mxu0 %v2241
        %2919 = vmatprep.subr.bf16.mxu0 %v2247
        %2920 = vmatpush1.bf16.msra.mxu0 %v2246
        %2921 = vmatprep.subr.bf16.mxu0 %v2252
        %2922 = vmatpush1.bf16.msra.mxu0 %v2251
        %2923 = vmatprep.subr.bf16.mxu0 %v2257
        %2924 = vmatpush1.bf16.msra.mxu0 %v2256
        %2925 = vmatprep.subr.bf16.mxu0 %v2262
        %2926 = vmatpush1.bf16.msra.mxu0 %v2261
        %2927 = vmatprep.subr.bf16.mxu0 %v2267
        %2928 = vmatpush1.bf16.msra.mxu0 %v2266
        %2929 = vmatprep.mubr.bf16.mxu0 %v1076
        %2930 = vmatmul.mubr.bf16.gmra.mrb[0].mxu0 %v1075
        %v2931 = vpop.f32.mrb[0].mxu0
        %v2932 = vadd.f32 %v2739, %v2931
        %v2933 = vpop.f32.mrb[0].mxu0
        %v2934 = vadd.f32 %v2741, %v2933
        %v2935 = vpop.f32.mrb[0].mxu0
        %v2936 = vadd.f32 %v2743, %v2935
        %v2937 = vpop.f32.mrb[0].mxu0
        %v2938 = vadd.f32 %v2745, %v2937
        %2939 = vmatprep.mubr.bf16.mxu0 %v1082
        %2940 = vmatmul.mubr.bf16.gmra.mrb[0].mxu0 %v1081
        %v2941 = vpop.f32.mrb[0].mxu0
        %v2942 = vadd.f32 %v2749, %v2941
        %v2943 = vpop.f32.mrb[0].mxu0
        %v2944 = vadd.f32 %v2751, %v2943
        %v2945 = vpop.f32.mrb[0].mxu0
        %v2946 = vadd.f32 %v2753, %v2945
        %v2947 = vpop.f32.mrb[0].mxu0
        %v2948 = vadd.f32 %v2755, %v2947
        %2949 = vmatprep.mubr.bf16.mxu0 %v1088
        %2950 = vmatmul.mubr.bf16.gmra.mrb[0].mxu0 %v1087
        %v2951 = vpop.f32.mrb[0].mxu0
        %v2952 = vadd.f32 %v2759, %v2951
        %v2953 = vpop.f32.mrb[0].mxu0
        %v2954 = vadd.f32 %v2761, %v2953
        %v2955 = vpop.f32.mrb[0].mxu0
        %v2956 = vadd.f32 %v2763, %v2955
        %v2957 = vpop.f32.mrb[0].mxu0
        %v2958 = vadd.f32 %v2765, %v2957
        %2959 = vmatprep.mubr.bf16.mxu0 %v1094
        %2960 = vmatmul.mubr.bf16.gmra.mrb[0].mxu0 %v1093
        %v2961 = vpop.f32.mrb[0].mxu0
        %v2962 = vadd.f32 %v2769, %v2961
        %v2963 = vpop.f32.mrb[0].mxu0
        %v2964 = vadd.f32 %v2771, %v2963
        %v2965 = vpop.f32.mrb[0].mxu0
        %v2966 = vadd.f32 %v2773, %v2965
        %v2967 = vpop.f32.mrb[0].mxu0
        %v2968 = vadd.f32 %v2775, %v2967
        %2969 = vmatprep.mubr.bf16.mxu0 %v1100
        %2970 = vmatmul.mubr.bf16.gmra.mrb[0].mxu0 %v1099
        %v2971 = vpop.f32.mrb[0].mxu0
        %v2972 = vadd.f32 %v2779, %v2971
        %v2973 = vpop.f32.mrb[0].mxu0
        %v2974 = vadd.f32 %v2781, %v2973
        %v2975 = vpop.f32.mrb[0].mxu0
        %v2976 = vadd.f32 %v2783, %v2975
        %v2977 = vpop.f32.mrb[0].mxu0
        %v2978 = vadd.f32 %v2785, %v2977
        %2979 = vmatprep.mubr.bf16.mxu0 %v1106
        %2980 = vmatmul.mubr.bf16.gmra.mrb[0].mxu0 %v1105
        %v2981 = vpop.f32.mrb[0].mxu0
        %v2982 = vadd.f32 %v2789, %v2981
        %v2983 = vpop.f32.mrb[0].mxu0
        %v2984 = vadd.f32 %v2791, %v2983
        %v2985 = vpop.f32.mrb[0].mxu0
        %v2986 = vadd.f32 %v2793, %v2985
        %v2987 = vpop.f32.mrb[0].mxu0
        %v2988 = vadd.f32 %v2795, %v2987
        %2989 = vmatprep.mubr.bf16.mxu0 %v1112
        %2990 = vmatmul.mubr.bf16.gmra.mrb[0].mxu0 %v1111
        %v2991 = vpop.f32.mrb[0].mxu0
        %v2992 = vadd.f32 %v2799, %v2991
        %v2993 = vpop.f32.mrb[0].mxu0
        %v2994 = vadd.f32 %v2801, %v2993
        %v2995 = vpop.f32.mrb[0].mxu0
        %v2996 = vadd.f32 %v2803, %v2995
        %v2997 = vpop.f32.mrb[0].mxu0
        %v2998 = vadd.f32 %v2805, %v2997
        %2999 = vmatprep.mubr.bf16.mxu0 %v1118
        %3000 = vmatmul.mubr.bf16.gmra.mrb[0].mxu0 %v1117
        %v3001 = vpop.f32.mrb[0].mxu0
        %v3002 = vadd.f32 %v2809, %v3001
        %v3003 = vpop.f32.mrb[0].mxu0
        %v3004 = vadd.f32 %v2811, %v3003
        %v3005 = vpop.f32.mrb[0].mxu0
        %v3006 = vadd.f32 %v2813, %v3005
        %v3007 = vpop.f32.mrb[0].mxu0
        %v3008 = vadd.f32 %v2815, %v3007
        %3009 = vmatprep.mubr.bf16.mxu0 %v1124
        %3010 = vmatmul.mubr.bf16.gmra.mrb[0].mxu0 %v1123
        %v3011 = vpop.f32.mrb[0].mxu0
        %v3012 = vadd.f32 %v2819, %v3011
        %v3013 = vpop.f32.mrb[0].mxu0
        %v3014 = vadd.f32 %v2821, %v3013
        %v3015 = vpop.f32.mrb[0].mxu0
        %v3016 = vadd.f32 %v2823, %v3015
        %v3017 = vpop.f32.mrb[0].mxu0
        %v3018 = vadd.f32 %v2825, %v3017
        %3019 = vmatprep.mubr.bf16.mxu0 %v1130
        %3020 = vmatmul.mubr.bf16.gmra.mrb[0].mxu0 %v1129
        %v3021 = vpop.f32.mrb[0].mxu0
        %v3022 = vadd.f32 %v2829, %v3021
        %v3023 = vpop.f32.mrb[0].mxu0
        %v3024 = vadd.f32 %v2831, %v3023
        %v3025 = vpop.f32.mrb[0].mxu0
        %v3026 = vadd.f32 %v2833, %v3025
        %v3027 = vpop.f32.mrb[0].mxu0
        %v3028 = vadd.f32 %v2835, %v3027
        %3029 = vmatprep.mubr.bf16.mxu0 %v1136
        %3030 = vmatmul.mubr.bf16.gmra.mrb[0].mxu0 %v1135
        %v3031 = vpop.f32.mrb[0].mxu0
        %v3032 = vadd.f32 %v2839, %v3031
        %v3033 = vpop.f32.mrb[0].mxu0
        %v3034 = vadd.f32 %v2841, %v3033
        %v3035 = vpop.f32.mrb[0].mxu0
        %v3036 = vadd.f32 %v2843, %v3035
        %v3037 = vpop.f32.mrb[0].mxu0
        %v3038 = vadd.f32 %v2845, %v3037
        %3039 = vmatprep.mubr.bf16.mxu0 %v1142
        %3040 = vmatmul.mubr.bf16.gmra.mrb[0].mxu0 %v1141
        %v3041 = vpop.f32.mrb[0].mxu0
        %v3042 = vadd.f32 %v2849, %v3041
        %v3043 = vpop.f32.mrb[0].mxu0
        %v3044 = vadd.f32 %v2851, %v3043
        %v3045 = vpop.f32.mrb[0].mxu0
        %v3046 = vadd.f32 %v2853, %v3045
        %v3047 = vpop.f32.mrb[0].mxu0
        %v3048 = vadd.f32 %v2855, %v3047
        %3049 = vmatprep.mubr.bf16.mxu0 %v1148
        %3050 = vmatmul.mubr.bf16.gmra.mrb[0].mxu0 %v1147
        %v3051 = vpop.f32.mrb[0].mxu0
        %v3052 = vadd.f32 %v2859, %v3051
        %v3053 = vpop.f32.mrb[0].mxu0
        %v3054 = vadd.f32 %v2861, %v3053
        %v3055 = vpop.f32.mrb[0].mxu0
        %v3056 = vadd.f32 %v2863, %v3055
        %v3057 = vpop.f32.mrb[0].mxu0
        %v3058 = vadd.f32 %v2865, %v3057
        %3059 = vmatprep.mubr.bf16.mxu0 %v1154
        %3060 = vmatmul.mubr.bf16.gmra.mrb[0].mxu0 %v1153
        %v3061 = vpop.f32.mrb[0].mxu0
        %v3062 = vadd.f32 %v2869, %v3061
        %v3063 = vpop.f32.mrb[0].mxu0
        %v3064 = vadd.f32 %v2871, %v3063
        %v3065 = vpop.f32.mrb[0].mxu0
        %v3066 = vadd.f32 %v2873, %v3065
        %v3067 = vpop.f32.mrb[0].mxu0
        %v3068 = vadd.f32 %v2875, %v3067
        %3069 = vmatprep.mubr.bf16.mxu0 %v1160
        %3070 = vmatmul.mubr.bf16.gmra.mrb[0].mxu0 %v1159
        %v3071 = vpop.f32.mrb[0].mxu0
        %v3072 = vadd.f32 %v2879, %v3071
        %v3073 = vpop.f32.mrb[0].mxu0
        %v3074 = vadd.f32 %v2881, %v3073
        %v3075 = vpop.f32.mrb[0].mxu0
        %v3076 = vadd.f32 %v2883, %v3075
        %v3077 = vpop.f32.mrb[0].mxu0
        %v3078 = vadd.f32 %v2885, %v3077
        %3079 = vmatprep.mubr.bf16.mxu0 %v1166
        %3080 = vmatmul.mubr.bf16.gmra.mrb[0].mxu0 %v1165
        %v3081 = vpop.f32.mrb[0].mxu0
        %v3082 = vadd.f32 %v2889, %v3081
        %v3083 = vpop.f32.mrb[0].mxu0
        %v3084 = vadd.f32 %v2891, %v3083
        %v3085 = vpop.f32.mrb[0].mxu0
        %v3086 = vadd.f32 %v2893, %v3085
        %v3087 = vpop.f32.mrb[0].mxu0
        %v3088 = vadd.f32 %v2895, %v3087
        %3089 = vdwg.mxu0
        %3090 = vmatprep.subr.bf16.mxu0 %v2034
        %3091 = vmatpush1.bf16.msra.mxu0 %v2033
        %3092 = vmatprep.subr.bf16.mxu0 %v2039
        %3093 = vmatpush1.bf16.msra.mxu0 %v2038
        %3094 = vmatprep.subr.bf16.mxu0 %v2044
        %3095 = vmatpush1.bf16.msra.mxu0 %v2043
        %3096 = vmatprep.subr.bf16.mxu0 %v2049
        %3097 = vmatpush1.bf16.msra.mxu0 %v2048
        %3098 = vmatprep.subr.bf16.mxu0 %v2054
        %3099 = vmatpush1.bf16.msra.mxu0 %v2053
        %3100 = vmatprep.subr.bf16.mxu0 %v2059
        %3101 = vmatpush1.bf16.msra.mxu0 %v2058
        %3102 = vmatprep.subr.bf16.mxu0 %v2064
        %3103 = vmatpush1.bf16.msra.mxu0 %v2063
        %3104 = vmatprep.subr.bf16.mxu0 %v2069
        %3105 = vmatpush1.bf16.msra.mxu0 %v2068
        %3106 = vmatprep.subr.bf16.mxu0 %v2074
        %3107 = vmatpush1.bf16.msra.mxu0 %v2073
        %3108 = vmatprep.subr.bf16.mxu0 %v2079
        %3109 = vmatpush1.bf16.msra.mxu0 %v2078
        %3110 = vmatprep.subr.bf16.mxu0 %v2084
        %3111 = vmatpush1.bf16.msra.mxu0 %v2083
        %3112 = vmatprep.subr.bf16.mxu0 %v2089
        %3113 = vmatpush1.bf16.msra.mxu0 %v2088
        %3114 = vmatprep.subr.bf16.mxu0 %v2094
        %3115 = vmatpush1.bf16.msra.mxu0 %v2093
        %3116 = vmatprep.subr.bf16.mxu0 %v2099
        %3117 = vmatpush1.bf16.msra.mxu0 %v2098
        %3118 = vmatprep.subr.bf16.mxu0 %v2104
        %3119 = vmatpush1.bf16.msra.mxu0 %v2103
        %3120 = vmatprep.subr.bf16.mxu0 %v2109
        %3121 = vmatpush1.bf16.msra.mxu0 %v2108
        %3122 = vmatprep.mubr.bf16.mxu0 %v1072
        %3123 = vmatmul.mubr.bf16.gmra.mrb[0].mxu0 %v1071
        %v3124 = vpop.f32.mrb[0].mxu0
        %v3125 = vadd.f32 0.0, %v3124
        %v3126 = vpop.f32.mrb[0].mxu0
        %v3127 = vadd.f32 0.0, %v3126
        %v3128 = vpop.f32.mrb[0].mxu0
        %v3129 = vadd.f32 0.0, %v3128
        %v3130 = vpop.f32.mrb[0].mxu0
        %v3131 = vadd.f32 0.0, %v3130
        %3132 = vmatprep.mubr.bf16.mxu0 %v1078
        %3133 = vmatmul.mubr.bf16.gmra.mrb[0].mxu0 %v1077
        %v3134 = vpop.f32.mrb[0].mxu0
        %v3135 = vadd.f32 0.0, %v3134
        %v3136 = vpop.f32.mrb[0].mxu0
        %v3137 = vadd.f32 0.0, %v3136
        %v3138 = vpop.f32.mrb[0].mxu0
        %v3139 = vadd.f32 0.0, %v3138
        %v3140 = vpop.f32.mrb[0].mxu0
        %v3141 = vadd.f32 0.0, %v3140
        %3142 = vmatprep.mubr.bf16.mxu0 %v1084
        %3143 = vmatmul.mubr.bf16.gmra.mrb[0].mxu0 %v1083
        %v3144 = vpop.f32.mrb[0].mxu0
        %v3145 = vadd.f32 0.0, %v3144
        %v3146 = vpop.f32.mrb[0].mxu0
        %v3147 = vadd.f32 0.0, %v3146
        %v3148 = vpop.f32.mrb[0].mxu0
        %v3149 = vadd.f32 0.0, %v3148
        %v3150 = vpop.f32.mrb[0].mxu0
        %v3151 = vadd.f32 0.0, %v3150
        %3152 = vmatprep.mubr.bf16.mxu0 %v1090
        %3153 = vmatmul.mubr.bf16.gmra.mrb[0].mxu0 %v1089
        %v3154 = vpop.f32.mrb[0].mxu0
        %v3155 = vadd.f32 0.0, %v3154
        %v3156 = vpop.f32.mrb[0].mxu0
        %v3157 = vadd.f32 0.0, %v3156
        %v3158 = vpop.f32.mrb[0].mxu0
        %v3159 = vadd.f32 0.0, %v3158
        %v3160 = vpop.f32.mrb[0].mxu0
        %v3161 = vadd.f32 0.0, %v3160
        %3162 = vmatprep.mubr.bf16.mxu0 %v1096
        %3163 = vmatmul.mubr.bf16.gmra.mrb[0].mxu0 %v1095
        %v3164 = vpop.f32.mrb[0].mxu0
        %v3165 = vadd.f32 0.0, %v3164
        %v3166 = vpop.f32.mrb[0].mxu0
        %v3167 = vadd.f32 0.0, %v3166
        %v3168 = vpop.f32.mrb[0].mxu0
        %v3169 = vadd.f32 0.0, %v3168
        %v3170 = vpop.f32.mrb[0].mxu0
        %v3171 = vadd.f32 0.0, %v3170
        %3172 = vmatprep.mubr.bf16.mxu0 %v1102
        %3173 = vmatmul.mubr.bf16.gmra.mrb[0].mxu0 %v1101
        %v3174 = vpop.f32.mrb[0].mxu0
        %v3175 = vadd.f32 0.0, %v3174
        %v3176 = vpop.f32.mrb[0].mxu0
        %v3177 = vadd.f32 0.0, %v3176
        %v3178 = vpop.f32.mrb[0].mxu0
        %v3179 = vadd.f32 0.0, %v3178
        %v3180 = vpop.f32.mrb[0].mxu0
        %v3181 = vadd.f32 0.0, %v3180
        %3182 = vmatprep.mubr.bf16.mxu0 %v1108
        %3183 = vmatmul.mubr.bf16.gmra.mrb[0].mxu0 %v1107
        %v3184 = vpop.f32.mrb[0].mxu0
        %v3185 = vadd.f32 0.0, %v3184
        %v3186 = vpop.f32.mrb[0].mxu0
        %v3187 = vadd.f32 0.0, %v3186
        %v3188 = vpop.f32.mrb[0].mxu0
        %v3189 = vadd.f32 0.0, %v3188
        %v3190 = vpop.f32.mrb[0].mxu0
        %v3191 = vadd.f32 0.0, %v3190
        %3192 = vmatprep.mubr.bf16.mxu0 %v1114
        %3193 = vmatmul.mubr.bf16.gmra.mrb[0].mxu0 %v1113
        %v3194 = vpop.f32.mrb[0].mxu0
        %v3195 = vadd.f32 0.0, %v3194
        %v3196 = vpop.f32.mrb[0].mxu0
        %v3197 = vadd.f32 0.0, %v3196
        %v3198 = vpop.f32.mrb[0].mxu0
        %v3199 = vadd.f32 0.0, %v3198
        %v3200 = vpop.f32.mrb[0].mxu0
        %v3201 = vadd.f32 0.0, %v3200
        %3202 = vmatprep.mubr.bf16.mxu0 %v1120
        %3203 = vmatmul.mubr.bf16.gmra.mrb[0].mxu0 %v1119
        %v3204 = vpop.f32.mrb[0].mxu0
        %v3205 = vadd.f32 0.0, %v3204
        %v3206 = vpop.f32.mrb[0].mxu0
        %v3207 = vadd.f32 0.0, %v3206
        %v3208 = vpop.f32.mrb[0].mxu0
        %v3209 = vadd.f32 0.0, %v3208
        %v3210 = vpop.f32.mrb[0].mxu0
        %v3211 = vadd.f32 0.0, %v3210
        %3212 = vmatprep.mubr.bf16.mxu0 %v1126
        %3213 = vmatmul.mubr.bf16.gmra.mrb[0].mxu0 %v1125
        %v3214 = vpop.f32.mrb[0].mxu0
        %v3215 = vadd.f32 0.0, %v3214
        %v3216 = vpop.f32.mrb[0].mxu0
        %v3217 = vadd.f32 0.0, %v3216
        %v3218 = vpop.f32.mrb[0].mxu0
        %v3219 = vadd.f32 0.0, %v3218
        %v3220 = vpop.f32.mrb[0].mxu0
        %v3221 = vadd.f32 0.0, %v3220
        %3222 = vmatprep.mubr.bf16.mxu0 %v1132
        %3223 = vmatmul.mubr.bf16.gmra.mrb[0].mxu0 %v1131
        %v3224 = vpop.f32.mrb[0].mxu0
        %v3225 = vadd.f32 0.0, %v3224
        %v3226 = vpop.f32.mrb[0].mxu0
        %v3227 = vadd.f32 0.0, %v3226
        %v3228 = vpop.f32.mrb[0].mxu0
        %v3229 = vadd.f32 0.0, %v3228
        %v3230 = vpop.f32.mrb[0].mxu0
        %v3231 = vadd.f32 0.0, %v3230
        %3232 = vmatprep.mubr.bf16.mxu0 %v1138
        %3233 = vmatmul.mubr.bf16.gmra.mrb[0].mxu0 %v1137
        %v3234 = vpop.f32.mrb[0].mxu0
        %v3235 = vadd.f32 0.0, %v3234
        %v3236 = vpop.f32.mrb[0].mxu0
        %v3237 = vadd.f32 0.0, %v3236
        %v3238 = vpop.f32.mrb[0].mxu0
        %v3239 = vadd.f32 0.0, %v3238
        %v3240 = vpop.f32.mrb[0].mxu0
        %v3241 = vadd.f32 0.0, %v3240
        %3242 = vmatprep.mubr.bf16.mxu0 %v1144
        %3243 = vmatmul.mubr.bf16.gmra.mrb[0].mxu0 %v1143
        %v3244 = vpop.f32.mrb[0].mxu0
        %v3245 = vadd.f32 0.0, %v3244
        %v3246 = vpop.f32.mrb[0].mxu0
        %v3247 = vadd.f32 0.0, %v3246
        %v3248 = vpop.f32.mrb[0].mxu0
        %v3249 = vadd.f32 0.0, %v3248
        %v3250 = vpop.f32.mrb[0].mxu0
        %v3251 = vadd.f32 0.0, %v3250
        %3252 = vmatprep.mubr.bf16.mxu0 %v1150
        %3253 = vmatmul.mubr.bf16.gmra.mrb[0].mxu0 %v1149
        %v3254 = vpop.f32.mrb[0].mxu0
        %v3255 = vadd.f32 0.0, %v3254
        %v3256 = vpop.f32.mrb[0].mxu0
        %v3257 = vadd.f32 0.0, %v3256
        %v3258 = vpop.f32.mrb[0].mxu0
        %v3259 = vadd.f32 0.0, %v3258
        %v3260 = vpop.f32.mrb[0].mxu0
        %v3261 = vadd.f32 0.0, %v3260
        %3262 = vmatprep.mubr.bf16.mxu0 %v1156
        %3263 = vmatmul.mubr.bf16.gmra.mrb[0].mxu0 %v1155
        %v3264 = vpop.f32.mrb[0].mxu0
        %v3265 = vadd.f32 0.0, %v3264
        %v3266 = vpop.f32.mrb[0].mxu0
        %v3267 = vadd.f32 0.0, %v3266
        %v3268 = vpop.f32.mrb[0].mxu0
        %v3269 = vadd.f32 0.0, %v3268
        %v3270 = vpop.f32.mrb[0].mxu0
        %v3271 = vadd.f32 0.0, %v3270
        %3272 = vmatprep.mubr.bf16.mxu0 %v1162
        %3273 = vmatmul.mubr.bf16.gmra.mrb[0].mxu0 %v1161
        %v3274 = vpop.f32.mrb[0].mxu0
        %v3275 = vadd.f32 0.0, %v3274
        %v3276 = vpop.f32.mrb[0].mxu0
        %v3277 = vadd.f32 0.0, %v3276
        %v3278 = vpop.f32.mrb[0].mxu0
        %v3279 = vadd.f32 0.0, %v3278
        %v3280 = vpop.f32.mrb[0].mxu0
        %v3281 = vadd.f32 0.0, %v3280
        %3282 = vdwg.mxu0
        %3283 = vmatprep.subr.bf16.mxu0 %v2114
        %3284 = vmatpush1.bf16.msra.mxu0 %v2113
        %3285 = vmatprep.subr.bf16.mxu0 %v2119
        %3286 = vmatpush1.bf16.msra.mxu0 %v2118
        %3287 = vmatprep.subr.bf16.mxu0 %v2124
        %3288 = vmatpush1.bf16.msra.mxu0 %v2123
        %3289 = vmatprep.subr.bf16.mxu0 %v2129
        %3290 = vmatpush1.bf16.msra.mxu0 %v2128
        %3291 = vmatprep.subr.bf16.mxu0 %v2134
        %3292 = vmatpush1.bf16.msra.mxu0 %v2133
        %3293 = vmatprep.subr.bf16.mxu0 %v2139
        %3294 = vmatpush1.bf16.msra.mxu0 %v2138
        %3295 = vmatprep.subr.bf16.mxu0 %v2144
        %3296 = vmatpush1.bf16.msra.mxu0 %v2143
        %3297 = vmatprep.subr.bf16.mxu0 %v2149
        %3298 = vmatpush1.bf16.msra.mxu0 %v2148
        %3299 = vmatprep.subr.bf16.mxu0 %v2154
        %3300 = vmatpush1.bf16.msra.mxu0 %v2153
        %3301 = vmatprep.subr.bf16.mxu0 %v2159
        %3302 = vmatpush1.bf16.msra.mxu0 %v2158
        %3303 = vmatprep.subr.bf16.mxu0 %v2164
        %3304 = vmatpush1.bf16.msra.mxu0 %v2163
        %3305 = vmatprep.subr.bf16.mxu0 %v2169
        %3306 = vmatpush1.bf16.msra.mxu0 %v2168
        %3307 = vmatprep.subr.bf16.mxu0 %v2174
        %3308 = vmatpush1.bf16.msra.mxu0 %v2173
        %3309 = vmatprep.subr.bf16.mxu0 %v2179
        %3310 = vmatpush1.bf16.msra.mxu0 %v2178
        %3311 = vmatprep.subr.bf16.mxu0 %v2184
        %3312 = vmatpush1.bf16.msra.mxu0 %v2183
        %3313 = vmatprep.subr.bf16.mxu0 %v2189
        %3314 = vmatpush1.bf16.msra.mxu0 %v2188
        %3315 = vmatprep.mubr.bf16.mxu0 %v1074
        %3316 = vmatmul.mubr.bf16.gmra.mrb[0].mxu0 %v1073
        %v3317 = vpop.f32.mrb[0].mxu0
        %v3318 = vadd.f32 %v3125, %v3317
        %v3319 = vpop.f32.mrb[0].mxu0
        %v3320 = vadd.f32 %v3127, %v3319
        %v3321 = vpop.f32.mrb[0].mxu0
        %v3322 = vadd.f32 %v3129, %v3321
        %v3323 = vpop.f32.mrb[0].mxu0
        %v3324 = vadd.f32 %v3131, %v3323
        %3325 = vmatprep.mubr.bf16.mxu0 %v1080
        %3326 = vmatmul.mubr.bf16.gmra.mrb[0].mxu0 %v1079
        %v3327 = vpop.f32.mrb[0].mxu0
        %v3328 = vadd.f32 %v3135, %v3327
        %v3329 = vpop.f32.mrb[0].mxu0
        %v3330 = vadd.f32 %v3137, %v3329
        %v3331 = vpop.f32.mrb[0].mxu0
        %v3332 = vadd.f32 %v3139, %v3331
        %v3333 = vpop.f32.mrb[0].mxu0
        %v3334 = vadd.f32 %v3141, %v3333
        %3335 = vmatprep.mubr.bf16.mxu0 %v1086
        %3336 = vmatmul.mubr.bf16.gmra.mrb[0].mxu0 %v1085
        %v3337 = vpop.f32.mrb[0].mxu0
        %v3338 = vadd.f32 %v3145, %v3337
        %v3339 = vpop.f32.mrb[0].mxu0
        %v3340 = vadd.f32 %v3147, %v3339
        %v3341 = vpop.f32.mrb[0].mxu0
        %v3342 = vadd.f32 %v3149, %v3341
        %v3343 = vpop.f32.mrb[0].mxu0
        %v3344 = vadd.f32 %v3151, %v3343
        %3345 = vmatprep.mubr.bf16.mxu0 %v1092
        %3346 = vmatmul.mubr.bf16.gmra.mrb[0].mxu0 %v1091
        %v3347 = vpop.f32.mrb[0].mxu0
        %v3348 = vadd.f32 %v3155, %v3347
        %v3349 = vpop.f32.mrb[0].mxu0
        %v3350 = vadd.f32 %v3157, %v3349
        %v3351 = vpop.f32.mrb[0].mxu0
        %v3352 = vadd.f32 %v3159, %v3351
        %v3353 = vpop.f32.mrb[0].mxu0
        %v3354 = vadd.f32 %v3161, %v3353
        %3355 = vmatprep.mubr.bf16.mxu0 %v1098
        %3356 = vmatmul.mubr.bf16.gmra.mrb[0].mxu0 %v1097
        %v3357 = vpop.f32.mrb[0].mxu0
        %v3358 = vadd.f32 %v3165, %v3357
        %v3359 = vpop.f32.mrb[0].mxu0
        %v3360 = vadd.f32 %v3167, %v3359
        %v3361 = vpop.f32.mrb[0].mxu0
        %v3362 = vadd.f32 %v3169, %v3361
        %v3363 = vpop.f32.mrb[0].mxu0
        %v3364 = vadd.f32 %v3171, %v3363
        %3365 = vmatprep.mubr.bf16.mxu0 %v1104
        %3366 = vmatmul.mubr.bf16.gmra.mrb[0].mxu0 %v1103
        %v3367 = vpop.f32.mrb[0].mxu0
        %v3368 = vadd.f32 %v3175, %v3367
        %v3369 = vpop.f32.mrb[0].mxu0
        %v3370 = vadd.f32 %v3177, %v3369
        %v3371 = vpop.f32.mrb[0].mxu0
        %v3372 = vadd.f32 %v3179, %v3371
        %v3373 = vpop.f32.mrb[0].mxu0
        %v3374 = vadd.f32 %v3181, %v3373
        %3375 = vmatprep.mubr.bf16.mxu0 %v1110
        %3376 = vmatmul.mubr.bf16.gmra.mrb[0].mxu0 %v1109
        %v3377 = vpop.f32.mrb[0].mxu0
        %v3378 = vadd.f32 %v3185, %v3377
        %v3379 = vpop.f32.mrb[0].mxu0
        %v3380 = vadd.f32 %v3187, %v3379
        %v3381 = vpop.f32.mrb[0].mxu0
        %v3382 = vadd.f32 %v3189, %v3381
        %v3383 = vpop.f32.mrb[0].mxu0
        %v3384 = vadd.f32 %v3191, %v3383
        %3385 = vmatprep.mubr.bf16.mxu0 %v1116
        %3386 = vmatmul.mubr.bf16.gmra.mrb[0].mxu0 %v1115
        %v3387 = vpop.f32.mrb[0].mxu0
        %v3388 = vadd.f32 %v3195, %v3387
        %v3389 = vpop.f32.mrb[0].mxu0
        %v3390 = vadd.f32 %v3197, %v3389
        %v3391 = vpop.f32.mrb[0].mxu0
        %v3392 = vadd.f32 %v3199, %v3391
        %v3393 = vpop.f32.mrb[0].mxu0
        %v3394 = vadd.f32 %v3201, %v3393
        %3395 = vmatprep.mubr.bf16.mxu0 %v1122
        %3396 = vmatmul.mubr.bf16.gmra.mrb[0].mxu0 %v1121
        %v3397 = vpop.f32.mrb[0].mxu0
        %v3398 = vadd.f32 %v3205, %v3397
        %v3399 = vpop.f32.mrb[0].mxu0
        %v3400 = vadd.f32 %v3207, %v3399
        %v3401 = vpop.f32.mrb[0].mxu0
        %v3402 = vadd.f32 %v3209, %v3401
        %v3403 = vpop.f32.mrb[0].mxu0
        %v3404 = vadd.f32 %v3211, %v3403
        %3405 = vmatprep.mubr.bf16.mxu0 %v1128
        %3406 = vmatmul.mubr.bf16.gmra.mrb[0].mxu0 %v1127
        %v3407 = vpop.f32.mrb[0].mxu0
        %v3408 = vadd.f32 %v3215, %v3407
        %v3409 = vpop.f32.mrb[0].mxu0
        %v3410 = vadd.f32 %v3217, %v3409
        %v3411 = vpop.f32.mrb[0].mxu0
        %v3412 = vadd.f32 %v3219, %v3411
        %v3413 = vpop.f32.mrb[0].mxu0
        %v3414 = vadd.f32 %v3221, %v3413
        %3415 = vmatprep.mubr.bf16.mxu0 %v1134
        %3416 = vmatmul.mubr.bf16.gmra.mrb[0].mxu0 %v1133
        %v3417 = vpop.f32.mrb[0].mxu0
        %v3418 = vadd.f32 %v3225, %v3417
        %v3419 = vpop.f32.mrb[0].mxu0
        %v3420 = vadd.f32 %v3227, %v3419
        %v3421 = vpop.f32.mrb[0].mxu0
        %v3422 = vadd.f32 %v3229, %v3421
        %v3423 = vpop.f32.mrb[0].mxu0
        %v3424 = vadd.f32 %v3231, %v3423
        %3425 = vmatprep.mubr.bf16.mxu0 %v1140
        %3426 = vmatmul.mubr.bf16.gmra.mrb[0].mxu0 %v1139
        %v3427 = vpop.f32.mrb[0].mxu0
        %v3428 = vadd.f32 %v3235, %v3427
        %v3429 = vpop.f32.mrb[0].mxu0
        %v3430 = vadd.f32 %v3237, %v3429
        %v3431 = vpop.f32.mrb[0].mxu0
        %v3432 = vadd.f32 %v3239, %v3431
        %v3433 = vpop.f32.mrb[0].mxu0
        %v3434 = vadd.f32 %v3241, %v3433
        %3435 = vmatprep.mubr.bf16.mxu0 %v1146
        %3436 = vmatmul.mubr.bf16.gmra.mrb[0].mxu0 %v1145
        %v3437 = vpop.f32.mrb[0].mxu0
        %v3438 = vadd.f32 %v3245, %v3437
        %v3439 = vpop.f32.mrb[0].mxu0
        %v3440 = vadd.f32 %v3247, %v3439
        %v3441 = vpop.f32.mrb[0].mxu0
        %v3442 = vadd.f32 %v3249, %v3441
        %v3443 = vpop.f32.mrb[0].mxu0
        %v3444 = vadd.f32 %v3251, %v3443
        %3445 = vmatprep.mubr.bf16.mxu0 %v1152
        %3446 = vmatmul.mubr.bf16.gmra.mrb[0].mxu0 %v1151
        %v3447 = vpop.f32.mrb[0].mxu0
        %v3448 = vadd.f32 %v3255, %v3447
        %v3449 = vpop.f32.mrb[0].mxu0
        %v3450 = vadd.f32 %v3257, %v3449
        %v3451 = vpop.f32.mrb[0].mxu0
        %v3452 = vadd.f32 %v3259, %v3451
        %v3453 = vpop.f32.mrb[0].mxu0
        %v3454 = vadd.f32 %v3261, %v3453
        %3455 = vmatprep.mubr.bf16.mxu0 %v1158
        %3456 = vmatmul.mubr.bf16.gmra.mrb[0].mxu0 %v1157
        %v3457 = vpop.f32.mrb[0].mxu0
        %v3458 = vadd.f32 %v3265, %v3457
        %v3459 = vpop.f32.mrb[0].mxu0
        %v3460 = vadd.f32 %v3267, %v3459
        %v3461 = vpop.f32.mrb[0].mxu0
        %v3462 = vadd.f32 %v3269, %v3461
        %v3463 = vpop.f32.mrb[0].mxu0
        %v3464 = vadd.f32 %v3271, %v3463
        %3465 = vmatprep.mubr.bf16.mxu0 %v1164
        %3466 = vmatmul.mubr.bf16.gmra.mrb[0].mxu0 %v1163
        %v3467 = vpop.f32.mrb[0].mxu0
        %v3468 = vadd.f32 %v3275, %v3467
        %v3469 = vpop.f32.mrb[0].mxu0
        %v3470 = vadd.f32 %v3277, %v3469
        %v3471 = vpop.f32.mrb[0].mxu0
        %v3472 = vadd.f32 %v3279, %v3471
        %v3473 = vpop.f32.mrb[0].mxu0
        %v3474 = vadd.f32 %v3281, %v3473
        %3475 = vdwg.mxu0
        %3476 = vmatprep.subr.bf16.mxu0 %v2194
        %3477 = vmatpush1.bf16.msra.mxu0 %v2193
        %3478 = vmatprep.subr.bf16.mxu0 %v2199
        %3479 = vmatpush1.bf16.msra.mxu0 %v2198
        %3480 = vmatprep.subr.bf16.mxu0 %v2204
        %3481 = vmatpush1.bf16.msra.mxu0 %v2203
        %3482 = vmatprep.subr.bf16.mxu0 %v2209
        %3483 = vmatpush1.bf16.msra.mxu0 %v2208
        %3484 = vmatprep.subr.bf16.mxu0 %v2214
        %3485 = vmatpush1.bf16.msra.mxu0 %v2213
        %3486 = vmatprep.subr.bf16.mxu0 %v2219
        %3487 = vmatpush1.bf16.msra.mxu0 %v2218
        %3488 = vmatprep.subr.bf16.mxu0 %v2224
        %3489 = vmatpush1.bf16.msra.mxu0 %v2223
        %3490 = vmatprep.subr.bf16.mxu0 %v2229
        %3491 = vmatpush1.bf16.msra.mxu0 %v2228
        %3492 = vmatprep.subr.bf16.mxu0 %v2234
        %3493 = vmatpush1.bf16.msra.mxu0 %v2233
        %3494 = vmatprep.subr.bf16.mxu0 %v2239
        %3495 = vmatpush1.bf16.msra.mxu0 %v2238
        %3496 = vmatprep.subr.bf16.mxu0 %v2244
        %3497 = vmatpush1.bf16.msra.mxu0 %v2243
        %3498 = vmatprep.subr.bf16.mxu0 %v2249
        %3499 = vmatpush1.bf16.msra.mxu0 %v2248
        %3500 = vmatprep.subr.bf16.mxu0 %v2254
        %3501 = vmatpush1.bf16.msra.mxu0 %v2253
        %3502 = vmatprep.subr.bf16.mxu0 %v2259
        %3503 = vmatpush1.bf16.msra.mxu0 %v2258
        %3504 = vmatprep.subr.bf16.mxu0 %v2264
        %3505 = vmatpush1.bf16.msra.mxu0 %v2263
        %3506 = vmatprep.subr.bf16.mxu0 %v2269
        %3507 = vmatpush1.bf16.msra.mxu0 %v2268
        %3508 = vmatprep.mubr.bf16.mxu0 %v1076
        %3509 = vmatmul.mubr.bf16.gmra.mrb[0].mxu0 %v1075
        %v3510 = vpop.f32.mrb[0].mxu0
        %v3511 = vadd.f32 %v3318, %v3510
        %v3512 = vpop.f32.mrb[0].mxu0
        %v3513 = vadd.f32 %v3320, %v3512
        %v3514 = vpop.f32.mrb[0].mxu0
        %v3515 = vadd.f32 %v3322, %v3514
        %v3516 = vpop.f32.mrb[0].mxu0
        %v3517 = vadd.f32 %v3324, %v3516
        %3518 = vmatprep.mubr.bf16.mxu0 %v1082
        %3519 = vmatmul.mubr.bf16.gmra.mrb[0].mxu0 %v1081
        %v3520 = vpop.f32.mrb[0].mxu0
        %v3521 = vadd.f32 %v3328, %v3520
        %v3522 = vpop.f32.mrb[0].mxu0
        %v3523 = vadd.f32 %v3330, %v3522
        %v3524 = vpop.f32.mrb[0].mxu0
        %v3525 = vadd.f32 %v3332, %v3524
        %v3526 = vpop.f32.mrb[0].mxu0
        %v3527 = vadd.f32 %v3334, %v3526
        %3528 = vmatprep.mubr.bf16.mxu0 %v1088
        %3529 = vmatmul.mubr.bf16.gmra.mrb[0].mxu0 %v1087
        %v3530 = vpop.f32.mrb[0].mxu0
        %v3531 = vadd.f32 %v3338, %v3530
        %v3532 = vpop.f32.mrb[0].mxu0
        %v3533 = vadd.f32 %v3340, %v3532
        %v3534 = vpop.f32.mrb[0].mxu0
        %v3535 = vadd.f32 %v3342, %v3534
        %v3536 = vpop.f32.mrb[0].mxu0
        %v3537 = vadd.f32 %v3344, %v3536
        %3538 = vmatprep.mubr.bf16.mxu0 %v1094
        %3539 = vmatmul.mubr.bf16.gmra.mrb[0].mxu0 %v1093
        %v3540 = vpop.f32.mrb[0].mxu0
        %v3541 = vadd.f32 %v3348, %v3540
        %v3542 = vpop.f32.mrb[0].mxu0
        %v3543 = vadd.f32 %v3350, %v3542
        %v3544 = vpop.f32.mrb[0].mxu0
        %v3545 = vadd.f32 %v3352, %v3544
        %v3546 = vpop.f32.mrb[0].mxu0
        %v3547 = vadd.f32 %v3354, %v3546
        %3548 = vmatprep.mubr.bf16.mxu0 %v1100
        %3549 = vmatmul.mubr.bf16.gmra.mrb[0].mxu0 %v1099
        %v3550 = vpop.f32.mrb[0].mxu0
        %v3551 = vadd.f32 %v3358, %v3550
        %v3552 = vpop.f32.mrb[0].mxu0
        %v3553 = vadd.f32 %v3360, %v3552
        %v3554 = vpop.f32.mrb[0].mxu0
        %v3555 = vadd.f32 %v3362, %v3554
        %v3556 = vpop.f32.mrb[0].mxu0
        %v3557 = vadd.f32 %v3364, %v3556
        %3558 = vmatprep.mubr.bf16.mxu0 %v1106
        %3559 = vmatmul.mubr.bf16.gmra.mrb[0].mxu0 %v1105
        %v3560 = vpop.f32.mrb[0].mxu0
        %v3561 = vadd.f32 %v3368, %v3560
        %v3562 = vpop.f32.mrb[0].mxu0
        %v3563 = vadd.f32 %v3370, %v3562
        %v3564 = vpop.f32.mrb[0].mxu0
        %v3565 = vadd.f32 %v3372, %v3564
        %v3566 = vpop.f32.mrb[0].mxu0
        %v3567 = vadd.f32 %v3374, %v3566
        %3568 = vmatprep.mubr.bf16.mxu0 %v1112
        %3569 = vmatmul.mubr.bf16.gmra.mrb[0].mxu0 %v1111
        %v3570 = vpop.f32.mrb[0].mxu0
        %v3571 = vadd.f32 %v3378, %v3570
        %v3572 = vpop.f32.mrb[0].mxu0
        %v3573 = vadd.f32 %v3380, %v3572
        %v3574 = vpop.f32.mrb[0].mxu0
        %v3575 = vadd.f32 %v3382, %v3574
        %v3576 = vpop.f32.mrb[0].mxu0
        %v3577 = vadd.f32 %v3384, %v3576
        %3578 = vmatprep.mubr.bf16.mxu0 %v1118
        %3579 = vmatmul.mubr.bf16.gmra.mrb[0].mxu0 %v1117
        %v3580 = vpop.f32.mrb[0].mxu0
        %v3581 = vadd.f32 %v3388, %v3580
        %v3582 = vpop.f32.mrb[0].mxu0
        %v3583 = vadd.f32 %v3390, %v3582
        %v3584 = vpop.f32.mrb[0].mxu0
        %v3585 = vadd.f32 %v3392, %v3584
        %v3586 = vpop.f32.mrb[0].mxu0
        %v3587 = vadd.f32 %v3394, %v3586
        %3588 = vmatprep.mubr.bf16.mxu0 %v1124
        %3589 = vmatmul.mubr.bf16.gmra.mrb[0].mxu0 %v1123
        %v3590 = vpop.f32.mrb[0].mxu0
        %v3591 = vadd.f32 %v3398, %v3590
        %v3592 = vpop.f32.mrb[0].mxu0
        %v3593 = vadd.f32 %v3400, %v3592
        %v3594 = vpop.f32.mrb[0].mxu0
        %v3595 = vadd.f32 %v3402, %v3594
        %v3596 = vpop.f32.mrb[0].mxu0
        %v3597 = vadd.f32 %v3404, %v3596
        %3598 = vmatprep.mubr.bf16.mxu0 %v1130
        %3599 = vmatmul.mubr.bf16.gmra.mrb[0].mxu0 %v1129
        %v3600 = vpop.f32.mrb[0].mxu0
        %v3601 = vadd.f32 %v3408, %v3600
        %v3602 = vpop.f32.mrb[0].mxu0
        %v3603 = vadd.f32 %v3410, %v3602
        %v3604 = vpop.f32.mrb[0].mxu0
        %v3605 = vadd.f32 %v3412, %v3604
        %v3606 = vpop.f32.mrb[0].mxu0
        %v3607 = vadd.f32 %v3414, %v3606
        %3608 = vmatprep.mubr.bf16.mxu0 %v1136
        %3609 = vmatmul.mubr.bf16.gmra.mrb[0].mxu0 %v1135
        %v3610 = vpop.f32.mrb[0].mxu0
        %v3611 = vadd.f32 %v3418, %v3610
        %v3612 = vpop.f32.mrb[0].mxu0
        %v3613 = vadd.f32 %v3420, %v3612
        %v3614 = vpop.f32.mrb[0].mxu0
        %v3615 = vadd.f32 %v3422, %v3614
        %v3616 = vpop.f32.mrb[0].mxu0
        %v3617 = vadd.f32 %v3424, %v3616
        %3618 = vmatprep.mubr.bf16.mxu0 %v1142
        %3619 = vmatmul.mubr.bf16.gmra.mrb[0].mxu0 %v1141
        %v3620 = vpop.f32.mrb[0].mxu0
        %v3621 = vadd.f32 %v3428, %v3620
        %v3622 = vpop.f32.mrb[0].mxu0
        %v3623 = vadd.f32 %v3430, %v3622
        %v3624 = vpop.f32.mrb[0].mxu0
        %v3625 = vadd.f32 %v3432, %v3624
        %v3626 = vpop.f32.mrb[0].mxu0
        %v3627 = vadd.f32 %v3434, %v3626
        %3628 = vmatprep.mubr.bf16.mxu0 %v1148
        %3629 = vmatmul.mubr.bf16.gmra.mrb[0].mxu0 %v1147
        %v3630 = vpop.f32.mrb[0].mxu0
        %v3631 = vadd.f32 %v3438, %v3630
        %v3632 = vpop.f32.mrb[0].mxu0
        %v3633 = vadd.f32 %v3440, %v3632
        %v3634 = vpop.f32.mrb[0].mxu0
        %v3635 = vadd.f32 %v3442, %v3634
        %v3636 = vpop.f32.mrb[0].mxu0
        %v3637 = vadd.f32 %v3444, %v3636
        %3638 = vmatprep.mubr.bf16.mxu0 %v1154
        %3639 = vmatmul.mubr.bf16.gmra.mrb[0].mxu0 %v1153
        %v3640 = vpop.f32.mrb[0].mxu0
        %v3641 = vadd.f32 %v3448, %v3640
        %v3642 = vpop.f32.mrb[0].mxu0
        %v3643 = vadd.f32 %v3450, %v3642
        %v3644 = vpop.f32.mrb[0].mxu0
        %v3645 = vadd.f32 %v3452, %v3644
        %v3646 = vpop.f32.mrb[0].mxu0
        %v3647 = vadd.f32 %v3454, %v3646
        %3648 = vmatprep.mubr.bf16.mxu0 %v1160
        %3649 = vmatmul.mubr.bf16.gmra.mrb[0].mxu0 %v1159
        %v3650 = vpop.f32.mrb[0].mxu0
        %v3651 = vadd.f32 %v3458, %v3650
        %v3652 = vpop.f32.mrb[0].mxu0
        %v3653 = vadd.f32 %v3460, %v3652
        %v3654 = vpop.f32.mrb[0].mxu0
        %v3655 = vadd.f32 %v3462, %v3654
        %v3656 = vpop.f32.mrb[0].mxu0
        %v3657 = vadd.f32 %v3464, %v3656
        %3658 = vmatprep.mubr.bf16.mxu0 %v1166
        %3659 = vmatmul.mubr.bf16.gmra.mrb[0].mxu0 %v1165
        %v3660 = vpop.f32.mrb[0].mxu0
        %v3661 = vadd.f32 %v3468, %v3660
        %v3662 = vpop.f32.mrb[0].mxu0
        %v3663 = vadd.f32 %v3470, %v3662
        %v3664 = vpop.f32.mrb[0].mxu0
        %v3665 = vadd.f32 %v3472, %v3664
        %v3666 = vpop.f32.mrb[0].mxu0
        %v3667 = vadd.f32 %v3474, %v3666
        %3668 = vdwg.mxu0
        %3669 = vmatprep.subr.bf16.mxu0 0
        %3670 = vmatpush1.bf16.msra.mxu0 %v2035
        %3671 = vmatprep.subr.bf16.mxu0 0
        %3672 = vmatpush1.bf16.msra.mxu0 %v2040
        %3673 = vmatprep.subr.bf16.mxu0 0
        %3674 = vmatpush1.bf16.msra.mxu0 %v2045
        %3675 = vmatprep.subr.bf16.mxu0 0
        %3676 = vmatpush1.bf16.msra.mxu0 %v2050
        %3677 = vmatprep.subr.bf16.mxu0 0
        %3678 = vmatpush1.bf16.msra.mxu0 %v2055
        %3679 = vmatprep.subr.bf16.mxu0 0
        %3680 = vmatpush1.bf16.msra.mxu0 %v2060
        %3681 = vmatprep.subr.bf16.mxu0 0
        %3682 = vmatpush1.bf16.msra.mxu0 %v2065
        %3683 = vmatprep.subr.bf16.mxu0 0
        %3684 = vmatpush1.bf16.msra.mxu0 %v2070
        %3685 = vmatprep.subr.bf16.mxu0 0
        %3686 = vmatpush1.bf16.msra.mxu0 %v2075
        %3687 = vmatprep.subr.bf16.mxu0 0
        %3688 = vmatpush1.bf16.msra.mxu0 %v2080
        %3689 = vmatprep.subr.bf16.mxu0 0
        %3690 = vmatpush1.bf16.msra.mxu0 %v2085
        %3691 = vmatprep.subr.bf16.mxu0 0
        %3692 = vmatpush1.bf16.msra.mxu0 %v2090
        %3693 = vmatprep.subr.bf16.mxu0 0
        %3694 = vmatpush1.bf16.msra.mxu0 %v2095
        %3695 = vmatprep.subr.bf16.mxu0 0
        %3696 = vmatpush1.bf16.msra.mxu0 %v2100
        %3697 = vmatprep.subr.bf16.mxu0 0
        %3698 = vmatpush1.bf16.msra.mxu0 %v2105
        %3699 = vmatprep.subr.bf16.mxu0 0
        %3700 = vmatpush1.bf16.msra.mxu0 %v2110
        %3701 = vmatprep.mubr.bf16.mxu0 %v1072
        %3702 = vmatmul.mubr.bf16.gmra.mrb[0].mxu0 %v1071
        %v3703 = vpop.f32.mrb[0].mxu0
        %v3704 = vadd.f32 0.0, %v3703
        %v3705 = vpop.f32.mrb[0].mxu0
        %v3706 = vpop.f32.mrb[0].mxu0
        %v3707 = vadd.f32 0.0, %v3706
        %v3708 = vpop.f32.mrb[0].mxu0
        %3709 = vmatprep.mubr.bf16.mxu0 %v1078
        %3710 = vmatmul.mubr.bf16.gmra.mrb[0].mxu0 %v1077
        %v3711 = vpop.f32.mrb[0].mxu0
        %v3712 = vadd.f32 0.0, %v3711
        %v3713 = vpop.f32.mrb[0].mxu0
        %v3714 = vpop.f32.mrb[0].mxu0
        %v3715 = vadd.f32 0.0, %v3714
        %v3716 = vpop.f32.mrb[0].mxu0
        %3717 = vmatprep.mubr.bf16.mxu0 %v1084
        %3718 = vmatmul.mubr.bf16.gmra.mrb[0].mxu0 %v1083
        %v3719 = vpop.f32.mrb[0].mxu0
        %v3720 = vadd.f32 0.0, %v3719
        %v3721 = vpop.f32.mrb[0].mxu0
        %v3722 = vpop.f32.mrb[0].mxu0
        %v3723 = vadd.f32 0.0, %v3722
        %v3724 = vpop.f32.mrb[0].mxu0
        %3725 = vmatprep.mubr.bf16.mxu0 %v1090
        %3726 = vmatmul.mubr.bf16.gmra.mrb[0].mxu0 %v1089
        %v3727 = vpop.f32.mrb[0].mxu0
        %v3728 = vadd.f32 0.0, %v3727
        %v3729 = vpop.f32.mrb[0].mxu0
        %v3730 = vpop.f32.mrb[0].mxu0
        %v3731 = vadd.f32 0.0, %v3730
        %v3732 = vpop.f32.mrb[0].mxu0
        %3733 = vmatprep.mubr.bf16.mxu0 %v1096
        %3734 = vmatmul.mubr.bf16.gmra.mrb[0].mxu0 %v1095
        %v3735 = vpop.f32.mrb[0].mxu0
        %v3736 = vadd.f32 0.0, %v3735
        %v3737 = vpop.f32.mrb[0].mxu0
        %v3738 = vpop.f32.mrb[0].mxu0
        %v3739 = vadd.f32 0.0, %v3738
        %v3740 = vpop.f32.mrb[0].mxu0
        %3741 = vmatprep.mubr.bf16.mxu0 %v1102
        %3742 = vmatmul.mubr.bf16.gmra.mrb[0].mxu0 %v1101
        %v3743 = vpop.f32.mrb[0].mxu0
        %v3744 = vadd.f32 0.0, %v3743
        %v3745 = vpop.f32.mrb[0].mxu0
        %v3746 = vpop.f32.mrb[0].mxu0
        %v3747 = vadd.f32 0.0, %v3746
        %v3748 = vpop.f32.mrb[0].mxu0
        %3749 = vmatprep.mubr.bf16.mxu0 %v1108
        %3750 = vmatmul.mubr.bf16.gmra.mrb[0].mxu0 %v1107
        %v3751 = vpop.f32.mrb[0].mxu0
        %v3752 = vadd.f32 0.0, %v3751
        %v3753 = vpop.f32.mrb[0].mxu0
        %v3754 = vpop.f32.mrb[0].mxu0
        %v3755 = vadd.f32 0.0, %v3754
        %v3756 = vpop.f32.mrb[0].mxu0
        %3757 = vmatprep.mubr.bf16.mxu0 %v1114
        %3758 = vmatmul.mubr.bf16.gmra.mrb[0].mxu0 %v1113
        %v3759 = vpop.f32.mrb[0].mxu0
        %v3760 = vadd.f32 0.0, %v3759
        %v3761 = vpop.f32.mrb[0].mxu0
        %v3762 = vpop.f32.mrb[0].mxu0
        %v3763 = vadd.f32 0.0, %v3762
        %v3764 = vpop.f32.mrb[0].mxu0
        %3765 = vmatprep.mubr.bf16.mxu0 %v1120
        %3766 = vmatmul.mubr.bf16.gmra.mrb[0].mxu0 %v1119
        %v3767 = vpop.f32.mrb[0].mxu0
        %v3768 = vadd.f32 0.0, %v3767
        %v3769 = vpop.f32.mrb[0].mxu0
        %v3770 = vpop.f32.mrb[0].mxu0
        %v3771 = vadd.f32 0.0, %v3770
        %v3772 = vpop.f32.mrb[0].mxu0
        %3773 = vmatprep.mubr.bf16.mxu0 %v1126
        %3774 = vmatmul.mubr.bf16.gmra.mrb[0].mxu0 %v1125
        %v3775 = vpop.f32.mrb[0].mxu0
        %v3776 = vadd.f32 0.0, %v3775
        %v3777 = vpop.f32.mrb[0].mxu0
        %v3778 = vpop.f32.mrb[0].mxu0
        %v3779 = vadd.f32 0.0, %v3778
        %v3780 = vpop.f32.mrb[0].mxu0
        %3781 = vmatprep.mubr.bf16.mxu0 %v1132
        %3782 = vmatmul.mubr.bf16.gmra.mrb[0].mxu0 %v1131
        %v3783 = vpop.f32.mrb[0].mxu0
        %v3784 = vadd.f32 0.0, %v3783
        %v3785 = vpop.f32.mrb[0].mxu0
        %v3786 = vpop.f32.mrb[0].mxu0
        %v3787 = vadd.f32 0.0, %v3786
        %v3788 = vpop.f32.mrb[0].mxu0
        %3789 = vmatprep.mubr.bf16.mxu0 %v1138
        %3790 = vmatmul.mubr.bf16.gmra.mrb[0].mxu0 %v1137
        %v3791 = vpop.f32.mrb[0].mxu0
        %v3792 = vadd.f32 0.0, %v3791
        %v3793 = vpop.f32.mrb[0].mxu0
        %v3794 = vpop.f32.mrb[0].mxu0
        %v3795 = vadd.f32 0.0, %v3794
        %v3796 = vpop.f32.mrb[0].mxu0
        %3797 = vmatprep.mubr.bf16.mxu0 %v1144
        %3798 = vmatmul.mubr.bf16.gmra.mrb[0].mxu0 %v1143
        %v3799 = vpop.f32.mrb[0].mxu0
        %v3800 = vadd.f32 0.0, %v3799
        %v3801 = vpop.f32.mrb[0].mxu0
        %v3802 = vpop.f32.mrb[0].mxu0
        %v3803 = vadd.f32 0.0, %v3802
        %v3804 = vpop.f32.mrb[0].mxu0
        %3805 = vmatprep.mubr.bf16.mxu0 %v1150
        %3806 = vmatmul.mubr.bf16.gmra.mrb[0].mxu0 %v1149
        %v3807 = vpop.f32.mrb[0].mxu0
        %v3808 = vadd.f32 0.0, %v3807
        %v3809 = vpop.f32.mrb[0].mxu0
        %v3810 = vpop.f32.mrb[0].mxu0
        %v3811 = vadd.f32 0.0, %v3810
        %v3812 = vpop.f32.mrb[0].mxu0
        %3813 = vmatprep.mubr.bf16.mxu0 %v1156
        %3814 = vmatmul.mubr.bf16.gmra.mrb[0].mxu0 %v1155
        %v3815 = vpop.f32.mrb[0].mxu0
        %v3816 = vadd.f32 0.0, %v3815
        %v3817 = vpop.f32.mrb[0].mxu0
        %v3818 = vpop.f32.mrb[0].mxu0
        %v3819 = vadd.f32 0.0, %v3818
        %v3820 = vpop.f32.mrb[0].mxu0
        %3821 = vmatprep.mubr.bf16.mxu0 %v1162
        %3822 = vmatmul.mubr.bf16.gmra.mrb[0].mxu0 %v1161
        %v3823 = vpop.f32.mrb[0].mxu0
        %v3824 = vadd.f32 0.0, %v3823
        %v3825 = vpop.f32.mrb[0].mxu0
        %v3826 = vpop.f32.mrb[0].mxu0
        %v3827 = vadd.f32 0.0, %v3826
        %v3828 = vpop.f32.mrb[0].mxu0
        %3829 = vdwg.mxu0
        %3830 = vmatprep.subr.bf16.mxu0 0
        %3831 = vmatpush1.bf16.msra.mxu0 %v2115
        %3832 = vmatprep.subr.bf16.mxu0 0
        %3833 = vmatpush1.bf16.msra.mxu0 %v2120
        %3834 = vmatprep.subr.bf16.mxu0 0
        %3835 = vmatpush1.bf16.msra.mxu0 %v2125
        %3836 = vmatprep.subr.bf16.mxu0 0
        %3837 = vmatpush1.bf16.msra.mxu0 %v2130
        %3838 = vmatprep.subr.bf16.mxu0 0
        %3839 = vmatpush1.bf16.msra.mxu0 %v2135
        %3840 = vmatprep.subr.bf16.mxu0 0
        %3841 = vmatpush1.bf16.msra.mxu0 %v2140
        %3842 = vmatprep.subr.bf16.mxu0 0
        %3843 = vmatpush1.bf16.msra.mxu0 %v2145
        %3844 = vmatprep.subr.bf16.mxu0 0
        %3845 = vmatpush1.bf16.msra.mxu0 %v2150
        %3846 = vmatprep.subr.bf16.mxu0 0
        %3847 = vmatpush1.bf16.msra.mxu0 %v2155
        %3848 = vmatprep.subr.bf16.mxu0 0
        %3849 = vmatpush1.bf16.msra.mxu0 %v2160
        %3850 = vmatprep.subr.bf16.mxu0 0
        %3851 = vmatpush1.bf16.msra.mxu0 %v2165
        %3852 = vmatprep.subr.bf16.mxu0 0
        %3853 = vmatpush1.bf16.msra.mxu0 %v2170
        %3854 = vmatprep.subr.bf16.mxu0 0
        %3855 = vmatpush1.bf16.msra.mxu0 %v2175
        %3856 = vmatprep.subr.bf16.mxu0 0
        %3857 = vmatpush1.bf16.msra.mxu0 %v2180
        %3858 = vmatprep.subr.bf16.mxu0 0
        %3859 = vmatpush1.bf16.msra.mxu0 %v2185
        %3860 = vmatprep.subr.bf16.mxu0 0
        %3861 = vmatpush1.bf16.msra.mxu0 %v2190
        %3862 = vmatprep.mubr.bf16.mxu0 %v1074
        %3863 = vmatmul.mubr.bf16.gmra.mrb[0].mxu0 %v1073
        %v3864 = vpop.f32.mrb[0].mxu0
        %v3865 = vadd.f32 %v3704, %v3864
        %v3866 = vpop.f32.mrb[0].mxu0
        %v3867 = vpop.f32.mrb[0].mxu0
        %v3868 = vadd.f32 %v3707, %v3867
        %v3869 = vpop.f32.mrb[0].mxu0
        %3870 = vmatprep.mubr.bf16.mxu0 %v1080
        %3871 = vmatmul.mubr.bf16.gmra.mrb[0].mxu0 %v1079
        %v3872 = vpop.f32.mrb[0].mxu0
        %v3873 = vadd.f32 %v3712, %v3872
        %v3874 = vpop.f32.mrb[0].mxu0
        %v3875 = vpop.f32.mrb[0].mxu0
        %v3876 = vadd.f32 %v3715, %v3875
        %v3877 = vpop.f32.mrb[0].mxu0
        %3878 = vmatprep.mubr.bf16.mxu0 %v1086
        %3879 = vmatmul.mubr.bf16.gmra.mrb[0].mxu0 %v1085
        %v3880 = vpop.f32.mrb[0].mxu0
        %v3881 = vadd.f32 %v3720, %v3880
        %v3882 = vpop.f32.mrb[0].mxu0
        %v3883 = vpop.f32.mrb[0].mxu0
        %v3884 = vadd.f32 %v3723, %v3883
        %v3885 = vpop.f32.mrb[0].mxu0
        %3886 = vmatprep.mubr.bf16.mxu0 %v1092
        %3887 = vmatmul.mubr.bf16.gmra.mrb[0].mxu0 %v1091
        %v3888 = vpop.f32.mrb[0].mxu0
        %v3889 = vadd.f32 %v3728, %v3888
        %v3890 = vpop.f32.mrb[0].mxu0
        %v3891 = vpop.f32.mrb[0].mxu0
        %v3892 = vadd.f32 %v3731, %v3891
        %v3893 = vpop.f32.mrb[0].mxu0
        %3894 = vmatprep.mubr.bf16.mxu0 %v1098
        %3895 = vmatmul.mubr.bf16.gmra.mrb[0].mxu0 %v1097
        %v3896 = vpop.f32.mrb[0].mxu0
        %v3897 = vadd.f32 %v3736, %v3896
        %v3898 = vpop.f32.mrb[0].mxu0
        %v3899 = vpop.f32.mrb[0].mxu0
        %v3900 = vadd.f32 %v3739, %v3899
        %v3901 = vpop.f32.mrb[0].mxu0
        %3902 = vmatprep.mubr.bf16.mxu0 %v1104
        %3903 = vmatmul.mubr.bf16.gmra.mrb[0].mxu0 %v1103
        %v3904 = vpop.f32.mrb[0].mxu0
        %v3905 = vadd.f32 %v3744, %v3904
        %v3906 = vpop.f32.mrb[0].mxu0
        %v3907 = vpop.f32.mrb[0].mxu0
        %v3908 = vadd.f32 %v3747, %v3907
        %v3909 = vpop.f32.mrb[0].mxu0
        %3910 = vmatprep.mubr.bf16.mxu0 %v1110
        %3911 = vmatmul.mubr.bf16.gmra.mrb[0].mxu0 %v1109
        %v3912 = vpop.f32.mrb[0].mxu0
        %v3913 = vadd.f32 %v3752, %v3912
        %v3914 = vpop.f32.mrb[0].mxu0
        %v3915 = vpop.f32.mrb[0].mxu0
        %v3916 = vadd.f32 %v3755, %v3915
        %v3917 = vpop.f32.mrb[0].mxu0
        %3918 = vmatprep.mubr.bf16.mxu0 %v1116
        %3919 = vmatmul.mubr.bf16.gmra.mrb[0].mxu0 %v1115
        %v3920 = vpop.f32.mrb[0].mxu0
        %v3921 = vadd.f32 %v3760, %v3920
        %v3922 = vpop.f32.mrb[0].mxu0
        %v3923 = vpop.f32.mrb[0].mxu0
        %v3924 = vadd.f32 %v3763, %v3923
        %v3925 = vpop.f32.mrb[0].mxu0
        %3926 = vmatprep.mubr.bf16.mxu0 %v1122
        %3927 = vmatmul.mubr.bf16.gmra.mrb[0].mxu0 %v1121
        %v3928 = vpop.f32.mrb[0].mxu0
        %v3929 = vadd.f32 %v3768, %v3928
        %v3930 = vpop.f32.mrb[0].mxu0
        %v3931 = vpop.f32.mrb[0].mxu0
        %v3932 = vadd.f32 %v3771, %v3931
        %v3933 = vpop.f32.mrb[0].mxu0
        %3934 = vmatprep.mubr.bf16.mxu0 %v1128
        %3935 = vmatmul.mubr.bf16.gmra.mrb[0].mxu0 %v1127
        %v3936 = vpop.f32.mrb[0].mxu0
        %v3937 = vadd.f32 %v3776, %v3936
        %v3938 = vpop.f32.mrb[0].mxu0
        %v3939 = vpop.f32.mrb[0].mxu0
        %v3940 = vadd.f32 %v3779, %v3939
        %v3941 = vpop.f32.mrb[0].mxu0
        %3942 = vmatprep.mubr.bf16.mxu0 %v1134
        %3943 = vmatmul.mubr.bf16.gmra.mrb[0].mxu0 %v1133
        %v3944 = vpop.f32.mrb[0].mxu0
        %v3945 = vadd.f32 %v3784, %v3944
        %v3946 = vpop.f32.mrb[0].mxu0
        %v3947 = vpop.f32.mrb[0].mxu0
        %v3948 = vadd.f32 %v3787, %v3947
        %v3949 = vpop.f32.mrb[0].mxu0
        %3950 = vmatprep.mubr.bf16.mxu0 %v1140
        %3951 = vmatmul.mubr.bf16.gmra.mrb[0].mxu0 %v1139
        %v3952 = vpop.f32.mrb[0].mxu0
        %v3953 = vadd.f32 %v3792, %v3952
        %v3954 = vpop.f32.mrb[0].mxu0
        %v3955 = vpop.f32.mrb[0].mxu0
        %v3956 = vadd.f32 %v3795, %v3955
        %v3957 = vpop.f32.mrb[0].mxu0
        %3958 = vmatprep.mubr.bf16.mxu0 %v1146
        %3959 = vmatmul.mubr.bf16.gmra.mrb[0].mxu0 %v1145
        %v3960 = vpop.f32.mrb[0].mxu0
        %v3961 = vadd.f32 %v3800, %v3960
        %v3962 = vpop.f32.mrb[0].mxu0
        %v3963 = vpop.f32.mrb[0].mxu0
        %v3964 = vadd.f32 %v3803, %v3963
        %v3965 = vpop.f32.mrb[0].mxu0
        %3966 = vmatprep.mubr.bf16.mxu0 %v1152
        %3967 = vmatmul.mubr.bf16.gmra.mrb[0].mxu0 %v1151
        %v3968 = vpop.f32.mrb[0].mxu0
        %v3969 = vadd.f32 %v3808, %v3968
        %v3970 = vpop.f32.mrb[0].mxu0
        %v3971 = vpop.f32.mrb[0].mxu0
        %v3972 = vadd.f32 %v3811, %v3971
        %v3973 = vpop.f32.mrb[0].mxu0
        %3974 = vmatprep.mubr.bf16.mxu0 %v1158
        %3975 = vmatmul.mubr.bf16.gmra.mrb[0].mxu0 %v1157
        %v3976 = vpop.f32.mrb[0].mxu0
        %v3977 = vadd.f32 %v3816, %v3976
        %v3978 = vpop.f32.mrb[0].mxu0
        %v3979 = vpop.f32.mrb[0].mxu0
        %v3980 = vadd.f32 %v3819, %v3979
        %v3981 = vpop.f32.mrb[0].mxu0
        %3982 = vmatprep.mubr.bf16.mxu0 %v1164
        %3983 = vmatmul.mubr.bf16.gmra.mrb[0].mxu0 %v1163
        %v3984 = vpop.f32.mrb[0].mxu0
        %v3985 = vadd.f32 %v3824, %v3984
        %v3986 = vpop.f32.mrb[0].mxu0
        %v3987 = vpop.f32.mrb[0].mxu0
        %v3988 = vadd.f32 %v3827, %v3987
        %v3989 = vpop.f32.mrb[0].mxu0
        %3990 = vdwg.mxu0
        %3991 = vmatprep.subr.bf16.mxu0 0
        %3992 = vmatpush1.bf16.msra.mxu0 %v2195
        %3993 = vmatprep.subr.bf16.mxu0 0
        %3994 = vmatpush1.bf16.msra.mxu0 %v2200
        %3995 = vmatprep.subr.bf16.mxu0 0
        %3996 = vmatpush1.bf16.msra.mxu0 %v2205
        %3997 = vmatprep.subr.bf16.mxu0 0
        %3998 = vmatpush1.bf16.msra.mxu0 %v2210
        %3999 = vmatprep.subr.bf16.mxu0 0
        %4000 = vmatpush1.bf16.msra.mxu0 %v2215
        %4001 = vmatprep.subr.bf16.mxu0 0
        %4002 = vmatpush1.bf16.msra.mxu0 %v2220
        %4003 = vmatprep.subr.bf16.mxu0 0
        %4004 = vmatpush1.bf16.msra.mxu0 %v2225
        %4005 = vmatprep.subr.bf16.mxu0 0
        %4006 = vmatpush1.bf16.msra.mxu0 %v2230
        %4007 = vmatprep.subr.bf16.mxu0 0
        %4008 = vmatpush1.bf16.msra.mxu0 %v2235
        %4009 = vmatprep.subr.bf16.mxu0 0
        %4010 = vmatpush1.bf16.msra.mxu0 %v2240
        %4011 = vmatprep.subr.bf16.mxu0 0
        %4012 = vmatpush1.bf16.msra.mxu0 %v2245
        %4013 = vmatprep.subr.bf16.mxu0 0
        %4014 = vmatpush1.bf16.msra.mxu0 %v2250
        %4015 = vmatprep.subr.bf16.mxu0 0
        %4016 = vmatpush1.bf16.msra.mxu0 %v2255
        %4017 = vmatprep.subr.bf16.mxu0 0
        %4018 = vmatpush1.bf16.msra.mxu0 %v2260
        %4019 = vmatprep.subr.bf16.mxu0 0
        %4020 = vmatpush1.bf16.msra.mxu0 %v2265
        %4021 = vmatprep.subr.bf16.mxu0 0
        %4022 = vmatpush1.bf16.msra.mxu0 %v2270
        %4023 = vmatprep.mubr.bf16.mxu0 %v1076
        %4024 = vmatmul.mubr.bf16.gmra.mrb[0].mxu0 %v1075
        %v4025 = vpop.f32.mrb[0].mxu0
        %v4026 = vadd.f32 %v3865, %v4025
        %v4027 = vpop.f32.mrb[0].mxu0
        %v4028 = vpop.f32.mrb[0].mxu0
        %v4029 = vadd.f32 %v3868, %v4028
        %v4030 = vpop.f32.mrb[0].mxu0
        %4031 = vmatprep.mubr.bf16.mxu0 %v1082
        %4032 = vmatmul.mubr.bf16.gmra.mrb[0].mxu0 %v1081
        %v4033 = vpop.f32.mrb[0].mxu0
        %v4034 = vadd.f32 %v3873, %v4033
        %v4035 = vpop.f32.mrb[0].mxu0
        %v4036 = vpop.f32.mrb[0].mxu0
        %v4037 = vadd.f32 %v3876, %v4036
        %v4038 = vpop.f32.mrb[0].mxu0
        %4039 = vmatprep.mubr.bf16.mxu0 %v1088
        %4040 = vmatmul.mubr.bf16.gmra.mrb[0].mxu0 %v1087
        %v4041 = vpop.f32.mrb[0].mxu0
        %v4042 = vadd.f32 %v3881, %v4041
        %v4043 = vpop.f32.mrb[0].mxu0
        %v4044 = vpop.f32.mrb[0].mxu0
        %v4045 = vadd.f32 %v3884, %v4044
        %v4046 = vpop.f32.mrb[0].mxu0
        %4047 = vmatprep.mubr.bf16.mxu0 %v1094
        %4048 = vmatmul.mubr.bf16.gmra.mrb[0].mxu0 %v1093
        %v4049 = vpop.f32.mrb[0].mxu0
        %v4050 = vadd.f32 %v3889, %v4049
        %v4051 = vpop.f32.mrb[0].mxu0
        %v4052 = vpop.f32.mrb[0].mxu0
        %v4053 = vadd.f32 %v3892, %v4052
        %v4054 = vpop.f32.mrb[0].mxu0
        %4055 = vmatprep.mubr.bf16.mxu0 %v1100
        %4056 = vmatmul.mubr.bf16.gmra.mrb[0].mxu0 %v1099
        %v4057 = vpop.f32.mrb[0].mxu0
        %v4058 = vadd.f32 %v3897, %v4057
        %v4059 = vpop.f32.mrb[0].mxu0
        %v4060 = vpop.f32.mrb[0].mxu0
        %v4061 = vadd.f32 %v3900, %v4060
        %v4062 = vpop.f32.mrb[0].mxu0
        %4063 = vmatprep.mubr.bf16.mxu0 %v1106
        %4064 = vmatmul.mubr.bf16.gmra.mrb[0].mxu0 %v1105
        %v4065 = vpop.f32.mrb[0].mxu0
        %v4066 = vadd.f32 %v3905, %v4065
        %v4067 = vpop.f32.mrb[0].mxu0
        %v4068 = vpop.f32.mrb[0].mxu0
        %v4069 = vadd.f32 %v3908, %v4068
        %v4070 = vpop.f32.mrb[0].mxu0
        %4071 = vmatprep.mubr.bf16.mxu0 %v1112
        %4072 = vmatmul.mubr.bf16.gmra.mrb[0].mxu0 %v1111
        %v4073 = vpop.f32.mrb[0].mxu0
        %v4074 = vadd.f32 %v3913, %v4073
        %v4075 = vpop.f32.mrb[0].mxu0
        %v4076 = vpop.f32.mrb[0].mxu0
        %v4077 = vadd.f32 %v3916, %v4076
        %v4078 = vpop.f32.mrb[0].mxu0
        %4079 = vmatprep.mubr.bf16.mxu0 %v1118
        %4080 = vmatmul.mubr.bf16.gmra.mrb[0].mxu0 %v1117
        %v4081 = vpop.f32.mrb[0].mxu0
        %v4082 = vadd.f32 %v3921, %v4081
        %v4083 = vpop.f32.mrb[0].mxu0
        %v4084 = vpop.f32.mrb[0].mxu0
        %v4085 = vadd.f32 %v3924, %v4084
        %v4086 = vpop.f32.mrb[0].mxu0
        %4087 = vmatprep.mubr.bf16.mxu0 %v1124
        %4088 = vmatmul.mubr.bf16.gmra.mrb[0].mxu0 %v1123
        %v4089 = vpop.f32.mrb[0].mxu0
        %v4090 = vadd.f32 %v3929, %v4089
        %v4091 = vpop.f32.mrb[0].mxu0
        %v4092 = vpop.f32.mrb[0].mxu0
        %v4093 = vadd.f32 %v3932, %v4092
        %v4094 = vpop.f32.mrb[0].mxu0
        %4095 = vmatprep.mubr.bf16.mxu0 %v1130
        %4096 = vmatmul.mubr.bf16.gmra.mrb[0].mxu0 %v1129
        %v4097 = vpop.f32.mrb[0].mxu0
        %v4098 = vadd.f32 %v3937, %v4097
        %v4099 = vpop.f32.mrb[0].mxu0
        %v4100 = vpop.f32.mrb[0].mxu0
        %v4101 = vadd.f32 %v3940, %v4100
        %v4102 = vpop.f32.mrb[0].mxu0
        %4103 = vmatprep.mubr.bf16.mxu0 %v1136
        %4104 = vmatmul.mubr.bf16.gmra.mrb[0].mxu0 %v1135
        %v4105 = vpop.f32.mrb[0].mxu0
        %v4106 = vadd.f32 %v3945, %v4105
        %v4107 = vpop.f32.mrb[0].mxu0
        %v4108 = vpop.f32.mrb[0].mxu0
        %v4109 = vadd.f32 %v3948, %v4108
        %v4110 = vpop.f32.mrb[0].mxu0
        %4111 = vmatprep.mubr.bf16.mxu0 %v1142
        %4112 = vmatmul.mubr.bf16.gmra.mrb[0].mxu0 %v1141
        %v4113 = vpop.f32.mrb[0].mxu0
        %v4114 = vadd.f32 %v3953, %v4113
        %v4115 = vpop.f32.mrb[0].mxu0
        %v4116 = vpop.f32.mrb[0].mxu0
        %v4117 = vadd.f32 %v3956, %v4116
        %v4118 = vpop.f32.mrb[0].mxu0
        %4119 = vmatprep.mubr.bf16.mxu0 %v1148
        %4120 = vmatmul.mubr.bf16.gmra.mrb[0].mxu0 %v1147
        %v4121 = vpop.f32.mrb[0].mxu0
        %v4122 = vadd.f32 %v3961, %v4121
        %v4123 = vpop.f32.mrb[0].mxu0
        %v4124 = vpop.f32.mrb[0].mxu0
        %v4125 = vadd.f32 %v3964, %v4124
        %v4126 = vpop.f32.mrb[0].mxu0
        %4127 = vmatprep.mubr.bf16.mxu0 %v1154
        %4128 = vmatmul.mubr.bf16.gmra.mrb[0].mxu0 %v1153
        %v4129 = vpop.f32.mrb[0].mxu0
        %v4130 = vadd.f32 %v3969, %v4129
        %v4131 = vpop.f32.mrb[0].mxu0
        %v4132 = vpop.f32.mrb[0].mxu0
        %v4133 = vadd.f32 %v3972, %v4132
        %v4134 = vpop.f32.mrb[0].mxu0
        %4135 = vmatprep.mubr.bf16.mxu0 %v1160
        %4136 = vmatmul.mubr.bf16.gmra.mrb[0].mxu0 %v1159
        %v4137 = vpop.f32.mrb[0].mxu0
        %v4138 = vadd.f32 %v3977, %v4137
        %v4139 = vpop.f32.mrb[0].mxu0
        %v4140 = vpop.f32.mrb[0].mxu0
        %v4141 = vadd.f32 %v3980, %v4140
        %v4142 = vpop.f32.mrb[0].mxu0
        %4143 = vmatprep.mubr.bf16.mxu0 %v1166
        %4144 = vmatmul.mubr.bf16.gmra.mrb[0].mxu0 %v1165
        %v4145 = vpop.f32.mrb[0].mxu0
        %v4146 = vadd.f32 %v3985, %v4145
        %v4147 = vpop.f32.mrb[0].mxu0
        %v4148 = vpop.f32.mrb[0].mxu0
        %v4149 = vadd.f32 %v3988, %v4148
        %v4150 = vpop.f32.mrb[0].mxu0
        %4151 = vdwg.mxu0
        %v4152 = vld [vmem:[%s2] sm:$0xf]
        %v4154 = vlaneseq
        %v4155 = vshrl.u32 %v4154, 7
        %v4156 = vsub.s32 0, %v4155
        %v4157 = vrot.slane %v4152, %v4156
        %v4158 = vlaneseq
        %v4159 = vshrl.u32 %v4158, 7
        %v4160 = vsub.s32 1, %v4159
        %v4161 = vrot.slane %v4152, %v4160
        %v4162 = vlaneseq
        %v4163 = vshrl.u32 %v4162, 7
        %v4164 = vsub.s32 2, %v4163
        %v4165 = vrot.slane %v4152, %v4164
        %v4166 = vlaneseq
        %v4167 = vshrl.u32 %v4166, 7
        %v4168 = vsub.s32 3, %v4167
        %v4169 = vrot.slane %v4152, %v4168
        %v4174 = vadd.f32 %v2932, %v4157
        %v4175 = vadd.f32 %v2934, %v4161
        %v4176 = vadd.f32 %v3511, %v4165
        %v4177 = vadd.f32 %v3513, %v4169
        %v4178 = vadd.f32 %v2936, %v4157
        %v4179 = vadd.f32 %v2938, %v4161
        %v4180 = vadd.f32 %v3515, %v4165
        %v4181 = vadd.f32 %v3517, %v4169
        %v4182 = vadd.f32 %v2942, %v4157
        %v4183 = vadd.f32 %v2944, %v4161
        %v4184 = vadd.f32 %v3521, %v4165
        %v4185 = vadd.f32 %v3523, %v4169
        %v4186 = vadd.f32 %v2946, %v4157
        %v4187 = vadd.f32 %v2948, %v4161
        %v4188 = vadd.f32 %v3525, %v4165
        %v4189 = vadd.f32 %v3527, %v4169
        %v4190 = vadd.f32 %v2952, %v4157
        %v4191 = vadd.f32 %v2954, %v4161
        %v4192 = vadd.f32 %v3531, %v4165
        %v4193 = vadd.f32 %v3533, %v4169
        %v4194 = vadd.f32 %v2956, %v4157
        %v4195 = vadd.f32 %v2958, %v4161
        %v4196 = vadd.f32 %v3535, %v4165
        %v4197 = vadd.f32 %v3537, %v4169
        %v4198 = vadd.f32 %v2962, %v4157
        %v4199 = vadd.f32 %v2964, %v4161
        %v4200 = vadd.f32 %v3541, %v4165
        %v4201 = vadd.f32 %v3543, %v4169
        %v4202 = vadd.f32 %v2966, %v4157
        %v4203 = vadd.f32 %v2968, %v4161
        %v4204 = vadd.f32 %v3545, %v4165
        %v4205 = vadd.f32 %v3547, %v4169
        %v4206 = vadd.f32 %v2972, %v4157
        %v4207 = vadd.f32 %v2974, %v4161
        %v4208 = vadd.f32 %v3551, %v4165
        %v4209 = vadd.f32 %v3553, %v4169
        %v4210 = vadd.f32 %v2976, %v4157
        %v4211 = vadd.f32 %v2978, %v4161
        %v4212 = vadd.f32 %v3555, %v4165
        %v4213 = vadd.f32 %v3557, %v4169
        %v4214 = vadd.f32 %v2982, %v4157
        %v4215 = vadd.f32 %v2984, %v4161
        %v4216 = vadd.f32 %v3561, %v4165
        %v4217 = vadd.f32 %v3563, %v4169
        %v4218 = vadd.f32 %v2986, %v4157
        %v4219 = vadd.f32 %v2988, %v4161
        %v4220 = vadd.f32 %v3565, %v4165
        %v4221 = vadd.f32 %v3567, %v4169
        %v4222 = vadd.f32 %v2992, %v4157
        %v4223 = vadd.f32 %v2994, %v4161
        %v4224 = vadd.f32 %v3571, %v4165
        %v4225 = vadd.f32 %v3573, %v4169
        %v4226 = vadd.f32 %v2996, %v4157
        %v4227 = vadd.f32 %v2998, %v4161
        %v4228 = vadd.f32 %v3575, %v4165
        %v4229 = vadd.f32 %v3577, %v4169
        %v4230 = vadd.f32 %v3002, %v4157
        %v4231 = vadd.f32 %v3004, %v4161
        %v4232 = vadd.f32 %v3581, %v4165
        %v4233 = vadd.f32 %v3583, %v4169
        %v4234 = vadd.f32 %v3006, %v4157
        %v4235 = vadd.f32 %v3008, %v4161
        %v4236 = vadd.f32 %v3585, %v4165
        %v4237 = vadd.f32 %v3587, %v4169
        %v4238 = vadd.f32 %v3012, %v4157
        %v4239 = vadd.f32 %v3014, %v4161
        %v4240 = vadd.f32 %v3591, %v4165
        %v4241 = vadd.f32 %v3593, %v4169
        %v4242 = vadd.f32 %v3016, %v4157
        %v4243 = vadd.f32 %v3018, %v4161
        %v4244 = vadd.f32 %v3595, %v4165
        %v4245 = vadd.f32 %v3597, %v4169
        %v4246 = vadd.f32 %v3022, %v4157
        %v4247 = vadd.f32 %v3024, %v4161
        %v4248 = vadd.f32 %v3601, %v4165
        %v4249 = vadd.f32 %v3603, %v4169
        %v4250 = vadd.f32 %v3026, %v4157
        %v4251 = vadd.f32 %v3028, %v4161
        %v4252 = vadd.f32 %v3605, %v4165
        %v4253 = vadd.f32 %v3607, %v4169
        %v4254 = vadd.f32 %v3032, %v4157
        %v4255 = vadd.f32 %v3034, %v4161
        %v4256 = vadd.f32 %v3611, %v4165
        %v4257 = vadd.f32 %v3613, %v4169
        %v4258 = vadd.f32 %v3036, %v4157
        %v4259 = vadd.f32 %v3038, %v4161
        %v4260 = vadd.f32 %v3615, %v4165
        %v4261 = vadd.f32 %v3617, %v4169
        %v4262 = vadd.f32 %v3042, %v4157
        %v4263 = vadd.f32 %v3044, %v4161
        %v4264 = vadd.f32 %v3621, %v4165
        %v4265 = vadd.f32 %v3623, %v4169
        %v4266 = vadd.f32 %v3046, %v4157
        %v4267 = vadd.f32 %v3048, %v4161
        %v4268 = vadd.f32 %v3625, %v4165
        %v4269 = vadd.f32 %v3627, %v4169
        %v4270 = vadd.f32 %v3052, %v4157
        %v4271 = vadd.f32 %v3054, %v4161
        %v4272 = vadd.f32 %v3631, %v4165
        %v4273 = vadd.f32 %v3633, %v4169
        %v4274 = vadd.f32 %v3056, %v4157
        %v4275 = vadd.f32 %v3058, %v4161
        %v4276 = vadd.f32 %v3635, %v4165
        %v4277 = vadd.f32 %v3637, %v4169
        %v4278 = vadd.f32 %v3062, %v4157
        %v4279 = vadd.f32 %v3064, %v4161
        %v4280 = vadd.f32 %v3641, %v4165
        %v4281 = vadd.f32 %v3643, %v4169
        %v4282 = vadd.f32 %v3066, %v4157
        %v4283 = vadd.f32 %v3068, %v4161
        %v4284 = vadd.f32 %v3645, %v4165
        %v4285 = vadd.f32 %v3647, %v4169
        %v4286 = vadd.f32 %v3072, %v4157
        %v4287 = vadd.f32 %v3074, %v4161
        %v4288 = vadd.f32 %v3651, %v4165
        %v4289 = vadd.f32 %v3653, %v4169
        %v4290 = vadd.f32 %v3076, %v4157
        %v4291 = vadd.f32 %v3078, %v4161
        %v4292 = vadd.f32 %v3655, %v4165
        %v4293 = vadd.f32 %v3657, %v4169
        %v4294 = vadd.f32 %v3082, %v4157
        %v4295 = vadd.f32 %v3084, %v4161
        %v4296 = vadd.f32 %v3661, %v4165
        %v4297 = vadd.f32 %v3663, %v4169
        %v4298 = vadd.f32 %v3086, %v4157
        %v4299 = vadd.f32 %v3088, %v4161
        %v4300 = vadd.f32 %v3665, %v4165
        %v4301 = vadd.f32 %v3667, %v4169
        %v4302 = vpack.c.bf16 %v4178, %v4174
        %v4303 = vpack.c.bf16 %v4179, %v4175
        %v4304 = vpack.c.bf16 %v4180, %v4176
        %v4305 = vpack.c.bf16 %v4181, %v4177
        %v4306 = vpack.c.bf16 %v4186, %v4182
        %v4307 = vpack.c.bf16 %v4187, %v4183
        %v4308 = vpack.c.bf16 %v4188, %v4184
        %v4309 = vpack.c.bf16 %v4189, %v4185
        %v4310 = vpack.c.bf16 %v4194, %v4190
        %v4311 = vpack.c.bf16 %v4195, %v4191
        %v4312 = vpack.c.bf16 %v4196, %v4192
        %v4313 = vpack.c.bf16 %v4197, %v4193
        %v4314 = vpack.c.bf16 %v4202, %v4198
        %v4315 = vpack.c.bf16 %v4203, %v4199
        %v4316 = vpack.c.bf16 %v4204, %v4200
        %v4317 = vpack.c.bf16 %v4205, %v4201
        %v4318 = vpack.c.bf16 %v4210, %v4206
        %v4319 = vpack.c.bf16 %v4211, %v4207
        %v4320 = vpack.c.bf16 %v4212, %v4208
        %v4321 = vpack.c.bf16 %v4213, %v4209
        %v4322 = vpack.c.bf16 %v4218, %v4214
        %v4323 = vpack.c.bf16 %v4219, %v4215
        %v4324 = vpack.c.bf16 %v4220, %v4216
        %v4325 = vpack.c.bf16 %v4221, %v4217
        %v4326 = vpack.c.bf16 %v4226, %v4222
        %v4327 = vpack.c.bf16 %v4227, %v4223
        %v4328 = vpack.c.bf16 %v4228, %v4224
        %v4329 = vpack.c.bf16 %v4229, %v4225
        %v4330 = vpack.c.bf16 %v4234, %v4230
        %v4331 = vpack.c.bf16 %v4235, %v4231
        %v4332 = vpack.c.bf16 %v4236, %v4232
        %v4333 = vpack.c.bf16 %v4237, %v4233
        %v4334 = vpack.c.bf16 %v4242, %v4238
        %v4335 = vpack.c.bf16 %v4243, %v4239
        %v4336 = vpack.c.bf16 %v4244, %v4240
        %v4337 = vpack.c.bf16 %v4245, %v4241
        %v4338 = vpack.c.bf16 %v4250, %v4246
        %v4339 = vpack.c.bf16 %v4251, %v4247
        %v4340 = vpack.c.bf16 %v4252, %v4248
        %v4341 = vpack.c.bf16 %v4253, %v4249
        %v4342 = vpack.c.bf16 %v4258, %v4254
        %v4343 = vpack.c.bf16 %v4259, %v4255
        %v4344 = vpack.c.bf16 %v4260, %v4256
        %v4345 = vpack.c.bf16 %v4261, %v4257
        %v4346 = vpack.c.bf16 %v4266, %v4262
        %v4347 = vpack.c.bf16 %v4267, %v4263
        %v4348 = vpack.c.bf16 %v4268, %v4264
        %v4349 = vpack.c.bf16 %v4269, %v4265
        %v4350 = vpack.c.bf16 %v4274, %v4270
        %v4351 = vpack.c.bf16 %v4275, %v4271
        %v4352 = vpack.c.bf16 %v4276, %v4272
        %v4353 = vpack.c.bf16 %v4277, %v4273
        %v4354 = vpack.c.bf16 %v4282, %v4278
        %v4355 = vpack.c.bf16 %v4283, %v4279
        %v4356 = vpack.c.bf16 %v4284, %v4280
        %v4357 = vpack.c.bf16 %v4285, %v4281
        %v4358 = vpack.c.bf16 %v4290, %v4286
        %v4359 = vpack.c.bf16 %v4291, %v4287
        %v4360 = vpack.c.bf16 %v4292, %v4288
        %v4361 = vpack.c.bf16 %v4293, %v4289
        %v4362 = vpack.c.bf16 %v4298, %v4294
        %v4363 = vpack.c.bf16 %v4299, %v4295
        %v4364 = vpack.c.bf16 %v4300, %v4296
        %v4365 = vpack.c.bf16 %v4301, %v4297
        %v4366 = vld [vmem:[#allocation7] sm:$0xff]
        %v4367 = vld [vmem:[#allocation7 + $0x8] sm:$0xff]
        %v4368 = vld [vmem:[#allocation7 + $0x10] sm:$0xff]
        %v4369 = vld [vmem:[#allocation7 + $0x18] sm:$0xff]
        %v4370 = vld [vmem:[#allocation7 + $0x20] sm:$0xff]
        %v4371 = vld [vmem:[#allocation7 + $0x28] sm:$0xff]
        %v4372 = vld [vmem:[#allocation7 + $0x30] sm:$0xff]
        %v4373 = vld [vmem:[#allocation7 + $0x38] sm:$0xff]
        %v4374 = vld [vmem:[#allocation7 + $0x40] sm:$0xff]
        %v4375 = vld [vmem:[#allocation7 + $0x48] sm:$0xff]
        %v4376 = vld [vmem:[#allocation7 + $0x50] sm:$0xff]
        %v4377 = vld [vmem:[#allocation7 + $0x58] sm:$0xff]
        %v4378 = vld [vmem:[#allocation7 + $0x60] sm:$0xff]
        %v4379 = vld [vmem:[#allocation7 + $0x68] sm:$0xff]
        %v4380 = vld [vmem:[#allocation7 + $0x70] sm:$0xff]
        %v4381 = vld [vmem:[#allocation7 + $0x78] sm:$0xff]
        %v4382 = vld [vmem:[#allocation7 + $0x80] sm:$0xff]
        %v4383 = vld [vmem:[#allocation7 + $0x88] sm:$0xff]
        %v4384 = vld [vmem:[#allocation7 + $0x90] sm:$0xff]
        %v4385 = vld [vmem:[#allocation7 + $0x98] sm:$0xff]
        %v4386 = vld [vmem:[#allocation7 + $0xa0] sm:$0xff]
        %v4387 = vld [vmem:[#allocation7 + $0xa8] sm:$0xff]
        %v4388 = vld [vmem:[#allocation7 + $0xb0] sm:$0xff]
        %v4389 = vld [vmem:[#allocation7 + $0xb8] sm:$0xff]
        %v4390 = vld [vmem:[#allocation7 + $0xc0] sm:$0xff]
        %v4391 = vld [vmem:[#allocation7 + $0xc8] sm:$0xff]
        %v4392 = vld [vmem:[#allocation7 + $0xd0] sm:$0xff]
        %v4393 = vld [vmem:[#allocation7 + $0xd8] sm:$0xff]
        %v4394 = vld [vmem:[#allocation7 + $0xe0] sm:$0xff]
        %v4395 = vld [vmem:[#allocation7 + $0xe8] sm:$0xff]
        %v4396 = vld [vmem:[#allocation7 + $0xf0] sm:$0xff]
        %v4397 = vld [vmem:[#allocation7 + $0xf8] sm:$0xff]
        %v4398 = vld [vmem:[#allocation7 + $0x100] sm:$0xff]
        %v4399 = vld [vmem:[#allocation7 + $0x108] sm:$0xff]
        %v4400 = vld [vmem:[#allocation7 + $0x110] sm:$0xff]
        %v4401 = vld [vmem:[#allocation7 + $0x118] sm:$0xff]
        %v4402 = vld [vmem:[#allocation7 + $0x120] sm:$0xff]
        %v4403 = vld [vmem:[#allocation7 + $0x128] sm:$0xff]
        %v4404 = vld [vmem:[#allocation7 + $0x130] sm:$0xff]
        %v4405 = vld [vmem:[#allocation7 + $0x138] sm:$0xff]
        %v4406 = vld [vmem:[#allocation7 + $0x140] sm:$0xff]
        %v4407 = vld [vmem:[#allocation7 + $0x148] sm:$0xff]
        %v4408 = vld [vmem:[#allocation7 + $0x150] sm:$0xff]
        %v4409 = vld [vmem:[#allocation7 + $0x158] sm:$0xff]
        %v4410 = vld [vmem:[#allocation7 + $0x160] sm:$0xff]
        %v4411 = vld [vmem:[#allocation7 + $0x168] sm:$0xff]
        %v4412 = vld [vmem:[#allocation7 + $0x170] sm:$0xff]
        %v4413 = vld [vmem:[#allocation7 + $0x178] sm:$0xff]
        %v4414 = vld [vmem:[#allocation7 + $0x180] sm:$0xff]
        %v4415 = vld [vmem:[#allocation7 + $0x188] sm:$0xff]
        %v4416 = vld [vmem:[#allocation7 + $0x190] sm:$0xff]
        %v4417 = vld [vmem:[#allocation7 + $0x198] sm:$0xff]
        %v4418 = vld [vmem:[#allocation7 + $0x1a0] sm:$0xff]
        %v4419 = vld [vmem:[#allocation7 + $0x1a8] sm:$0xff]
        %v4420 = vld [vmem:[#allocation7 + $0x1b0] sm:$0xff]
        %v4421 = vld [vmem:[#allocation7 + $0x1b8] sm:$0xff]
        %v4422 = vld [vmem:[#allocation7 + $0x1c0] sm:$0xff]
        %v4423 = vld [vmem:[#allocation7 + $0x1c8] sm:$0xff]
        %v4424 = vld [vmem:[#allocation7 + $0x1d0] sm:$0xff]
        %v4425 = vld [vmem:[#allocation7 + $0x1d8] sm:$0xff]
        %v4426 = vld [vmem:[#allocation7 + $0x1e0] sm:$0xff]
        %v4427 = vld [vmem:[#allocation7 + $0x1e8] sm:$0xff]
        %v4428 = vld [vmem:[#allocation7 + $0x1f0] sm:$0xff]
        %v4429 = vld [vmem:[#allocation7 + $0x1f8] sm:$0xff]
        %v4430 = vld [vmem:[%s4] sm:$0x3]
        %v4432 = vlaneseq
        %v4433 = vshrl.u32 %v4432, 7
        %v4434 = vsub.s32 0, %v4433
        %v4435 = vrot.slane %v4430, %v4434
        %v4436 = vlaneseq
        %v4437 = vshrl.u32 %v4436, 7
        %v4438 = vsub.s32 1, %v4437
        %v4439 = vrot.slane %v4430, %v4438
        %v4506 = vunpack.c.l.b16 %v4366
        %v4507 = vunpack.c.h.b16 %v4366
        %v4508 = vunpack.c.l.b16 %v4367
        %v4509 = vunpack.c.h.b16 %v4367
        %v4510 = vunpack.c.l.b16 %v4368
        %v4511 = vunpack.c.h.b16 %v4368
        %v4512 = vunpack.c.l.b16 %v4369
        %v4513 = vunpack.c.h.b16 %v4369
        %v4514 = vunpack.c.l.b16 %v4370
        %v4515 = vunpack.c.h.b16 %v4370
        %v4516 = vunpack.c.l.b16 %v4371
        %v4517 = vunpack.c.h.b16 %v4371
        %v4518 = vunpack.c.l.b16 %v4372
        %v4519 = vunpack.c.h.b16 %v4372
        %v4520 = vunpack.c.l.b16 %v4373
        %v4521 = vunpack.c.h.b16 %v4373
        %v4522 = vunpack.c.l.b16 %v4374
        %v4523 = vunpack.c.h.b16 %v4374
        %v4524 = vunpack.c.l.b16 %v4375
        %v4525 = vunpack.c.h.b16 %v4375
        %v4526 = vunpack.c.l.b16 %v4376
        %v4527 = vunpack.c.h.b16 %v4376
        %v4528 = vunpack.c.l.b16 %v4377
        %v4529 = vunpack.c.h.b16 %v4377
        %v4530 = vunpack.c.l.b16 %v4378
        %v4531 = vunpack.c.h.b16 %v4378
        %v4532 = vunpack.c.l.b16 %v4379
        %v4533 = vunpack.c.h.b16 %v4379
        %v4534 = vunpack.c.l.b16 %v4380
        %v4535 = vunpack.c.h.b16 %v4380
        %v4536 = vunpack.c.l.b16 %v4381
        %v4537 = vunpack.c.h.b16 %v4381
        %v4538 = vunpack.c.l.b16 %v4382
        %v4539 = vunpack.c.h.b16 %v4382
        %v4540 = vunpack.c.l.b16 %v4383
        %v4541 = vunpack.c.h.b16 %v4383
        %v4542 = vunpack.c.l.b16 %v4384
        %v4543 = vunpack.c.h.b16 %v4384
        %v4544 = vunpack.c.l.b16 %v4385
        %v4545 = vunpack.c.h.b16 %v4385
        %v4546 = vunpack.c.l.b16 %v4386
        %v4547 = vunpack.c.h.b16 %v4386
        %v4548 = vunpack.c.l.b16 %v4387
        %v4549 = vunpack.c.h.b16 %v4387
        %v4550 = vunpack.c.l.b16 %v4388
        %v4551 = vunpack.c.h.b16 %v4388
        %v4552 = vunpack.c.l.b16 %v4389
        %v4553 = vunpack.c.h.b16 %v4389
        %v4554 = vunpack.c.l.b16 %v4390
        %v4555 = vunpack.c.h.b16 %v4390
        %v4556 = vunpack.c.l.b16 %v4391
        %v4557 = vunpack.c.h.b16 %v4391
        %v4558 = vunpack.c.l.b16 %v4392
        %v4559 = vunpack.c.h.b16 %v4392
        %v4560 = vunpack.c.l.b16 %v4393
        %v4561 = vunpack.c.h.b16 %v4393
        %v4562 = vunpack.c.l.b16 %v4394
        %v4563 = vunpack.c.h.b16 %v4394
        %v4564 = vunpack.c.l.b16 %v4395
        %v4565 = vunpack.c.h.b16 %v4395
        %v4566 = vunpack.c.l.b16 %v4396
        %v4567 = vunpack.c.h.b16 %v4396
        %v4568 = vunpack.c.l.b16 %v4397
        %v4569 = vunpack.c.h.b16 %v4397
        %v4570 = vunpack.c.l.b16 %v4398
        %v4571 = vunpack.c.h.b16 %v4398
        %v4572 = vunpack.c.l.b16 %v4399
        %v4573 = vunpack.c.h.b16 %v4399
        %v4574 = vunpack.c.l.b16 %v4400
        %v4575 = vunpack.c.h.b16 %v4400
        %v4576 = vunpack.c.l.b16 %v4401
        %v4577 = vunpack.c.h.b16 %v4401
        %v4578 = vunpack.c.l.b16 %v4402
        %v4579 = vunpack.c.h.b16 %v4402
        %v4580 = vunpack.c.l.b16 %v4403
        %v4581 = vunpack.c.h.b16 %v4403
        %v4582 = vunpack.c.l.b16 %v4404
        %v4583 = vunpack.c.h.b16 %v4404
        %v4584 = vunpack.c.l.b16 %v4405
        %v4585 = vunpack.c.h.b16 %v4405
        %v4586 = vunpack.c.l.b16 %v4406
        %v4587 = vunpack.c.h.b16 %v4406
        %v4588 = vunpack.c.l.b16 %v4407
        %v4589 = vunpack.c.h.b16 %v4407
        %v4590 = vunpack.c.l.b16 %v4408
        %v4591 = vunpack.c.h.b16 %v4408
        %v4592 = vunpack.c.l.b16 %v4409
        %v4593 = vunpack.c.h.b16 %v4409
        %v4594 = vunpack.c.l.b16 %v4410
        %v4595 = vunpack.c.h.b16 %v4410
        %v4596 = vunpack.c.l.b16 %v4411
        %v4597 = vunpack.c.h.b16 %v4411
        %v4598 = vunpack.c.l.b16 %v4412
        %v4599 = vunpack.c.h.b16 %v4412
        %v4600 = vunpack.c.l.b16 %v4413
        %v4601 = vunpack.c.h.b16 %v4413
        %v4602 = vunpack.c.l.b16 %v4414
        %v4603 = vunpack.c.h.b16 %v4414
        %v4604 = vunpack.c.l.b16 %v4415
        %v4605 = vunpack.c.h.b16 %v4415
        %v4606 = vunpack.c.l.b16 %v4416
        %v4607 = vunpack.c.h.b16 %v4416
        %v4608 = vunpack.c.l.b16 %v4417
        %v4609 = vunpack.c.h.b16 %v4417
        %v4610 = vunpack.c.l.b16 %v4418
        %v4611 = vunpack.c.h.b16 %v4418
        %v4612 = vunpack.c.l.b16 %v4419
        %v4613 = vunpack.c.h.b16 %v4419
        %v4614 = vunpack.c.l.b16 %v4420
        %v4615 = vunpack.c.h.b16 %v4420
        %v4616 = vunpack.c.l.b16 %v4421
        %v4617 = vunpack.c.h.b16 %v4421
        %v4618 = vunpack.c.l.b16 %v4422
        %v4619 = vunpack.c.h.b16 %v4422
        %v4620 = vunpack.c.l.b16 %v4423
        %v4621 = vunpack.c.h.b16 %v4423
        %v4622 = vunpack.c.l.b16 %v4424
        %v4623 = vunpack.c.h.b16 %v4424
        %v4624 = vunpack.c.l.b16 %v4425
        %v4625 = vunpack.c.h.b16 %v4425
        %v4626 = vunpack.c.l.b16 %v4426
        %v4627 = vunpack.c.h.b16 %v4426
        %v4628 = vunpack.c.l.b16 %v4427
        %v4629 = vunpack.c.h.b16 %v4427
        %v4630 = vunpack.c.l.b16 %v4428
        %v4631 = vunpack.c.h.b16 %v4428
        %v4632 = vunpack.c.l.b16 %v4429
        %v4633 = vunpack.c.h.b16 %v4429
        %v4634 = vpack.c.b16 %v4508, %v4506
        %v4635 = vpack.c.b16 %v4509, %v4507
        %v4636 = vpack.c.b16 %v4512, %v4510
        %v4637 = vpack.c.b16 %v4513, %v4511
        %v4638 = vpack.c.b16 %v4516, %v4514
        %v4639 = vpack.c.b16 %v4517, %v4515
        %v4640 = vpack.c.b16 %v4520, %v4518
        %v4641 = vpack.c.b16 %v4521, %v4519
        %v4642 = vpack.c.b16 %v4524, %v4522
        %v4643 = vpack.c.b16 %v4525, %v4523
        %v4644 = vpack.c.b16 %v4528, %v4526
        %v4645 = vpack.c.b16 %v4529, %v4527
        %v4646 = vpack.c.b16 %v4532, %v4530
        %v4647 = vpack.c.b16 %v4533, %v4531
        %v4648 = vpack.c.b16 %v4536, %v4534
        %v4649 = vpack.c.b16 %v4537, %v4535
        %v4650 = vpack.c.b16 %v4540, %v4538
        %v4651 = vpack.c.b16 %v4541, %v4539
        %v4652 = vpack.c.b16 %v4544, %v4542
        %v4653 = vpack.c.b16 %v4545, %v4543
        %v4654 = vpack.c.b16 %v4548, %v4546
        %v4655 = vpack.c.b16 %v4549, %v4547
        %v4656 = vpack.c.b16 %v4552, %v4550
        %v4657 = vpack.c.b16 %v4553, %v4551
        %v4658 = vpack.c.b16 %v4556, %v4554
        %v4659 = vpack.c.b16 %v4557, %v4555
        %v4660 = vpack.c.b16 %v4560, %v4558
        %v4661 = vpack.c.b16 %v4561, %v4559
        %v4662 = vpack.c.b16 %v4564, %v4562
        %v4663 = vpack.c.b16 %v4565, %v4563
        %v4664 = vpack.c.b16 %v4568, %v4566
        %v4665 = vpack.c.b16 %v4569, %v4567
        %v4666 = vpack.c.b16 %v4572, %v4570
        %v4667 = vpack.c.b16 %v4573, %v4571
        %v4668 = vpack.c.b16 %v4576, %v4574
        %v4669 = vpack.c.b16 %v4577, %v4575
        %v4670 = vpack.c.b16 %v4580, %v4578
        %v4671 = vpack.c.b16 %v4581, %v4579
        %v4672 = vpack.c.b16 %v4584, %v4582
        %v4673 = vpack.c.b16 %v4585, %v4583
        %v4674 = vpack.c.b16 %v4588, %v4586
        %v4675 = vpack.c.b16 %v4589, %v4587
        %v4676 = vpack.c.b16 %v4592, %v4590
        %v4677 = vpack.c.b16 %v4593, %v4591
        %v4678 = vpack.c.b16 %v4596, %v4594
        %v4679 = vpack.c.b16 %v4597, %v4595
        %v4680 = vpack.c.b16 %v4600, %v4598
        %v4681 = vpack.c.b16 %v4601, %v4599
        %v4682 = vpack.c.b16 %v4604, %v4602
        %v4683 = vpack.c.b16 %v4605, %v4603
        %v4684 = vpack.c.b16 %v4608, %v4606
        %v4685 = vpack.c.b16 %v4609, %v4607
        %v4686 = vpack.c.b16 %v4612, %v4610
        %v4687 = vpack.c.b16 %v4613, %v4611
        %v4688 = vpack.c.b16 %v4616, %v4614
        %v4689 = vpack.c.b16 %v4617, %v4615
        %v4690 = vpack.c.b16 %v4620, %v4618
        %v4691 = vpack.c.b16 %v4621, %v4619
        %v4692 = vpack.c.b16 %v4624, %v4622
        %v4693 = vpack.c.b16 %v4625, %v4623
        %v4694 = vpack.c.b16 %v4628, %v4626
        %v4695 = vpack.c.b16 %v4629, %v4627
        %v4696 = vpack.c.b16 %v4632, %v4630
        %v4697 = vpack.c.b16 %v4633, %v4631
        %4762 = vmatprep.subr.bf16.mxu0 %v4635
        %4763 = vmatpush1.bf16.msra.mxu0 %v4634
        %4764 = vmatprep.subr.bf16.mxu0 %v4637
        %4765 = vmatpush1.bf16.msra.mxu0 %v4636
        %4766 = vmatprep.subr.bf16.mxu0 %v4639
        %4767 = vmatpush1.bf16.msra.mxu0 %v4638
        %4768 = vmatprep.subr.bf16.mxu0 %v4641
        %4769 = vmatpush1.bf16.msra.mxu0 %v4640
        %4770 = vmatprep.subr.bf16.mxu0 %v4643
        %4771 = vmatpush1.bf16.msra.mxu0 %v4642
        %4772 = vmatprep.subr.bf16.mxu0 %v4645
        %4773 = vmatpush1.bf16.msra.mxu0 %v4644
        %4774 = vmatprep.subr.bf16.mxu0 %v4647
        %4775 = vmatpush1.bf16.msra.mxu0 %v4646
        %4776 = vmatprep.subr.bf16.mxu0 %v4649
        %4777 = vmatpush1.bf16.msra.mxu0 %v4648
        %4778 = vmatprep.subr.bf16.mxu0 %v4651
        %4779 = vmatpush1.bf16.msra.mxu0 %v4650
        %4780 = vmatprep.subr.bf16.mxu0 %v4653
        %4781 = vmatpush1.bf16.msra.mxu0 %v4652
        %4782 = vmatprep.subr.bf16.mxu0 %v4655
        %4783 = vmatpush1.bf16.msra.mxu0 %v4654
        %4784 = vmatprep.subr.bf16.mxu0 %v4657
        %4785 = vmatpush1.bf16.msra.mxu0 %v4656
        %4786 = vmatprep.subr.bf16.mxu0 %v4659
        %4787 = vmatpush1.bf16.msra.mxu0 %v4658
        %4788 = vmatprep.subr.bf16.mxu0 %v4661
        %4789 = vmatpush1.bf16.msra.mxu0 %v4660
        %4790 = vmatprep.subr.bf16.mxu0 %v4663
        %4791 = vmatpush1.bf16.msra.mxu0 %v4662
        %4792 = vmatprep.subr.bf16.mxu0 %v4665
        %4793 = vmatpush1.bf16.msra.mxu0 %v4664
        %4794 = vmatprep.mubr.bf16.mxu0 %v4303
        %4795 = vmatmul.mubr.bf16.gmra.mrb[0].mxu0 %v4302
        %v4796 = vpop.f32.mrb[0].mxu0
        %v4797 = vadd.f32 %v4435, %v4796
        %v4798 = vpop.f32.mrb[0].mxu0
        %v4799 = vadd.f32 %v4439, %v4798
        %v4800 = vpop.f32.mrb[0].mxu0
        %v4801 = vadd.f32 %v4435, %v4800
        %v4802 = vpop.f32.mrb[0].mxu0
        %v4803 = vadd.f32 %v4439, %v4802
        %4804 = vmatprep.mubr.bf16.mxu0 %v4307
        %4805 = vmatmul.mubr.bf16.gmra.mrb[0].mxu0 %v4306
        %v4806 = vpop.f32.mrb[0].mxu0
        %v4807 = vadd.f32 %v4435, %v4806
        %v4808 = vpop.f32.mrb[0].mxu0
        %v4809 = vadd.f32 %v4439, %v4808
        %v4810 = vpop.f32.mrb[0].mxu0
        %v4811 = vadd.f32 %v4435, %v4810
        %v4812 = vpop.f32.mrb[0].mxu0
        %v4813 = vadd.f32 %v4439, %v4812
        %4814 = vmatprep.mubr.bf16.mxu0 %v4311
        %4815 = vmatmul.mubr.bf16.gmra.mrb[0].mxu0 %v4310
        %v4816 = vpop.f32.mrb[0].mxu0
        %v4817 = vadd.f32 %v4435, %v4816
        %v4818 = vpop.f32.mrb[0].mxu0
        %v4819 = vadd.f32 %v4439, %v4818
        %v4820 = vpop.f32.mrb[0].mxu0
        %v4821 = vadd.f32 %v4435, %v4820
        %v4822 = vpop.f32.mrb[0].mxu0
        %v4823 = vadd.f32 %v4439, %v4822
        %4824 = vmatprep.mubr.bf16.mxu0 %v4315
        %4825 = vmatmul.mubr.bf16.gmra.mrb[0].mxu0 %v4314
        %v4826 = vpop.f32.mrb[0].mxu0
        %v4827 = vadd.f32 %v4435, %v4826
        %v4828 = vpop.f32.mrb[0].mxu0
        %v4829 = vadd.f32 %v4439, %v4828
        %v4830 = vpop.f32.mrb[0].mxu0
        %v4831 = vadd.f32 %v4435, %v4830
        %v4832 = vpop.f32.mrb[0].mxu0
        %v4833 = vadd.f32 %v4439, %v4832
        %4834 = vmatprep.mubr.bf16.mxu0 %v4319
        %4835 = vmatmul.mubr.bf16.gmra.mrb[0].mxu0 %v4318
        %v4836 = vpop.f32.mrb[0].mxu0
        %v4837 = vadd.f32 %v4435, %v4836
        %v4838 = vpop.f32.mrb[0].mxu0
        %v4839 = vadd.f32 %v4439, %v4838
        %v4840 = vpop.f32.mrb[0].mxu0
        %v4841 = vadd.f32 %v4435, %v4840
        %v4842 = vpop.f32.mrb[0].mxu0
        %v4843 = vadd.f32 %v4439, %v4842
        %4844 = vmatprep.mubr.bf16.mxu0 %v4323
        %4845 = vmatmul.mubr.bf16.gmra.mrb[0].mxu0 %v4322
        %v4846 = vpop.f32.mrb[0].mxu0
        %v4847 = vadd.f32 %v4435, %v4846
        %v4848 = vpop.f32.mrb[0].mxu0
        %v4849 = vadd.f32 %v4439, %v4848
        %v4850 = vpop.f32.mrb[0].mxu0
        %v4851 = vadd.f32 %v4435, %v4850
        %v4852 = vpop.f32.mrb[0].mxu0
        %v4853 = vadd.f32 %v4439, %v4852
        %4854 = vmatprep.mubr.bf16.mxu0 %v4327
        %4855 = vmatmul.mubr.bf16.gmra.mrb[0].mxu0 %v4326
        %v4856 = vpop.f32.mrb[0].mxu0
        %v4857 = vadd.f32 %v4435, %v4856
        %v4858 = vpop.f32.mrb[0].mxu0
        %v4859 = vadd.f32 %v4439, %v4858
        %v4860 = vpop.f32.mrb[0].mxu0
        %v4861 = vadd.f32 %v4435, %v4860
        %v4862 = vpop.f32.mrb[0].mxu0
        %v4863 = vadd.f32 %v4439, %v4862
        %4864 = vmatprep.mubr.bf16.mxu0 %v4331
        %4865 = vmatmul.mubr.bf16.gmra.mrb[0].mxu0 %v4330
        %v4866 = vpop.f32.mrb[0].mxu0
        %v4867 = vadd.f32 %v4435, %v4866
        %v4868 = vpop.f32.mrb[0].mxu0
        %v4869 = vadd.f32 %v4439, %v4868
        %v4870 = vpop.f32.mrb[0].mxu0
        %v4871 = vadd.f32 %v4435, %v4870
        %v4872 = vpop.f32.mrb[0].mxu0
        %v4873 = vadd.f32 %v4439, %v4872
        %4874 = vmatprep.mubr.bf16.mxu0 %v4335
        %4875 = vmatmul.mubr.bf16.gmra.mrb[0].mxu0 %v4334
        %v4876 = vpop.f32.mrb[0].mxu0
        %v4877 = vadd.f32 %v4435, %v4876
        %v4878 = vpop.f32.mrb[0].mxu0
        %v4879 = vadd.f32 %v4439, %v4878
        %v4880 = vpop.f32.mrb[0].mxu0
        %v4881 = vadd.f32 %v4435, %v4880
        %v4882 = vpop.f32.mrb[0].mxu0
        %v4883 = vadd.f32 %v4439, %v4882
        %4884 = vmatprep.mubr.bf16.mxu0 %v4339
        %4885 = vmatmul.mubr.bf16.gmra.mrb[0].mxu0 %v4338
        %v4886 = vpop.f32.mrb[0].mxu0
        %v4887 = vadd.f32 %v4435, %v4886
        %v4888 = vpop.f32.mrb[0].mxu0
        %v4889 = vadd.f32 %v4439, %v4888
        %v4890 = vpop.f32.mrb[0].mxu0
        %v4891 = vadd.f32 %v4435, %v4890
        %v4892 = vpop.f32.mrb[0].mxu0
        %v4893 = vadd.f32 %v4439, %v4892
        %4894 = vmatprep.mubr.bf16.mxu0 %v4343
        %4895 = vmatmul.mubr.bf16.gmra.mrb[0].mxu0 %v4342
        %v4896 = vpop.f32.mrb[0].mxu0
        %v4897 = vadd.f32 %v4435, %v4896
        %v4898 = vpop.f32.mrb[0].mxu0
        %v4899 = vadd.f32 %v4439, %v4898
        %v4900 = vpop.f32.mrb[0].mxu0
        %v4901 = vadd.f32 %v4435, %v4900
        %v4902 = vpop.f32.mrb[0].mxu0
        %v4903 = vadd.f32 %v4439, %v4902
        %4904 = vmatprep.mubr.bf16.mxu0 %v4347
        %4905 = vmatmul.mubr.bf16.gmra.mrb[0].mxu0 %v4346
        %v4906 = vpop.f32.mrb[0].mxu0
        %v4907 = vadd.f32 %v4435, %v4906
        %v4908 = vpop.f32.mrb[0].mxu0
        %v4909 = vadd.f32 %v4439, %v4908
        %v4910 = vpop.f32.mrb[0].mxu0
        %v4911 = vadd.f32 %v4435, %v4910
        %v4912 = vpop.f32.mrb[0].mxu0
        %v4913 = vadd.f32 %v4439, %v4912
        %4914 = vmatprep.mubr.bf16.mxu0 %v4351
        %4915 = vmatmul.mubr.bf16.gmra.mrb[0].mxu0 %v4350
        %v4916 = vpop.f32.mrb[0].mxu0
        %v4917 = vadd.f32 %v4435, %v4916
        %v4918 = vpop.f32.mrb[0].mxu0
        %v4919 = vadd.f32 %v4439, %v4918
        %v4920 = vpop.f32.mrb[0].mxu0
        %v4921 = vadd.f32 %v4435, %v4920
        %v4922 = vpop.f32.mrb[0].mxu0
        %v4923 = vadd.f32 %v4439, %v4922
        %4924 = vmatprep.mubr.bf16.mxu0 %v4355
        %4925 = vmatmul.mubr.bf16.gmra.mrb[0].mxu0 %v4354
        %v4926 = vpop.f32.mrb[0].mxu0
        %v4927 = vadd.f32 %v4435, %v4926
        %v4928 = vpop.f32.mrb[0].mxu0
        %v4929 = vadd.f32 %v4439, %v4928
        %v4930 = vpop.f32.mrb[0].mxu0
        %v4931 = vadd.f32 %v4435, %v4930
        %v4932 = vpop.f32.mrb[0].mxu0
        %v4933 = vadd.f32 %v4439, %v4932
        %4934 = vmatprep.mubr.bf16.mxu0 %v4359
        %4935 = vmatmul.mubr.bf16.gmra.mrb[0].mxu0 %v4358
        %v4936 = vpop.f32.mrb[0].mxu0
        %v4937 = vadd.f32 %v4435, %v4936
        %v4938 = vpop.f32.mrb[0].mxu0
        %v4939 = vadd.f32 %v4439, %v4938
        %v4940 = vpop.f32.mrb[0].mxu0
        %v4941 = vadd.f32 %v4435, %v4940
        %v4942 = vpop.f32.mrb[0].mxu0
        %v4943 = vadd.f32 %v4439, %v4942
        %4944 = vmatprep.mubr.bf16.mxu0 %v4363
        %4945 = vmatmul.mubr.bf16.gmra.mrb[0].mxu0 %v4362
        %v4946 = vpop.f32.mrb[0].mxu0
        %v4947 = vadd.f32 %v4435, %v4946
        %v4948 = vpop.f32.mrb[0].mxu0
        %v4949 = vadd.f32 %v4439, %v4948
        %v4950 = vpop.f32.mrb[0].mxu0
        %v4951 = vadd.f32 %v4435, %v4950
        %v4952 = vpop.f32.mrb[0].mxu0
        %v4953 = vadd.f32 %v4439, %v4952
        %4954 = vdwg.mxu0
        %4955 = vmatprep.subr.bf16.mxu0 %v4667
        %4956 = vmatpush1.bf16.msra.mxu0 %v4666
        %4957 = vmatprep.subr.bf16.mxu0 %v4669
        %4958 = vmatpush1.bf16.msra.mxu0 %v4668
        %4959 = vmatprep.subr.bf16.mxu0 %v4671
        %4960 = vmatpush1.bf16.msra.mxu0 %v4670
        %4961 = vmatprep.subr.bf16.mxu0 %v4673
        %4962 = vmatpush1.bf16.msra.mxu0 %v4672
        %4963 = vmatprep.subr.bf16.mxu0 %v4675
        %4964 = vmatpush1.bf16.msra.mxu0 %v4674
        %4965 = vmatprep.subr.bf16.mxu0 %v4677
        %4966 = vmatpush1.bf16.msra.mxu0 %v4676
        %4967 = vmatprep.subr.bf16.mxu0 %v4679
        %4968 = vmatpush1.bf16.msra.mxu0 %v4678
        %4969 = vmatprep.subr.bf16.mxu0 %v4681
        %4970 = vmatpush1.bf16.msra.mxu0 %v4680
        %4971 = vmatprep.subr.bf16.mxu0 %v4683
        %4972 = vmatpush1.bf16.msra.mxu0 %v4682
        %4973 = vmatprep.subr.bf16.mxu0 %v4685
        %4974 = vmatpush1.bf16.msra.mxu0 %v4684
        %4975 = vmatprep.subr.bf16.mxu0 %v4687
        %4976 = vmatpush1.bf16.msra.mxu0 %v4686
        %4977 = vmatprep.subr.bf16.mxu0 %v4689
        %4978 = vmatpush1.bf16.msra.mxu0 %v4688
        %4979 = vmatprep.subr.bf16.mxu0 %v4691
        %4980 = vmatpush1.bf16.msra.mxu0 %v4690
        %4981 = vmatprep.subr.bf16.mxu0 %v4693
        %4982 = vmatpush1.bf16.msra.mxu0 %v4692
        %4983 = vmatprep.subr.bf16.mxu0 %v4695
        %4984 = vmatpush1.bf16.msra.mxu0 %v4694
        %4985 = vmatprep.subr.bf16.mxu0 %v4697
        %4986 = vmatpush1.bf16.msra.mxu0 %v4696
        %4987 = vmatprep.mubr.bf16.mxu0 %v4305
        %4988 = vmatmul.mubr.bf16.gmra.mrb[0].mxu0 %v4304
        %v4989 = vpop.f32.mrb[0].mxu0
        %v4990 = vadd.f32 %v4797, %v4989
        %v4991 = vpop.f32.mrb[0].mxu0
        %v4992 = vadd.f32 %v4799, %v4991
        %v4993 = vpop.f32.mrb[0].mxu0
        %v4994 = vadd.f32 %v4801, %v4993
        %v4995 = vpop.f32.mrb[0].mxu0
        %v4996 = vadd.f32 %v4803, %v4995
        %4997 = vmatprep.mubr.bf16.mxu0 %v4309
        %4998 = vmatmul.mubr.bf16.gmra.mrb[0].mxu0 %v4308
        %v4999 = vpop.f32.mrb[0].mxu0
        %v5000 = vadd.f32 %v4807, %v4999
        %v5001 = vpop.f32.mrb[0].mxu0
        %v5002 = vadd.f32 %v4809, %v5001
        %v5003 = vpop.f32.mrb[0].mxu0
        %v5004 = vadd.f32 %v4811, %v5003
        %v5005 = vpop.f32.mrb[0].mxu0
        %v5006 = vadd.f32 %v4813, %v5005
        %5007 = vmatprep.mubr.bf16.mxu0 %v4313
        %5008 = vmatmul.mubr.bf16.gmra.mrb[0].mxu0 %v4312
        %v5009 = vpop.f32.mrb[0].mxu0
        %v5010 = vadd.f32 %v4817, %v5009
        %v5011 = vpop.f32.mrb[0].mxu0
        %v5012 = vadd.f32 %v4819, %v5011
        %v5013 = vpop.f32.mrb[0].mxu0
        %v5014 = vadd.f32 %v4821, %v5013
        %v5015 = vpop.f32.mrb[0].mxu0
        %v5016 = vadd.f32 %v4823, %v5015
        %5017 = vmatprep.mubr.bf16.mxu0 %v4317
        %5018 = vmatmul.mubr.bf16.gmra.mrb[0].mxu0 %v4316
        %v5019 = vpop.f32.mrb[0].mxu0
        %v5020 = vadd.f32 %v4827, %v5019
        %v5021 = vpop.f32.mrb[0].mxu0
        %v5022 = vadd.f32 %v4829, %v5021
        %v5023 = vpop.f32.mrb[0].mxu0
        %v5024 = vadd.f32 %v4831, %v5023
        %v5025 = vpop.f32.mrb[0].mxu0
        %v5026 = vadd.f32 %v4833, %v5025
        %5027 = vmatprep.mubr.bf16.mxu0 %v4321
        %5028 = vmatmul.mubr.bf16.gmra.mrb[0].mxu0 %v4320
        %v5029 = vpop.f32.mrb[0].mxu0
        %v5030 = vadd.f32 %v4837, %v5029
        %v5031 = vpop.f32.mrb[0].mxu0
        %v5032 = vadd.f32 %v4839, %v5031
        %v5033 = vpop.f32.mrb[0].mxu0
        %v5034 = vadd.f32 %v4841, %v5033
        %v5035 = vpop.f32.mrb[0].mxu0
        %v5036 = vadd.f32 %v4843, %v5035
        %5037 = vmatprep.mubr.bf16.mxu0 %v4325
        %5038 = vmatmul.mubr.bf16.gmra.mrb[0].mxu0 %v4324
        %v5039 = vpop.f32.mrb[0].mxu0
        %v5040 = vadd.f32 %v4847, %v5039
        %v5041 = vpop.f32.mrb[0].mxu0
        %v5042 = vadd.f32 %v4849, %v5041
        %v5043 = vpop.f32.mrb[0].mxu0
        %v5044 = vadd.f32 %v4851, %v5043
        %v5045 = vpop.f32.mrb[0].mxu0
        %v5046 = vadd.f32 %v4853, %v5045
        %5047 = vmatprep.mubr.bf16.mxu0 %v4329
        %5048 = vmatmul.mubr.bf16.gmra.mrb[0].mxu0 %v4328
        %v5049 = vpop.f32.mrb[0].mxu0
        %v5050 = vadd.f32 %v4857, %v5049
        %v5051 = vpop.f32.mrb[0].mxu0
        %v5052 = vadd.f32 %v4859, %v5051
        %v5053 = vpop.f32.mrb[0].mxu0
        %v5054 = vadd.f32 %v4861, %v5053
        %v5055 = vpop.f32.mrb[0].mxu0
        %v5056 = vadd.f32 %v4863, %v5055
        %5057 = vmatprep.mubr.bf16.mxu0 %v4333
        %5058 = vmatmul.mubr.bf16.gmra.mrb[0].mxu0 %v4332
        %v5059 = vpop.f32.mrb[0].mxu0
        %v5060 = vadd.f32 %v4867, %v5059
        %v5061 = vpop.f32.mrb[0].mxu0
        %v5062 = vadd.f32 %v4869, %v5061
        %v5063 = vpop.f32.mrb[0].mxu0
        %v5064 = vadd.f32 %v4871, %v5063
        %v5065 = vpop.f32.mrb[0].mxu0
        %v5066 = vadd.f32 %v4873, %v5065
        %5067 = vmatprep.mubr.bf16.mxu0 %v4337
        %5068 = vmatmul.mubr.bf16.gmra.mrb[0].mxu0 %v4336
        %v5069 = vpop.f32.mrb[0].mxu0
        %v5070 = vadd.f32 %v4877, %v5069
        %v5071 = vpop.f32.mrb[0].mxu0
        %v5072 = vadd.f32 %v4879, %v5071
        %v5073 = vpop.f32.mrb[0].mxu0
        %v5074 = vadd.f32 %v4881, %v5073
        %v5075 = vpop.f32.mrb[0].mxu0
        %v5076 = vadd.f32 %v4883, %v5075
        %5077 = vmatprep.mubr.bf16.mxu0 %v4341
        %5078 = vmatmul.mubr.bf16.gmra.mrb[0].mxu0 %v4340
        %v5079 = vpop.f32.mrb[0].mxu0
        %v5080 = vadd.f32 %v4887, %v5079
        %v5081 = vpop.f32.mrb[0].mxu0
        %v5082 = vadd.f32 %v4889, %v5081
        %v5083 = vpop.f32.mrb[0].mxu0
        %v5084 = vadd.f32 %v4891, %v5083
        %v5085 = vpop.f32.mrb[0].mxu0
        %v5086 = vadd.f32 %v4893, %v5085
        %5087 = vmatprep.mubr.bf16.mxu0 %v4345
        %5088 = vmatmul.mubr.bf16.gmra.mrb[0].mxu0 %v4344
        %v5089 = vpop.f32.mrb[0].mxu0
        %v5090 = vadd.f32 %v4897, %v5089
        %v5091 = vpop.f32.mrb[0].mxu0
        %v5092 = vadd.f32 %v4899, %v5091
        %v5093 = vpop.f32.mrb[0].mxu0
        %v5094 = vadd.f32 %v4901, %v5093
        %v5095 = vpop.f32.mrb[0].mxu0
        %v5096 = vadd.f32 %v4903, %v5095
        %5097 = vmatprep.mubr.bf16.mxu0 %v4349
        %5098 = vmatmul.mubr.bf16.gmra.mrb[0].mxu0 %v4348
        %v5099 = vpop.f32.mrb[0].mxu0
        %v5100 = vadd.f32 %v4907, %v5099
        %v5101 = vpop.f32.mrb[0].mxu0
        %v5102 = vadd.f32 %v4909, %v5101
        %v5103 = vpop.f32.mrb[0].mxu0
        %v5104 = vadd.f32 %v4911, %v5103
        %v5105 = vpop.f32.mrb[0].mxu0
        %v5106 = vadd.f32 %v4913, %v5105
        %5107 = vmatprep.mubr.bf16.mxu0 %v4353
        %5108 = vmatmul.mubr.bf16.gmra.mrb[0].mxu0 %v4352
        %v5109 = vpop.f32.mrb[0].mxu0
        %v5110 = vadd.f32 %v4917, %v5109
        %v5111 = vpop.f32.mrb[0].mxu0
        %v5112 = vadd.f32 %v4919, %v5111
        %v5113 = vpop.f32.mrb[0].mxu0
        %v5114 = vadd.f32 %v4921, %v5113
        %v5115 = vpop.f32.mrb[0].mxu0
        %v5116 = vadd.f32 %v4923, %v5115
        %5117 = vmatprep.mubr.bf16.mxu0 %v4357
        %5118 = vmatmul.mubr.bf16.gmra.mrb[0].mxu0 %v4356
        %v5119 = vpop.f32.mrb[0].mxu0
        %v5120 = vadd.f32 %v4927, %v5119
        %v5121 = vpop.f32.mrb[0].mxu0
        %v5122 = vadd.f32 %v4929, %v5121
        %v5123 = vpop.f32.mrb[0].mxu0
        %v5124 = vadd.f32 %v4931, %v5123
        %v5125 = vpop.f32.mrb[0].mxu0
        %v5126 = vadd.f32 %v4933, %v5125
        %5127 = vmatprep.mubr.bf16.mxu0 %v4361
        %5128 = vmatmul.mubr.bf16.gmra.mrb[0].mxu0 %v4360
        %v5129 = vpop.f32.mrb[0].mxu0
        %v5130 = vadd.f32 %v4937, %v5129
        %v5131 = vpop.f32.mrb[0].mxu0
        %v5132 = vadd.f32 %v4939, %v5131
        %v5133 = vpop.f32.mrb[0].mxu0
        %v5134 = vadd.f32 %v4941, %v5133
        %v5135 = vpop.f32.mrb[0].mxu0
        %v5136 = vadd.f32 %v4943, %v5135
        %5137 = vmatprep.mubr.bf16.mxu0 %v4365
        %5138 = vmatmul.mubr.bf16.gmra.mrb[0].mxu0 %v4364
        %v5139 = vpop.f32.mrb[0].mxu0
        %v5140 = vadd.f32 %v4947, %v5139
        %v5141 = vpop.f32.mrb[0].mxu0
        %v5142 = vadd.f32 %v4949, %v5141
        %v5143 = vpop.f32.mrb[0].mxu0
        %v5144 = vadd.f32 %v4951, %v5143
        %v5145 = vpop.f32.mrb[0].mxu0
        %v5146 = vadd.f32 %v4953, %v5145
        %5147 = vdwg.mxu0
        %v5148 = vadd.f32 %v4990, %v4992
        %5149 = vadd.xlane.f32.xlu0 %v5148
        %v5150 = vpop.xlane.xlu0 %5149
        %v5151 = vadd.f32 %v4994, %v4996
        %5152 = vadd.xlane.f32.xlu0 %v5151
        %v5153 = vpop.xlane.xlu0 %5152
        %v5154 = vadd.f32 %v5000, %v5002
        %5155 = vadd.xlane.f32.xlu0 %v5154
        %v5156 = vpop.xlane.xlu0 %5155
        %v5157 = vadd.f32 %v5004, %v5006
        %5158 = vadd.xlane.f32.xlu0 %v5157
        %v5159 = vpop.xlane.xlu0 %5158
        %v5160 = vadd.f32 %v5010, %v5012
        %5161 = vadd.xlane.f32.xlu0 %v5160
        %v5162 = vpop.xlane.xlu0 %5161
        %v5163 = vadd.f32 %v5014, %v5016
        %5164 = vadd.xlane.f32.xlu0 %v5163
        %v5165 = vpop.xlane.xlu0 %5164
        %v5166 = vadd.f32 %v5020, %v5022
        %5167 = vadd.xlane.f32.xlu0 %v5166
        %v5168 = vpop.xlane.xlu0 %5167
        %v5169 = vadd.f32 %v5024, %v5026
        %5170 = vadd.xlane.f32.xlu0 %v5169
        %v5171 = vpop.xlane.xlu0 %5170
        %v5172 = vadd.f32 %v5030, %v5032
        %5173 = vadd.xlane.f32.xlu0 %v5172
        %v5174 = vpop.xlane.xlu0 %5173
        %v5175 = vadd.f32 %v5034, %v5036
        %5176 = vadd.xlane.f32.xlu0 %v5175
        %v5177 = vpop.xlane.xlu0 %5176
        %v5178 = vadd.f32 %v5040, %v5042
        %5179 = vadd.xlane.f32.xlu0 %v5178
        %v5180 = vpop.xlane.xlu0 %5179
        %v5181 = vadd.f32 %v5044, %v5046
        %5182 = vadd.xlane.f32.xlu0 %v5181
        %v5183 = vpop.xlane.xlu0 %5182
        %v5184 = vadd.f32 %v5050, %v5052
        %5185 = vadd.xlane.f32.xlu0 %v5184
        %v5186 = vpop.xlane.xlu0 %5185
        %v5187 = vadd.f32 %v5054, %v5056
        %5188 = vadd.xlane.f32.xlu0 %v5187
        %v5189 = vpop.xlane.xlu0 %5188
        %v5190 = vadd.f32 %v5060, %v5062
        %5191 = vadd.xlane.f32.xlu0 %v5190
        %v5192 = vpop.xlane.xlu0 %5191
        %v5193 = vadd.f32 %v5064, %v5066
        %5194 = vadd.xlane.f32.xlu0 %v5193
        %v5195 = vpop.xlane.xlu0 %5194
        %v5196 = vadd.f32 %v5070, %v5072
        %5197 = vadd.xlane.f32.xlu0 %v5196
        %v5198 = vpop.xlane.xlu0 %5197
        %v5199 = vadd.f32 %v5074, %v5076
        %5200 = vadd.xlane.f32.xlu0 %v5199
        %v5201 = vpop.xlane.xlu0 %5200
        %v5202 = vadd.f32 %v5080, %v5082
        %5203 = vadd.xlane.f32.xlu0 %v5202
        %v5204 = vpop.xlane.xlu0 %5203
        %v5205 = vadd.f32 %v5084, %v5086
        %5206 = vadd.xlane.f32.xlu0 %v5205
        %v5207 = vpop.xlane.xlu0 %5206
        %v5208 = vadd.f32 %v5090, %v5092
        %5209 = vadd.xlane.f32.xlu0 %v5208
        %v5210 = vpop.xlane.xlu0 %5209
        %v5211 = vadd.f32 %v5094, %v5096
        %5212 = vadd.xlane.f32.xlu0 %v5211
        %v5213 = vpop.xlane.xlu0 %5212
        %v5214 = vadd.f32 %v5100, %v5102
        %5215 = vadd.xlane.f32.xlu0 %v5214
        %v5216 = vpop.xlane.xlu0 %5215
        %v5217 = vadd.f32 %v5104, %v5106
        %5218 = vadd.xlane.f32.xlu0 %v5217
        %v5219 = vpop.xlane.xlu0 %5218
        %v5220 = vadd.f32 %v5110, %v5112
        %5221 = vadd.xlane.f32.xlu0 %v5220
        %v5222 = vpop.xlane.xlu0 %5221
        %v5223 = vadd.f32 %v5114, %v5116
        %5224 = vadd.xlane.f32.xlu0 %v5223
        %v5225 = vpop.xlane.xlu0 %5224
        %v5226 = vadd.f32 %v5120, %v5122
        %5227 = vadd.xlane.f32.xlu0 %v5226
        %v5228 = vpop.xlane.xlu0 %5227
        %v5229 = vadd.f32 %v5124, %v5126
        %5230 = vadd.xlane.f32.xlu0 %v5229
        %v5231 = vpop.xlane.xlu0 %5230
        %v5232 = vadd.f32 %v5130, %v5132
        %5233 = vadd.xlane.f32.xlu0 %v5232
        %v5234 = vpop.xlane.xlu0 %5233
        %v5235 = vadd.f32 %v5134, %v5136
        %5236 = vadd.xlane.f32.xlu0 %v5235
        %v5237 = vpop.xlane.xlu0 %5236
        %v5238 = vadd.f32 %v5140, %v5142
        %5239 = vadd.xlane.f32.xlu0 %v5238
        %v5240 = vpop.xlane.xlu0 %5239
        %v5241 = vadd.f32 %v5144, %v5146
        %5242 = vadd.xlane.f32.xlu0 %v5241
        %v5243 = vpop.xlane.xlu0 %5242
        %v5244 = vrcp.pop 256.0
        %v5245 = vmul.f32 %v5150, %v5244
        %v5246 = vmul.f32 %v5153, %v5244
        %v5247 = vmul.f32 %v5156, %v5244
        %v5248 = vmul.f32 %v5159, %v5244
        %v5249 = vmul.f32 %v5162, %v5244
        %v5250 = vmul.f32 %v5165, %v5244
        %v5251 = vmul.f32 %v5168, %v5244
        %v5252 = vmul.f32 %v5171, %v5244
        %v5253 = vmul.f32 %v5174, %v5244
        %v5254 = vmul.f32 %v5177, %v5244
        %v5255 = vmul.f32 %v5180, %v5244
        %v5256 = vmul.f32 %v5183, %v5244
        %v5257 = vmul.f32 %v5186, %v5244
        %v5258 = vmul.f32 %v5189, %v5244
        %v5259 = vmul.f32 %v5192, %v5244
        %v5260 = vmul.f32 %v5195, %v5244
        %v5261 = vmul.f32 %v5198, %v5244
        %v5262 = vmul.f32 %v5201, %v5244
        %v5263 = vmul.f32 %v5204, %v5244
        %v5264 = vmul.f32 %v5207, %v5244
        %v5265 = vmul.f32 %v5210, %v5244
        %v5266 = vmul.f32 %v5213, %v5244
        %v5267 = vmul.f32 %v5216, %v5244
        %v5268 = vmul.f32 %v5219, %v5244
        %v5269 = vmul.f32 %v5222, %v5244
        %v5270 = vmul.f32 %v5225, %v5244
        %v5271 = vmul.f32 %v5228, %v5244
        %v5272 = vmul.f32 %v5231, %v5244
        %v5273 = vmul.f32 %v5234, %v5244
        %v5274 = vmul.f32 %v5237, %v5244
        %v5275 = vmul.f32 %v5240, %v5244
        %v5276 = vmul.f32 %v5243, %v5244
        %v5277 = vsub.f32 %v4990, %v5245
        %v5278 = vsub.f32 %v4992, %v5245
        %v5279 = vsub.f32 %v4994, %v5246
        %v5280 = vsub.f32 %v4996, %v5246
        %v5281 = vsub.f32 %v5000, %v5247
        %v5282 = vsub.f32 %v5002, %v5247
        %v5283 = vsub.f32 %v5004, %v5248
        %v5284 = vsub.f32 %v5006, %v5248
        %v5285 = vsub.f32 %v5010, %v5249
        %v5286 = vsub.f32 %v5012, %v5249
        %v5287 = vsub.f32 %v5014, %v5250
        %v5288 = vsub.f32 %v5016, %v5250
        %v5289 = vsub.f32 %v5020, %v5251
        %v5290 = vsub.f32 %v5022, %v5251
        %v5291 = vsub.f32 %v5024, %v5252
        %v5292 = vsub.f32 %v5026, %v5252
        %v5293 = vsub.f32 %v5030, %v5253
        %v5294 = vsub.f32 %v5032, %v5253
        %v5295 = vsub.f32 %v5034, %v5254
        %v5296 = vsub.f32 %v5036, %v5254
        %v5297 = vsub.f32 %v5040, %v5255
        %v5298 = vsub.f32 %v5042, %v5255
        %v5299 = vsub.f32 %v5044, %v5256
        %v5300 = vsub.f32 %v5046, %v5256
        %v5301 = vsub.f32 %v5050, %v5257
        %v5302 = vsub.f32 %v5052, %v5257
        %v5303 = vsub.f32 %v5054, %v5258
        %v5304 = vsub.f32 %v5056, %v5258
        %v5305 = vsub.f32 %v5060, %v5259
        %v5306 = vsub.f32 %v5062, %v5259
        %v5307 = vsub.f32 %v5064, %v5260
        %v5308 = vsub.f32 %v5066, %v5260
        %v5309 = vsub.f32 %v5070, %v5261
        %v5310 = vsub.f32 %v5072, %v5261
        %v5311 = vsub.f32 %v5074, %v5262
        %v5312 = vsub.f32 %v5076, %v5262
        %v5313 = vsub.f32 %v5080, %v5263
        %v5314 = vsub.f32 %v5082, %v5263
        %v5315 = vsub.f32 %v5084, %v5264
        %v5316 = vsub.f32 %v5086, %v5264
        %v5317 = vsub.f32 %v5090, %v5265
        %v5318 = vsub.f32 %v5092, %v5265
        %v5319 = vsub.f32 %v5094, %v5266
        %v5320 = vsub.f32 %v5096, %v5266
        %v5321 = vsub.f32 %v5100, %v5267
        %v5322 = vsub.f32 %v5102, %v5267
        %v5323 = vsub.f32 %v5104, %v5268
        %v5324 = vsub.f32 %v5106, %v5268
        %v5325 = vsub.f32 %v5110, %v5269
        %v5326 = vsub.f32 %v5112, %v5269
        %v5327 = vsub.f32 %v5114, %v5270
        %v5328 = vsub.f32 %v5116, %v5270
        %v5329 = vsub.f32 %v5120, %v5271
        %v5330 = vsub.f32 %v5122, %v5271
        %v5331 = vsub.f32 %v5124, %v5272
        %v5332 = vsub.f32 %v5126, %v5272
        %v5333 = vsub.f32 %v5130, %v5273
        %v5334 = vsub.f32 %v5132, %v5273
        %v5335 = vsub.f32 %v5134, %v5274
        %v5336 = vsub.f32 %v5136, %v5274
        %v5337 = vsub.f32 %v5140, %v5275
        %v5338 = vsub.f32 %v5142, %v5275
        %v5339 = vsub.f32 %v5144, %v5276
        %v5340 = vsub.f32 %v5146, %v5276
        %v5341 = vmul.f32 %v5277, %v5277
        %v5342 = vmul.f32 %v5278, %v5278
        %v5343 = vmul.f32 %v5279, %v5279
        %v5344 = vmul.f32 %v5280, %v5280
        %v5345 = vmul.f32 %v5281, %v5281
        %v5346 = vmul.f32 %v5282, %v5282
        %v5347 = vmul.f32 %v5283, %v5283
        %v5348 = vmul.f32 %v5284, %v5284
        %v5349 = vmul.f32 %v5285, %v5285
        %v5350 = vmul.f32 %v5286, %v5286
        %v5351 = vmul.f32 %v5287, %v5287
        %v5352 = vmul.f32 %v5288, %v5288
        %v5353 = vmul.f32 %v5289, %v5289
        %v5354 = vmul.f32 %v5290, %v5290
        %v5355 = vmul.f32 %v5291, %v5291
        %v5356 = vmul.f32 %v5292, %v5292
        %v5357 = vmul.f32 %v5293, %v5293
        %v5358 = vmul.f32 %v5294, %v5294
        %v5359 = vmul.f32 %v5295, %v5295
        %v5360 = vmul.f32 %v5296, %v5296
        %v5361 = vmul.f32 %v5297, %v5297
        %v5362 = vmul.f32 %v5298, %v5298
        %v5363 = vmul.f32 %v5299, %v5299
        %v5364 = vmul.f32 %v5300, %v5300
        %v5365 = vmul.f32 %v5301, %v5301
        %v5366 = vmul.f32 %v5302, %v5302
        %v5367 = vmul.f32 %v5303, %v5303
        %v5368 = vmul.f32 %v5304, %v5304
        %v5369 = vmul.f32 %v5305, %v5305
        %v5370 = vmul.f32 %v5306, %v5306
        %v5371 = vmul.f32 %v5307, %v5307
        %v5372 = vmul.f32 %v5308, %v5308
        %v5373 = vmul.f32 %v5309, %v5309
        %v5374 = vmul.f32 %v5310, %v5310
        %v5375 = vmul.f32 %v5311, %v5311
        %v5376 = vmul.f32 %v5312, %v5312
        %v5377 = vmul.f32 %v5313, %v5313
        %v5378 = vmul.f32 %v5314, %v5314
        %v5379 = vmul.f32 %v5315, %v5315
        %v5380 = vmul.f32 %v5316, %v5316
        %v5381 = vmul.f32 %v5317, %v5317
        %v5382 = vmul.f32 %v5318, %v5318
        %v5383 = vmul.f32 %v5319, %v5319
        %v5384 = vmul.f32 %v5320, %v5320
        %v5385 = vmul.f32 %v5321, %v5321
        %v5386 = vmul.f32 %v5322, %v5322
        %v5387 = vmul.f32 %v5323, %v5323
        %v5388 = vmul.f32 %v5324, %v5324
        %v5389 = vmul.f32 %v5325, %v5325
        %v5390 = vmul.f32 %v5326, %v5326
        %v5391 = vmul.f32 %v5327, %v5327
        %v5392 = vmul.f32 %v5328, %v5328
        %v5393 = vmul.f32 %v5329, %v5329
        %v5394 = vmul.f32 %v5330, %v5330
        %v5395 = vmul.f32 %v5331, %v5331
        %v5396 = vmul.f32 %v5332, %v5332
        %v5397 = vmul.f32 %v5333, %v5333
        %v5398 = vmul.f32 %v5334, %v5334
        %v5399 = vmul.f32 %v5335, %v5335
        %v5400 = vmul.f32 %v5336, %v5336
        %v5401 = vmul.f32 %v5337, %v5337
        %v5402 = vmul.f32 %v5338, %v5338
        %v5403 = vmul.f32 %v5339, %v5339
        %v5404 = vmul.f32 %v5340, %v5340
        %v5405 = vadd.f32 %v5341, %v5342
        %5406 = vadd.xlane.f32.xlu0 %v5405
        %v5407 = vpop.xlane.xlu0 %5406
        %v5408 = vadd.f32 %v5343, %v5344
        %5409 = vadd.xlane.f32.xlu0 %v5408
        %v5410 = vpop.xlane.xlu0 %5409
        %v5411 = vadd.f32 %v5345, %v5346
        %5412 = vadd.xlane.f32.xlu0 %v5411
        %v5413 = vpop.xlane.xlu0 %5412
        %v5414 = vadd.f32 %v5347, %v5348
        %5415 = vadd.xlane.f32.xlu0 %v5414
        %v5416 = vpop.xlane.xlu0 %5415
        %v5417 = vadd.f32 %v5349, %v5350
        %5418 = vadd.xlane.f32.xlu0 %v5417
        %v5419 = vpop.xlane.xlu0 %5418
        %v5420 = vadd.f32 %v5351, %v5352
        %5421 = vadd.xlane.f32.xlu0 %v5420
        %v5422 = vpop.xlane.xlu0 %5421
        %v5423 = vadd.f32 %v5353, %v5354
        %5424 = vadd.xlane.f32.xlu0 %v5423
        %v5425 = vpop.xlane.xlu0 %5424
        %v5426 = vadd.f32 %v5355, %v5356
        %5427 = vadd.xlane.f32.xlu0 %v5426
        %v5428 = vpop.xlane.xlu0 %5427
        %v5429 = vadd.f32 %v5357, %v5358
        %5430 = vadd.xlane.f32.xlu0 %v5429
        %v5431 = vpop.xlane.xlu0 %5430
        %v5432 = vadd.f32 %v5359, %v5360
        %5433 = vadd.xlane.f32.xlu0 %v5432
        %v5434 = vpop.xlane.xlu0 %5433
        %v5435 = vadd.f32 %v5361, %v5362
        %5436 = vadd.xlane.f32.xlu0 %v5435
        %v5437 = vpop.xlane.xlu0 %5436
        %v5438 = vadd.f32 %v5363, %v5364
        %5439 = vadd.xlane.f32.xlu0 %v5438
        %v5440 = vpop.xlane.xlu0 %5439
        %v5441 = vadd.f32 %v5365, %v5366
        %5442 = vadd.xlane.f32.xlu0 %v5441
        %v5443 = vpop.xlane.xlu0 %5442
        %v5444 = vadd.f32 %v5367, %v5368
        %5445 = vadd.xlane.f32.xlu0 %v5444
        %v5446 = vpop.xlane.xlu0 %5445
        %v5447 = vadd.f32 %v5369, %v5370
        %5448 = vadd.xlane.f32.xlu0 %v5447
        %v5449 = vpop.xlane.xlu0 %5448
        %v5450 = vadd.f32 %v5371, %v5372
        %5451 = vadd.xlane.f32.xlu0 %v5450
        %v5452 = vpop.xlane.xlu0 %5451
        %v5453 = vadd.f32 %v5373, %v5374
        %5454 = vadd.xlane.f32.xlu0 %v5453
        %v5455 = vpop.xlane.xlu0 %5454
        %v5456 = vadd.f32 %v5375, %v5376
        %5457 = vadd.xlane.f32.xlu0 %v5456
        %v5458 = vpop.xlane.xlu0 %5457
        %v5459 = vadd.f32 %v5377, %v5378
        %5460 = vadd.xlane.f32.xlu0 %v5459
        %v5461 = vpop.xlane.xlu0 %5460
        %v5462 = vadd.f32 %v5379, %v5380
        %5463 = vadd.xlane.f32.xlu0 %v5462
        %v5464 = vpop.xlane.xlu0 %5463
        %v5465 = vadd.f32 %v5381, %v5382
        %5466 = vadd.xlane.f32.xlu0 %v5465
        %v5467 = vpop.xlane.xlu0 %5466
        %v5468 = vadd.f32 %v5383, %v5384
        %5469 = vadd.xlane.f32.xlu0 %v5468
        %v5470 = vpop.xlane.xlu0 %5469
        %v5471 = vadd.f32 %v5385, %v5386
        %5472 = vadd.xlane.f32.xlu0 %v5471
        %v5473 = vpop.xlane.xlu0 %5472
        %v5474 = vadd.f32 %v5387, %v5388
        %5475 = vadd.xlane.f32.xlu0 %v5474
        %v5476 = vpop.xlane.xlu0 %5475
        %v5477 = vadd.f32 %v5389, %v5390
        %5478 = vadd.xlane.f32.xlu0 %v5477
        %v5479 = vpop.xlane.xlu0 %5478
        %v5480 = vadd.f32 %v5391, %v5392
        %5481 = vadd.xlane.f32.xlu0 %v5480
        %v5482 = vpop.xlane.xlu0 %5481
        %v5483 = vadd.f32 %v5393, %v5394
        %5484 = vadd.xlane.f32.xlu0 %v5483
        %v5485 = vpop.xlane.xlu0 %5484
        %v5486 = vadd.f32 %v5395, %v5396
        %5487 = vadd.xlane.f32.xlu0 %v5486
        %v5488 = vpop.xlane.xlu0 %5487
        %v5489 = vadd.f32 %v5397, %v5398
        %5490 = vadd.xlane.f32.xlu0 %v5489
        %v5491 = vpop.xlane.xlu0 %5490
        %v5492 = vadd.f32 %v5399, %v5400
        %5493 = vadd.xlane.f32.xlu0 %v5492
        %v5494 = vpop.xlane.xlu0 %5493
        %v5495 = vadd.f32 %v5401, %v5402
        %5496 = vadd.xlane.f32.xlu0 %v5495
        %v5497 = vpop.xlane.xlu0 %5496
        %v5498 = vadd.f32 %v5403, %v5404
        %5499 = vadd.xlane.f32.xlu0 %v5498
        %v5500 = vpop.xlane.xlu0 %5499
        %v5501 = vmul.f32 %v5407, %v5244
        %v5502 = vmul.f32 %v5410, %v5244
        %v5503 = vmul.f32 %v5413, %v5244
        %v5504 = vmul.f32 %v5416, %v5244
        %v5505 = vmul.f32 %v5419, %v5244
        %v5506 = vmul.f32 %v5422, %v5244
        %v5507 = vmul.f32 %v5425, %v5244
        %v5508 = vmul.f32 %v5428, %v5244
        %v5509 = vmul.f32 %v5431, %v5244
        %v5510 = vmul.f32 %v5434, %v5244
        %v5511 = vmul.f32 %v5437, %v5244
        %v5512 = vmul.f32 %v5440, %v5244
        %v5513 = vmul.f32 %v5443, %v5244
        %v5514 = vmul.f32 %v5446, %v5244
        %v5515 = vmul.f32 %v5449, %v5244
        %v5516 = vmul.f32 %v5452, %v5244
        %v5517 = vmul.f32 %v5455, %v5244
        %v5518 = vmul.f32 %v5458, %v5244
        %v5519 = vmul.f32 %v5461, %v5244
        %v5520 = vmul.f32 %v5464, %v5244
        %v5521 = vmul.f32 %v5467, %v5244
        %v5522 = vmul.f32 %v5470, %v5244
        %v5523 = vmul.f32 %v5473, %v5244
        %v5524 = vmul.f32 %v5476, %v5244
        %v5525 = vmul.f32 %v5479, %v5244
        %v5526 = vmul.f32 %v5482, %v5244
        %v5527 = vmul.f32 %v5485, %v5244
        %v5528 = vmul.f32 %v5488, %v5244
        %v5529 = vmul.f32 %v5491, %v5244
        %v5530 = vmul.f32 %v5494, %v5244
        %v5531 = vmul.f32 %v5497, %v5244
        %v5532 = vmul.f32 %v5500, %v5244
        %v5533 = vadd.f32 %v5501, 1e-05
        %v5534 = vadd.f32 %v5502, 1e-05
        %v5535 = vadd.f32 %v5503, 1e-05
        %v5536 = vadd.f32 %v5504, 1e-05
        %v5537 = vadd.f32 %v5505, 1e-05
        %v5538 = vadd.f32 %v5506, 1e-05
        %v5539 = vadd.f32 %v5507, 1e-05
        %v5540 = vadd.f32 %v5508, 1e-05
        %v5541 = vadd.f32 %v5509, 1e-05
        %v5542 = vadd.f32 %v5510, 1e-05
        %v5543 = vadd.f32 %v5511, 1e-05
        %v5544 = vadd.f32 %v5512, 1e-05
        %v5545 = vadd.f32 %v5513, 1e-05
        %v5546 = vadd.f32 %v5514, 1e-05
        %v5547 = vadd.f32 %v5515, 1e-05
        %v5548 = vadd.f32 %v5516, 1e-05
        %v5549 = vadd.f32 %v5517, 1e-05
        %v5550 = vadd.f32 %v5518, 1e-05
        %v5551 = vadd.f32 %v5519, 1e-05
        %v5552 = vadd.f32 %v5520, 1e-05
        %v5553 = vadd.f32 %v5521, 1e-05
        %v5554 = vadd.f32 %v5522, 1e-05
        %v5555 = vadd.f32 %v5523, 1e-05
        %v5556 = vadd.f32 %v5524, 1e-05
        %v5557 = vadd.f32 %v5525, 1e-05
        %v5558 = vadd.f32 %v5526, 1e-05
        %v5559 = vadd.f32 %v5527, 1e-05
        %v5560 = vadd.f32 %v5528, 1e-05
        %v5561 = vadd.f32 %v5529, 1e-05
        %v5562 = vadd.f32 %v5530, 1e-05
        %v5563 = vadd.f32 %v5531, 1e-05
        %v5564 = vadd.f32 %v5532, 1e-05
        %v5565 = vrsqrt.pop %v5533
        %v5566 = vrsqrt.pop %v5534
        %v5567 = vrsqrt.pop %v5535
        %v5568 = vrsqrt.pop %v5536
        %v5569 = vrsqrt.pop %v5537
        %v5570 = vrsqrt.pop %v5538
        %v5571 = vrsqrt.pop %v5539
        %v5572 = vrsqrt.pop %v5540
        %v5573 = vrsqrt.pop %v5541
        %v5574 = vrsqrt.pop %v5542
        %v5575 = vrsqrt.pop %v5543
        %v5576 = vrsqrt.pop %v5544
        %v5577 = vrsqrt.pop %v5545
        %v5578 = vrsqrt.pop %v5546
        %v5579 = vrsqrt.pop %v5547
        %v5580 = vrsqrt.pop %v5548
        %v5581 = vrsqrt.pop %v5549
        %v5582 = vrsqrt.pop %v5550
        %v5583 = vrsqrt.pop %v5551
        %v5584 = vrsqrt.pop %v5552
        %v5585 = vrsqrt.pop %v5553
        %v5586 = vrsqrt.pop %v5554
        %v5587 = vrsqrt.pop %v5555
        %v5588 = vrsqrt.pop %v5556
        %v5589 = vrsqrt.pop %v5557
        %v5590 = vrsqrt.pop %v5558
        %v5591 = vrsqrt.pop %v5559
        %v5592 = vrsqrt.pop %v5560
        %v5593 = vrsqrt.pop %v5561
        %v5594 = vrsqrt.pop %v5562
        %v5595 = vrsqrt.pop %v5563
        %v5596 = vrsqrt.pop %v5564
        %v5597 = vmul.f32 %v5277, %v5565
        %v5598 = vmul.f32 %v5278, %v5565
        %v5599 = vmul.f32 %v5279, %v5566
        %v5600 = vmul.f32 %v5280, %v5566
        %v5601 = vmul.f32 %v5281, %v5567
        %v5602 = vmul.f32 %v5282, %v5567
        %v5603 = vmul.f32 %v5283, %v5568
        %v5604 = vmul.f32 %v5284, %v5568
        %v5605 = vmul.f32 %v5285, %v5569
        %v5606 = vmul.f32 %v5286, %v5569
        %v5607 = vmul.f32 %v5287, %v5570
        %v5608 = vmul.f32 %v5288, %v5570
        %v5609 = vmul.f32 %v5289, %v5571
        %v5610 = vmul.f32 %v5290, %v5571
        %v5611 = vmul.f32 %v5291, %v5572
        %v5612 = vmul.f32 %v5292, %v5572
        %v5613 = vmul.f32 %v5293, %v5573
        %v5614 = vmul.f32 %v5294, %v5573
        %v5615 = vmul.f32 %v5295, %v5574
        %v5616 = vmul.f32 %v5296, %v5574
        %v5617 = vmul.f32 %v5297, %v5575
        %v5618 = vmul.f32 %v5298, %v5575
        %v5619 = vmul.f32 %v5299, %v5576
        %v5620 = vmul.f32 %v5300, %v5576
        %v5621 = vmul.f32 %v5301, %v5577
        %v5622 = vmul.f32 %v5302, %v5577
        %v5623 = vmul.f32 %v5303, %v5578
        %v5624 = vmul.f32 %v5304, %v5578
        %v5625 = vmul.f32 %v5305, %v5579
        %v5626 = vmul.f32 %v5306, %v5579
        %v5627 = vmul.f32 %v5307, %v5580
        %v5628 = vmul.f32 %v5308, %v5580
        %v5629 = vmul.f32 %v5309, %v5581
        %v5630 = vmul.f32 %v5310, %v5581
        %v5631 = vmul.f32 %v5311, %v5582
        %v5632 = vmul.f32 %v5312, %v5582
        %v5633 = vmul.f32 %v5313, %v5583
        %v5634 = vmul.f32 %v5314, %v5583
        %v5635 = vmul.f32 %v5315, %v5584
        %v5636 = vmul.f32 %v5316, %v5584
        %v5637 = vmul.f32 %v5317, %v5585
        %v5638 = vmul.f32 %v5318, %v5585
        %v5639 = vmul.f32 %v5319, %v5586
        %v5640 = vmul.f32 %v5320, %v5586
        %v5641 = vmul.f32 %v5321, %v5587
        %v5642 = vmul.f32 %v5322, %v5587
        %v5643 = vmul.f32 %v5323, %v5588
        %v5644 = vmul.f32 %v5324, %v5588
        %v5645 = vmul.f32 %v5325, %v5589
        %v5646 = vmul.f32 %v5326, %v5589
        %v5647 = vmul.f32 %v5327, %v5590
        %v5648 = vmul.f32 %v5328, %v5590
        %v5649 = vmul.f32 %v5329, %v5591
        %v5650 = vmul.f32 %v5330, %v5591
        %v5651 = vmul.f32 %v5331, %v5592
        %v5652 = vmul.f32 %v5332, %v5592
        %v5653 = vmul.f32 %v5333, %v5593
        %v5654 = vmul.f32 %v5334, %v5593
        %v5655 = vmul.f32 %v5335, %v5594
        %v5656 = vmul.f32 %v5336, %v5594
        %v5657 = vmul.f32 %v5337, %v5595
        %v5658 = vmul.f32 %v5338, %v5595
        %v5659 = vmul.f32 %v5339, %v5596
        %v5660 = vmul.f32 %v5340, %v5596
        %v5661 = vld [vmem:[%s5] sm:$0x3]
        %v5663 = vlaneseq
        %v5664 = vshrl.u32 %v5663, 7
        %v5665 = vsub.s32 0, %v5664
        %v5666 = vrot.slane %v5661, %v5665
        %v5667 = vlaneseq
        %v5668 = vshrl.u32 %v5667, 7
        %v5669 = vsub.s32 1, %v5668
        %v5670 = vrot.slane %v5661, %v5669
        %v5673 = vmul.f32 %v5597, %v5666
        %v5674 = vmul.f32 %v5598, %v5670
        %v5675 = vmul.f32 %v5599, %v5666
        %v5676 = vmul.f32 %v5600, %v5670
        %v5677 = vmul.f32 %v5601, %v5666
        %v5678 = vmul.f32 %v5602, %v5670
        %v5679 = vmul.f32 %v5603, %v5666
        %v5680 = vmul.f32 %v5604, %v5670
        %v5681 = vmul.f32 %v5605, %v5666
        %v5682 = vmul.f32 %v5606, %v5670
        %v5683 = vmul.f32 %v5607, %v5666
        %v5684 = vmul.f32 %v5608, %v5670
        %v5685 = vmul.f32 %v5609, %v5666
        %v5686 = vmul.f32 %v5610, %v5670
        %v5687 = vmul.f32 %v5611, %v5666
        %v5688 = vmul.f32 %v5612, %v5670
        %v5689 = vmul.f32 %v5613, %v5666
        %v5690 = vmul.f32 %v5614, %v5670
        %v5691 = vmul.f32 %v5615, %v5666
        %v5692 = vmul.f32 %v5616, %v5670
        %v5693 = vmul.f32 %v5617, %v5666
        %v5694 = vmul.f32 %v5618, %v5670
        %v5695 = vmul.f32 %v5619, %v5666
        %v5696 = vmul.f32 %v5620, %v5670
        %v5697 = vmul.f32 %v5621, %v5666
        %v5698 = vmul.f32 %v5622, %v5670
        %v5699 = vmul.f32 %v5623, %v5666
        %v5700 = vmul.f32 %v5624, %v5670
        %v5701 = vmul.f32 %v5625, %v5666
        %v5702 = vmul.f32 %v5626, %v5670
        %v5703 = vmul.f32 %v5627, %v5666
        %v5704 = vmul.f32 %v5628, %v5670
        %v5705 = vmul.f32 %v5629, %v5666
        %v5706 = vmul.f32 %v5630, %v5670
        %v5707 = vmul.f32 %v5631, %v5666
        %v5708 = vmul.f32 %v5632, %v5670
        %v5709 = vmul.f32 %v5633, %v5666
        %v5710 = vmul.f32 %v5634, %v5670
        %v5711 = vmul.f32 %v5635, %v5666
        %v5712 = vmul.f32 %v5636, %v5670
        %v5713 = vmul.f32 %v5637, %v5666
        %v5714 = vmul.f32 %v5638, %v5670
        %v5715 = vmul.f32 %v5639, %v5666
        %v5716 = vmul.f32 %v5640, %v5670
        %v5717 = vmul.f32 %v5641, %v5666
        %v5718 = vmul.f32 %v5642, %v5670
        %v5719 = vmul.f32 %v5643, %v5666
        %v5720 = vmul.f32 %v5644, %v5670
        %v5721 = vmul.f32 %v5645, %v5666
        %v5722 = vmul.f32 %v5646, %v5670
        %v5723 = vmul.f32 %v5647, %v5666
        %v5724 = vmul.f32 %v5648, %v5670
        %v5725 = vmul.f32 %v5649, %v5666
        %v5726 = vmul.f32 %v5650, %v5670
        %v5727 = vmul.f32 %v5651, %v5666
        %v5728 = vmul.f32 %v5652, %v5670
        %v5729 = vmul.f32 %v5653, %v5666
        %v5730 = vmul.f32 %v5654, %v5670
        %v5731 = vmul.f32 %v5655, %v5666
        %v5732 = vmul.f32 %v5656, %v5670
        %v5733 = vmul.f32 %v5657, %v5666
        %v5734 = vmul.f32 %v5658, %v5670
        %v5735 = vmul.f32 %v5659, %v5666
        %v5736 = vmul.f32 %v5660, %v5670
        %v5737 = vld [vmem:[%s6] sm:$0x3]
        %v5739 = vlaneseq
        %v5740 = vshrl.u32 %v5739, 7
        %v5741 = vsub.s32 0, %v5740
        %v5742 = vrot.slane %v5737, %v5741
        %v5743 = vlaneseq
        %v5744 = vshrl.u32 %v5743, 7
        %v5745 = vsub.s32 1, %v5744
        %v5746 = vrot.slane %v5737, %v5745
        %v5749 = vadd.f32 %v5673, %v5742
        %v5750 = vadd.f32 %v5674, %v5746
        %v5751 = vadd.f32 %v5675, %v5742
        %v5752 = vadd.f32 %v5676, %v5746
        %v5753 = vadd.f32 %v5677, %v5742
        %v5754 = vadd.f32 %v5678, %v5746
        %v5755 = vadd.f32 %v5679, %v5742
        %v5756 = vadd.f32 %v5680, %v5746
        %v5757 = vadd.f32 %v5681, %v5742
        %v5758 = vadd.f32 %v5682, %v5746
        %v5759 = vadd.f32 %v5683, %v5742
        %v5760 = vadd.f32 %v5684, %v5746
        %v5761 = vadd.f32 %v5685, %v5742
        %v5762 = vadd.f32 %v5686, %v5746
        %v5763 = vadd.f32 %v5687, %v5742
        %v5764 = vadd.f32 %v5688, %v5746
        %v5765 = vadd.f32 %v5689, %v5742
        %v5766 = vadd.f32 %v5690, %v5746
        %v5767 = vadd.f32 %v5691, %v5742
        %v5768 = vadd.f32 %v5692, %v5746
        %v5769 = vadd.f32 %v5693, %v5742
        %v5770 = vadd.f32 %v5694, %v5746
        %v5771 = vadd.f32 %v5695, %v5742
        %v5772 = vadd.f32 %v5696, %v5746
        %v5773 = vadd.f32 %v5697, %v5742
        %v5774 = vadd.f32 %v5698, %v5746
        %v5775 = vadd.f32 %v5699, %v5742
        %v5776 = vadd.f32 %v5700, %v5746
        %v5777 = vadd.f32 %v5701, %v5742
        %v5778 = vadd.f32 %v5702, %v5746
        %v5779 = vadd.f32 %v5703, %v5742
        %v5780 = vadd.f32 %v5704, %v5746
        %v5781 = vadd.f32 %v5705, %v5742
        %v5782 = vadd.f32 %v5706, %v5746
        %v5783 = vadd.f32 %v5707, %v5742
        %v5784 = vadd.f32 %v5708, %v5746
        %v5785 = vadd.f32 %v5709, %v5742
        %v5786 = vadd.f32 %v5710, %v5746
        %v5787 = vadd.f32 %v5711, %v5742
        %v5788 = vadd.f32 %v5712, %v5746
        %v5789 = vadd.f32 %v5713, %v5742
        %v5790 = vadd.f32 %v5714, %v5746
        %v5791 = vadd.f32 %v5715, %v5742
        %v5792 = vadd.f32 %v5716, %v5746
        %v5793 = vadd.f32 %v5717, %v5742
        %v5794 = vadd.f32 %v5718, %v5746
        %v5795 = vadd.f32 %v5719, %v5742
        %v5796 = vadd.f32 %v5720, %v5746
        %v5797 = vadd.f32 %v5721, %v5742
        %v5798 = vadd.f32 %v5722, %v5746
        %v5799 = vadd.f32 %v5723, %v5742
        %v5800 = vadd.f32 %v5724, %v5746
        %v5801 = vadd.f32 %v5725, %v5742
        %v5802 = vadd.f32 %v5726, %v5746
        %v5803 = vadd.f32 %v5727, %v5742
        %v5804 = vadd.f32 %v5728, %v5746
        %v5805 = vadd.f32 %v5729, %v5742
        %v5806 = vadd.f32 %v5730, %v5746
        %v5807 = vadd.f32 %v5731, %v5742
        %v5808 = vadd.f32 %v5732, %v5746
        %v5809 = vadd.f32 %v5733, %v5742
        %v5810 = vadd.f32 %v5734, %v5746
        %v5811 = vadd.f32 %v5735, %v5742
        %v5812 = vadd.f32 %v5736, %v5746
        %v5813 = vmul.f32 %v5749, 0.5
        %v5814 = vmul.f32 %v5750, 0.5
        %v5815 = vmul.f32 %v5751, 0.5
        %v5816 = vmul.f32 %v5752, 0.5
        %v5817 = vmul.f32 %v5753, 0.5
        %v5818 = vmul.f32 %v5754, 0.5
        %v5819 = vmul.f32 %v5755, 0.5
        %v5820 = vmul.f32 %v5756, 0.5
        %v5821 = vmul.f32 %v5757, 0.5
        %v5822 = vmul.f32 %v5758, 0.5
        %v5823 = vmul.f32 %v5759, 0.5
        %v5824 = vmul.f32 %v5760, 0.5
        %v5825 = vmul.f32 %v5761, 0.5
        %v5826 = vmul.f32 %v5762, 0.5
        %v5827 = vmul.f32 %v5763, 0.5
        %v5828 = vmul.f32 %v5764, 0.5
        %v5829 = vmul.f32 %v5765, 0.5
        %v5830 = vmul.f32 %v5766, 0.5
        %v5831 = vmul.f32 %v5767, 0.5
        %v5832 = vmul.f32 %v5768, 0.5
        %v5833 = vmul.f32 %v5769, 0.5
        %v5834 = vmul.f32 %v5770, 0.5
        %v5835 = vmul.f32 %v5771, 0.5
        %v5836 = vmul.f32 %v5772, 0.5
        %v5837 = vmul.f32 %v5773, 0.5
        %v5838 = vmul.f32 %v5774, 0.5
        %v5839 = vmul.f32 %v5775, 0.5
        %v5840 = vmul.f32 %v5776, 0.5
        %v5841 = vmul.f32 %v5777, 0.5
        %v5842 = vmul.f32 %v5778, 0.5
        %v5843 = vmul.f32 %v5779, 0.5
        %v5844 = vmul.f32 %v5780, 0.5
        %v5845 = vmul.f32 %v5781, 0.5
        %v5846 = vmul.f32 %v5782, 0.5
        %v5847 = vmul.f32 %v5783, 0.5
        %v5848 = vmul.f32 %v5784, 0.5
        %v5849 = vmul.f32 %v5785, 0.5
        %v5850 = vmul.f32 %v5786, 0.5
        %v5851 = vmul.f32 %v5787, 0.5
        %v5852 = vmul.f32 %v5788, 0.5
        %v5853 = vmul.f32 %v5789, 0.5
        %v5854 = vmul.f32 %v5790, 0.5
        %v5855 = vmul.f32 %v5791, 0.5
        %v5856 = vmul.f32 %v5792, 0.5
        %v5857 = vmul.f32 %v5793, 0.5
        %v5858 = vmul.f32 %v5794, 0.5
        %v5859 = vmul.f32 %v5795, 0.5
        %v5860 = vmul.f32 %v5796, 0.5
        %v5861 = vmul.f32 %v5797, 0.5
        %v5862 = vmul.f32 %v5798, 0.5
        %v5863 = vmul.f32 %v5799, 0.5
        %v5864 = vmul.f32 %v5800, 0.5
        %v5865 = vmul.f32 %v5801, 0.5
        %v5866 = vmul.f32 %v5802, 0.5
        %v5867 = vmul.f32 %v5803, 0.5
        %v5868 = vmul.f32 %v5804, 0.5
        %v5869 = vmul.f32 %v5805, 0.5
        %v5870 = vmul.f32 %v5806, 0.5
        %v5871 = vmul.f32 %v5807, 0.5
        %v5872 = vmul.f32 %v5808, 0.5
        %v5873 = vmul.f32 %v5809, 0.5
        %v5874 = vmul.f32 %v5810, 0.5
        %v5875 = vmul.f32 %v5811, 0.5
        %v5876 = vmul.f32 %v5812, 0.5
        %v5877 = vmul.f32 %v5749, 0.70710677
        %v5878 = vmul.f32 %v5750, 0.70710677
        %v5879 = vmul.f32 %v5751, 0.70710677
        %v5880 = vmul.f32 %v5752, 0.70710677
        %v5881 = vmul.f32 %v5753, 0.70710677
        %v5882 = vmul.f32 %v5754, 0.70710677
        %v5883 = vmul.f32 %v5755, 0.70710677
        %v5884 = vmul.f32 %v5756, 0.70710677
        %v5885 = vmul.f32 %v5757, 0.70710677
        %v5886 = vmul.f32 %v5758, 0.70710677
        %v5887 = vmul.f32 %v5759, 0.70710677
        %v5888 = vmul.f32 %v5760, 0.70710677
        %v5889 = vmul.f32 %v5761, 0.70710677
        %v5890 = vmul.f32 %v5762, 0.70710677
        %v5891 = vmul.f32 %v5763, 0.70710677
        %v5892 = vmul.f32 %v5764, 0.70710677
        %v5893 = vmul.f32 %v5765, 0.70710677
        %v5894 = vmul.f32 %v5766, 0.70710677
        %v5895 = vmul.f32 %v5767, 0.70710677
        %v5896 = vmul.f32 %v5768, 0.70710677
        %v5897 = vmul.f32 %v5769, 0.70710677
        %v5898 = vmul.f32 %v5770, 0.70710677
        %v5899 = vmul.f32 %v5771, 0.70710677
        %v5900 = vmul.f32 %v5772, 0.70710677
        %v5901 = vmul.f32 %v5773, 0.70710677
        %v5902 = vmul.f32 %v5774, 0.70710677
        %v5903 = vmul.f32 %v5775, 0.70710677
        %v5904 = vmul.f32 %v5776, 0.70710677
        %v5905 = vmul.f32 %v5777, 0.70710677
        %v5906 = vmul.f32 %v5778, 0.70710677
        %v5907 = vmul.f32 %v5779, 0.70710677
        %v5908 = vmul.f32 %v5780, 0.70710677
        %v5909 = vmul.f32 %v5781, 0.70710677
        %v5910 = vmul.f32 %v5782, 0.70710677
        %v5911 = vmul.f32 %v5783, 0.70710677
        %v5912 = vmul.f32 %v5784, 0.70710677
        %v5913 = vmul.f32 %v5785, 0.70710677
        %v5914 = vmul.f32 %v5786, 0.70710677
        %v5915 = vmul.f32 %v5787, 0.70710677
        %v5916 = vmul.f32 %v5788, 0.70710677
        %v5917 = vmul.f32 %v5789, 0.70710677
        %v5918 = vmul.f32 %v5790, 0.70710677
        %v5919 = vmul.f32 %v5791, 0.70710677
        %v5920 = vmul.f32 %v5792, 0.70710677
        %v5921 = vmul.f32 %v5793, 0.70710677
        %v5922 = vmul.f32 %v5794, 0.70710677
        %v5923 = vmul.f32 %v5795, 0.70710677
        %v5924 = vmul.f32 %v5796, 0.70710677
        %v5925 = vmul.f32 %v5797, 0.70710677
        %v5926 = vmul.f32 %v5798, 0.70710677
        %v5927 = vmul.f32 %v5799, 0.70710677
        %v5928 = vmul.f32 %v5800, 0.70710677
        %v5929 = vmul.f32 %v5801, 0.70710677
        %v5930 = vmul.f32 %v5802, 0.70710677
        %v5931 = vmul.f32 %v5803, 0.70710677
        %v5932 = vmul.f32 %v5804, 0.70710677
        %v5933 = vmul.f32 %v5805, 0.70710677
        %v5934 = vmul.f32 %v5806, 0.70710677
        %v5935 = vmul.f32 %v5807, 0.70710677
        %v5936 = vmul.f32 %v5808, 0.70710677
        %v5937 = vmul.f32 %v5809, 0.70710677
        %v5938 = vmul.f32 %v5810, 0.70710677
        %v5939 = vmul.f32 %v5811, 0.70710677
        %v5940 = vmul.f32 %v5812, 0.70710677
        %vm5941 = vcmp.lt.f32.partialorder %v5877, 0.0
        %vm5942 = vcmp.lt.f32.partialorder %v5878, 0.0
        %vm5943 = vcmp.lt.f32.partialorder %v5879, 0.0
        %vm5944 = vcmp.lt.f32.partialorder %v5880, 0.0
        %vm5945 = vcmp.lt.f32.partialorder %v5881, 0.0
        %vm5946 = vcmp.lt.f32.partialorder %v5882, 0.0
        %vm5947 = vcmp.lt.f32.partialorder %v5883, 0.0
        %vm5948 = vcmp.lt.f32.partialorder %v5884, 0.0
        %vm5949 = vcmp.lt.f32.partialorder %v5885, 0.0
        %vm5950 = vcmp.lt.f32.partialorder %v5886, 0.0
        %vm5951 = vcmp.lt.f32.partialorder %v5887, 0.0
        %vm5952 = vcmp.lt.f32.partialorder %v5888, 0.0
        %vm5953 = vcmp.lt.f32.partialorder %v5889, 0.0
        %vm5954 = vcmp.lt.f32.partialorder %v5890, 0.0
        %vm5955 = vcmp.lt.f32.partialorder %v5891, 0.0
        %vm5956 = vcmp.lt.f32.partialorder %v5892, 0.0
        %vm5957 = vcmp.lt.f32.partialorder %v5893, 0.0
        %vm5958 = vcmp.lt.f32.partialorder %v5894, 0.0
        %vm5959 = vcmp.lt.f32.partialorder %v5895, 0.0
        %vm5960 = vcmp.lt.f32.partialorder %v5896, 0.0
        %vm5961 = vcmp.lt.f32.partialorder %v5897, 0.0
        %vm5962 = vcmp.lt.f32.partialorder %v5898, 0.0
        %vm5963 = vcmp.lt.f32.partialorder %v5899, 0.0
        %vm5964 = vcmp.lt.f32.partialorder %v5900, 0.0
        %vm5965 = vcmp.lt.f32.partialorder %v5901, 0.0
        %vm5966 = vcmp.lt.f32.partialorder %v5902, 0.0
        %vm5967 = vcmp.lt.f32.partialorder %v5903, 0.0
        %vm5968 = vcmp.lt.f32.partialorder %v5904, 0.0
        %vm5969 = vcmp.lt.f32.partialorder %v5905, 0.0
        %vm5970 = vcmp.lt.f32.partialorder %v5906, 0.0
        %vm5971 = vcmp.lt.f32.partialorder %v5907, 0.0
        %vm5972 = vcmp.lt.f32.partialorder %v5908, 0.0
        %vm5973 = vcmp.lt.f32.partialorder %v5909, 0.0
        %vm5974 = vcmp.lt.f32.partialorder %v5910, 0.0
        %vm5975 = vcmp.lt.f32.partialorder %v5911, 0.0
        %vm5976 = vcmp.lt.f32.partialorder %v5912, 0.0
        %vm5977 = vcmp.lt.f32.partialorder %v5913, 0.0
        %vm5978 = vcmp.lt.f32.partialorder %v5914, 0.0
        %vm5979 = vcmp.lt.f32.partialorder %v5915, 0.0
        %vm5980 = vcmp.lt.f32.partialorder %v5916, 0.0
        %vm5981 = vcmp.lt.f32.partialorder %v5917, 0.0
        %vm5982 = vcmp.lt.f32.partialorder %v5918, 0.0
        %vm5983 = vcmp.lt.f32.partialorder %v5919, 0.0
        %vm5984 = vcmp.lt.f32.partialorder %v5920, 0.0
        %vm5985 = vcmp.lt.f32.partialorder %v5921, 0.0
        %vm5986 = vcmp.lt.f32.partialorder %v5922, 0.0
        %vm5987 = vcmp.lt.f32.partialorder %v5923, 0.0
        %vm5988 = vcmp.lt.f32.partialorder %v5924, 0.0
        %vm5989 = vcmp.lt.f32.partialorder %v5925, 0.0
        %vm5990 = vcmp.lt.f32.partialorder %v5926, 0.0
        %vm5991 = vcmp.lt.f32.partialorder %v5927, 0.0
        %vm5992 = vcmp.lt.f32.partialorder %v5928, 0.0
        %vm5993 = vcmp.lt.f32.partialorder %v5929, 0.0
        %vm5994 = vcmp.lt.f32.partialorder %v5930, 0.0
        %vm5995 = vcmp.lt.f32.partialorder %v5931, 0.0
        %vm5996 = vcmp.lt.f32.partialorder %v5932, 0.0
        %vm5997 = vcmp.lt.f32.partialorder %v5933, 0.0
        %vm5998 = vcmp.lt.f32.partialorder %v5934, 0.0
        %vm5999 = vcmp.lt.f32.partialorder %v5935, 0.0
        %vm6000 = vcmp.lt.f32.partialorder %v5936, 0.0
        %vm6001 = vcmp.lt.f32.partialorder %v5937, 0.0
        %vm6002 = vcmp.lt.f32.partialorder %v5938, 0.0
        %vm6003 = vcmp.lt.f32.partialorder %v5939, 0.0
        %vm6004 = vcmp.lt.f32.partialorder %v5940, 0.0
        %v6005 = vsub.f32 0.0, %v5877
        %v6006 = vsub.f32 0.0, %v5878
        %v6007 = vsub.f32 0.0, %v5879
        %v6008 = vsub.f32 0.0, %v5880
        %v6009 = vsub.f32 0.0, %v5881
        %v6010 = vsub.f32 0.0, %v5882
        %v6011 = vsub.f32 0.0, %v5883
        %v6012 = vsub.f32 0.0, %v5884
        %v6013 = vsub.f32 0.0, %v5885
        %v6014 = vsub.f32 0.0, %v5886
        %v6015 = vsub.f32 0.0, %v5887
        %v6016 = vsub.f32 0.0, %v5888
        %v6017 = vsub.f32 0.0, %v5889
        %v6018 = vsub.f32 0.0, %v5890
        %v6019 = vsub.f32 0.0, %v5891
        %v6020 = vsub.f32 0.0, %v5892
        %v6021 = vsub.f32 0.0, %v5893
        %v6022 = vsub.f32 0.0, %v5894
        %v6023 = vsub.f32 0.0, %v5895
        %v6024 = vsub.f32 0.0, %v5896
        %v6025 = vsub.f32 0.0, %v5897
        %v6026 = vsub.f32 0.0, %v5898
        %v6027 = vsub.f32 0.0, %v5899
        %v6028 = vsub.f32 0.0, %v5900
        %v6029 = vsub.f32 0.0, %v5901
        %v6030 = vsub.f32 0.0, %v5902
        %v6031 = vsub.f32 0.0, %v5903
        %v6032 = vsub.f32 0.0, %v5904
        %v6033 = vsub.f32 0.0, %v5905
        %v6034 = vsub.f32 0.0, %v5906
        %v6035 = vsub.f32 0.0, %v5907
        %v6036 = vsub.f32 0.0, %v5908
        %v6037 = vsub.f32 0.0, %v5909
        %v6038 = vsub.f32 0.0, %v5910
        %v6039 = vsub.f32 0.0, %v5911
        %v6040 = vsub.f32 0.0, %v5912
        %v6041 = vsub.f32 0.0, %v5913
        %v6042 = vsub.f32 0.0, %v5914
        %v6043 = vsub.f32 0.0, %v5915
        %v6044 = vsub.f32 0.0, %v5916
        %v6045 = vsub.f32 0.0, %v5917
        %v6046 = vsub.f32 0.0, %v5918
        %v6047 = vsub.f32 0.0, %v5919
        %v6048 = vsub.f32 0.0, %v5920
        %v6049 = vsub.f32 0.0, %v5921
        %v6050 = vsub.f32 0.0, %v5922
        %v6051 = vsub.f32 0.0, %v5923
        %v6052 = vsub.f32 0.0, %v5924
        %v6053 = vsub.f32 0.0, %v5925
        %v6054 = vsub.f32 0.0, %v5926
        %v6055 = vsub.f32 0.0, %v5927
        %v6056 = vsub.f32 0.0, %v5928
        %v6057 = vsub.f32 0.0, %v5929
        %v6058 = vsub.f32 0.0, %v5930
        %v6059 = vsub.f32 0.0, %v5931
        %v6060 = vsub.f32 0.0, %v5932
        %v6061 = vsub.f32 0.0, %v5933
        %v6062 = vsub.f32 0.0, %v5934
        %v6063 = vsub.f32 0.0, %v5935
        %v6064 = vsub.f32 0.0, %v5936
        %v6065 = vsub.f32 0.0, %v5937
        %v6066 = vsub.f32 0.0, %v5938
        %v6067 = vsub.f32 0.0, %v5939
        %v6068 = vsub.f32 0.0, %v5940
        %v6069 = vsel %vm5941, %v6005, %v5877
        %v6070 = vsel %vm5942, %v6006, %v5878
        %v6071 = vsel %vm5943, %v6007, %v5879
        %v6072 = vsel %vm5944, %v6008, %v5880
        %v6073 = vsel %vm5945, %v6009, %v5881
        %v6074 = vsel %vm5946, %v6010, %v5882
        %v6075 = vsel %vm5947, %v6011, %v5883
        %v6076 = vsel %vm5948, %v6012, %v5884
        %v6077 = vsel %vm5949, %v6013, %v5885
        %v6078 = vsel %vm5950, %v6014, %v5886
        %v6079 = vsel %vm5951, %v6015, %v5887
        %v6080 = vsel %vm5952, %v6016, %v5888
        %v6081 = vsel %vm5953, %v6017, %v5889
        %v6082 = vsel %vm5954, %v6018, %v5890
        %v6083 = vsel %vm5955, %v6019, %v5891
        %v6084 = vsel %vm5956, %v6020, %v5892
        %v6085 = vsel %vm5957, %v6021, %v5893
        %v6086 = vsel %vm5958, %v6022, %v5894
        %v6087 = vsel %vm5959, %v6023, %v5895
        %v6088 = vsel %vm5960, %v6024, %v5896
        %v6089 = vsel %vm5961, %v6025, %v5897
        %v6090 = vsel %vm5962, %v6026, %v5898
        %v6091 = vsel %vm5963, %v6027, %v5899
        %v6092 = vsel %vm5964, %v6028, %v5900
        %v6093 = vsel %vm5965, %v6029, %v5901
        %v6094 = vsel %vm5966, %v6030, %v5902
        %v6095 = vsel %vm5967, %v6031, %v5903
        %v6096 = vsel %vm5968, %v6032, %v5904
        %v6097 = vsel %vm5969, %v6033, %v5905
        %v6098 = vsel %vm5970, %v6034, %v5906
        %v6099 = vsel %vm5971, %v6035, %v5907
        %v6100 = vsel %vm5972, %v6036, %v5908
        %v6101 = vsel %vm5973, %v6037, %v5909
        %v6102 = vsel %vm5974, %v6038, %v5910
        %v6103 = vsel %vm5975, %v6039, %v5911
        %v6104 = vsel %vm5976, %v6040, %v5912
        %v6105 = vsel %vm5977, %v6041, %v5913
        %v6106 = vsel %vm5978, %v6042, %v5914
        %v6107 = vsel %vm5979, %v6043, %v5915
        %v6108 = vsel %vm5980, %v6044, %v5916
        %v6109 = vsel %vm5981, %v6045, %v5917
        %v6110 = vsel %vm5982, %v6046, %v5918
        %v6111 = vsel %vm5983, %v6047, %v5919
        %v6112 = vsel %vm5984, %v6048, %v5920
        %v6113 = vsel %vm5985, %v6049, %v5921
        %v6114 = vsel %vm5986, %v6050, %v5922
        %v6115 = vsel %vm5987, %v6051, %v5923
        %v6116 = vsel %vm5988, %v6052, %v5924
        %v6117 = vsel %vm5989, %v6053, %v5925
        %v6118 = vsel %vm5990, %v6054, %v5926
        %v6119 = vsel %vm5991, %v6055, %v5927
        %v6120 = vsel %vm5992, %v6056, %v5928
        %v6121 = vsel %vm5993, %v6057, %v5929
        %v6122 = vsel %vm5994, %v6058, %v5930
        %v6123 = vsel %vm5995, %v6059, %v5931
        %v6124 = vsel %vm5996, %v6060, %v5932
        %v6125 = vsel %vm5997, %v6061, %v5933
        %v6126 = vsel %vm5998, %v6062, %v5934
        %v6127 = vsel %vm5999, %v6063, %v5935
        %v6128 = vsel %vm6000, %v6064, %v5936
        %v6129 = vsel %vm6001, %v6065, %v5937
        %v6130 = vsel %vm6002, %v6066, %v5938
        %v6131 = vsel %vm6003, %v6067, %v5939
        %v6132 = vsel %vm6004, %v6068, %v5940
        %v6133 = vmul.f32 %v6069, 0.3275911
        %v6134 = vmul.f32 %v6070, 0.3275911
        %v6135 = vmul.f32 %v6071, 0.3275911
        %v6136 = vmul.f32 %v6072, 0.3275911
        %v6137 = vmul.f32 %v6073, 0.3275911
        %v6138 = vmul.f32 %v6074, 0.3275911
        %v6139 = vmul.f32 %v6075, 0.3275911
        %v6140 = vmul.f32 %v6076, 0.3275911
        %v6141 = vmul.f32 %v6077, 0.3275911
        %v6142 = vmul.f32 %v6078, 0.3275911
        %v6143 = vmul.f32 %v6079, 0.3275911
        %v6144 = vmul.f32 %v6080, 0.3275911
        %v6145 = vmul.f32 %v6081, 0.3275911
        %v6146 = vmul.f32 %v6082, 0.3275911
        %v6147 = vmul.f32 %v6083, 0.3275911
        %v6148 = vmul.f32 %v6084, 0.3275911
        %v6149 = vmul.f32 %v6085, 0.3275911
        %v6150 = vmul.f32 %v6086, 0.3275911
        %v6151 = vmul.f32 %v6087, 0.3275911
        %v6152 = vmul.f32 %v6088, 0.3275911
        %v6153 = vmul.f32 %v6089, 0.3275911
        %v6154 = vmul.f32 %v6090, 0.3275911
        %v6155 = vmul.f32 %v6091, 0.3275911
        %v6156 = vmul.f32 %v6092, 0.3275911
        %v6157 = vmul.f32 %v6093, 0.3275911
        %v6158 = vmul.f32 %v6094, 0.3275911
        %v6159 = vmul.f32 %v6095, 0.3275911
        %v6160 = vmul.f32 %v6096, 0.3275911
        %v6161 = vmul.f32 %v6097, 0.3275911
        %v6162 = vmul.f32 %v6098, 0.3275911
        %v6163 = vmul.f32 %v6099, 0.3275911
        %v6164 = vmul.f32 %v6100, 0.3275911
        %v6165 = vmul.f32 %v6101, 0.3275911
        %v6166 = vmul.f32 %v6102, 0.3275911
        %v6167 = vmul.f32 %v6103, 0.3275911
        %v6168 = vmul.f32 %v6104, 0.3275911
        %v6169 = vmul.f32 %v6105, 0.3275911
        %v6170 = vmul.f32 %v6106, 0.3275911
        %v6171 = vmul.f32 %v6107, 0.3275911
        %v6172 = vmul.f32 %v6108, 0.3275911
        %v6173 = vmul.f32 %v6109, 0.3275911
        %v6174 = vmul.f32 %v6110, 0.3275911
        %v6175 = vmul.f32 %v6111, 0.3275911
        %v6176 = vmul.f32 %v6112, 0.3275911
        %v6177 = vmul.f32 %v6113, 0.3275911
        %v6178 = vmul.f32 %v6114, 0.3275911
        %v6179 = vmul.f32 %v6115, 0.3275911
        %v6180 = vmul.f32 %v6116, 0.3275911
        %v6181 = vmul.f32 %v6117, 0.3275911
        %v6182 = vmul.f32 %v6118, 0.3275911
        %v6183 = vmul.f32 %v6119, 0.3275911
        %v6184 = vmul.f32 %v6120, 0.3275911
        %v6185 = vmul.f32 %v6121, 0.3275911
        %v6186 = vmul.f32 %v6122, 0.3275911
        %v6187 = vmul.f32 %v6123, 0.3275911
        %v6188 = vmul.f32 %v6124, 0.3275911
        %v6189 = vmul.f32 %v6125, 0.3275911
        %v6190 = vmul.f32 %v6126, 0.3275911
        %v6191 = vmul.f32 %v6127, 0.3275911
        %v6192 = vmul.f32 %v6128, 0.3275911
        %v6193 = vmul.f32 %v6129, 0.3275911
        %v6194 = vmul.f32 %v6130, 0.3275911
        %v6195 = vmul.f32 %v6131, 0.3275911
        %v6196 = vmul.f32 %v6132, 0.3275911
        %v6197 = vadd.f32 %v6133, 1.0
        %v6198 = vadd.f32 %v6134, 1.0
        %v6199 = vadd.f32 %v6135, 1.0
        %v6200 = vadd.f32 %v6136, 1.0
        %v6201 = vadd.f32 %v6137, 1.0
        %v6202 = vadd.f32 %v6138, 1.0
        %v6203 = vadd.f32 %v6139, 1.0
        %v6204 = vadd.f32 %v6140, 1.0
        %v6205 = vadd.f32 %v6141, 1.0
        %v6206 = vadd.f32 %v6142, 1.0
        %v6207 = vadd.f32 %v6143, 1.0
        %v6208 = vadd.f32 %v6144, 1.0
        %v6209 = vadd.f32 %v6145, 1.0
        %v6210 = vadd.f32 %v6146, 1.0
        %v6211 = vadd.f32 %v6147, 1.0
        %v6212 = vadd.f32 %v6148, 1.0
        %v6213 = vadd.f32 %v6149, 1.0
        %v6214 = vadd.f32 %v6150, 1.0
        %v6215 = vadd.f32 %v6151, 1.0
        %v6216 = vadd.f32 %v6152, 1.0
        %v6217 = vadd.f32 %v6153, 1.0
        %v6218 = vadd.f32 %v6154, 1.0
        %v6219 = vadd.f32 %v6155, 1.0
        %v6220 = vadd.f32 %v6156, 1.0
        %v6221 = vadd.f32 %v6157, 1.0
        %v6222 = vadd.f32 %v6158, 1.0
        %v6223 = vadd.f32 %v6159, 1.0
        %v6224 = vadd.f32 %v6160, 1.0
        %v6225 = vadd.f32 %v6161, 1.0
        %v6226 = vadd.f32 %v6162, 1.0
        %v6227 = vadd.f32 %v6163, 1.0
        %v6228 = vadd.f32 %v6164, 1.0
        %v6229 = vadd.f32 %v6165, 1.0
        %v6230 = vadd.f32 %v6166, 1.0
        %v6231 = vadd.f32 %v6167, 1.0
        %v6232 = vadd.f32 %v6168, 1.0
        %v6233 = vadd.f32 %v6169, 1.0
        %v6234 = vadd.f32 %v6170, 1.0
        %v6235 = vadd.f32 %v6171, 1.0
        %v6236 = vadd.f32 %v6172, 1.0
        %v6237 = vadd.f32 %v6173, 1.0
        %v6238 = vadd.f32 %v6174, 1.0
        %v6239 = vadd.f32 %v6175, 1.0
        %v6240 = vadd.f32 %v6176, 1.0
        %v6241 = vadd.f32 %v6177, 1.0
        %v6242 = vadd.f32 %v6178, 1.0
        %v6243 = vadd.f32 %v6179, 1.0
        %v6244 = vadd.f32 %v6180, 1.0
        %v6245 = vadd.f32 %v6181, 1.0
        %v6246 = vadd.f32 %v6182, 1.0
        %v6247 = vadd.f32 %v6183, 1.0
        %v6248 = vadd.f32 %v6184, 1.0
        %v6249 = vadd.f32 %v6185, 1.0
        %v6250 = vadd.f32 %v6186, 1.0
        %v6251 = vadd.f32 %v6187, 1.0
        %v6252 = vadd.f32 %v6188, 1.0
        %v6253 = vadd.f32 %v6189, 1.0
        %v6254 = vadd.f32 %v6190, 1.0
        %v6255 = vadd.f32 %v6191, 1.0
        %v6256 = vadd.f32 %v6192, 1.0
        %v6257 = vadd.f32 %v6193, 1.0
        %v6258 = vadd.f32 %v6194, 1.0
        %v6259 = vadd.f32 %v6195, 1.0
        %v6260 = vadd.f32 %v6196, 1.0
        %v6261 = vrcp.pop %v6197
        %v6262 = vmul.f32 1.0, %v6261
        %v6263 = vrcp.pop %v6198
        %v6264 = vmul.f32 1.0, %v6263
        %v6265 = vrcp.pop %v6199
        %v6266 = vmul.f32 1.0, %v6265
        %v6267 = vrcp.pop %v6200
        %v6268 = vmul.f32 1.0, %v6267
        %v6269 = vrcp.pop %v6201
        %v6270 = vmul.f32 1.0, %v6269
        %v6271 = vrcp.pop %v6202
        %v6272 = vmul.f32 1.0, %v6271
        %v6273 = vrcp.pop %v6203
        %v6274 = vmul.f32 1.0, %v6273
        %v6275 = vrcp.pop %v6204
        %v6276 = vmul.f32 1.0, %v6275
        %v6277 = vrcp.pop %v6205
        %v6278 = vmul.f32 1.0, %v6277
        %v6279 = vrcp.pop %v6206
        %v6280 = vmul.f32 1.0, %v6279
        %v6281 = vrcp.pop %v6207
        %v6282 = vmul.f32 1.0, %v6281
        %v6283 = vrcp.pop %v6208
        %v6284 = vmul.f32 1.0, %v6283
        %v6285 = vrcp.pop %v6209
        %v6286 = vmul.f32 1.0, %v6285
        %v6287 = vrcp.pop %v6210
        %v6288 = vmul.f32 1.0, %v6287
        %v6289 = vrcp.pop %v6211
        %v6290 = vmul.f32 1.0, %v6289
        %v6291 = vrcp.pop %v6212
        %v6292 = vmul.f32 1.0, %v6291
        %v6293 = vrcp.pop %v6213
        %v6294 = vmul.f32 1.0, %v6293
        %v6295 = vrcp.pop %v6214
        %v6296 = vmul.f32 1.0, %v6295
        %v6297 = vrcp.pop %v6215
        %v6298 = vmul.f32 1.0, %v6297
        %v6299 = vrcp.pop %v6216
        %v6300 = vmul.f32 1.0, %v6299
        %v6301 = vrcp.pop %v6217
        %v6302 = vmul.f32 1.0, %v6301
        %v6303 = vrcp.pop %v6218
        %v6304 = vmul.f32 1.0, %v6303
        %v6305 = vrcp.pop %v6219
        %v6306 = vmul.f32 1.0, %v6305
        %v6307 = vrcp.pop %v6220
        %v6308 = vmul.f32 1.0, %v6307
        %v6309 = vrcp.pop %v6221
        %v6310 = vmul.f32 1.0, %v6309
        %v6311 = vrcp.pop %v6222
        %v6312 = vmul.f32 1.0, %v6311
        %v6313 = vrcp.pop %v6223
        %v6314 = vmul.f32 1.0, %v6313
        %v6315 = vrcp.pop %v6224
        %v6316 = vmul.f32 1.0, %v6315
        %v6317 = vrcp.pop %v6225
        %v6318 = vmul.f32 1.0, %v6317
        %v6319 = vrcp.pop %v6226
        %v6320 = vmul.f32 1.0, %v6319
        %v6321 = vrcp.pop %v6227
        %v6322 = vmul.f32 1.0, %v6321
        %v6323 = vrcp.pop %v6228
        %v6324 = vmul.f32 1.0, %v6323
        %v6325 = vrcp.pop %v6229
        %v6326 = vmul.f32 1.0, %v6325
        %v6327 = vrcp.pop %v6230
        %v6328 = vmul.f32 1.0, %v6327
        %v6329 = vrcp.pop %v6231
        %v6330 = vmul.f32 1.0, %v6329
        %v6331 = vrcp.pop %v6232
        %v6332 = vmul.f32 1.0, %v6331
        %v6333 = vrcp.pop %v6233
        %v6334 = vmul.f32 1.0, %v6333
        %v6335 = vrcp.pop %v6234
        %v6336 = vmul.f32 1.0, %v6335
        %v6337 = vrcp.pop %v6235
        %v6338 = vmul.f32 1.0, %v6337
        %v6339 = vrcp.pop %v6236
        %v6340 = vmul.f32 1.0, %v6339
        %v6341 = vrcp.pop %v6237
        %v6342 = vmul.f32 1.0, %v6341
        %v6343 = vrcp.pop %v6238
        %v6344 = vmul.f32 1.0, %v6343
        %v6345 = vrcp.pop %v6239
        %v6346 = vmul.f32 1.0, %v6345
        %v6347 = vrcp.pop %v6240
        %v6348 = vmul.f32 1.0, %v6347
        %v6349 = vrcp.pop %v6241
        %v6350 = vmul.f32 1.0, %v6349
        %v6351 = vrcp.pop %v6242
        %v6352 = vmul.f32 1.0, %v6351
        %v6353 = vrcp.pop %v6243
        %v6354 = vmul.f32 1.0, %v6353
        %v6355 = vrcp.pop %v6244
        %v6356 = vmul.f32 1.0, %v6355
        %v6357 = vrcp.pop %v6245
        %v6358 = vmul.f32 1.0, %v6357
        %v6359 = vrcp.pop %v6246
        %v6360 = vmul.f32 1.0, %v6359
        %v6361 = vrcp.pop %v6247
        %v6362 = vmul.f32 1.0, %v6361
        %v6363 = vrcp.pop %v6248
        %v6364 = vmul.f32 1.0, %v6363
        %v6365 = vrcp.pop %v6249
        %v6366 = vmul.f32 1.0, %v6365
        %v6367 = vrcp.pop %v6250
        %v6368 = vmul.f32 1.0, %v6367
        %v6369 = vrcp.pop %v6251
        %v6370 = vmul.f32 1.0, %v6369
        %v6371 = vrcp.pop %v6252
        %v6372 = vmul.f32 1.0, %v6371
        %v6373 = vrcp.pop %v6253
        %v6374 = vmul.f32 1.0, %v6373
        %v6375 = vrcp.pop %v6254
        %v6376 = vmul.f32 1.0, %v6375
        %v6377 = vrcp.pop %v6255
        %v6378 = vmul.f32 1.0, %v6377
        %v6379 = vrcp.pop %v6256
        %v6380 = vmul.f32 1.0, %v6379
        %v6381 = vrcp.pop %v6257
        %v6382 = vmul.f32 1.0, %v6381
        %v6383 = vrcp.pop %v6258
        %v6384 = vmul.f32 1.0, %v6383
        %v6385 = vrcp.pop %v6259
        %v6386 = vmul.f32 1.0, %v6385
        %v6387 = vrcp.pop %v6260
        %v6388 = vmul.f32 1.0, %v6387
        %v6389 = vmul.f32 %v6262, 1.0614054
        %v6390 = vmul.f32 %v6264, 1.0614054
        %v6391 = vmul.f32 %v6266, 1.0614054
        %v6392 = vmul.f32 %v6268, 1.0614054
        %v6393 = vmul.f32 %v6270, 1.0614054
        %v6394 = vmul.f32 %v6272, 1.0614054
        %v6395 = vmul.f32 %v6274, 1.0614054
        %v6396 = vmul.f32 %v6276, 1.0614054
        %v6397 = vmul.f32 %v6278, 1.0614054
        %v6398 = vmul.f32 %v6280, 1.0614054
        %v6399 = vmul.f32 %v6282, 1.0614054
        %v6400 = vmul.f32 %v6284, 1.0614054
        %v6401 = vmul.f32 %v6286, 1.0614054
        %v6402 = vmul.f32 %v6288, 1.0614054
        %v6403 = vmul.f32 %v6290, 1.0614054
        %v6404 = vmul.f32 %v6292, 1.0614054
        %v6405 = vmul.f32 %v6294, 1.0614054
        %v6406 = vmul.f32 %v6296, 1.0614054
        %v6407 = vmul.f32 %v6298, 1.0614054
        %v6408 = vmul.f32 %v6300, 1.0614054
        %v6409 = vmul.f32 %v6302, 1.0614054
        %v6410 = vmul.f32 %v6304, 1.0614054
        %v6411 = vmul.f32 %v6306, 1.0614054
        %v6412 = vmul.f32 %v6308, 1.0614054
        %v6413 = vmul.f32 %v6310, 1.0614054
        %v6414 = vmul.f32 %v6312, 1.0614054
        %v6415 = vmul.f32 %v6314, 1.0614054
        %v6416 = vmul.f32 %v6316, 1.0614054
        %v6417 = vmul.f32 %v6318, 1.0614054
        %v6418 = vmul.f32 %v6320, 1.0614054
        %v6419 = vmul.f32 %v6322, 1.0614054
        %v6420 = vmul.f32 %v6324, 1.0614054
        %v6421 = vmul.f32 %v6326, 1.0614054
        %v6422 = vmul.f32 %v6328, 1.0614054
        %v6423 = vmul.f32 %v6330, 1.0614054
        %v6424 = vmul.f32 %v6332, 1.0614054
        %v6425 = vmul.f32 %v6334, 1.0614054
        %v6426 = vmul.f32 %v6336, 1.0614054
        %v6427 = vmul.f32 %v6338, 1.0614054
        %v6428 = vmul.f32 %v6340, 1.0614054
        %v6429 = vmul.f32 %v6342, 1.0614054
        %v6430 = vmul.f32 %v6344, 1.0614054
        %v6431 = vmul.f32 %v6346, 1.0614054
        %v6432 = vmul.f32 %v6348, 1.0614054
        %v6433 = vmul.f32 %v6350, 1.0614054
        %v6434 = vmul.f32 %v6352, 1.0614054
        %v6435 = vmul.f32 %v6354, 1.0614054
        %v6436 = vmul.f32 %v6356, 1.0614054
        %v6437 = vmul.f32 %v6358, 1.0614054
        %v6438 = vmul.f32 %v6360, 1.0614054
        %v6439 = vmul.f32 %v6362, 1.0614054
        %v6440 = vmul.f32 %v6364, 1.0614054
        %v6441 = vmul.f32 %v6366, 1.0614054
        %v6442 = vmul.f32 %v6368, 1.0614054
        %v6443 = vmul.f32 %v6370, 1.0614054
        %v6444 = vmul.f32 %v6372, 1.0614054
        %v6445 = vmul.f32 %v6374, 1.0614054
        %v6446 = vmul.f32 %v6376, 1.0614054
        %v6447 = vmul.f32 %v6378, 1.0614054
        %v6448 = vmul.f32 %v6380, 1.0614054
        %v6449 = vmul.f32 %v6382, 1.0614054
        %v6450 = vmul.f32 %v6384, 1.0614054
        %v6451 = vmul.f32 %v6386, 1.0614054
        %v6452 = vmul.f32 %v6388, 1.0614054
        %v6453 = vadd.f32 %v6389, -1.4531521
        %v6454 = vadd.f32 %v6390, -1.4531521
        %v6455 = vadd.f32 %v6391, -1.4531521
        %v6456 = vadd.f32 %v6392, -1.4531521
        %v6457 = vadd.f32 %v6393, -1.4531521
        %v6458 = vadd.f32 %v6394, -1.4531521
        %v6459 = vadd.f32 %v6395, -1.4531521
        %v6460 = vadd.f32 %v6396, -1.4531521
        %v6461 = vadd.f32 %v6397, -1.4531521
        %v6462 = vadd.f32 %v6398, -1.4531521
        %v6463 = vadd.f32 %v6399, -1.4531521
        %v6464 = vadd.f32 %v6400, -1.4531521
        %v6465 = vadd.f32 %v6401, -1.4531521
        %v6466 = vadd.f32 %v6402, -1.4531521
        %v6467 = vadd.f32 %v6403, -1.4531521
        %v6468 = vadd.f32 %v6404, -1.4531521
        %v6469 = vadd.f32 %v6405, -1.4531521
        %v6470 = vadd.f32 %v6406, -1.4531521
        %v6471 = vadd.f32 %v6407, -1.4531521
        %v6472 = vadd.f32 %v6408, -1.4531521
        %v6473 = vadd.f32 %v6409, -1.4531521
        %v6474 = vadd.f32 %v6410, -1.4531521
        %v6475 = vadd.f32 %v6411, -1.4531521
        %v6476 = vadd.f32 %v6412, -1.4531521
        %v6477 = vadd.f32 %v6413, -1.4531521
        %v6478 = vadd.f32 %v6414, -1.4531521
        %v6479 = vadd.f32 %v6415, -1.4531521
        %v6480 = vadd.f32 %v6416, -1.4531521
        %v6481 = vadd.f32 %v6417, -1.4531521
        %v6482 = vadd.f32 %v6418, -1.4531521
        %v6483 = vadd.f32 %v6419, -1.4531521
        %v6484 = vadd.f32 %v6420, -1.4531521
        %v6485 = vadd.f32 %v6421, -1.4531521
        %v6486 = vadd.f32 %v6422, -1.4531521
        %v6487 = vadd.f32 %v6423, -1.4531521
        %v6488 = vadd.f32 %v6424, -1.4531521
        %v6489 = vadd.f32 %v6425, -1.4531521
        %v6490 = vadd.f32 %v6426, -1.4531521
        %v6491 = vadd.f32 %v6427, -1.4531521
        %v6492 = vadd.f32 %v6428, -1.4531521
        %v6493 = vadd.f32 %v6429, -1.4531521
        %v6494 = vadd.f32 %v6430, -1.4531521
        %v6495 = vadd.f32 %v6431, -1.4531521
        %v6496 = vadd.f32 %v6432, -1.4531521
        %v6497 = vadd.f32 %v6433, -1.4531521
        %v6498 = vadd.f32 %v6434, -1.4531521
        %v6499 = vadd.f32 %v6435, -1.4531521
        %v6500 = vadd.f32 %v6436, -1.4531521
        %v6501 = vadd.f32 %v6437, -1.4531521
        %v6502 = vadd.f32 %v6438, -1.4531521
        %v6503 = vadd.f32 %v6439, -1.4531521
        %v6504 = vadd.f32 %v6440, -1.4531521
        %v6505 = vadd.f32 %v6441, -1.4531521
        %v6506 = vadd.f32 %v6442, -1.4531521
        %v6507 = vadd.f32 %v6443, -1.4531521
        %v6508 = vadd.f32 %v6444, -1.4531521
        %v6509 = vadd.f32 %v6445, -1.4531521
        %v6510 = vadd.f32 %v6446, -1.4531521
        %v6511 = vadd.f32 %v6447, -1.4531521
        %v6512 = vadd.f32 %v6448, -1.4531521
        %v6513 = vadd.f32 %v6449, -1.4531521
        %v6514 = vadd.f32 %v6450, -1.4531521
        %v6515 = vadd.f32 %v6451, -1.4531521
        %v6516 = vadd.f32 %v6452, -1.4531521
        %v6517 = vmul.f32 %v6453, %v6262
        %v6518 = vmul.f32 %v6454, %v6264
        %v6519 = vmul.f32 %v6455, %v6266
        %v6520 = vmul.f32 %v6456, %v6268
        %v6521 = vmul.f32 %v6457, %v6270
        %v6522 = vmul.f32 %v6458, %v6272
        %v6523 = vmul.f32 %v6459, %v6274
        %v6524 = vmul.f32 %v6460, %v6276
        %v6525 = vmul.f32 %v6461, %v6278
        %v6526 = vmul.f32 %v6462, %v6280
        %v6527 = vmul.f32 %v6463, %v6282
        %v6528 = vmul.f32 %v6464, %v6284
        %v6529 = vmul.f32 %v6465, %v6286
        %v6530 = vmul.f32 %v6466, %v6288
        %v6531 = vmul.f32 %v6467, %v6290
        %v6532 = vmul.f32 %v6468, %v6292
        %v6533 = vmul.f32 %v6469, %v6294
        %v6534 = vmul.f32 %v6470, %v6296
        %v6535 = vmul.f32 %v6471, %v6298
        %v6536 = vmul.f32 %v6472, %v6300
        %v6537 = vmul.f32 %v6473, %v6302
        %v6538 = vmul.f32 %v6474, %v6304
        %v6539 = vmul.f32 %v6475, %v6306
        %v6540 = vmul.f32 %v6476, %v6308
        %v6541 = vmul.f32 %v6477, %v6310
        %v6542 = vmul.f32 %v6478, %v6312
        %v6543 = vmul.f32 %v6479, %v6314
        %v6544 = vmul.f32 %v6480, %v6316
        %v6545 = vmul.f32 %v6481, %v6318
        %v6546 = vmul.f32 %v6482, %v6320
        %v6547 = vmul.f32 %v6483, %v6322
        %v6548 = vmul.f32 %v6484, %v6324
        %v6549 = vmul.f32 %v6485, %v6326
        %v6550 = vmul.f32 %v6486, %v6328
        %v6551 = vmul.f32 %v6487, %v6330
        %v6552 = vmul.f32 %v6488, %v6332
        %v6553 = vmul.f32 %v6489, %v6334
        %v6554 = vmul.f32 %v6490, %v6336
        %v6555 = vmul.f32 %v6491, %v6338
        %v6556 = vmul.f32 %v6492, %v6340
        %v6557 = vmul.f32 %v6493, %v6342
        %v6558 = vmul.f32 %v6494, %v6344
        %v6559 = vmul.f32 %v6495, %v6346
        %v6560 = vmul.f32 %v6496, %v6348
        %v6561 = vmul.f32 %v6497, %v6350
        %v6562 = vmul.f32 %v6498, %v6352
        %v6563 = vmul.f32 %v6499, %v6354
        %v6564 = vmul.f32 %v6500, %v6356
        %v6565 = vmul.f32 %v6501, %v6358
        %v6566 = vmul.f32 %v6502, %v6360
        %v6567 = vmul.f32 %v6503, %v6362
        %v6568 = vmul.f32 %v6504, %v6364
        %v6569 = vmul.f32 %v6505, %v6366
        %v6570 = vmul.f32 %v6506, %v6368
        %v6571 = vmul.f32 %v6507, %v6370
        %v6572 = vmul.f32 %v6508, %v6372
        %v6573 = vmul.f32 %v6509, %v6374
        %v6574 = vmul.f32 %v6510, %v6376
        %v6575 = vmul.f32 %v6511, %v6378
        %v6576 = vmul.f32 %v6512, %v6380
        %v6577 = vmul.f32 %v6513, %v6382
        %v6578 = vmul.f32 %v6514, %v6384
        %v6579 = vmul.f32 %v6515, %v6386
        %v6580 = vmul.f32 %v6516, %v6388
        %v6581 = vadd.f32 %v6517, 1.4214138
        %v6582 = vadd.f32 %v6518, 1.4214138
        %v6583 = vadd.f32 %v6519, 1.4214138
        %v6584 = vadd.f32 %v6520, 1.4214138
        %v6585 = vadd.f32 %v6521, 1.4214138
        %v6586 = vadd.f32 %v6522, 1.4214138
        %v6587 = vadd.f32 %v6523, 1.4214138
        %v6588 = vadd.f32 %v6524, 1.4214138
        %v6589 = vadd.f32 %v6525, 1.4214138
        %v6590 = vadd.f32 %v6526, 1.4214138
        %v6591 = vadd.f32 %v6527, 1.4214138
        %v6592 = vadd.f32 %v6528, 1.4214138
        %v6593 = vadd.f32 %v6529, 1.4214138
        %v6594 = vadd.f32 %v6530, 1.4214138
        %v6595 = vadd.f32 %v6531, 1.4214138
        %v6596 = vadd.f32 %v6532, 1.4214138
        %v6597 = vadd.f32 %v6533, 1.4214138
        %v6598 = vadd.f32 %v6534, 1.4214138
        %v6599 = vadd.f32 %v6535, 1.4214138
        %v6600 = vadd.f32 %v6536, 1.4214138
        %v6601 = vadd.f32 %v6537, 1.4214138
        %v6602 = vadd.f32 %v6538, 1.4214138
        %v6603 = vadd.f32 %v6539, 1.4214138
        %v6604 = vadd.f32 %v6540, 1.4214138
        %v6605 = vadd.f32 %v6541, 1.4214138
        %v6606 = vadd.f32 %v6542, 1.4214138
        %v6607 = vadd.f32 %v6543, 1.4214138
        %v6608 = vadd.f32 %v6544, 1.4214138
        %v6609 = vadd.f32 %v6545, 1.4214138
        %v6610 = vadd.f32 %v6546, 1.4214138
        %v6611 = vadd.f32 %v6547, 1.4214138
        %v6612 = vadd.f32 %v6548, 1.4214138
        %v6613 = vadd.f32 %v6549, 1.4214138
        %v6614 = vadd.f32 %v6550, 1.4214138
        %v6615 = vadd.f32 %v6551, 1.4214138
        %v6616 = vadd.f32 %v6552, 1.4214138
        %v6617 = vadd.f32 %v6553, 1.4214138
        %v6618 = vadd.f32 %v6554, 1.4214138
        %v6619 = vadd.f32 %v6555, 1.4214138
        %v6620 = vadd.f32 %v6556, 1.4214138
        %v6621 = vadd.f32 %v6557, 1.4214138
        %v6622 = vadd.f32 %v6558, 1.4214138
        %v6623 = vadd.f32 %v6559, 1.4214138
        %v6624 = vadd.f32 %v6560, 1.4214138
        %v6625 = vadd.f32 %v6561, 1.4214138
        %v6626 = vadd.f32 %v6562, 1.4214138
        %v6627 = vadd.f32 %v6563, 1.4214138
        %v6628 = vadd.f32 %v6564, 1.4214138
        %v6629 = vadd.f32 %v6565, 1.4214138
        %v6630 = vadd.f32 %v6566, 1.4214138
        %v6631 = vadd.f32 %v6567, 1.4214138
        %v6632 = vadd.f32 %v6568, 1.4214138
        %v6633 = vadd.f32 %v6569, 1.4214138
        %v6634 = vadd.f32 %v6570, 1.4214138
        %v6635 = vadd.f32 %v6571, 1.4214138
        %v6636 = vadd.f32 %v6572, 1.4214138
        %v6637 = vadd.f32 %v6573, 1.4214138
        %v6638 = vadd.f32 %v6574, 1.4214138
        %v6639 = vadd.f32 %v6575, 1.4214138
        %v6640 = vadd.f32 %v6576, 1.4214138
        %v6641 = vadd.f32 %v6577, 1.4214138
        %v6642 = vadd.f32 %v6578, 1.4214138
        %v6643 = vadd.f32 %v6579, 1.4214138
        %v6644 = vadd.f32 %v6580, 1.4214138
        %v6645 = vmul.f32 %v6581, %v6262
        %v6646 = vmul.f32 %v6582, %v6264
        %v6647 = vmul.f32 %v6583, %v6266
        %v6648 = vmul.f32 %v6584, %v6268
        %v6649 = vmul.f32 %v6585, %v6270
        %v6650 = vmul.f32 %v6586, %v6272
        %v6651 = vmul.f32 %v6587, %v6274
        %v6652 = vmul.f32 %v6588, %v6276
        %v6653 = vmul.f32 %v6589, %v6278
        %v6654 = vmul.f32 %v6590, %v6280
        %v6655 = vmul.f32 %v6591, %v6282
        %v6656 = vmul.f32 %v6592, %v6284
        %v6657 = vmul.f32 %v6593, %v6286
        %v6658 = vmul.f32 %v6594, %v6288
        %v6659 = vmul.f32 %v6595, %v6290
        %v6660 = vmul.f32 %v6596, %v6292
        %v6661 = vmul.f32 %v6597, %v6294
        %v6662 = vmul.f32 %v6598, %v6296
        %v6663 = vmul.f32 %v6599, %v6298
        %v6664 = vmul.f32 %v6600, %v6300
        %v6665 = vmul.f32 %v6601, %v6302
        %v6666 = vmul.f32 %v6602, %v6304
        %v6667 = vmul.f32 %v6603, %v6306
        %v6668 = vmul.f32 %v6604, %v6308
        %v6669 = vmul.f32 %v6605, %v6310
        %v6670 = vmul.f32 %v6606, %v6312
        %v6671 = vmul.f32 %v6607, %v6314
        %v6672 = vmul.f32 %v6608, %v6316
        %v6673 = vmul.f32 %v6609, %v6318
        %v6674 = vmul.f32 %v6610, %v6320
        %v6675 = vmul.f32 %v6611, %v6322
        %v6676 = vmul.f32 %v6612, %v6324
        %v6677 = vmul.f32 %v6613, %v6326
        %v6678 = vmul.f32 %v6614, %v6328
        %v6679 = vmul.f32 %v6615, %v6330
        %v6680 = vmul.f32 %v6616, %v6332
        %v6681 = vmul.f32 %v6617, %v6334
        %v6682 = vmul.f32 %v6618, %v6336
        %v6683 = vmul.f32 %v6619, %v6338
        %v6684 = vmul.f32 %v6620, %v6340
        %v6685 = vmul.f32 %v6621, %v6342
        %v6686 = vmul.f32 %v6622, %v6344
        %v6687 = vmul.f32 %v6623, %v6346
        %v6688 = vmul.f32 %v6624, %v6348
        %v6689 = vmul.f32 %v6625, %v6350
        %v6690 = vmul.f32 %v6626, %v6352
        %v6691 = vmul.f32 %v6627, %v6354
        %v6692 = vmul.f32 %v6628, %v6356
        %v6693 = vmul.f32 %v6629, %v6358
        %v6694 = vmul.f32 %v6630, %v6360
        %v6695 = vmul.f32 %v6631, %v6362
        %v6696 = vmul.f32 %v6632, %v6364
        %v6697 = vmul.f32 %v6633, %v6366
        %v6698 = vmul.f32 %v6634, %v6368
        %v6699 = vmul.f32 %v6635, %v6370
        %v6700 = vmul.f32 %v6636, %v6372
        %v6701 = vmul.f32 %v6637, %v6374
        %v6702 = vmul.f32 %v6638, %v6376
        %v6703 = vmul.f32 %v6639, %v6378
        %v6704 = vmul.f32 %v6640, %v6380
        %v6705 = vmul.f32 %v6641, %v6382
        %v6706 = vmul.f32 %v6642, %v6384
        %v6707 = vmul.f32 %v6643, %v6386
        %v6708 = vmul.f32 %v6644, %v6388
        %v6709 = vadd.f32 %v6645, -0.28449672
        %v6710 = vadd.f32 %v6646, -0.28449672
        %v6711 = vadd.f32 %v6647, -0.28449672
        %v6712 = vadd.f32 %v6648, -0.28449672
        %v6713 = vadd.f32 %v6649, -0.28449672
        %v6714 = vadd.f32 %v6650, -0.28449672
        %v6715 = vadd.f32 %v6651, -0.28449672
        %v6716 = vadd.f32 %v6652, -0.28449672
        %v6717 = vadd.f32 %v6653, -0.28449672
        %v6718 = vadd.f32 %v6654, -0.28449672
        %v6719 = vadd.f32 %v6655, -0.28449672
        %v6720 = vadd.f32 %v6656, -0.28449672
        %v6721 = vadd.f32 %v6657, -0.28449672
        %v6722 = vadd.f32 %v6658, -0.28449672
        %v6723 = vadd.f32 %v6659, -0.28449672
        %v6724 = vadd.f32 %v6660, -0.28449672
        %v6725 = vadd.f32 %v6661, -0.28449672
        %v6726 = vadd.f32 %v6662, -0.28449672
        %v6727 = vadd.f32 %v6663, -0.28449672
        %v6728 = vadd.f32 %v6664, -0.28449672
        %v6729 = vadd.f32 %v6665, -0.28449672
        %v6730 = vadd.f32 %v6666, -0.28449672
        %v6731 = vadd.f32 %v6667, -0.28449672
        %v6732 = vadd.f32 %v6668, -0.28449672
        %v6733 = vadd.f32 %v6669, -0.28449672
        %v6734 = vadd.f32 %v6670, -0.28449672
        %v6735 = vadd.f32 %v6671, -0.28449672
        %v6736 = vadd.f32 %v6672, -0.28449672
        %v6737 = vadd.f32 %v6673, -0.28449672
        %v6738 = vadd.f32 %v6674, -0.28449672
        %v6739 = vadd.f32 %v6675, -0.28449672
        %v6740 = vadd.f32 %v6676, -0.28449672
        %v6741 = vadd.f32 %v6677, -0.28449672
        %v6742 = vadd.f32 %v6678, -0.28449672
        %v6743 = vadd.f32 %v6679, -0.28449672
        %v6744 = vadd.f32 %v6680, -0.28449672
        %v6745 = vadd.f32 %v6681, -0.28449672
        %v6746 = vadd.f32 %v6682, -0.28449672
        %v6747 = vadd.f32 %v6683, -0.28449672
        %v6748 = vadd.f32 %v6684, -0.28449672
        %v6749 = vadd.f32 %v6685, -0.28449672
        %v6750 = vadd.f32 %v6686, -0.28449672
        %v6751 = vadd.f32 %v6687, -0.28449672
        %v6752 = vadd.f32 %v6688, -0.28449672
        %v6753 = vadd.f32 %v6689, -0.28449672
        %v6754 = vadd.f32 %v6690, -0.28449672
        %v6755 = vadd.f32 %v6691, -0.28449672
        %v6756 = vadd.f32 %v6692, -0.28449672
        %v6757 = vadd.f32 %v6693, -0.28449672
        %v6758 = vadd.f32 %v6694, -0.28449672
        %v6759 = vadd.f32 %v6695, -0.28449672
        %v6760 = vadd.f32 %v6696, -0.28449672
        %v6761 = vadd.f32 %v6697, -0.28449672
        %v6762 = vadd.f32 %v6698, -0.28449672
        %v6763 = vadd.f32 %v6699, -0.28449672
        %v6764 = vadd.f32 %v6700, -0.28449672
        %v6765 = vadd.f32 %v6701, -0.28449672
        %v6766 = vadd.f32 %v6702, -0.28449672
        %v6767 = vadd.f32 %v6703, -0.28449672
        %v6768 = vadd.f32 %v6704, -0.28449672
        %v6769 = vadd.f32 %v6705, -0.28449672
        %v6770 = vadd.f32 %v6706, -0.28449672
        %v6771 = vadd.f32 %v6707, -0.28449672
        %v6772 = vadd.f32 %v6708, -0.28449672
        %v6773 = vmul.f32 %v6709, %v6262
        %v6774 = vmul.f32 %v6710, %v6264
        %v6775 = vmul.f32 %v6711, %v6266
        %v6776 = vmul.f32 %v6712, %v6268
        %v6777 = vmul.f32 %v6713, %v6270
        %v6778 = vmul.f32 %v6714, %v6272
        %v6779 = vmul.f32 %v6715, %v6274
        %v6780 = vmul.f32 %v6716, %v6276
        %v6781 = vmul.f32 %v6717, %v6278
        %v6782 = vmul.f32 %v6718, %v6280
        %v6783 = vmul.f32 %v6719, %v6282
        %v6784 = vmul.f32 %v6720, %v6284
        %v6785 = vmul.f32 %v6721, %v6286
        %v6786 = vmul.f32 %v6722, %v6288
        %v6787 = vmul.f32 %v6723, %v6290
        %v6788 = vmul.f32 %v6724, %v6292
        %v6789 = vmul.f32 %v6725, %v6294
        %v6790 = vmul.f32 %v6726, %v6296
        %v6791 = vmul.f32 %v6727, %v6298
        %v6792 = vmul.f32 %v6728, %v6300
        %v6793 = vmul.f32 %v6729, %v6302
        %v6794 = vmul.f32 %v6730, %v6304
        %v6795 = vmul.f32 %v6731, %v6306
        %v6796 = vmul.f32 %v6732, %v6308
        %v6797 = vmul.f32 %v6733, %v6310
        %v6798 = vmul.f32 %v6734, %v6312
        %v6799 = vmul.f32 %v6735, %v6314
        %v6800 = vmul.f32 %v6736, %v6316
        %v6801 = vmul.f32 %v6737, %v6318
        %v6802 = vmul.f32 %v6738, %v6320
        %v6803 = vmul.f32 %v6739, %v6322
        %v6804 = vmul.f32 %v6740, %v6324
        %v6805 = vmul.f32 %v6741, %v6326
        %v6806 = vmul.f32 %v6742, %v6328
        %v6807 = vmul.f32 %v6743, %v6330
        %v6808 = vmul.f32 %v6744, %v6332
        %v6809 = vmul.f32 %v6745, %v6334
        %v6810 = vmul.f32 %v6746, %v6336
        %v6811 = vmul.f32 %v6747, %v6338
        %v6812 = vmul.f32 %v6748, %v6340
        %v6813 = vmul.f32 %v6749, %v6342
        %v6814 = vmul.f32 %v6750, %v6344
        %v6815 = vmul.f32 %v6751, %v6346
        %v6816 = vmul.f32 %v6752, %v6348
        %v6817 = vmul.f32 %v6753, %v6350
        %v6818 = vmul.f32 %v6754, %v6352
        %v6819 = vmul.f32 %v6755, %v6354
        %v6820 = vmul.f32 %v6756, %v6356
        %v6821 = vmul.f32 %v6757, %v6358
        %v6822 = vmul.f32 %v6758, %v6360
        %v6823 = vmul.f32 %v6759, %v6362
        %v6824 = vmul.f32 %v6760, %v6364
        %v6825 = vmul.f32 %v6761, %v6366
        %v6826 = vmul.f32 %v6762, %v6368
        %v6827 = vmul.f32 %v6763, %v6370
        %v6828 = vmul.f32 %v6764, %v6372
        %v6829 = vmul.f32 %v6765, %v6374
        %v6830 = vmul.f32 %v6766, %v6376
        %v6831 = vmul.f32 %v6767, %v6378
        %v6832 = vmul.f32 %v6768, %v6380
        %v6833 = vmul.f32 %v6769, %v6382
        %v6834 = vmul.f32 %v6770, %v6384
        %v6835 = vmul.f32 %v6771, %v6386
        %v6836 = vmul.f32 %v6772, %v6388
        %v6837 = vadd.f32 %v6773, 0.2548296
        %v6838 = vadd.f32 %v6774, 0.2548296
        %v6839 = vadd.f32 %v6775, 0.2548296
        %v6840 = vadd.f32 %v6776, 0.2548296
        %v6841 = vadd.f32 %v6777, 0.2548296
        %v6842 = vadd.f32 %v6778, 0.2548296
        %v6843 = vadd.f32 %v6779, 0.2548296
        %v6844 = vadd.f32 %v6780, 0.2548296
        %v6845 = vadd.f32 %v6781, 0.2548296
        %v6846 = vadd.f32 %v6782, 0.2548296
        %v6847 = vadd.f32 %v6783, 0.2548296
        %v6848 = vadd.f32 %v6784, 0.2548296
        %v6849 = vadd.f32 %v6785, 0.2548296
        %v6850 = vadd.f32 %v6786, 0.2548296
        %v6851 = vadd.f32 %v6787, 0.2548296
        %v6852 = vadd.f32 %v6788, 0.2548296
        %v6853 = vadd.f32 %v6789, 0.2548296
        %v6854 = vadd.f32 %v6790, 0.2548296
        %v6855 = vadd.f32 %v6791, 0.2548296
        %v6856 = vadd.f32 %v6792, 0.2548296
        %v6857 = vadd.f32 %v6793, 0.2548296
        %v6858 = vadd.f32 %v6794, 0.2548296
        %v6859 = vadd.f32 %v6795, 0.2548296
        %v6860 = vadd.f32 %v6796, 0.2548296
        %v6861 = vadd.f32 %v6797, 0.2548296
        %v6862 = vadd.f32 %v6798, 0.2548296
        %v6863 = vadd.f32 %v6799, 0.2548296
        %v6864 = vadd.f32 %v6800, 0.2548296
        %v6865 = vadd.f32 %v6801, 0.2548296
        %v6866 = vadd.f32 %v6802, 0.2548296
        %v6867 = vadd.f32 %v6803, 0.2548296
        %v6868 = vadd.f32 %v6804, 0.2548296
        %v6869 = vadd.f32 %v6805, 0.2548296
        %v6870 = vadd.f32 %v6806, 0.2548296
        %v6871 = vadd.f32 %v6807, 0.2548296
        %v6872 = vadd.f32 %v6808, 0.2548296
        %v6873 = vadd.f32 %v6809, 0.2548296
        %v6874 = vadd.f32 %v6810, 0.2548296
        %v6875 = vadd.f32 %v6811, 0.2548296
        %v6876 = vadd.f32 %v6812, 0.2548296
        %v6877 = vadd.f32 %v6813, 0.2548296
        %v6878 = vadd.f32 %v6814, 0.2548296
        %v6879 = vadd.f32 %v6815, 0.2548296
        %v6880 = vadd.f32 %v6816, 0.2548296
        %v6881 = vadd.f32 %v6817, 0.2548296
        %v6882 = vadd.f32 %v6818, 0.2548296
        %v6883 = vadd.f32 %v6819, 0.2548296
        %v6884 = vadd.f32 %v6820, 0.2548296
        %v6885 = vadd.f32 %v6821, 0.2548296
        %v6886 = vadd.f32 %v6822, 0.2548296
        %v6887 = vadd.f32 %v6823, 0.2548296
        %v6888 = vadd.f32 %v6824, 0.2548296
        %v6889 = vadd.f32 %v6825, 0.2548296
        %v6890 = vadd.f32 %v6826, 0.2548296
        %v6891 = vadd.f32 %v6827, 0.2548296
        %v6892 = vadd.f32 %v6828, 0.2548296
        %v6893 = vadd.f32 %v6829, 0.2548296
        %v6894 = vadd.f32 %v6830, 0.2548296
        %v6895 = vadd.f32 %v6831, 0.2548296
        %v6896 = vadd.f32 %v6832, 0.2548296
        %v6897 = vadd.f32 %v6833, 0.2548296
        %v6898 = vadd.f32 %v6834, 0.2548296
        %v6899 = vadd.f32 %v6835, 0.2548296
        %v6900 = vadd.f32 %v6836, 0.2548296
        %v6901 = vmul.f32 %v6837, %v6262
        %v6902 = vmul.f32 %v6838, %v6264
        %v6903 = vmul.f32 %v6839, %v6266
        %v6904 = vmul.f32 %v6840, %v6268
        %v6905 = vmul.f32 %v6841, %v6270
        %v6906 = vmul.f32 %v6842, %v6272
        %v6907 = vmul.f32 %v6843, %v6274
        %v6908 = vmul.f32 %v6844, %v6276
        %v6909 = vmul.f32 %v6845, %v6278
        %v6910 = vmul.f32 %v6846, %v6280
        %v6911 = vmul.f32 %v6847, %v6282
        %v6912 = vmul.f32 %v6848, %v6284
        %v6913 = vmul.f32 %v6849, %v6286
        %v6914 = vmul.f32 %v6850, %v6288
        %v6915 = vmul.f32 %v6851, %v6290
        %v6916 = vmul.f32 %v6852, %v6292
        %v6917 = vmul.f32 %v6853, %v6294
        %v6918 = vmul.f32 %v6854, %v6296
        %v6919 = vmul.f32 %v6855, %v6298
        %v6920 = vmul.f32 %v6856, %v6300
        %v6921 = vmul.f32 %v6857, %v6302
        %v6922 = vmul.f32 %v6858, %v6304
        %v6923 = vmul.f32 %v6859, %v6306
        %v6924 = vmul.f32 %v6860, %v6308
        %v6925 = vmul.f32 %v6861, %v6310
        %v6926 = vmul.f32 %v6862, %v6312
        %v6927 = vmul.f32 %v6863, %v6314
        %v6928 = vmul.f32 %v6864, %v6316
        %v6929 = vmul.f32 %v6865, %v6318
        %v6930 = vmul.f32 %v6866, %v6320
        %v6931 = vmul.f32 %v6867, %v6322
        %v6932 = vmul.f32 %v6868, %v6324
        %v6933 = vmul.f32 %v6869, %v6326
        %v6934 = vmul.f32 %v6870, %v6328
        %v6935 = vmul.f32 %v6871, %v6330
        %v6936 = vmul.f32 %v6872, %v6332
        %v6937 = vmul.f32 %v6873, %v6334
        %v6938 = vmul.f32 %v6874, %v6336
        %v6939 = vmul.f32 %v6875, %v6338
        %v6940 = vmul.f32 %v6876, %v6340
        %v6941 = vmul.f32 %v6877, %v6342
        %v6942 = vmul.f32 %v6878, %v6344
        %v6943 = vmul.f32 %v6879, %v6346
        %v6944 = vmul.f32 %v6880, %v6348
        %v6945 = vmul.f32 %v6881, %v6350
        %v6946 = vmul.f32 %v6882, %v6352
        %v6947 = vmul.f32 %v6883, %v6354
        %v6948 = vmul.f32 %v6884, %v6356
        %v6949 = vmul.f32 %v6885, %v6358
        %v6950 = vmul.f32 %v6886, %v6360
        %v6951 = vmul.f32 %v6887, %v6362
        %v6952 = vmul.f32 %v6888, %v6364
        %v6953 = vmul.f32 %v6889, %v6366
        %v6954 = vmul.f32 %v6890, %v6368
        %v6955 = vmul.f32 %v6891, %v6370
        %v6956 = vmul.f32 %v6892, %v6372
        %v6957 = vmul.f32 %v6893, %v6374
        %v6958 = vmul.f32 %v6894, %v6376
        %v6959 = vmul.f32 %v6895, %v6378
        %v6960 = vmul.f32 %v6896, %v6380
        %v6961 = vmul.f32 %v6897, %v6382
        %v6962 = vmul.f32 %v6898, %v6384
        %v6963 = vmul.f32 %v6899, %v6386
        %v6964 = vmul.f32 %v6900, %v6388
        %v6965 = vmul.f32 %v6069, %v6069
        %v6966 = vmul.f32 %v6070, %v6070
        %v6967 = vmul.f32 %v6071, %v6071
        %v6968 = vmul.f32 %v6072, %v6072
        %v6969 = vmul.f32 %v6073, %v6073
        %v6970 = vmul.f32 %v6074, %v6074
        %v6971 = vmul.f32 %v6075, %v6075
        %v6972 = vmul.f32 %v6076, %v6076
        %v6973 = vmul.f32 %v6077, %v6077
        %v6974 = vmul.f32 %v6078, %v6078
        %v6975 = vmul.f32 %v6079, %v6079
        %v6976 = vmul.f32 %v6080, %v6080
        %v6977 = vmul.f32 %v6081, %v6081
        %v6978 = vmul.f32 %v6082, %v6082
        %v6979 = vmul.f32 %v6083, %v6083
        %v6980 = vmul.f32 %v6084, %v6084
        %v6981 = vmul.f32 %v6085, %v6085
        %v6982 = vmul.f32 %v6086, %v6086
        %v6983 = vmul.f32 %v6087, %v6087
        %v6984 = vmul.f32 %v6088, %v6088
        %v6985 = vmul.f32 %v6089, %v6089
        %v6986 = vmul.f32 %v6090, %v6090
        %v6987 = vmul.f32 %v6091, %v6091
        %v6988 = vmul.f32 %v6092, %v6092
        %v6989 = vmul.f32 %v6093, %v6093
        %v6990 = vmul.f32 %v6094, %v6094
        %v6991 = vmul.f32 %v6095, %v6095
        %v6992 = vmul.f32 %v6096, %v6096
        %v6993 = vmul.f32 %v6097, %v6097
        %v6994 = vmul.f32 %v6098, %v6098
        %v6995 = vmul.f32 %v6099, %v6099
        %v6996 = vmul.f32 %v6100, %v6100
        %v6997 = vmul.f32 %v6101, %v6101
        %v6998 = vmul.f32 %v6102, %v6102
        %v6999 = vmul.f32 %v6103, %v6103
        %v7000 = vmul.f32 %v6104, %v6104
        %v7001 = vmul.f32 %v6105, %v6105
        %v7002 = vmul.f32 %v6106, %v6106
        %v7003 = vmul.f32 %v6107, %v6107
        %v7004 = vmul.f32 %v6108, %v6108
        %v7005 = vmul.f32 %v6109, %v6109
        %v7006 = vmul.f32 %v6110, %v6110
        %v7007 = vmul.f32 %v6111, %v6111
        %v7008 = vmul.f32 %v6112, %v6112
        %v7009 = vmul.f32 %v6113, %v6113
        %v7010 = vmul.f32 %v6114, %v6114
        %v7011 = vmul.f32 %v6115, %v6115
        %v7012 = vmul.f32 %v6116, %v6116
        %v7013 = vmul.f32 %v6117, %v6117
        %v7014 = vmul.f32 %v6118, %v6118
        %v7015 = vmul.f32 %v6119, %v6119
        %v7016 = vmul.f32 %v6120, %v6120
        %v7017 = vmul.f32 %v6121, %v6121
        %v7018 = vmul.f32 %v6122, %v6122
        %v7019 = vmul.f32 %v6123, %v6123
        %v7020 = vmul.f32 %v6124, %v6124
        %v7021 = vmul.f32 %v6125, %v6125
        %v7022 = vmul.f32 %v6126, %v6126
        %v7023 = vmul.f32 %v6127, %v6127
        %v7024 = vmul.f32 %v6128, %v6128
        %v7025 = vmul.f32 %v6129, %v6129
        %v7026 = vmul.f32 %v6130, %v6130
        %v7027 = vmul.f32 %v6131, %v6131
        %v7028 = vmul.f32 %v6132, %v6132
        %v7029 = vsub.f32 0.0, %v6965
        %v7030 = vsub.f32 0.0, %v6966
        %v7031 = vsub.f32 0.0, %v6967
        %v7032 = vsub.f32 0.0, %v6968
        %v7033 = vsub.f32 0.0, %v6969
        %v7034 = vsub.f32 0.0, %v6970
        %v7035 = vsub.f32 0.0, %v6971
        %v7036 = vsub.f32 0.0, %v6972
        %v7037 = vsub.f32 0.0, %v6973
        %v7038 = vsub.f32 0.0, %v6974
        %v7039 = vsub.f32 0.0, %v6975
        %v7040 = vsub.f32 0.0, %v6976
        %v7041 = vsub.f32 0.0, %v6977
        %v7042 = vsub.f32 0.0, %v6978
        %v7043 = vsub.f32 0.0, %v6979
        %v7044 = vsub.f32 0.0, %v6980
        %v7045 = vsub.f32 0.0, %v6981
        %v7046 = vsub.f32 0.0, %v6982
        %v7047 = vsub.f32 0.0, %v6983
        %v7048 = vsub.f32 0.0, %v6984
        %v7049 = vsub.f32 0.0, %v6985
        %v7050 = vsub.f32 0.0, %v6986
        %v7051 = vsub.f32 0.0, %v6987
        %v7052 = vsub.f32 0.0, %v6988
        %v7053 = vsub.f32 0.0, %v6989
        %v7054 = vsub.f32 0.0, %v6990
        %v7055 = vsub.f32 0.0, %v6991
        %v7056 = vsub.f32 0.0, %v6992
        %v7057 = vsub.f32 0.0, %v6993
        %v7058 = vsub.f32 0.0, %v6994
        %v7059 = vsub.f32 0.0, %v6995
        %v7060 = vsub.f32 0.0, %v6996
        %v7061 = vsub.f32 0.0, %v6997
        %v7062 = vsub.f32 0.0, %v6998
        %v7063 = vsub.f32 0.0, %v6999
        %v7064 = vsub.f32 0.0, %v7000
        %v7065 = vsub.f32 0.0, %v7001
        %v7066 = vsub.f32 0.0, %v7002
        %v7067 = vsub.f32 0.0, %v7003
        %v7068 = vsub.f32 0.0, %v7004
        %v7069 = vsub.f32 0.0, %v7005
        %v7070 = vsub.f32 0.0, %v7006
        %v7071 = vsub.f32 0.0, %v7007
        %v7072 = vsub.f32 0.0, %v7008
        %v7073 = vsub.f32 0.0, %v7009
        %v7074 = vsub.f32 0.0, %v7010
        %v7075 = vsub.f32 0.0, %v7011
        %v7076 = vsub.f32 0.0, %v7012
        %v7077 = vsub.f32 0.0, %v7013
        %v7078 = vsub.f32 0.0, %v7014
        %v7079 = vsub.f32 0.0, %v7015
        %v7080 = vsub.f32 0.0, %v7016
        %v7081 = vsub.f32 0.0, %v7017
        %v7082 = vsub.f32 0.0, %v7018
        %v7083 = vsub.f32 0.0, %v7019
        %v7084 = vsub.f32 0.0, %v7020
        %v7085 = vsub.f32 0.0, %v7021
        %v7086 = vsub.f32 0.0, %v7022
        %v7087 = vsub.f32 0.0, %v7023
        %v7088 = vsub.f32 0.0, %v7024
        %v7089 = vsub.f32 0.0, %v7025
        %v7090 = vsub.f32 0.0, %v7026
        %v7091 = vsub.f32 0.0, %v7027
        %v7092 = vsub.f32 0.0, %v7028
        %v7093 = vmul.f32 %v7029, 1.442695
        %v7094 = vpow.pop %v7093
        %v7095 = vmul.f32 %v7030, 1.442695
        %v7096 = vpow.pop %v7095
        %v7097 = vmul.f32 %v7031, 1.442695
        %v7098 = vpow.pop %v7097
        %v7099 = vmul.f32 %v7032, 1.442695
        %v7100 = vpow.pop %v7099
        %v7101 = vmul.f32 %v7033, 1.442695
        %v7102 = vpow.pop %v7101
        %v7103 = vmul.f32 %v7034, 1.442695
        %v7104 = vpow.pop %v7103
        %v7105 = vmul.f32 %v7035, 1.442695
        %v7106 = vpow.pop %v7105
        %v7107 = vmul.f32 %v7036, 1.442695
        %v7108 = vpow.pop %v7107
        %v7109 = vmul.f32 %v7037, 1.442695
        %v7110 = vpow.pop %v7109
        %v7111 = vmul.f32 %v7038, 1.442695
        %v7112 = vpow.pop %v7111
        %v7113 = vmul.f32 %v7039, 1.442695
        %v7114 = vpow.pop %v7113
        %v7115 = vmul.f32 %v7040, 1.442695
        %v7116 = vpow.pop %v7115
        %v7117 = vmul.f32 %v7041, 1.442695
        %v7118 = vpow.pop %v7117
        %v7119 = vmul.f32 %v7042, 1.442695
        %v7120 = vpow.pop %v7119
        %v7121 = vmul.f32 %v7043, 1.442695
        %v7122 = vpow.pop %v7121
        %v7123 = vmul.f32 %v7044, 1.442695
        %v7124 = vpow.pop %v7123
        %v7125 = vmul.f32 %v7045, 1.442695
        %v7126 = vpow.pop %v7125
        %v7127 = vmul.f32 %v7046, 1.442695
        %v7128 = vpow.pop %v7127
        %v7129 = vmul.f32 %v7047, 1.442695
        %v7130 = vpow.pop %v7129
        %v7131 = vmul.f32 %v7048, 1.442695
        %v7132 = vpow.pop %v7131
        %v7133 = vmul.f32 %v7049, 1.442695
        %v7134 = vpow.pop %v7133
        %v7135 = vmul.f32 %v7050, 1.442695
        %v7136 = vpow.pop %v7135
        %v7137 = vmul.f32 %v7051, 1.442695
        %v7138 = vpow.pop %v7137
        %v7139 = vmul.f32 %v7052, 1.442695
        %v7140 = vpow.pop %v7139
        %v7141 = vmul.f32 %v7053, 1.442695
        %v7142 = vpow.pop %v7141
        %v7143 = vmul.f32 %v7054, 1.442695
        %v7144 = vpow.pop %v7143
        %v7145 = vmul.f32 %v7055, 1.442695
        %v7146 = vpow.pop %v7145
        %v7147 = vmul.f32 %v7056, 1.442695
        %v7148 = vpow.pop %v7147
        %v7149 = vmul.f32 %v7057, 1.442695
        %v7150 = vpow.pop %v7149
        %v7151 = vmul.f32 %v7058, 1.442695
        %v7152 = vpow.pop %v7151
        %v7153 = vmul.f32 %v7059, 1.442695
        %v7154 = vpow.pop %v7153
        %v7155 = vmul.f32 %v7060, 1.442695
        %v7156 = vpow.pop %v7155
        %v7157 = vmul.f32 %v7061, 1.442695
        %v7158 = vpow.pop %v7157
        %v7159 = vmul.f32 %v7062, 1.442695
        %v7160 = vpow.pop %v7159
        %v7161 = vmul.f32 %v7063, 1.442695
        %v7162 = vpow.pop %v7161
        %v7163 = vmul.f32 %v7064, 1.442695
        %v7164 = vpow.pop %v7163
        %v7165 = vmul.f32 %v7065, 1.442695
        %v7166 = vpow.pop %v7165
        %v7167 = vmul.f32 %v7066, 1.442695
        %v7168 = vpow.pop %v7167
        %v7169 = vmul.f32 %v7067, 1.442695
        %v7170 = vpow.pop %v7169
        %v7171 = vmul.f32 %v7068, 1.442695
        %v7172 = vpow.pop %v7171
        %v7173 = vmul.f32 %v7069, 1.442695
        %v7174 = vpow.pop %v7173
        %v7175 = vmul.f32 %v7070, 1.442695
        %v7176 = vpow.pop %v7175
        %v7177 = vmul.f32 %v7071, 1.442695
        %v7178 = vpow.pop %v7177
        %v7179 = vmul.f32 %v7072, 1.442695
        %v7180 = vpow.pop %v7179
        %v7181 = vmul.f32 %v7073, 1.442695
        %v7182 = vpow.pop %v7181
        %v7183 = vmul.f32 %v7074, 1.442695
        %v7184 = vpow.pop %v7183
        %v7185 = vmul.f32 %v7075, 1.442695
        %v7186 = vpow.pop %v7185
        %v7187 = vmul.f32 %v7076, 1.442695
        %v7188 = vpow.pop %v7187
        %v7189 = vmul.f32 %v7077, 1.442695
        %v7190 = vpow.pop %v7189
        %v7191 = vmul.f32 %v7078, 1.442695
        %v7192 = vpow.pop %v7191
        %v7193 = vmul.f32 %v7079, 1.442695
        %v7194 = vpow.pop %v7193
        %v7195 = vmul.f32 %v7080, 1.442695
        %v7196 = vpow.pop %v7195
        %v7197 = vmul.f32 %v7081, 1.442695
        %v7198 = vpow.pop %v7197
        %v7199 = vmul.f32 %v7082, 1.442695
        %v7200 = vpow.pop %v7199
        %v7201 = vmul.f32 %v7083, 1.442695
        %v7202 = vpow.pop %v7201
        %v7203 = vmul.f32 %v7084, 1.442695
        %v7204 = vpow.pop %v7203
        %v7205 = vmul.f32 %v7085, 1.442695
        %v7206 = vpow.pop %v7205
        %v7207 = vmul.f32 %v7086, 1.442695
        %v7208 = vpow.pop %v7207
        %v7209 = vmul.f32 %v7087, 1.442695
        %v7210 = vpow.pop %v7209
        %v7211 = vmul.f32 %v7088, 1.442695
        %v7212 = vpow.pop %v7211
        %v7213 = vmul.f32 %v7089, 1.442695
        %v7214 = vpow.pop %v7213
        %v7215 = vmul.f32 %v7090, 1.442695
        %v7216 = vpow.pop %v7215
        %v7217 = vmul.f32 %v7091, 1.442695
        %v7218 = vpow.pop %v7217
        %v7219 = vmul.f32 %v7092, 1.442695
        %v7220 = vpow.pop %v7219
        %v7221 = vmul.f32 %v6901, %v7094
        %v7222 = vmul.f32 %v6902, %v7096
        %v7223 = vmul.f32 %v6903, %v7098
        %v7224 = vmul.f32 %v6904, %v7100
        %v7225 = vmul.f32 %v6905, %v7102
        %v7226 = vmul.f32 %v6906, %v7104
        %v7227 = vmul.f32 %v6907, %v7106
        %v7228 = vmul.f32 %v6908, %v7108
        %v7229 = vmul.f32 %v6909, %v7110
        %v7230 = vmul.f32 %v6910, %v7112
        %v7231 = vmul.f32 %v6911, %v7114
        %v7232 = vmul.f32 %v6912, %v7116
        %v7233 = vmul.f32 %v6913, %v7118
        %v7234 = vmul.f32 %v6914, %v7120
        %v7235 = vmul.f32 %v6915, %v7122
        %v7236 = vmul.f32 %v6916, %v7124
        %v7237 = vmul.f32 %v6917, %v7126
        %v7238 = vmul.f32 %v6918, %v7128
        %v7239 = vmul.f32 %v6919, %v7130
        %v7240 = vmul.f32 %v6920, %v7132
        %v7241 = vmul.f32 %v6921, %v7134
        %v7242 = vmul.f32 %v6922, %v7136
        %v7243 = vmul.f32 %v6923, %v7138
        %v7244 = vmul.f32 %v6924, %v7140
        %v7245 = vmul.f32 %v6925, %v7142
        %v7246 = vmul.f32 %v6926, %v7144
        %v7247 = vmul.f32 %v6927, %v7146
        %v7248 = vmul.f32 %v6928, %v7148
        %v7249 = vmul.f32 %v6929, %v7150
        %v7250 = vmul.f32 %v6930, %v7152
        %v7251 = vmul.f32 %v6931, %v7154
        %v7252 = vmul.f32 %v6932, %v7156
        %v7253 = vmul.f32 %v6933, %v7158
        %v7254 = vmul.f32 %v6934, %v7160
        %v7255 = vmul.f32 %v6935, %v7162
        %v7256 = vmul.f32 %v6936, %v7164
        %v7257 = vmul.f32 %v6937, %v7166
        %v7258 = vmul.f32 %v6938, %v7168
        %v7259 = vmul.f32 %v6939, %v7170
        %v7260 = vmul.f32 %v6940, %v7172
        %v7261 = vmul.f32 %v6941, %v7174
        %v7262 = vmul.f32 %v6942, %v7176
        %v7263 = vmul.f32 %v6943, %v7178
        %v7264 = vmul.f32 %v6944, %v7180
        %v7265 = vmul.f32 %v6945, %v7182
        %v7266 = vmul.f32 %v6946, %v7184
        %v7267 = vmul.f32 %v6947, %v7186
        %v7268 = vmul.f32 %v6948, %v7188
        %v7269 = vmul.f32 %v6949, %v7190
        %v7270 = vmul.f32 %v6950, %v7192
        %v7271 = vmul.f32 %v6951, %v7194
        %v7272 = vmul.f32 %v6952, %v7196
        %v7273 = vmul.f32 %v6953, %v7198
        %v7274 = vmul.f32 %v6954, %v7200
        %v7275 = vmul.f32 %v6955, %v7202
        %v7276 = vmul.f32 %v6956, %v7204
        %v7277 = vmul.f32 %v6957, %v7206
        %v7278 = vmul.f32 %v6958, %v7208
        %v7279 = vmul.f32 %v6959, %v7210
        %v7280 = vmul.f32 %v6960, %v7212
        %v7281 = vmul.f32 %v6961, %v7214
        %v7282 = vmul.f32 %v6962, %v7216
        %v7283 = vmul.f32 %v6963, %v7218
        %v7284 = vmul.f32 %v6964, %v7220
        %v7285 = vsub.f32 1.0, %v7221
        %v7286 = vsub.f32 1.0, %v7222
        %v7287 = vsub.f32 1.0, %v7223
        %v7288 = vsub.f32 1.0, %v7224
        %v7289 = vsub.f32 1.0, %v7225
        %v7290 = vsub.f32 1.0, %v7226
        %v7291 = vsub.f32 1.0, %v7227
        %v7292 = vsub.f32 1.0, %v7228
        %v7293 = vsub.f32 1.0, %v7229
        %v7294 = vsub.f32 1.0, %v7230
        %v7295 = vsub.f32 1.0, %v7231
        %v7296 = vsub.f32 1.0, %v7232
        %v7297 = vsub.f32 1.0, %v7233
        %v7298 = vsub.f32 1.0, %v7234
        %v7299 = vsub.f32 1.0, %v7235
        %v7300 = vsub.f32 1.0, %v7236
        %v7301 = vsub.f32 1.0, %v7237
        %v7302 = vsub.f32 1.0, %v7238
        %v7303 = vsub.f32 1.0, %v7239
        %v7304 = vsub.f32 1.0, %v7240
        %v7305 = vsub.f32 1.0, %v7241
        %v7306 = vsub.f32 1.0, %v7242
        %v7307 = vsub.f32 1.0, %v7243
        %v7308 = vsub.f32 1.0, %v7244
        %v7309 = vsub.f32 1.0, %v7245
        %v7310 = vsub.f32 1.0, %v7246
        %v7311 = vsub.f32 1.0, %v7247
        %v7312 = vsub.f32 1.0, %v7248
        %v7313 = vsub.f32 1.0, %v7249
        %v7314 = vsub.f32 1.0, %v7250
        %v7315 = vsub.f32 1.0, %v7251
        %v7316 = vsub.f32 1.0, %v7252
        %v7317 = vsub.f32 1.0, %v7253
        %v7318 = vsub.f32 1.0, %v7254
        %v7319 = vsub.f32 1.0, %v7255
        %v7320 = vsub.f32 1.0, %v7256
        %v7321 = vsub.f32 1.0, %v7257
        %v7322 = vsub.f32 1.0, %v7258
        %v7323 = vsub.f32 1.0, %v7259
        %v7324 = vsub.f32 1.0, %v7260
        %v7325 = vsub.f32 1.0, %v7261
        %v7326 = vsub.f32 1.0, %v7262
        %v7327 = vsub.f32 1.0, %v7263
        %v7328 = vsub.f32 1.0, %v7264
        %v7329 = vsub.f32 1.0, %v7265
        %v7330 = vsub.f32 1.0, %v7266
        %v7331 = vsub.f32 1.0, %v7267
        %v7332 = vsub.f32 1.0, %v7268
        %v7333 = vsub.f32 1.0, %v7269
        %v7334 = vsub.f32 1.0, %v7270
        %v7335 = vsub.f32 1.0, %v7271
        %v7336 = vsub.f32 1.0, %v7272
        %v7337 = vsub.f32 1.0, %v7273
        %v7338 = vsub.f32 1.0, %v7274
        %v7339 = vsub.f32 1.0, %v7275
        %v7340 = vsub.f32 1.0, %v7276
        %v7341 = vsub.f32 1.0, %v7277
        %v7342 = vsub.f32 1.0, %v7278
        %v7343 = vsub.f32 1.0, %v7279
        %v7344 = vsub.f32 1.0, %v7280
        %v7345 = vsub.f32 1.0, %v7281
        %v7346 = vsub.f32 1.0, %v7282
        %v7347 = vsub.f32 1.0, %v7283
        %v7348 = vsub.f32 1.0, %v7284
        %v7349 = vsub.f32 0.0, %v7285
        %v7350 = vsub.f32 0.0, %v7286
        %v7351 = vsub.f32 0.0, %v7287
        %v7352 = vsub.f32 0.0, %v7288
        %v7353 = vsub.f32 0.0, %v7289
        %v7354 = vsub.f32 0.0, %v7290
        %v7355 = vsub.f32 0.0, %v7291
        %v7356 = vsub.f32 0.0, %v7292
        %v7357 = vsub.f32 0.0, %v7293
        %v7358 = vsub.f32 0.0, %v7294
        %v7359 = vsub.f32 0.0, %v7295
        %v7360 = vsub.f32 0.0, %v7296
        %v7361 = vsub.f32 0.0, %v7297
        %v7362 = vsub.f32 0.0, %v7298
        %v7363 = vsub.f32 0.0, %v7299
        %v7364 = vsub.f32 0.0, %v7300
        %v7365 = vsub.f32 0.0, %v7301
        %v7366 = vsub.f32 0.0, %v7302
        %v7367 = vsub.f32 0.0, %v7303
        %v7368 = vsub.f32 0.0, %v7304
        %v7369 = vsub.f32 0.0, %v7305
        %v7370 = vsub.f32 0.0, %v7306
        %v7371 = vsub.f32 0.0, %v7307
        %v7372 = vsub.f32 0.0, %v7308
        %v7373 = vsub.f32 0.0, %v7309
        %v7374 = vsub.f32 0.0, %v7310
        %v7375 = vsub.f32 0.0, %v7311
        %v7376 = vsub.f32 0.0, %v7312
        %v7377 = vsub.f32 0.0, %v7313
        %v7378 = vsub.f32 0.0, %v7314
        %v7379 = vsub.f32 0.0, %v7315
        %v7380 = vsub.f32 0.0, %v7316
        %v7381 = vsub.f32 0.0, %v7317
        %v7382 = vsub.f32 0.0, %v7318
        %v7383 = vsub.f32 0.0, %v7319
        %v7384 = vsub.f32 0.0, %v7320
        %v7385 = vsub.f32 0.0, %v7321
        %v7386 = vsub.f32 0.0, %v7322
        %v7387 = vsub.f32 0.0, %v7323
        %v7388 = vsub.f32 0.0, %v7324
        %v7389 = vsub.f32 0.0, %v7325
        %v7390 = vsub.f32 0.0, %v7326
        %v7391 = vsub.f32 0.0, %v7327
        %v7392 = vsub.f32 0.0, %v7328
        %v7393 = vsub.f32 0.0, %v7329
        %v7394 = vsub.f32 0.0, %v7330
        %v7395 = vsub.f32 0.0, %v7331
        %v7396 = vsub.f32 0.0, %v7332
        %v7397 = vsub.f32 0.0, %v7333
        %v7398 = vsub.f32 0.0, %v7334
        %v7399 = vsub.f32 0.0, %v7335
        %v7400 = vsub.f32 0.0, %v7336
        %v7401 = vsub.f32 0.0, %v7337
        %v7402 = vsub.f32 0.0, %v7338
        %v7403 = vsub.f32 0.0, %v7339
        %v7404 = vsub.f32 0.0, %v7340
        %v7405 = vsub.f32 0.0, %v7341
        %v7406 = vsub.f32 0.0, %v7342
        %v7407 = vsub.f32 0.0, %v7343
        %v7408 = vsub.f32 0.0, %v7344
        %v7409 = vsub.f32 0.0, %v7345
        %v7410 = vsub.f32 0.0, %v7346
        %v7411 = vsub.f32 0.0, %v7347
        %v7412 = vsub.f32 0.0, %v7348
        %v7413 = vsel %vm5941, %v7349, %v7285
        %v7414 = vsel %vm5942, %v7350, %v7286
        %v7415 = vsel %vm5943, %v7351, %v7287
        %v7416 = vsel %vm5944, %v7352, %v7288
        %v7417 = vsel %vm5945, %v7353, %v7289
        %v7418 = vsel %vm5946, %v7354, %v7290
        %v7419 = vsel %vm5947, %v7355, %v7291
        %v7420 = vsel %vm5948, %v7356, %v7292
        %v7421 = vsel %vm5949, %v7357, %v7293
        %v7422 = vsel %vm5950, %v7358, %v7294
        %v7423 = vsel %vm5951, %v7359, %v7295
        %v7424 = vsel %vm5952, %v7360, %v7296
        %v7425 = vsel %vm5953, %v7361, %v7297
        %v7426 = vsel %vm5954, %v7362, %v7298
        %v7427 = vsel %vm5955, %v7363, %v7299
        %v7428 = vsel %vm5956, %v7364, %v7300
        %v7429 = vsel %vm5957, %v7365, %v7301
        %v7430 = vsel %vm5958, %v7366, %v7302
        %v7431 = vsel %vm5959, %v7367, %v7303
        %v7432 = vsel %vm5960, %v7368, %v7304
        %v7433 = vsel %vm5961, %v7369, %v7305
        %v7434 = vsel %vm5962, %v7370, %v7306
        %v7435 = vsel %vm5963, %v7371, %v7307
        %v7436 = vsel %vm5964, %v7372, %v7308
        %v7437 = vsel %vm5965, %v7373, %v7309
        %v7438 = vsel %vm5966, %v7374, %v7310
        %v7439 = vsel %vm5967, %v7375, %v7311
        %v7440 = vsel %vm5968, %v7376, %v7312
        %v7441 = vsel %vm5969, %v7377, %v7313
        %v7442 = vsel %vm5970, %v7378, %v7314
        %v7443 = vsel %vm5971, %v7379, %v7315
        %v7444 = vsel %vm5972, %v7380, %v7316
        %v7445 = vsel %vm5973, %v7381, %v7317
        %v7446 = vsel %vm5974, %v7382, %v7318
        %v7447 = vsel %vm5975, %v7383, %v7319
        %v7448 = vsel %vm5976, %v7384, %v7320
        %v7449 = vsel %vm5977, %v7385, %v7321
        %v7450 = vsel %vm5978, %v7386, %v7322
        %v7451 = vsel %vm5979, %v7387, %v7323
        %v7452 = vsel %vm5980, %v7388, %v7324
        %v7453 = vsel %vm5981, %v7389, %v7325
        %v7454 = vsel %vm5982, %v7390, %v7326
        %v7455 = vsel %vm5983, %v7391, %v7327
        %v7456 = vsel %vm5984, %v7392, %v7328
        %v7457 = vsel %vm5985, %v7393, %v7329
        %v7458 = vsel %vm5986, %v7394, %v7330
        %v7459 = vsel %vm5987, %v7395, %v7331
        %v7460 = vsel %vm5988, %v7396, %v7332
        %v7461 = vsel %vm5989, %v7397, %v7333
        %v7462 = vsel %vm5990, %v7398, %v7334
        %v7463 = vsel %vm5991, %v7399, %v7335
        %v7464 = vsel %vm5992, %v7400, %v7336
        %v7465 = vsel %vm5993, %v7401, %v7337
        %v7466 = vsel %vm5994, %v7402, %v7338
        %v7467 = vsel %vm5995, %v7403, %v7339
        %v7468 = vsel %vm5996, %v7404, %v7340
        %v7469 = vsel %vm5997, %v7405, %v7341
        %v7470 = vsel %vm5998, %v7406, %v7342
        %v7471 = vsel %vm5999, %v7407, %v7343
        %v7472 = vsel %vm6000, %v7408, %v7344
        %v7473 = vsel %vm6001, %v7409, %v7345
        %v7474 = vsel %vm6002, %v7410, %v7346
        %v7475 = vsel %vm6003, %v7411, %v7347
        %v7476 = vsel %vm6004, %v7412, %v7348
        %v7477 = vadd.f32 %v7413, 1.0
        %v7478 = vadd.f32 %v7414, 1.0
        %v7479 = vadd.f32 %v7415, 1.0
        %v7480 = vadd.f32 %v7416, 1.0
        %v7481 = vadd.f32 %v7417, 1.0
        %v7482 = vadd.f32 %v7418, 1.0
        %v7483 = vadd.f32 %v7419, 1.0
        %v7484 = vadd.f32 %v7420, 1.0
        %v7485 = vadd.f32 %v7421, 1.0
        %v7486 = vadd.f32 %v7422, 1.0
        %v7487 = vadd.f32 %v7423, 1.0
        %v7488 = vadd.f32 %v7424, 1.0
        %v7489 = vadd.f32 %v7425, 1.0
        %v7490 = vadd.f32 %v7426, 1.0
        %v7491 = vadd.f32 %v7427, 1.0
        %v7492 = vadd.f32 %v7428, 1.0
        %v7493 = vadd.f32 %v7429, 1.0
        %v7494 = vadd.f32 %v7430, 1.0
        %v7495 = vadd.f32 %v7431, 1.0
        %v7496 = vadd.f32 %v7432, 1.0
        %v7497 = vadd.f32 %v7433, 1.0
        %v7498 = vadd.f32 %v7434, 1.0
        %v7499 = vadd.f32 %v7435, 1.0
        %v7500 = vadd.f32 %v7436, 1.0
        %v7501 = vadd.f32 %v7437, 1.0
        %v7502 = vadd.f32 %v7438, 1.0
        %v7503 = vadd.f32 %v7439, 1.0
        %v7504 = vadd.f32 %v7440, 1.0
        %v7505 = vadd.f32 %v7441, 1.0
        %v7506 = vadd.f32 %v7442, 1.0
        %v7507 = vadd.f32 %v7443, 1.0
        %v7508 = vadd.f32 %v7444, 1.0
        %v7509 = vadd.f32 %v7445, 1.0
        %v7510 = vadd.f32 %v7446, 1.0
        %v7511 = vadd.f32 %v7447, 1.0
        %v7512 = vadd.f32 %v7448, 1.0
        %v7513 = vadd.f32 %v7449, 1.0
        %v7514 = vadd.f32 %v7450, 1.0
        %v7515 = vadd.f32 %v7451, 1.0
        %v7516 = vadd.f32 %v7452, 1.0
        %v7517 = vadd.f32 %v7453, 1.0
        %v7518 = vadd.f32 %v7454, 1.0
        %v7519 = vadd.f32 %v7455, 1.0
        %v7520 = vadd.f32 %v7456, 1.0
        %v7521 = vadd.f32 %v7457, 1.0
        %v7522 = vadd.f32 %v7458, 1.0
        %v7523 = vadd.f32 %v7459, 1.0
        %v7524 = vadd.f32 %v7460, 1.0
        %v7525 = vadd.f32 %v7461, 1.0
        %v7526 = vadd.f32 %v7462, 1.0
        %v7527 = vadd.f32 %v7463, 1.0
        %v7528 = vadd.f32 %v7464, 1.0
        %v7529 = vadd.f32 %v7465, 1.0
        %v7530 = vadd.f32 %v7466, 1.0
        %v7531 = vadd.f32 %v7467, 1.0
        %v7532 = vadd.f32 %v7468, 1.0
        %v7533 = vadd.f32 %v7469, 1.0
        %v7534 = vadd.f32 %v7470, 1.0
        %v7535 = vadd.f32 %v7471, 1.0
        %v7536 = vadd.f32 %v7472, 1.0
        %v7537 = vadd.f32 %v7473, 1.0
        %v7538 = vadd.f32 %v7474, 1.0
        %v7539 = vadd.f32 %v7475, 1.0
        %v7540 = vadd.f32 %v7476, 1.0
        %v7541 = vmul.f32 %v5813, %v7477
        %v7542 = vmul.f32 %v5814, %v7478
        %v7543 = vmul.f32 %v5815, %v7479
        %v7544 = vmul.f32 %v5816, %v7480
        %v7545 = vmul.f32 %v5817, %v7481
        %v7546 = vmul.f32 %v5818, %v7482
        %v7547 = vmul.f32 %v5819, %v7483
        %v7548 = vmul.f32 %v5820, %v7484
        %v7549 = vmul.f32 %v5821, %v7485
        %v7550 = vmul.f32 %v5822, %v7486
        %v7551 = vmul.f32 %v5823, %v7487
        %v7552 = vmul.f32 %v5824, %v7488
        %v7553 = vmul.f32 %v5825, %v7489
        %v7554 = vmul.f32 %v5826, %v7490
        %v7555 = vmul.f32 %v5827, %v7491
        %v7556 = vmul.f32 %v5828, %v7492
        %v7557 = vmul.f32 %v5829, %v7493
        %v7558 = vmul.f32 %v5830, %v7494
        %v7559 = vmul.f32 %v5831, %v7495
        %v7560 = vmul.f32 %v5832, %v7496
        %v7561 = vmul.f32 %v5833, %v7497
        %v7562 = vmul.f32 %v5834, %v7498
        %v7563 = vmul.f32 %v5835, %v7499
        %v7564 = vmul.f32 %v5836, %v7500
        %v7565 = vmul.f32 %v5837, %v7501
        %v7566 = vmul.f32 %v5838, %v7502
        %v7567 = vmul.f32 %v5839, %v7503
        %v7568 = vmul.f32 %v5840, %v7504
        %v7569 = vmul.f32 %v5841, %v7505
        %v7570 = vmul.f32 %v5842, %v7506
        %v7571 = vmul.f32 %v5843, %v7507
        %v7572 = vmul.f32 %v5844, %v7508
        %v7573 = vmul.f32 %v5845, %v7509
        %v7574 = vmul.f32 %v5846, %v7510
        %v7575 = vmul.f32 %v5847, %v7511
        %v7576 = vmul.f32 %v5848, %v7512
        %v7577 = vmul.f32 %v5849, %v7513
        %v7578 = vmul.f32 %v5850, %v7514
        %v7579 = vmul.f32 %v5851, %v7515
        %v7580 = vmul.f32 %v5852, %v7516
        %v7581 = vmul.f32 %v5853, %v7517
        %v7582 = vmul.f32 %v5854, %v7518
        %v7583 = vmul.f32 %v5855, %v7519
        %v7584 = vmul.f32 %v5856, %v7520
        %v7585 = vmul.f32 %v5857, %v7521
        %v7586 = vmul.f32 %v5858, %v7522
        %v7587 = vmul.f32 %v5859, %v7523
        %v7588 = vmul.f32 %v5860, %v7524
        %v7589 = vmul.f32 %v5861, %v7525
        %v7590 = vmul.f32 %v5862, %v7526
        %v7591 = vmul.f32 %v5863, %v7527
        %v7592 = vmul.f32 %v5864, %v7528
        %v7593 = vmul.f32 %v5865, %v7529
        %v7594 = vmul.f32 %v5866, %v7530
        %v7595 = vmul.f32 %v5867, %v7531
        %v7596 = vmul.f32 %v5868, %v7532
        %v7597 = vmul.f32 %v5869, %v7533
        %v7598 = vmul.f32 %v5870, %v7534
        %v7599 = vmul.f32 %v5871, %v7535
        %v7600 = vmul.f32 %v5872, %v7536
        %v7601 = vmul.f32 %v5873, %v7537
        %v7602 = vmul.f32 %v5874, %v7538
        %v7603 = vmul.f32 %v5875, %v7539
        %v7604 = vmul.f32 %v5876, %v7540
        %v7605 = vpack.c.bf16 %v7543, %v7541
        %v7606 = vpack.c.bf16 %v7544, %v7542
        %v7607 = vpack.c.bf16 %v7547, %v7545
        %v7608 = vpack.c.bf16 %v7548, %v7546
        %v7609 = vpack.c.bf16 %v7551, %v7549
        %v7610 = vpack.c.bf16 %v7552, %v7550
        %v7611 = vpack.c.bf16 %v7555, %v7553
        %v7612 = vpack.c.bf16 %v7556, %v7554
        %v7613 = vpack.c.bf16 %v7559, %v7557
        %v7614 = vpack.c.bf16 %v7560, %v7558
        %v7615 = vpack.c.bf16 %v7563, %v7561
        %v7616 = vpack.c.bf16 %v7564, %v7562
        %v7617 = vpack.c.bf16 %v7567, %v7565
        %v7618 = vpack.c.bf16 %v7568, %v7566
        %v7619 = vpack.c.bf16 %v7571, %v7569
        %v7620 = vpack.c.bf16 %v7572, %v7570
        %v7621 = vpack.c.bf16 %v7575, %v7573
        %v7622 = vpack.c.bf16 %v7576, %v7574
        %v7623 = vpack.c.bf16 %v7579, %v7577
        %v7624 = vpack.c.bf16 %v7580, %v7578
        %v7625 = vpack.c.bf16 %v7583, %v7581
        %v7626 = vpack.c.bf16 %v7584, %v7582
        %v7627 = vpack.c.bf16 %v7587, %v7585
        %v7628 = vpack.c.bf16 %v7588, %v7586
        %v7629 = vpack.c.bf16 %v7591, %v7589
        %v7630 = vpack.c.bf16 %v7592, %v7590
        %v7631 = vpack.c.bf16 %v7595, %v7593
        %v7632 = vpack.c.bf16 %v7596, %v7594
        %v7633 = vpack.c.bf16 %v7599, %v7597
        %v7634 = vpack.c.bf16 %v7600, %v7598
        %v7635 = vpack.c.bf16 %v7603, %v7601
        %v7636 = vpack.c.bf16 %v7604, %v7602
        %v7637 = vld [vmem:[#allocation8] sm:$0xf]
        %v7638 = vld [vmem:[#allocation8 + $0x4] sm:$0xf]
        %v7639 = vld [vmem:[#allocation8 + $0x8] sm:$0xf]
        %v7640 = vld [vmem:[#allocation8 + $0xc] sm:$0xf]
        %v7641 = vld [vmem:[#allocation8 + $0x10] sm:$0xf]
        %v7642 = vld [vmem:[#allocation8 + $0x14] sm:$0xf]
        %v7643 = vld [vmem:[#allocation8 + $0x18] sm:$0xf]
        %v7644 = vld [vmem:[#allocation8 + $0x1c] sm:$0xf]
        %v7645 = vld [vmem:[#allocation8 + $0x20] sm:$0xf]
        %v7646 = vld [vmem:[#allocation8 + $0x24] sm:$0xf]
        %v7647 = vld [vmem:[#allocation8 + $0x28] sm:$0xf]
        %v7648 = vld [vmem:[#allocation8 + $0x2c] sm:$0xf]
        %v7649 = vld [vmem:[#allocation8 + $0x30] sm:$0xf]
        %v7650 = vld [vmem:[#allocation8 + $0x34] sm:$0xf]
        %v7651 = vld [vmem:[#allocation8 + $0x38] sm:$0xf]
        %v7652 = vld [vmem:[#allocation8 + $0x3c] sm:$0xf]
        %v7653 = vld [vmem:[#allocation8 + $0x40] sm:$0xf]
        %v7654 = vld [vmem:[#allocation8 + $0x44] sm:$0xf]
        %v7655 = vld [vmem:[#allocation8 + $0x48] sm:$0xf]
        %v7656 = vld [vmem:[#allocation8 + $0x4c] sm:$0xf]
        %v7657 = vld [vmem:[#allocation8 + $0x50] sm:$0xf]
        %v7658 = vld [vmem:[#allocation8 + $0x54] sm:$0xf]
        %v7659 = vld [vmem:[#allocation8 + $0x58] sm:$0xf]
        %v7660 = vld [vmem:[#allocation8 + $0x5c] sm:$0xf]
        %v7661 = vld [vmem:[#allocation8 + $0x60] sm:$0xf]
        %v7662 = vld [vmem:[#allocation8 + $0x64] sm:$0xf]
        %v7663 = vld [vmem:[#allocation8 + $0x68] sm:$0xf]
        %v7664 = vld [vmem:[#allocation8 + $0x6c] sm:$0xf]
        %v7665 = vld [vmem:[#allocation8 + $0x70] sm:$0xf]
        %v7666 = vld [vmem:[#allocation8 + $0x74] sm:$0xf]
        %v7667 = vld [vmem:[#allocation8 + $0x78] sm:$0xf]
        %v7668 = vld [vmem:[#allocation8 + $0x7c] sm:$0xf]
        %v7669 = vld [vmem:[%s8] sm:$0x1]
        %v7671 = vlaneseq
        %v7672 = vshrl.u32 %v7671, 7
        %v7673 = vsub.s32 0, %v7672
        %v7674 = vrot.slane %v7669, %v7673
        %v7708 = vunpack.c.l.b16 %v7637
        %v7709 = vunpack.c.l.b16 %v7638
        %v7710 = vunpack.c.l.b16 %v7639
        %v7711 = vunpack.c.l.b16 %v7640
        %v7712 = vunpack.c.l.b16 %v7641
        %v7713 = vunpack.c.l.b16 %v7642
        %v7714 = vunpack.c.l.b16 %v7643
        %v7715 = vunpack.c.l.b16 %v7644
        %v7716 = vunpack.c.l.b16 %v7645
        %v7717 = vunpack.c.l.b16 %v7646
        %v7718 = vunpack.c.l.b16 %v7647
        %v7719 = vunpack.c.l.b16 %v7648
        %v7720 = vunpack.c.l.b16 %v7649
        %v7721 = vunpack.c.l.b16 %v7650
        %v7722 = vunpack.c.l.b16 %v7651
        %v7723 = vunpack.c.l.b16 %v7652
        %v7724 = vunpack.c.l.b16 %v7653
        %v7725 = vunpack.c.l.b16 %v7654
        %v7726 = vunpack.c.l.b16 %v7655
        %v7727 = vunpack.c.l.b16 %v7656
        %v7728 = vunpack.c.l.b16 %v7657
        %v7729 = vunpack.c.l.b16 %v7658
        %v7730 = vunpack.c.l.b16 %v7659
        %v7731 = vunpack.c.l.b16 %v7660
        %v7732 = vunpack.c.l.b16 %v7661
        %v7733 = vunpack.c.l.b16 %v7662
        %v7734 = vunpack.c.l.b16 %v7663
        %v7735 = vunpack.c.l.b16 %v7664
        %v7736 = vunpack.c.l.b16 %v7665
        %v7737 = vunpack.c.l.b16 %v7666
        %v7738 = vunpack.c.l.b16 %v7667
        %v7739 = vunpack.c.l.b16 %v7668
        %v7740 = vpack.c.b16 %v7709, %v7708
        %v7741 = vpack.c.b16 %v7711, %v7710
        %v7742 = vpack.c.b16 %v7713, %v7712
        %v7743 = vpack.c.b16 %v7715, %v7714
        %v7744 = vpack.c.b16 %v7717, %v7716
        %v7745 = vpack.c.b16 %v7719, %v7718
        %v7746 = vpack.c.b16 %v7721, %v7720
        %v7747 = vpack.c.b16 %v7723, %v7722
        %v7748 = vpack.c.b16 %v7725, %v7724
        %v7749 = vpack.c.b16 %v7727, %v7726
        %v7750 = vpack.c.b16 %v7729, %v7728
        %v7751 = vpack.c.b16 %v7731, %v7730
        %v7752 = vpack.c.b16 %v7733, %v7732
        %v7753 = vpack.c.b16 %v7735, %v7734
        %v7754 = vpack.c.b16 %v7737, %v7736
        %v7755 = vpack.c.b16 %v7739, %v7738
        %7772 = vmatprep.subr.bf16.mxu0 0
        %7773 = vmatpush1.bf16.msra.mxu0 %v7740
        %7774 = vmatprep.subr.bf16.mxu0 0
        %7775 = vmatpush1.bf16.msra.mxu0 %v7741
        %7776 = vmatprep.subr.bf16.mxu0 0
        %7777 = vmatpush1.bf16.msra.mxu0 %v7742
        %7778 = vmatprep.subr.bf16.mxu0 0
        %7779 = vmatpush1.bf16.msra.mxu0 %v7743
        %7780 = vmatprep.subr.bf16.mxu0 0
        %7781 = vmatpush1.bf16.msra.mxu0 %v7744
        %7782 = vmatprep.subr.bf16.mxu0 0
        %7783 = vmatpush1.bf16.msra.mxu0 %v7745
        %7784 = vmatprep.subr.bf16.mxu0 0
        %7785 = vmatpush1.bf16.msra.mxu0 %v7746
        %7786 = vmatprep.subr.bf16.mxu0 0
        %7787 = vmatpush1.bf16.msra.mxu0 %v7747
        %7788 = vmatprep.subr.bf16.mxu0 0
        %7789 = vmatpush1.bf16.msra.mxu0 %v7748
        %7790 = vmatprep.subr.bf16.mxu0 0
        %7791 = vmatpush1.bf16.msra.mxu0 %v7749
        %7792 = vmatprep.subr.bf16.mxu0 0
        %7793 = vmatpush1.bf16.msra.mxu0 %v7750
        %7794 = vmatprep.subr.bf16.mxu0 0
        %7795 = vmatpush1.bf16.msra.mxu0 %v7751
        %7796 = vmatprep.subr.bf16.mxu0 0
        %7797 = vmatpush1.bf16.msra.mxu0 %v7752
        %7798 = vmatprep.subr.bf16.mxu0 0
        %7799 = vmatpush1.bf16.msra.mxu0 %v7753
        %7800 = vmatprep.subr.bf16.mxu0 0
        %7801 = vmatpush1.bf16.msra.mxu0 %v7754
        %7802 = vmatprep.subr.bf16.mxu0 0
        %7803 = vmatpush1.bf16.msra.mxu0 %v7755
        %7804 = vmatprep.mubr.bf16.mxu0 %v7606
        %7805 = vmatmul.mubr.bf16.gmra.mrb[0].mxu0 %v7605
        %v7806 = vpop.f32.mrb[0].mxu0
        %v7807 = vadd.f32 %v7674, %v7806
        %v7808 = vpop.f32.mrb[0].mxu0
        %v7809 = vpop.f32.mrb[0].mxu0
        %v7810 = vadd.f32 %v7674, %v7809
        %v7811 = vpop.f32.mrb[0].mxu0
        %7812 = vmatprep.mubr.bf16.mxu0 %v7608
        %7813 = vmatmul.mubr.bf16.gmra.mrb[0].mxu0 %v7607
        %v7814 = vpop.f32.mrb[0].mxu0
        %v7815 = vadd.f32 %v7674, %v7814
        %v7816 = vpop.f32.mrb[0].mxu0
        %v7817 = vpop.f32.mrb[0].mxu0
        %v7818 = vadd.f32 %v7674, %v7817
        %v7819 = vpop.f32.mrb[0].mxu0
        %7820 = vmatprep.mubr.bf16.mxu0 %v7610
        %7821 = vmatmul.mubr.bf16.gmra.mrb[0].mxu0 %v7609
        %v7822 = vpop.f32.mrb[0].mxu0
        %v7823 = vadd.f32 %v7674, %v7822
        %v7824 = vpop.f32.mrb[0].mxu0
        %v7825 = vpop.f32.mrb[0].mxu0
        %v7826 = vadd.f32 %v7674, %v7825
        %v7827 = vpop.f32.mrb[0].mxu0
        %7828 = vmatprep.mubr.bf16.mxu0 %v7612
        %7829 = vmatmul.mubr.bf16.gmra.mrb[0].mxu0 %v7611
        %v7830 = vpop.f32.mrb[0].mxu0
        %v7831 = vadd.f32 %v7674, %v7830
        %v7832 = vpop.f32.mrb[0].mxu0
        %v7833 = vpop.f32.mrb[0].mxu0
        %v7834 = vadd.f32 %v7674, %v7833
        %v7835 = vpop.f32.mrb[0].mxu0
        %7836 = vmatprep.mubr.bf16.mxu0 %v7614
        %7837 = vmatmul.mubr.bf16.gmra.mrb[0].mxu0 %v7613
        %v7838 = vpop.f32.mrb[0].mxu0
        %v7839 = vadd.f32 %v7674, %v7838
        %v7840 = vpop.f32.mrb[0].mxu0
        %v7841 = vpop.f32.mrb[0].mxu0
        %v7842 = vadd.f32 %v7674, %v7841
        %v7843 = vpop.f32.mrb[0].mxu0
        %7844 = vmatprep.mubr.bf16.mxu0 %v7616
        %7845 = vmatmul.mubr.bf16.gmra.mrb[0].mxu0 %v7615
        %v7846 = vpop.f32.mrb[0].mxu0
        %v7847 = vadd.f32 %v7674, %v7846
        %v7848 = vpop.f32.mrb[0].mxu0
        %v7849 = vpop.f32.mrb[0].mxu0
        %v7850 = vadd.f32 %v7674, %v7849
        %v7851 = vpop.f32.mrb[0].mxu0
        %7852 = vmatprep.mubr.bf16.mxu0 %v7618
        %7853 = vmatmul.mubr.bf16.gmra.mrb[0].mxu0 %v7617
        %v7854 = vpop.f32.mrb[0].mxu0
        %v7855 = vadd.f32 %v7674, %v7854
        %v7856 = vpop.f32.mrb[0].mxu0
        %v7857 = vpop.f32.mrb[0].mxu0
        %v7858 = vadd.f32 %v7674, %v7857
        %v7859 = vpop.f32.mrb[0].mxu0
        %7860 = vmatprep.mubr.bf16.mxu0 %v7620
        %7861 = vmatmul.mubr.bf16.gmra.mrb[0].mxu0 %v7619
        %v7862 = vpop.f32.mrb[0].mxu0
        %v7863 = vadd.f32 %v7674, %v7862
        %v7864 = vpop.f32.mrb[0].mxu0
        %v7865 = vpop.f32.mrb[0].mxu0
        %v7866 = vadd.f32 %v7674, %v7865
        %v7867 = vpop.f32.mrb[0].mxu0
        %7868 = vmatprep.mubr.bf16.mxu0 %v7622
        %7869 = vmatmul.mubr.bf16.gmra.mrb[0].mxu0 %v7621
        %v7870 = vpop.f32.mrb[0].mxu0
        %v7871 = vadd.f32 %v7674, %v7870
        %v7872 = vpop.f32.mrb[0].mxu0
        %v7873 = vpop.f32.mrb[0].mxu0
        %v7874 = vadd.f32 %v7674, %v7873
        %v7875 = vpop.f32.mrb[0].mxu0
        %7876 = vmatprep.mubr.bf16.mxu0 %v7624
        %7877 = vmatmul.mubr.bf16.gmra.mrb[0].mxu0 %v7623
        %v7878 = vpop.f32.mrb[0].mxu0
        %v7879 = vadd.f32 %v7674, %v7878
        %v7880 = vpop.f32.mrb[0].mxu0
        %v7881 = vpop.f32.mrb[0].mxu0
        %v7882 = vadd.f32 %v7674, %v7881
        %v7883 = vpop.f32.mrb[0].mxu0
        %7884 = vmatprep.mubr.bf16.mxu0 %v7626
        %7885 = vmatmul.mubr.bf16.gmra.mrb[0].mxu0 %v7625
        %v7886 = vpop.f32.mrb[0].mxu0
        %v7887 = vadd.f32 %v7674, %v7886
        %v7888 = vpop.f32.mrb[0].mxu0
        %v7889 = vpop.f32.mrb[0].mxu0
        %v7890 = vadd.f32 %v7674, %v7889
        %v7891 = vpop.f32.mrb[0].mxu0
        %7892 = vmatprep.mubr.bf16.mxu0 %v7628
        %7893 = vmatmul.mubr.bf16.gmra.mrb[0].mxu0 %v7627
        %v7894 = vpop.f32.mrb[0].mxu0
        %v7895 = vadd.f32 %v7674, %v7894
        %v7896 = vpop.f32.mrb[0].mxu0
        %v7897 = vpop.f32.mrb[0].mxu0
        %v7898 = vadd.f32 %v7674, %v7897
        %v7899 = vpop.f32.mrb[0].mxu0
        %7900 = vmatprep.mubr.bf16.mxu0 %v7630
        %7901 = vmatmul.mubr.bf16.gmra.mrb[0].mxu0 %v7629
        %v7902 = vpop.f32.mrb[0].mxu0
        %v7903 = vadd.f32 %v7674, %v7902
        %v7904 = vpop.f32.mrb[0].mxu0
        %v7905 = vpop.f32.mrb[0].mxu0
        %v7906 = vadd.f32 %v7674, %v7905
        %v7907 = vpop.f32.mrb[0].mxu0
        %7908 = vmatprep.mubr.bf16.mxu0 %v7632
        %7909 = vmatmul.mubr.bf16.gmra.mrb[0].mxu0 %v7631
        %v7910 = vpop.f32.mrb[0].mxu0
        %v7911 = vadd.f32 %v7674, %v7910
        %v7912 = vpop.f32.mrb[0].mxu0
        %v7913 = vpop.f32.mrb[0].mxu0
        %v7914 = vadd.f32 %v7674, %v7913
        %v7915 = vpop.f32.mrb[0].mxu0
        %7916 = vmatprep.mubr.bf16.mxu0 %v7634
        %7917 = vmatmul.mubr.bf16.gmra.mrb[0].mxu0 %v7633
        %v7918 = vpop.f32.mrb[0].mxu0
        %v7919 = vadd.f32 %v7674, %v7918
        %v7920 = vpop.f32.mrb[0].mxu0
        %v7921 = vpop.f32.mrb[0].mxu0
        %v7922 = vadd.f32 %v7674, %v7921
        %v7923 = vpop.f32.mrb[0].mxu0
        %7924 = vmatprep.mubr.bf16.mxu0 %v7636
        %7925 = vmatmul.mubr.bf16.gmra.mrb[0].mxu0 %v7635
        %v7926 = vpop.f32.mrb[0].mxu0
        %v7927 = vadd.f32 %v7674, %v7926
        %v7928 = vpop.f32.mrb[0].mxu0
        %v7929 = vpop.f32.mrb[0].mxu0
        %v7930 = vadd.f32 %v7674, %v7929
        %v7931 = vpop.f32.mrb[0].mxu0
        %7932 = vdwg.mxu0
        %v7933 = vadd.f32 %v7807, %v4026
        %v7934 = vadd.f32 %v7810, %v4029
        %v7935 = vadd.f32 %v7815, %v4034
        %v7936 = vadd.f32 %v7818, %v4037
        %v7937 = vadd.f32 %v7823, %v4042
        %v7938 = vadd.f32 %v7826, %v4045
        %v7939 = vadd.f32 %v7831, %v4050
        %v7940 = vadd.f32 %v7834, %v4053
        %v7941 = vadd.f32 %v7839, %v4058
        %v7942 = vadd.f32 %v7842, %v4061
        %v7943 = vadd.f32 %v7847, %v4066
        %v7944 = vadd.f32 %v7850, %v4069
        %v7945 = vadd.f32 %v7855, %v4074
        %v7946 = vadd.f32 %v7858, %v4077
        %v7947 = vadd.f32 %v7863, %v4082
        %v7948 = vadd.f32 %v7866, %v4085
        %v7949 = vadd.f32 %v7871, %v4090
        %v7950 = vadd.f32 %v7874, %v4093
        %v7951 = vadd.f32 %v7879, %v4098
        %v7952 = vadd.f32 %v7882, %v4101
        %v7953 = vadd.f32 %v7887, %v4106
        %v7954 = vadd.f32 %v7890, %v4109
        %v7955 = vadd.f32 %v7895, %v4114
        %v7956 = vadd.f32 %v7898, %v4117
        %v7957 = vadd.f32 %v7903, %v4122
        %v7958 = vadd.f32 %v7906, %v4125
        %v7959 = vadd.f32 %v7911, %v4130
        %v7960 = vadd.f32 %v7914, %v4133
        %v7961 = vadd.f32 %v7919, %v4138
        %v7962 = vadd.f32 %v7922, %v4141
        %v7963 = vadd.f32 %v7927, %v4146
        %v7964 = vadd.f32 %v7930, %v4149
        %7965 = vst [vmem:[%s395] sm:$0xff] %v7933
        %7966 = vst [vmem:[%s395 + $0x8] sm:$0xff] %v7934
        %7967 = vst [vmem:[%s395 + $0x10] sm:$0xff] %v7935
        %7968 = vst [vmem:[%s395 + $0x18] sm:$0xff] %v7936
        %7969 = vst [vmem:[%s395 + $0x20] sm:$0xff] %v7937
        %7970 = vst [vmem:[%s395 + $0x28] sm:$0xff] %v7938
        %7971 = vst [vmem:[%s395 + $0x30] sm:$0xff] %v7939
        %7972 = vst [vmem:[%s395 + $0x38] sm:$0xff] %v7940
        %7973 = vst [vmem:[%s395 + $0x40] sm:$0xff] %v7941
        %7974 = vst [vmem:[%s395 + $0x48] sm:$0xff] %v7942
        %7975 = vst [vmem:[%s395 + $0x50] sm:$0xff] %v7943
        %7976 = vst [vmem:[%s395 + $0x58] sm:$0xff] %v7944
        %7977 = vst [vmem:[%s395 + $0x60] sm:$0xff] %v7945
        %7978 = vst [vmem:[%s395 + $0x68] sm:$0xff] %v7946
        %7979 = vst [vmem:[%s395 + $0x70] sm:$0xff] %v7947
        %7980 = vst [vmem:[%s395 + $0x78] sm:$0xff] %v7948
        %7981 = vst [vmem:[%s395 + $0x80] sm:$0xff] %v7949
        %7982 = vst [vmem:[%s395 + $0x88] sm:$0xff] %v7950
        %7983 = vst [vmem:[%s395 + $0x90] sm:$0xff] %v7951
        %7984 = vst [vmem:[%s395 + $0x98] sm:$0xff] %v7952
        %7985 = vst [vmem:[%s395 + $0xa0] sm:$0xff] %v7953
        %7986 = vst [vmem:[%s395 + $0xa8] sm:$0xff] %v7954
        %7987 = vst [vmem:[%s395 + $0xb0] sm:$0xff] %v7955
        %7988 = vst [vmem:[%s395 + $0xb8] sm:$0xff] %v7956
        %7989 = vst [vmem:[%s395 + $0xc0] sm:$0xff] %v7957
        %7990 = vst [vmem:[%s395 + $0xc8] sm:$0xff] %v7958
        %7991 = vst [vmem:[%s395 + $0xd0] sm:$0xff] %v7959
        %7992 = vst [vmem:[%s395 + $0xd8] sm:$0xff] %v7960
        %7993 = vst [vmem:[%s395 + $0xe0] sm:$0xff] %v7961
        %7994 = vst [vmem:[%s395 + $0xe8] sm:$0xff] %v7962
        %7995 = vst [vmem:[%s395 + $0xf0] sm:$0xff] %v7963
        %7996 = vst [vmem:[%s395 + $0xf8] sm:$0xff] %v7964
        %s7997 = sand.u32 %s230, 1
        %s7998 = scalar_lea.sflag [#allocation4], %s7997
        %s7999 = sand.u32 %s230, 1
        %s8000 = smul.addr %s7999, 256
        %s8001 = scalar_lea.vmem [#allocation10], %s8000
        // Predicated region
        $region73: #{tpu_custom_call.1} parent=55 // pred_check
          %p8002 = pneg %p240
        $region74: #{tpu_custom_call.1} parent=55 // pred_check_branch
          %8004 = sbr.rel (%p8002) target = $region76
        $region75: #{tpu_custom_call.1} parent=55 // pred_region
          %s8005 = smul.u32 32, %s28
          %s8007 = ssub.s32 4096, 4096
          %8008 = vsyncadd %s7998, %s8007
          %s8009 = smul.addr %s8005, 128
          %s8010 = scalar_lea.hbm %s9, %s8009
          %s8011 = sshll.u32 %s8001, 4
          %s8012 = int_to_ptr.vmem [resolvable:$true] %s8011
          %8017 = dma.vmem_to_hbm [thread:$0]  %s8012, 4096, %s8010, %s7998, 128, 128, 8
        $region76: #{tpu_custom_call.1} parent=55 // pred_fallthru
          _
      $region56: #{tpu_custom_call.1} parent=5 // pred_fallthru
        _
      %p8018 = scmp.le.s32.totalorder 2, %s23
      // Predicated region
      $region77: #{tpu_custom_call.1} parent=5 // pred_check
        %p8019 = pneg %p8018
      $region78: #{tpu_custom_call.1} parent=5 // pred_check_branch
        %8021 = sbr.rel (%p8019) target = $region80
      $region79: #{tpu_custom_call.1} parent=5 // pred_region
        %s8022 = ssub.s32 %s23, 2
        // Predicated region
        $region81: #{tpu_custom_call.1} parent=79 // pred_check
          %p8023 = pneg %p246
        $region82: #{tpu_custom_call.1} parent=79 // pred_check_branch
          %8025 = sbr.rel (%p8023) target = $region84
        $region83: #{tpu_custom_call.1} parent=79 // pred_region
          %s8026 = sand.u32 %s231, 1
          %s8027 = scalar_lea.sflag [#allocation4], %s8026
          %s8028 = sand.u32 %s231, 1
          %s8029 = smul.addr %s8028, 256
          %s8030 = scalar_lea.vmem [#allocation10], %s8029
          %8031 = dma.done %s8027, 4096
        $region84: #{tpu_custom_call.1} parent=79 // pred_fallthru
          _
      $region80: #{tpu_custom_call.1} parent=5 // pred_fallthru
        _
    $region6: #{tpu_custom_call.1} parent=1 // loop_footer
      %s27 = sadd.s32 1, %s23
    $region7: #{tpu_custom_call.1} parent=1 // loop_footer_branch
      %22 = sbr.rel target = $region3
    $region8: #{tpu_custom_call.1} parent=1 // loop_exit
      _
    %8032 = vsyncpa [#allocation3], 1
    %s8033 = scalar_lea.sflag [#allocation3], 1
    %8034 = vsyncpa %s8033, 1
    %8035 = vsyncpa [#allocation6], 1
    %8036 = vsyncpa [#allocation9], 1
    %8037 = vsyncpa [#allocation4], 1
    %s8038 = scalar_lea.sflag [#allocation4], 1
    %8039 = vsyncpa %s8038, 1

</llo_original>
